<compile_context>
chip_gen: v7x
topology: tpu7x:2x2x1
jax: 0.10.0
libtpu: 0.0.40
codegen_flags: <defaults>
</compile_context>

<pallas_src>
import functools

import jax
import jax.numpy as jnp
from jax import lax
from jax.experimental import pallas as pl
from jax.experimental.pallas import tpu as pltpu


# --------------------------- model configuration ---------------------------

CFG = dict(
    batch=2,
    img_size=16, img_channels=3, patch=8,
    vision_hidden=64, vision_ff=128,
    text_hidden=64, text_ff=128,
    heads=4, layers=2,
    proj_dim=32,
    vocab=64, text_seq=8,
)

PROJ_PAD = 128                      # lane-dense padded projection width (sliced outside)

STACK_KEYS = ("ln1_g", "ln1_b", "w_qkv", "b_qkv", "wo", "bo",
              "ln2_g", "ln2_b", "w1", "b1", "w2", "b2")
BF16_KEYS = frozenset({"w_qkv", "wo", "w1", "w2"})


# ----------------------- in-kernel building blocks --------------------------

def _ln(x, g, b, eps=1e-5):
    """LayerNorm on last axis (f32). x: [M, D], g/b: [1, D]."""
    mean = jnp.mean(x, axis=-1, keepdims=True)
    var = jnp.mean(jnp.square(x - mean), axis=-1, keepdims=True)
    return (x - mean) * lax.rsqrt(var + eps) * g + b


def _l2_normalize(y):
    return y * lax.rsqrt(jnp.sum(y * y, axis=-1, keepdims=True))


def _bf(x):
    return x.astype(jnp.bfloat16)


def _attention_mask(B, S, n_heads, causal, n_valid_keys):
    """Additive mask for the [B*H*S, S] batched score slab (f32, or None)."""
    nb = B * n_heads
    if causal:
        q = lax.broadcasted_iota(jnp.int32, (S, S), 0)
        kcol = lax.broadcasted_iota(jnp.int32, (S, S), 1)
        m = jnp.where(q >= kcol, 0.0, -1e9).astype(jnp.float32)
        return jnp.concatenate([m] * nb, axis=0)                 # [B*H*S, S]
    if n_valid_keys < S:
        col = lax.broadcasted_iota(jnp.int32, (nb * S, S), 1)
        return jnp.where(col < n_valid_keys, 0.0, -1e9).astype(jnp.float32)
    return None


def _encoder_stack(x, lrefs, *, B, S, n_heads, n_layers, causal, n_valid_keys):
    """All transformer layers on x: [B*S, D] (f32), fully VMEM-resident, no scratch."""
    (ln1_g, ln1_b, w_qkv, b_qkv, wo, bo,
     ln2_g, ln2_b, w1, b1, w2, b2) = lrefs
    D = x.shape[-1]
    hd = D // n_heads
    scale = hd ** -0.5

    neg_mask = _attention_mask(B, S, n_heads, causal, n_valid_keys)   # hoisted

    for l in range(n_layers):
        # ---- pre-LN fused-QKV multi-head self-attention + residual ----
        h = _ln(x, ln1_g[l], ln1_b[l])
        qkv = jnp.dot(_bf(h), w_qkv[l], preferred_element_type=jnp.float32) + b_qkv[l]
        q = qkv[:, 0:D] * scale
        k = qkv[:, D:2 * D]
        v = qkv[:, 2 * D:3 * D]

        # scores for every (batch, head) stacked along sublanes -> ONE softmax pass
        blocks = []
        for b in range(B):
            r0 = b * S
            for hh in range(n_heads):
                c0 = hh * hd
                blocks.append(lax.dot_general(
                    _bf(q[r0:r0 + S, c0:c0 + hd]), _bf(k[r0:r0 + S, c0:c0 + hd]),
                    (((1,), (1,)), ((), ())), preferred_element_type=jnp.float32))
        s = jnp.concatenate(blocks, axis=0)                      # [B*H*S, S] f32
        if neg_mask is not None:
            s = s + neg_mask
        s = s - jnp.max(s, axis=-1, keepdims=True)
        p = jnp.exp(s)
        p = p * pl.reciprocal(jnp.sum(p, axis=-1, keepdims=True), approx=True)

        # per-(batch, head) PV, reassembled as values (no scratch round trip)
        rows = []
        for b in range(B):
            heads = []
            for hh in range(n_heads):
                i = b * n_heads + hh
                heads.append(jnp.dot(
                    _bf(p[i * S:(i + 1) * S, :]),
                    _bf(v[b * S:(b + 1) * S, hh * hd:(hh + 1) * hd]),
                    preferred_element_type=jnp.float32))
            rows.append(jnp.concatenate(heads, axis=-1))          # [S, D]
        attn = jnp.concatenate(rows, axis=0)                      # [B*S, D]

        o = jnp.dot(_bf(attn), wo[l], preferred_element_type=jnp.float32) + bo[l]
        x = x + o

        # ---- pre-LN MLP with quick_gelu epilogue + residual ----
        h = _ln(x, ln2_g[l], ln2_b[l])
        h = jnp.dot(_bf(h), w1[l], preferred_element_type=jnp.float32) + b1[l]
        h = h * jax.nn.sigmoid(1.702 * h)                         # quick_gelu (EUP)
        h = jnp.dot(_bf(h), w2[l], preferred_element_type=jnp.float32) + b2[l]
        x = x + h
    return x


# -------------------------- fused two-tower kernel ---------------------------

def _clip_kernel(*refs, B, S, n_heads, n_layers, n_patch, vocab):
    (tok_ref, patches_ref, pw_ref, cls_ref, vpos_ref, vpre_g, vpre_b) = refs[0:7]
    v_lrefs = refs[7:19]
    (vpost_g, vpost_b, vproj_ref) = refs[19:22]
    (ttok_ref, tpos_ref) = refs[22:24]
    t_lrefs = refs[24:36]
    (tfin_g, tfin_b, tproj_ref) = refs[36:39]
    o_ref = refs[39]

    tower = pl.program_id(0)            # 0 = vision, 1 = text (parallel across TCs on v7x)

    @pl.when(tower == 0)
    def _vision_tower():
        D = pw_ref.shape[-1]
        n_real = n_patch + 1
        # patch "conv" as one matmul (no bias): [B*n_patch, C*P*P] @ [C*P*P, D]
        emb = jnp.dot(_bf(patches_ref[...]), pw_ref[...],
                      preferred_element_type=jnp.float32)
        pos = vpos_ref[...]                                       # [n_real, D]
        cls_row = cls_ref[...] + pos[0:1, :]                      # [1, D]
        pad = jnp.zeros((S - n_real, D), jnp.float32)             # sublane-align each batch
        blocks = []
        for b in range(B):
            blocks.append(jnp.concatenate(
                [cls_row,
                 emb[b * n_patch:(b + 1) * n_patch, :] + pos[1:n_real, :],
                 pad], axis=0))                                   # [S, D]
        x = jnp.concatenate(blocks, axis=0)                       # [B*S, D]
        x = _ln(x, vpre_g[...], vpre_b[...])                      # pre-LN

        x = _encoder_stack(x, v_lrefs, B=B, S=S, n_heads=n_heads, n_layers=n_layers,
                           causal=False, n_valid_keys=n_real)

        # pooled = cls token, post-LN, visual projection (no bias, lane-padded), L2 norm
        pooled = jnp.concatenate([x[b * S:b * S + 1, :] for b in range(B)], axis=0)
        pooled = _ln(pooled, vpost_g[...], vpost_b[...])
        y = jnp.dot(_bf(pooled), vproj_ref[...], preferred_element_type=jnp.float32)
        o_ref[...] = _l2_normalize(y)

    @pl.when(tower == 1)
    def _text_tower():
        # token-embedding gather as an exact one-hot matmul (keeps it in-kernel)
        ids = tok_ref[...]                                        # [B*S, 1] int32
        onehot = (lax.broadcasted_iota(jnp.int32, (B * S, vocab), 1) == ids
                  ).astype(jnp.float32)
        tok_emb = jnp.dot(onehot, ttok_ref[...], preferred_element_type=jnp.float32)
        pos = tpos_ref[...]                                       # [S, D]
        x = tok_emb + jnp.concatenate([pos] * B, axis=0)          # [B*S, D]

        x = _encoder_stack(x, t_lrefs, B=B, S=S, n_heads=n_heads, n_layers=n_layers,
                           causal=True, n_valid_keys=S)

        x = _ln(x, tfin_g[...], tfin_b[...])                      # final LN on full seq
        # TODO(synk): HF pools at the EOS-token position (argmax of eos id); here EOS is
        # assumed to sit at the last position of every (padded) sequence.
        pooled = jnp.concatenate(
            [x[(b + 1) * S - 1:(b + 1) * S, :] for b in range(B)], axis=0)
        y = jnp.dot(_bf(pooled), tproj_ref[...], preferred_element_type=jnp.float32)
        o_ref[...] = _l2_normalize(y)


# ------------------------------ parameter init -------------------------------

def _init_encoder_layer(key, d, ff):
    ks = jax.random.split(key, 6)
    s = 0.02
    wq = jax.random.normal(ks[0], (d, d), jnp.float32) * s
    wk = jax.random.normal(ks[1], (d, d), jnp.float32) * s
    wv = jax.random.normal(ks[2], (d, d), jnp.float32) * s
    return dict(
        ln1_g=jnp.ones((d,), jnp.float32), ln1_b=jnp.zeros((d,), jnp.float32),
        w_qkv=jnp.concatenate([wq, wk, wv], axis=1),              # fused [D, 3D]
        b_qkv=jnp.zeros((3 * d,), jnp.float32),
        wo=jax.random.normal(ks[3], (d, d), jnp.float32) * s, bo=jnp.zeros((d,), jnp.float32),
        ln2_g=jnp.ones((d,), jnp.float32), ln2_b=jnp.zeros((d,), jnp.float32),
        w1=jax.random.normal(ks[4], (d, ff), jnp.float32) * s, b1=jnp.zeros((ff,), jnp.float32),
        w2=jax.random.normal(ks[5], (ff, d), jnp.float32) * s, b2=jnp.zeros((d,), jnp.float32),
    )


def _stack_layers(layer_list):
    """Stack per-layer params into [L, ...]; 1-D params -> [L, 1, dim]; weights -> bf16."""
    stacked = []
    for name in STACK_KEYS:
        a = jnp.stack([lp[name] for lp in layer_list], axis=0)
        if a.ndim == 2:
            a = a[:, None, :]
        if name in BF16_KEYS:
            a = a.astype(jnp.bfloat16)
        stacked.append(a)
    return tuple(stacked)


def _pad_proj(w):
    d, p = w.shape
    return jnp.pad(w, ((0, 0), (0, PROJ_PAD - p))).astype(jnp.bfloat16)


def init_params(seed=0):
    c = CFG
    key = jax.random.PRNGKey(seed)
    keys = jax.random.split(key, 16)
    s = 0.02
    p = c["patch"]
    d = c["vision_hidden"]
    np_ = (c["img_size"] // p) ** 2
    v_layers = [_init_encoder_layer(k, d, c["vision_ff"])
                for k in jax.random.split(keys[3], c["layers"])]
    t_layers = [_init_encoder_layer(k, c["text_hidden"], c["text_ff"])
                for k in jax.random.split(keys[7], c["layers"])]
    params = dict(
        # vision tower
        v_patch_w=(jax.random.normal(keys[0], (c["img_channels"] * p * p, d), jnp.float32)
                   * s).astype(jnp.bfloat16),                     # conv (no bias)
        v_cls=jax.random.normal(keys[1], (1, d), jnp.float32) * s,
        v_pos=jax.random.normal(keys[2], (np_ + 1, d), jnp.float32) * s,
        v_pre_g=jnp.ones((1, d), jnp.float32), v_pre_b=jnp.zeros((1, d), jnp.float32),
        v_post_g=jnp.ones((1, d), jnp.float32), v_post_b=jnp.zeros((1, d), jnp.float32),
        v_stack=_stack_layers(v_layers),
        v_proj_pad=_pad_proj(jax.random.normal(keys[4], (d, c["proj_dim"]), jnp.float32) * s),
        # text tower
        t_tok=jax.random.normal(keys[5], (c["vocab"], c["text_hidden"]), jnp.float32) * s,
        t_pos=jax.random.normal(keys[6], (c["text_seq"], c["text_hidden"]), jnp.float32) * s,
        t_final_g=jnp.ones((1, c["text_hidden"]), jnp.float32),
        t_final_b=jnp.zeros((1, c["text_hidden"]), jnp.float32),
        t_stack=_stack_layers(t_layers),
        t_proj_pad=_pad_proj(jax.random.normal(keys[8], (c["text_hidden"], c["proj_dim"]),
                                               jnp.float32) * s),
    )
    return params


# ------------------------------ model forward -------------------------------

def clip_forward(params, image_nchw, token_ids):
    """Matches CLIP.forward: returns (image_embeds, text_embeds, masked_features=None)."""
    c = CFG
    B, C, H, W = image_nchw.shape
    P = c["patch"]
    n_patch = (H // P) * (W // P)
    S = c["text_seq"]                  # shared (padded) sequence length for both towers
    assert n_patch + 1 <= S and token_ids.shape == (B, S)

    # im2col: non-overlapping patch extraction, order matches nn.Conv2d + flatten(2).T
    patches = image_nchw.reshape(B, C, H // P, P, W // P, P)
    patches = patches.transpose(0, 2, 4, 1, 3, 5).reshape(B * n_patch, C * P * P)

    kern = functools.partial(_clip_kernel, B=B, S=S, n_heads=c["heads"],
                             n_layers=c["layers"], n_patch=n_patch, vocab=c["vocab"])

    inputs = (token_ids.reshape(B * S, 1).astype(jnp.int32),
              patches, params["v_patch_w"], params["v_cls"], params["v_pos"],
              params["v_pre_g"], params["v_pre_b"],
              *params["v_stack"],
              params["v_post_g"], params["v_post_b"], params["v_proj_pad"],
              params["t_tok"], params["t_pos"],
              *params["t_stack"],
              params["t_final_g"], params["t_final_b"], params["t_proj_pad"])

    out = pl.pallas_call(
        kern,
        grid=(2,),                                               # tower index
        out_shape=jax.ShapeDtypeStruct((2, B, PROJ_PAD), jnp.float32),
        out_specs=pl.BlockSpec((None, B, PROJ_PAD), lambda i: (i, 0, 0)),
        compiler_params=pltpu.CompilerParams(
            dimension_semantics=("parallel",)),                  # 2 TCs on v7x -> concurrent towers
    )(*inputs)

    image_embeds = out[0, :, :c["proj_dim"]]
    text_embeds = out[1, :, :c["proj_dim"]]
    return image_embeds, text_embeds, None


# ----------------------------------- main -----------------------------------

if __name__ == "__main__":
    key = jax.random.PRNGKey(0)
    k_img, k_txt = jax.random.split(key)

    params = init_params(seed=0)

    image = jax.random.normal(
        k_img, (CFG["batch"], CFG["img_channels"], CFG["img_size"], CFG["img_size"]),
        jnp.float32)                                   # NCHW, like the PyTorch processor output
    # Tokenised "text": random ids standing in for CLIPProcessor output.
    token_ids = jax.random.randint(k_txt, (CFG["batch"], CFG["text_seq"]), 0, CFG["vocab"],
                                   dtype=jnp.int32)

    img_e, txt_e, masked = clip_forward(params, image, token_ids)
    jax.block_until_ready((img_e, txt_e))

    assert img_e.shape == (CFG["batch"], CFG["proj_dim"])
    assert txt_e.shape == (CFG["batch"], CFG["proj_dim"])
    assert masked is None
    print("KERNEL_OK")
</pallas_src>

<mosaic_0001>
module attributes {stable_mosaic.version = 11 : i64} {
  func.func @_clip_kernel(%arg0: i32, %arg1: memref<16x1xi32, #tpu.memory_space<vmem>>, %arg2: memref<8x192xf32, #tpu.memory_space<vmem>>, %arg3: memref<192x64xbf16, #tpu.memory_space<vmem>>, %arg4: memref<1x64xf32, #tpu.memory_space<vmem>>, %arg5: memref<5x64xf32, #tpu.memory_space<vmem>>, %arg6: memref<1x64xf32, #tpu.memory_space<vmem>>, %arg7: memref<1x64xf32, #tpu.memory_space<vmem>>, %arg8: memref<2x1x64xf32, #tpu.memory_space<vmem>>, %arg9: memref<2x1x64xf32, #tpu.memory_space<vmem>>, %arg10: memref<2x64x192xbf16, #tpu.memory_space<vmem>>, %arg11: memref<2x1x192xf32, #tpu.memory_space<vmem>>, %arg12: memref<2x64x64xbf16, #tpu.memory_space<vmem>>, %arg13: memref<2x1x64xf32, #tpu.memory_space<vmem>>, %arg14: memref<2x1x64xf32, #tpu.memory_space<vmem>>, %arg15: memref<2x1x64xf32, #tpu.memory_space<vmem>>, %arg16: memref<2x64x128xbf16, #tpu.memory_space<vmem>>, %arg17: memref<2x1x128xf32, #tpu.memory_space<vmem>>, %arg18: memref<2x128x64xbf16, #tpu.memory_space<vmem>>, %arg19: memref<2x1x64xf32, #tpu.memory_space<vmem>>, %arg20: memref<1x64xf32, #tpu.memory_space<vmem>>, %arg21: memref<1x64xf32, #tpu.memory_space<vmem>>, %arg22: memref<64x128xbf16, #tpu.memory_space<vmem>>, %arg23: memref<64x64xf32, #tpu.memory_space<vmem>>, %arg24: memref<8x64xf32, #tpu.memory_space<vmem>>, %arg25: memref<2x1x64xf32, #tpu.memory_space<vmem>>, %arg26: memref<2x1x64xf32, #tpu.memory_space<vmem>>, %arg27: memref<2x64x192xbf16, #tpu.memory_space<vmem>>, %arg28: memref<2x1x192xf32, #tpu.memory_space<vmem>>, %arg29: memref<2x64x64xbf16, #tpu.memory_space<vmem>>, %arg30: memref<2x1x64xf32, #tpu.memory_space<vmem>>, %arg31: memref<2x1x64xf32, #tpu.memory_space<vmem>>, %arg32: memref<2x1x64xf32, #tpu.memory_space<vmem>>, %arg33: memref<2x64x128xbf16, #tpu.memory_space<vmem>>, %arg34: memref<2x1x128xf32, #tpu.memory_space<vmem>>, %arg35: memref<2x128x64xbf16, #tpu.memory_space<vmem>>, %arg36: memref<2x1x64xf32, #tpu.memory_space<vmem>>, %arg37: memref<1x64xf32, #tpu.memory_space<vmem>>, %arg38: memref<1x64xf32, #tpu.memory_space<vmem>>, %arg39: memref<64x128xbf16, #tpu.memory_space<vmem>>, %arg40: memref<1x2x128xf32, #tpu.memory_space<vmem>>) attributes {dimension_semantics = [#tpu.dimension_semantics<parallel>], iteration_bounds = array<i64: 2>, scalar_prefetch = 0 : i64, scratch_operands = 0 : i64, tpu.core_type = #tpu.core_type<tc>, window_params = [{pipeline_mode = #tpu.pipeline_mode<synchronous>, transform_indices = @transform_0, window_bounds = array<i64: 16, 1>}, {pipeline_mode = #tpu.pipeline_mode<synchronous>, transform_indices = @transform_1, window_bounds = array<i64: 8, 192>}, {pipeline_mode = #tpu.pipeline_mode<synchronous>, transform_indices = @transform_2, window_bounds = array<i64: 192, 64>}, {pipeline_mode = #tpu.pipeline_mode<synchronous>, transform_indices = @transform_3, window_bounds = array<i64: 1, 64>}, {pipeline_mode = #tpu.pipeline_mode<synchronous>, transform_indices = @transform_4, window_bounds = array<i64: 5, 64>}, {pipeline_mode = #tpu.pipeline_mode<synchronous>, transform_indices = @transform_5, window_bounds = array<i64: 1, 64>}, {pipeline_mode = #tpu.pipeline_mode<synchronous>, transform_indices = @transform_6, window_bounds = array<i64: 1, 64>}, {pipeline_mode = #tpu.pipeline_mode<synchronous>, transform_indices = @transform_7, window_bounds = array<i64: 2, 1, 64>}, {pipeline_mode = #tpu.pipeline_mode<synchronous>, transform_indices = @transform_8, window_bounds = array<i64: 2, 1, 64>}, {pipeline_mode = #tpu.pipeline_mode<synchronous>, transform_indices = @transform_9, window_bounds = array<i64: 2, 64, 192>}, {pipeline_mode = #tpu.pipeline_mode<synchronous>, transform_indices = @transform_10, window_bounds = array<i64: 2, 1, 192>}, {pipeline_mode = #tpu.pipeline_mode<synchronous>, transform_indices = @transform_11, window_bounds = array<i64: 2, 64, 64>}, {pipeline_mode = #tpu.pipeline_mode<synchronous>, transform_indices = @transform_12, window_bounds = array<i64: 2, 1, 64>}, {pipeline_mode = #tpu.pipeline_mode<synchronous>, transform_indices = @transform_13, window_bounds = array<i64: 2, 1, 64>}, {pipeline_mode = #tpu.pipeline_mode<synchronous>, transform_indices = @transform_14, window_bounds = array<i64: 2, 1, 64>}, {pipeline_mode = #tpu.pipeline_mode<synchronous>, transform_indices = @transform_15, window_bounds = array<i64: 2, 64, 128>}, {pipeline_mode = #tpu.pipeline_mode<synchronous>, transform_indices = @transform_16, window_bounds = array<i64: 2, 1, 128>}, {pipeline_mode = #tpu.pipeline_mode<synchronous>, transform_indices = @transform_17, window_bounds = array<i64: 2, 128, 64>}, {pipeline_mode = #tpu.pipeline_mode<synchronous>, transform_indices = @transform_18, window_bounds = array<i64: 2, 1, 64>}, {pipeline_mode = #tpu.pipeline_mode<synchronous>, transform_indices = @transform_19, window_bounds = array<i64: 1, 64>}, {pipeline_mode = #tpu.pipeline_mode<synchronous>, transform_indices = @transform_20, window_bounds = array<i64: 1, 64>}, {pipeline_mode = #tpu.pipeline_mode<synchronous>, transform_indices = @transform_21, window_bounds = array<i64: 64, 128>}, {pipeline_mode = #tpu.pipeline_mode<synchronous>, transform_indices = @transform_22, window_bounds = array<i64: 64, 64>}, {pipeline_mode = #tpu.pipeline_mode<synchronous>, transform_indices = @transform_23, window_bounds = array<i64: 8, 64>}, {pipeline_mode = #tpu.pipeline_mode<synchronous>, transform_indices = @transform_24, window_bounds = array<i64: 2, 1, 64>}, {pipeline_mode = #tpu.pipeline_mode<synchronous>, transform_indices = @transform_25, window_bounds = array<i64: 2, 1, 64>}, {pipeline_mode = #tpu.pipeline_mode<synchronous>, transform_indices = @transform_26, window_bounds = array<i64: 2, 64, 192>}, {pipeline_mode = #tpu.pipeline_mode<synchronous>, transform_indices = @transform_27, window_bounds = array<i64: 2, 1, 192>}, {pipeline_mode = #tpu.pipeline_mode<synchronous>, transform_indices = @transform_28, window_bounds = array<i64: 2, 64, 64>}, {pipeline_mode = #tpu.pipeline_mode<synchronous>, transform_indices = @transform_29, window_bounds = array<i64: 2, 1, 64>}, {pipeline_mode = #tpu.pipeline_mode<synchronous>, transform_indices = @transform_30, window_bounds = array<i64: 2, 1, 64>}, {pipeline_mode = #tpu.pipeline_mode<synchronous>, transform_indices = @transform_31, window_bounds = array<i64: 2, 1, 64>}, {pipeline_mode = #tpu.pipeline_mode<synchronous>, transform_indices = @transform_32, window_bounds = array<i64: 2, 64, 128>}, {pipeline_mode = #tpu.pipeline_mode<synchronous>, transform_indices = @transform_33, window_bounds = array<i64: 2, 1, 128>}, {pipeline_mode = #tpu.pipeline_mode<synchronous>, transform_indices = @transform_34, window_bounds = array<i64: 2, 128, 64>}, {pipeline_mode = #tpu.pipeline_mode<synchronous>, transform_indices = @transform_35, window_bounds = array<i64: 2, 1, 64>}, {pipeline_mode = #tpu.pipeline_mode<synchronous>, transform_indices = @transform_36, window_bounds = array<i64: 1, 64>}, {pipeline_mode = #tpu.pipeline_mode<synchronous>, transform_indices = @transform_37, window_bounds = array<i64: 1, 64>}, {pipeline_mode = #tpu.pipeline_mode<synchronous>, transform_indices = @transform_38, window_bounds = array<i64: 64, 128>}, {transform_indices = @transform_39, window_bounds = array<i64: 1, 2, 128>}]} {
    %c0_i32 = arith.constant 0 : i32
    %0 = arith.cmpi eq, %arg0, %c0_i32 : i32
    %1 = arith.extui %0 : i1 to i32
    %c0_i32_0 = arith.constant 0 : i32
    %2 = arith.cmpi ne, %1, %c0_i32_0 : i32
    scf.if %2 {
      %c0 = arith.constant 0 : index
      %c0_2 = arith.constant 0 : index
      %6 = vector.load %arg2[%c0, %c0_2] : memref<8x192xf32, #tpu.memory_space<vmem>>, vector<8x192xf32>
      %7 = arith.truncf %6 : vector<8x192xf32> to vector<8x192xbf16>
      %c0_3 = arith.constant 0 : index
      %c0_4 = arith.constant 0 : index
      %8 = vector.load %arg3[%c0_3, %c0_4] : memref<192x64xbf16, #tpu.memory_space<vmem>>, vector<192x64xbf16>
      %cst = arith.constant dense<0.000000e+00> : vector<8x64xf32>
      %9 = tpu.matmul %7, %8, %cst {dimension_numbers = #tpu.dot_dimension_numbers<[1], [0], [0], [1], [0, 0, 1, 1], [], []>} : vector<8x192xbf16>, vector<192x64xbf16>, vector<8x64xf32> -> vector<8x64xf32>
      %c0_5 = arith.constant 0 : index
      %c0_6 = arith.constant 0 : index
      %10 = vector.load %arg5[%c0_5, %c0_6] : memref<5x64xf32, #tpu.memory_space<vmem>>, vector<5x64xf32>
      %c0_7 = arith.constant 0 : index
      %c0_8 = arith.constant 0 : index
      %11 = vector.load %arg4[%c0_7, %c0_8] : memref<1x64xf32, #tpu.memory_space<vmem>>, vector<1x64xf32>
      %12 = vector.extract_strided_slice %10 {offsets = [0, 0], sizes = [1, 64], strides = [1, 1]} : vector<5x64xf32> to vector<1x64xf32>
      %13 = arith.addf %11, %12 : vector<1x64xf32>
      %cst_9 = arith.constant 0.000000e+00 : f32
      %14 = vector.broadcast %cst_9 : f32 to vector<3x64xf32>
      %15 = vector.extract_strided_slice %9 {offsets = [0, 0], sizes = [4, 64], strides = [1, 1]} : vector<8x64xf32> to vector<4x64xf32>
      %16 = vector.extract_strided_slice %10 {offsets = [1, 0], sizes = [4, 64], strides = [1, 1]} : vector<5x64xf32> to vector<4x64xf32>
      %17 = arith.addf %15, %16 : vector<4x64xf32>
      %18 = tpu.concatenate %13, %17, %14 in 0 : vector<1x64xf32>, vector<4x64xf32>, vector<3x64xf32> -> vector<8x64xf32>
      %19 = vector.extract_strided_slice %9 {offsets = [4, 0], sizes = [4, 64], strides = [1, 1]} : vector<8x64xf32> to vector<4x64xf32>
      %20 = vector.extract_strided_slice %10 {offsets = [1, 0], sizes = [4, 64], strides = [1, 1]} : vector<5x64xf32> to vector<4x64xf32>
      %21 = arith.addf %19, %20 : vector<4x64xf32>
      %22 = tpu.concatenate %13, %21, %14 in 0 : vector<1x64xf32>, vector<4x64xf32>, vector<3x64xf32> -> vector<8x64xf32>
      %23 = tpu.concatenate %18, %22 in 0 : vector<8x64xf32>, vector<8x64xf32> -> vector<16x64xf32>
      %c0_10 = arith.constant 0 : index
      %c0_11 = arith.constant 0 : index
      %24 = vector.load %arg6[%c0_10, %c0_11] : memref<1x64xf32, #tpu.memory_space<vmem>>, vector<1x64xf32>
      %c0_12 = arith.constant 0 : index
      %c0_13 = arith.constant 0 : index
      %25 = vector.load %arg7[%c0_12, %c0_13] : memref<1x64xf32, #tpu.memory_space<vmem>>, vector<1x64xf32>
      %cst_14 = arith.constant dense<0.000000e+00> : vector<16xf32>
      %26 = vector.multi_reduction <add>, %23, %cst_14 [1] : vector<16x64xf32> to vector<16xf32>
      %27 = vector.shape_cast %26 : vector<16xf32> to vector<16x1xf32>
      %cst_15 = arith.constant 6.400000e+01 : f32
      %28 = vector.broadcast %cst_15 : f32 to vector<16x1xf32>
      %29 = arith.divf %27, %28 : vector<16x1xf32>
      %30 = vector.broadcast %29 : vector<16x1xf32> to vector<16x64xf32>
      %31 = arith.subf %23, %30 : vector<16x64xf32>
      %32 = arith.mulf %31, %31 : vector<16x64xf32>
      %cst_16 = arith.constant dense<0.000000e+00> : vector<16xf32>
      %33 = vector.multi_reduction <add>, %32, %cst_16 [1] : vector<16x64xf32> to vector<16xf32>
      %34 = vector.shape_cast %33 : vector<16xf32> to vector<16x1xf32>
      %cst_17 = arith.constant 6.400000e+01 : f32
      %35 = vector.broadcast %cst_17 : f32 to vector<16x1xf32>
      %36 = arith.divf %34, %35 : vector<16x1xf32>
      %37 = vector.broadcast %29 : vector<16x1xf32> to vector<16x64xf32>
      %38 = arith.subf %23, %37 : vector<16x64xf32>
      %cst_18 = arith.constant 9.99999974E-6 : f32
      %39 = vector.broadcast %cst_18 : f32 to vector<16x1xf32>
      %40 = arith.addf %36, %39 : vector<16x1xf32>
      %41 = math.rsqrt %40 : vector<16x1xf32>
      %42 = vector.broadcast %41 : vector<16x1xf32> to vector<16x64xf32>
      %43 = arith.mulf %38, %42 : vector<16x64xf32>
      %44 = vector.broadcast %24 : vector<1x64xf32> to vector<16x64xf32>
      %45 = arith.mulf %43, %44 : vector<16x64xf32>
      %46 = vector.broadcast %25 : vector<1x64xf32> to vector<16x64xf32>
      %47 = arith.addf %45, %46 : vector<16x64xf32>
      %48 = tpu.iota {dimensions = array<i32: 1>} : vector<64x8xi32>
      %c5_i32 = arith.constant 5 : i32
      %49 = vector.broadcast %c5_i32 : i32 to vector<64x8xi32>
      %50 = arith.cmpi slt, %48, %49 : vector<64x8xi32>
      %cst_19 = arith.constant 0.000000e+00 : f32
      %cst_20 = arith.constant -1.000000e+09 : f32
      %51 = vector.broadcast %cst_19 : f32 to vector<64x8xf32>
      %52 = vector.broadcast %cst_20 : f32 to vector<64x8xf32>
      %53 = arith.select %50, %51, %52 : vector<64x8xi1>, vector<64x8xf32>
      %c0_21 = arith.constant 0 : index
      %c0_22 = arith.constant 0 : index
      %c0_23 = arith.constant 0 : index
      %54 = vector.load %arg8[%c0_21, %c0_22, %c0_23] : memref<2x1x64xf32, #tpu.memory_space<vmem>>, vector<1x1x64xf32>
      %55 = vector.shape_cast %54 : vector<1x1x64xf32> to vector<1x64xf32>
      %c0_24 = arith.constant 0 : index
      %c0_25 = arith.constant 0 : index
      %c0_26 = arith.constant 0 : index
      %56 = vector.load %arg9[%c0_24, %c0_25, %c0_26] : memref<2x1x64xf32, #tpu.memory_space<vmem>>, vector<1x1x64xf32>
      %57 = vector.shape_cast %56 : vector<1x1x64xf32> to vector<1x64xf32>
      %cst_27 = arith.constant dense<0.000000e+00> : vector<16xf32>
      %58 = vector.multi_reduction <add>, %47, %cst_27 [1] : vector<16x64xf32> to vector<16xf32>
      %59 = vector.shape_cast %58 : vector<16xf32> to vector<16x1xf32>
      %cst_28 = arith.constant 6.400000e+01 : f32
      %60 = vector.broadcast %cst_28 : f32 to vector<16x1xf32>
      %61 = arith.divf %59, %60 : vector<16x1xf32>
      %62 = vector.broadcast %61 : vector<16x1xf32> to vector<16x64xf32>
      %63 = arith.subf %47, %62 : vector<16x64xf32>
      %64 = arith.mulf %63, %63 : vector<16x64xf32>
      %cst_29 = arith.constant dense<0.000000e+00> : vector<16xf32>
      %65 = vector.multi_reduction <add>, %64, %cst_29 [1] : vector<16x64xf32> to vector<16xf32>
      %66 = vector.shape_cast %65 : vector<16xf32> to vector<16x1xf32>
      %cst_30 = arith.constant 6.400000e+01 : f32
      %67 = vector.broadcast %cst_30 : f32 to vector<16x1xf32>
      %68 = arith.divf %66, %67 : vector<16x1xf32>
      %69 = vector.broadcast %61 : vector<16x1xf32> to vector<16x64xf32>
      %70 = arith.subf %47, %69 : vector<16x64xf32>
      %cst_31 = arith.constant 9.99999974E-6 : f32
      %71 = vector.broadcast %cst_31 : f32 to vector<16x1xf32>
      %72 = arith.addf %68, %71 : vector<16x1xf32>
      %73 = math.rsqrt %72 : vector<16x1xf32>
      %74 = vector.broadcast %73 : vector<16x1xf32> to vector<16x64xf32>
      %75 = arith.mulf %70, %74 : vector<16x64xf32>
      %76 = vector.broadcast %55 : vector<1x64xf32> to vector<16x64xf32>
      %77 = arith.mulf %75, %76 : vector<16x64xf32>
      %78 = vector.broadcast %57 : vector<1x64xf32> to vector<16x64xf32>
      %79 = arith.addf %77, %78 : vector<16x64xf32>
      %80 = arith.truncf %79 : vector<16x64xf32> to vector<16x64xbf16>
      %c0_32 = arith.constant 0 : index
      %c0_33 = arith.constant 0 : index
      %c0_34 = arith.constant 0 : index
      %81 = vector.load %arg10[%c0_32, %c0_33, %c0_34] : memref<2x64x192xbf16, #tpu.memory_space<vmem>>, vector<1x64x192xbf16>
      %82 = vector.shape_cast %81 : vector<1x64x192xbf16> to vector<64x192xbf16>
      %cst_35 = arith.constant dense<0.000000e+00> : vector<16x192xf32>
      %83 = tpu.matmul %80, %82, %cst_35 {dimension_numbers = #tpu.dot_dimension_numbers<[1], [0], [0], [1], [0, 0, 1, 1], [], []>} : vector<16x64xbf16>, vector<64x192xbf16>, vector<16x192xf32> -> vector<16x192xf32>
      %c0_36 = arith.constant 0 : index
      %c0_37 = arith.constant 0 : index
      %c0_38 = arith.constant 0 : index
      %84 = vector.load %arg11[%c0_36, %c0_37, %c0_38] : memref<2x1x192xf32, #tpu.memory_space<vmem>>, vector<1x1x192xf32>
      %85 = vector.shape_cast %84 : vector<1x1x192xf32> to vector<1x192xf32>
      %86 = vector.broadcast %85 : vector<1x192xf32> to vector<16x192xf32>
      %87 = arith.addf %83, %86 : vector<16x192xf32>
      %88 = vector.extract_strided_slice %87 {offsets = [0, 0], sizes = [16, 64], strides = [1, 1]} : vector<16x192xf32> to vector<16x64xf32>
      %cst_39 = arith.constant 2.500000e-01 : f32
      %89 = vector.broadcast %cst_39 : f32 to vector<16x64xf32>
      %90 = arith.mulf %88, %89 : vector<16x64xf32>
      %91 = vector.extract_strided_slice %87 {offsets = [0, 64], sizes = [16, 64], strides = [1, 1]} : vector<16x192xf32> to vector<16x64xf32>
      %92 = vector.extract_strided_slice %87 {offsets = [0, 128], sizes = [16, 64], strides = [1, 1]} : vector<16x192xf32> to vector<16x64xf32>
      %93 = vector.extract_strided_slice %90 {offsets = [0, 0], sizes = [8, 16], strides = [1, 1]} : vector<16x64xf32> to vector<8x16xf32>
      %94 = arith.truncf %93 : vector<8x16xf32> to vector<8x16xbf16>
      %95 = vector.extract_strided_slice %91 {offsets = [0, 0], sizes = [8, 16], strides = [1, 1]} : vector<16x64xf32> to vector<8x16xf32>
      %96 = arith.truncf %95 : vector<8x16xf32> to vector<8x16xbf16>
      %cst_40 = arith.constant dense<0.000000e+00> : vector<8x8xf32>
      %97 = tpu.matmul %94, %96, %cst_40 {dimension_numbers = #tpu.dot_dimension_numbers<[1], [1], [0], [0], [0, 0, 1, 0], [], []>} : vector<8x16xbf16>, vector<8x16xbf16>, vector<8x8xf32> -> vector<8x8xf32>
      %98 = vector.extract_strided_slice %90 {offsets = [0, 16], sizes = [8, 16], strides = [1, 1]} : vector<16x64xf32> to vector<8x16xf32>
      %99 = arith.truncf %98 : vector<8x16xf32> to vector<8x16xbf16>
      %100 = vector.extract_strided_slice %91 {offsets = [0, 16], sizes = [8, 16], strides = [1, 1]} : vector<16x64xf32> to vector<8x16xf32>
      %101 = arith.truncf %100 : vector<8x16xf32> to vector<8x16xbf16>
      %cst_41 = arith.constant dense<0.000000e+00> : vector<8x8xf32>
      %102 = tpu.matmul %99, %101, %cst_41 {dimension_numbers = #tpu.dot_dimension_numbers<[1], [1], [0], [0], [0, 0, 1, 0], [], []>} : vector<8x16xbf16>, vector<8x16xbf16>, vector<8x8xf32> -> vector<8x8xf32>
      %103 = vector.extract_strided_slice %90 {offsets = [0, 32], sizes = [8, 16], strides = [1, 1]} : vector<16x64xf32> to vector<8x16xf32>
      %104 = arith.truncf %103 : vector<8x16xf32> to vector<8x16xbf16>
      %105 = vector.extract_strided_slice %91 {offsets = [0, 32], sizes = [8, 16], strides = [1, 1]} : vector<16x64xf32> to vector<8x16xf32>
      %106 = arith.truncf %105 : vector<8x16xf32> to vector<8x16xbf16>
      %cst_42 = arith.constant dense<0.000000e+00> : vector<8x8xf32>
      %107 = tpu.matmul %104, %106, %cst_42 {dimension_numbers = #tpu.dot_dimension_numbers<[1], [1], [0], [0], [0, 0, 1, 0], [], []>} : vector<8x16xbf16>, vector<8x16xbf16>, vector<8x8xf32> -> vector<8x8xf32>
      %108 = vector.extract_strided_slice %90 {offsets = [0, 48], sizes = [8, 16], strides = [1, 1]} : vector<16x64xf32> to vector<8x16xf32>
      %109 = arith.truncf %108 : vector<8x16xf32> to vector<8x16xbf16>
      %110 = vector.extract_strided_slice %91 {offsets = [0, 48], sizes = [8, 16], strides = [1, 1]} : vector<16x64xf32> to vector<8x16xf32>
      %111 = arith.truncf %110 : vector<8x16xf32> to vector<8x16xbf16>
      %cst_43 = arith.constant dense<0.000000e+00> : vector<8x8xf32>
      %112 = tpu.matmul %109, %111, %cst_43 {dimension_numbers = #tpu.dot_dimension_numbers<[1], [1], [0], [0], [0, 0, 1, 0], [], []>} : vector<8x16xbf16>, vector<8x16xbf16>, vector<8x8xf32> -> vector<8x8xf32>
      %113 = vector.extract_strided_slice %90 {offsets = [8, 0], sizes = [8, 16], strides = [1, 1]} : vector<16x64xf32> to vector<8x16xf32>
      %114 = arith.truncf %113 : vector<8x16xf32> to vector<8x16xbf16>
      %115 = vector.extract_strided_slice %91 {offsets = [8, 0], sizes = [8, 16], strides = [1, 1]} : vector<16x64xf32> to vector<8x16xf32>
      %116 = arith.truncf %115 : vector<8x16xf32> to vector<8x16xbf16>
      %cst_44 = arith.constant dense<0.000000e+00> : vector<8x8xf32>
      %117 = tpu.matmul %114, %116, %cst_44 {dimension_numbers = #tpu.dot_dimension_numbers<[1], [1], [0], [0], [0, 0, 1, 0], [], []>} : vector<8x16xbf16>, vector<8x16xbf16>, vector<8x8xf32> -> vector<8x8xf32>
      %118 = vector.extract_strided_slice %90 {offsets = [8, 16], sizes = [8, 16], strides = [1, 1]} : vector<16x64xf32> to vector<8x16xf32>
      %119 = arith.truncf %118 : vector<8x16xf32> to vector<8x16xbf16>
      %120 = vector.extract_strided_slice %91 {offsets = [8, 16], sizes = [8, 16], strides = [1, 1]} : vector<16x64xf32> to vector<8x16xf32>
      %121 = arith.truncf %120 : vector<8x16xf32> to vector<8x16xbf16>
      %cst_45 = arith.constant dense<0.000000e+00> : vector<8x8xf32>
      %122 = tpu.matmul %119, %121, %cst_45 {dimension_numbers = #tpu.dot_dimension_numbers<[1], [1], [0], [0], [0, 0, 1, 0], [], []>} : vector<8x16xbf16>, vector<8x16xbf16>, vector<8x8xf32> -> vector<8x8xf32>
      %123 = vector.extract_strided_slice %90 {offsets = [8, 32], sizes = [8, 16], strides = [1, 1]} : vector<16x64xf32> to vector<8x16xf32>
      %124 = arith.truncf %123 : vector<8x16xf32> to vector<8x16xbf16>
      %125 = vector.extract_strided_slice %91 {offsets = [8, 32], sizes = [8, 16], strides = [1, 1]} : vector<16x64xf32> to vector<8x16xf32>
      %126 = arith.truncf %125 : vector<8x16xf32> to vector<8x16xbf16>
      %cst_46 = arith.constant dense<0.000000e+00> : vector<8x8xf32>
      %127 = tpu.matmul %124, %126, %cst_46 {dimension_numbers = #tpu.dot_dimension_numbers<[1], [1], [0], [0], [0, 0, 1, 0], [], []>} : vector<8x16xbf16>, vector<8x16xbf16>, vector<8x8xf32> -> vector<8x8xf32>
      %128 = vector.extract_strided_slice %90 {offsets = [8, 48], sizes = [8, 16], strides = [1, 1]} : vector<16x64xf32> to vector<8x16xf32>
      %129 = arith.truncf %128 : vector<8x16xf32> to vector<8x16xbf16>
      %130 = vector.extract_strided_slice %91 {offsets = [8, 48], sizes = [8, 16], strides = [1, 1]} : vector<16x64xf32> to vector<8x16xf32>
      %131 = arith.truncf %130 : vector<8x16xf32> to vector<8x16xbf16>
      %cst_47 = arith.constant dense<0.000000e+00> : vector<8x8xf32>
      %132 = tpu.matmul %129, %131, %cst_47 {dimension_numbers = #tpu.dot_dimension_numbers<[1], [1], [0], [0], [0, 0, 1, 0], [], []>} : vector<8x16xbf16>, vector<8x16xbf16>, vector<8x8xf32> -> vector<8x8xf32>
      %133 = tpu.concatenate %97, %102, %107, %112, %117, %122, %127, %132 in 0 : vector<8x8xf32>, vector<8x8xf32>, vector<8x8xf32>, vector<8x8xf32>, vector<8x8xf32>, vector<8x8xf32>, vector<8x8xf32>, vector<8x8xf32> -> vector<64x8xf32>
      %134 = arith.addf %133, %53 : vector<64x8xf32>
      %cst_48 = arith.constant dense<0xFF800000> : vector<64xf32>
      %135 = vector.multi_reduction <maximumf>, %134, %cst_48 [1] : vector<64x8xf32> to vector<64xf32>
      %136 = vector.shape_cast %135 : vector<64xf32> to vector<64x1xf32>
      %137 = vector.broadcast %136 : vector<64x1xf32> to vector<64x8xf32>
      %138 = arith.subf %134, %137 : vector<64x8xf32>
      %139 = math.exp %138 : vector<64x8xf32>
      %cst_49 = arith.constant dense<0.000000e+00> : vector<64xf32>
      %140 = vector.multi_reduction <add>, %139, %cst_49 [1] : vector<64x8xf32> to vector<64xf32>
      %141 = vector.shape_cast %140 : vector<64xf32> to vector<64x1xf32>
      %142 = tpu.reciprocal %141 {approx = true} : vector<64x1xf32> -> vector<64x1xf32>
      %143 = vector.broadcast %142 : vector<64x1xf32> to vector<64x8xf32>
      %144 = arith.mulf %139, %143 : vector<64x8xf32>
      %145 = vector.extract_strided_slice %144 {offsets = [0, 0], sizes = [8, 8], strides = [1, 1]} : vector<64x8xf32> to vector<8x8xf32>
      %146 = arith.truncf %145 : vector<8x8xf32> to vector<8x8xbf16>
      %147 = vector.extract_strided_slice %92 {offsets = [0, 0], sizes = [8, 16], strides = [1, 1]} : vector<16x64xf32> to vector<8x16xf32>
      %148 = arith.truncf %147 : vector<8x16xf32> to vector<8x16xbf16>
      %cst_50 = arith.constant dense<0.000000e+00> : vector<8x16xf32>
      %149 = tpu.matmul %146, %148, %cst_50 {dimension_numbers = #tpu.dot_dimension_numbers<[1], [0], [0], [1], [0, 0, 1, 1], [], []>} : vector<8x8xbf16>, vector<8x16xbf16>, vector<8x16xf32> -> vector<8x16xf32>
      %150 = vector.extract_strided_slice %144 {offsets = [8, 0], sizes = [8, 8], strides = [1, 1]} : vector<64x8xf32> to vector<8x8xf32>
      %151 = arith.truncf %150 : vector<8x8xf32> to vector<8x8xbf16>
      %152 = vector.extract_strided_slice %92 {offsets = [0, 16], sizes = [8, 16], strides = [1, 1]} : vector<16x64xf32> to vector<8x16xf32>
      %153 = arith.truncf %152 : vector<8x16xf32> to vector<8x16xbf16>
      %cst_51 = arith.constant dense<0.000000e+00> : vector<8x16xf32>
      %154 = tpu.matmul %151, %153, %cst_51 {dimension_numbers = #tpu.dot_dimension_numbers<[1], [0], [0], [1], [0, 0, 1, 1], [], []>} : vector<8x8xbf16>, vector<8x16xbf16>, vector<8x16xf32> -> vector<8x16xf32>
      %155 = vector.extract_strided_slice %144 {offsets = [16, 0], sizes = [8, 8], strides = [1, 1]} : vector<64x8xf32> to vector<8x8xf32>
      %156 = arith.truncf %155 : vector<8x8xf32> to vector<8x8xbf16>
      %157 = vector.extract_strided_slice %92 {offsets = [0, 32], sizes = [8, 16], strides = [1, 1]} : vector<16x64xf32> to vector<8x16xf32>
      %158 = arith.truncf %157 : vector<8x16xf32> to vector<8x16xbf16>
      %cst_52 = arith.constant dense<0.000000e+00> : vector<8x16xf32>
      %159 = tpu.matmul %156, %158, %cst_52 {dimension_numbers = #tpu.dot_dimension_numbers<[1], [0], [0], [1], [0, 0, 1, 1], [], []>} : vector<8x8xbf16>, vector<8x16xbf16>, vector<8x16xf32> -> vector<8x16xf32>
      %160 = vector.extract_strided_slice %144 {offsets = [24, 0], sizes = [8, 8], strides = [1, 1]} : vector<64x8xf32> to vector<8x8xf32>
      %161 = arith.truncf %160 : vector<8x8xf32> to vector<8x8xbf16>
      %162 = vector.extract_strided_slice %92 {offsets = [0, 48], sizes = [8, 16], strides = [1, 1]} : vector<16x64xf32> to vector<8x16xf32>
      %163 = arith.truncf %162 : vector<8x16xf32> to vector<8x16xbf16>
      %cst_53 = arith.constant dense<0.000000e+00> : vector<8x16xf32>
      %164 = tpu.matmul %161, %163, %cst_53 {dimension_numbers = #tpu.dot_dimension_numbers<[1], [0], [0], [1], [0, 0, 1, 1], [], []>} : vector<8x8xbf16>, vector<8x16xbf16>, vector<8x16xf32> -> vector<8x16xf32>
      %165 = tpu.concatenate %149, %154, %159, %164 in 1 : vector<8x16xf32>, vector<8x16xf32>, vector<8x16xf32>, vector<8x16xf32> -> vector<8x64xf32>
      %166 = vector.extract_strided_slice %144 {offsets = [32, 0], sizes = [8, 8], strides = [1, 1]} : vector<64x8xf32> to vector<8x8xf32>
      %167 = arith.truncf %166 : vector<8x8xf32> to vector<8x8xbf16>
      %168 = vector.extract_strided_slice %92 {offsets = [8, 0], sizes = [8, 16], strides = [1, 1]} : vector<16x64xf32> to vector<8x16xf32>
      %169 = arith.truncf %168 : vector<8x16xf32> to vector<8x16xbf16>
      %cst_54 = arith.constant dense<0.000000e+00> : vector<8x16xf32>
      %170 = tpu.matmul %167, %169, %cst_54 {dimension_numbers = #tpu.dot_dimension_numbers<[1], [0], [0], [1], [0, 0, 1, 1], [], []>} : vector<8x8xbf16>, vector<8x16xbf16>, vector<8x16xf32> -> vector<8x16xf32>
      %171 = vector.extract_strided_slice %144 {offsets = [40, 0], sizes = [8, 8], strides = [1, 1]} : vector<64x8xf32> to vector<8x8xf32>
      %172 = arith.truncf %171 : vector<8x8xf32> to vector<8x8xbf16>
      %173 = vector.extract_strided_slice %92 {offsets = [8, 16], sizes = [8, 16], strides = [1, 1]} : vector<16x64xf32> to vector<8x16xf32>
      %174 = arith.truncf %173 : vector<8x16xf32> to vector<8x16xbf16>
      %cst_55 = arith.constant dense<0.000000e+00> : vector<8x16xf32>
      %175 = tpu.matmul %172, %174, %cst_55 {dimension_numbers = #tpu.dot_dimension_numbers<[1], [0], [0], [1], [0, 0, 1, 1], [], []>} : vector<8x8xbf16>, vector<8x16xbf16>, vector<8x16xf32> -> vector<8x16xf32>
      %176 = vector.extract_strided_slice %144 {offsets = [48, 0], sizes = [8, 8], strides = [1, 1]} : vector<64x8xf32> to vector<8x8xf32>
      %177 = arith.truncf %176 : vector<8x8xf32> to vector<8x8xbf16>
      %178 = vector.extract_strided_slice %92 {offsets = [8, 32], sizes = [8, 16], strides = [1, 1]} : vector<16x64xf32> to vector<8x16xf32>
      %179 = arith.truncf %178 : vector<8x16xf32> to vector<8x16xbf16>
      %cst_56 = arith.constant dense<0.000000e+00> : vector<8x16xf32>
      %180 = tpu.matmul %177, %179, %cst_56 {dimension_numbers = #tpu.dot_dimension_numbers<[1], [0], [0], [1], [0, 0, 1, 1], [], []>} : vector<8x8xbf16>, vector<8x16xbf16>, vector<8x16xf32> -> vector<8x16xf32>
      %181 = vector.extract_strided_slice %144 {offsets = [56, 0], sizes = [8, 8], strides = [1, 1]} : vector<64x8xf32> to vector<8x8xf32>
      %182 = arith.truncf %181 : vector<8x8xf32> to vector<8x8xbf16>
      %183 = vector.extract_strided_slice %92 {offsets = [8, 48], sizes = [8, 16], strides = [1, 1]} : vector<16x64xf32> to vector<8x16xf32>
      %184 = arith.truncf %183 : vector<8x16xf32> to vector<8x16xbf16>
      %cst_57 = arith.constant dense<0.000000e+00> : vector<8x16xf32>
      %185 = tpu.matmul %182, %184, %cst_57 {dimension_numbers = #tpu.dot_dimension_numbers<[1], [0], [0], [1], [0, 0, 1, 1], [], []>} : vector<8x8xbf16>, vector<8x16xbf16>, vector<8x16xf32> -> vector<8x16xf32>
      %186 = tpu.concatenate %170, %175, %180, %185 in 1 : vector<8x16xf32>, vector<8x16xf32>, vector<8x16xf32>, vector<8x16xf32> -> vector<8x64xf32>
      %187 = tpu.concatenate %165, %186 in 0 : vector<8x64xf32>, vector<8x64xf32> -> vector<16x64xf32>
      %188 = arith.truncf %187 : vector<16x64xf32> to vector<16x64xbf16>
      %c0_58 = arith.constant 0 : index
      %c0_59 = arith.constant 0 : index
      %c0_60 = arith.constant 0 : index
      %189 = vector.load %arg12[%c0_58, %c0_59, %c0_60] : memref<2x64x64xbf16, #tpu.memory_space<vmem>>, vector<1x64x64xbf16>
      %190 = vector.shape_cast %189 : vector<1x64x64xbf16> to vector<64x64xbf16>
      %cst_61 = arith.constant dense<0.000000e+00> : vector<16x64xf32>
      %191 = tpu.matmul %188, %190, %cst_61 {dimension_numbers = #tpu.dot_dimension_numbers<[1], [0], [0], [1], [0, 0, 1, 1], [], []>} : vector<16x64xbf16>, vector<64x64xbf16>, vector<16x64xf32> -> vector<16x64xf32>
      %c0_62 = arith.constant 0 : index
      %c0_63 = arith.constant 0 : index
      %c0_64 = arith.constant 0 : index
      %192 = vector.load %arg13[%c0_62, %c0_63, %c0_64] : memref<2x1x64xf32, #tpu.memory_space<vmem>>, vector<1x1x64xf32>
      %193 = vector.shape_cast %192 : vector<1x1x64xf32> to vector<1x64xf32>
      %194 = vector.broadcast %193 : vector<1x64xf32> to vector<16x64xf32>
      %195 = arith.addf %191, %194 : vector<16x64xf32>
      %196 = arith.addf %47, %195 : vector<16x64xf32>
      %c0_65 = arith.constant 0 : index
      %c0_66 = arith.constant 0 : index
      %c0_67 = arith.constant 0 : index
      %197 = vector.load %arg14[%c0_65, %c0_66, %c0_67] : memref<2x1x64xf32, #tpu.memory_space<vmem>>, vector<1x1x64xf32>
      %198 = vector.shape_cast %197 : vector<1x1x64xf32> to vector<1x64xf32>
      %c0_68 = arith.constant 0 : index
      %c0_69 = arith.constant 0 : index
      %c0_70 = arith.constant 0 : index
      %199 = vector.load %arg15[%c0_68, %c0_69, %c0_70] : memref<2x1x64xf32, #tpu.memory_space<vmem>>, vector<1x1x64xf32>
      %200 = vector.shape_cast %199 : vector<1x1x64xf32> to vector<1x64xf32>
      %cst_71 = arith.constant dense<0.000000e+00> : vector<16xf32>
      %201 = vector.multi_reduction <add>, %196, %cst_71 [1] : vector<16x64xf32> to vector<16xf32>
      %202 = vector.shape_cast %201 : vector<16xf32> to vector<16x1xf32>
      %cst_72 = arith.constant 6.400000e+01 : f32
      %203 = vector.broadcast %cst_72 : f32 to vector<16x1xf32>
      %204 = arith.divf %202, %203 : vector<16x1xf32>
      %205 = vector.broadcast %204 : vector<16x1xf32> to vector<16x64xf32>
      %206 = arith.subf %196, %205 : vector<16x64xf32>
      %207 = arith.mulf %206, %206 : vector<16x64xf32>
      %cst_73 = arith.constant dense<0.000000e+00> : vector<16xf32>
      %208 = vector.multi_reduction <add>, %207, %cst_73 [1] : vector<16x64xf32> to vector<16xf32>
      %209 = vector.shape_cast %208 : vector<16xf32> to vector<16x1xf32>
      %cst_74 = arith.constant 6.400000e+01 : f32
      %210 = vector.broadcast %cst_74 : f32 to vector<16x1xf32>
      %211 = arith.divf %209, %210 : vector<16x1xf32>
      %212 = vector.broadcast %204 : vector<16x1xf32> to vector<16x64xf32>
      %213 = arith.subf %196, %212 : vector<16x64xf32>
      %cst_75 = arith.constant 9.99999974E-6 : f32
      %214 = vector.broadcast %cst_75 : f32 to vector<16x1xf32>
      %215 = arith.addf %211, %214 : vector<16x1xf32>
      %216 = math.rsqrt %215 : vector<16x1xf32>
      %217 = vector.broadcast %216 : vector<16x1xf32> to vector<16x64xf32>
      %218 = arith.mulf %213, %217 : vector<16x64xf32>
      %219 = vector.broadcast %198 : vector<1x64xf32> to vector<16x64xf32>
      %220 = arith.mulf %218, %219 : vector<16x64xf32>
      %221 = vector.broadcast %200 : vector<1x64xf32> to vector<16x64xf32>
      %222 = arith.addf %220, %221 : vector<16x64xf32>
      %223 = arith.truncf %222 : vector<16x64xf32> to vector<16x64xbf16>
      %c0_76 = arith.constant 0 : index
      %c0_77 = arith.constant 0 : index
      %c0_78 = arith.constant 0 : index
      %224 = vector.load %arg16[%c0_76, %c0_77, %c0_78] : memref<2x64x128xbf16, #tpu.memory_space<vmem>>, vector<1x64x128xbf16>
      %225 = vector.shape_cast %224 : vector<1x64x128xbf16> to vector<64x128xbf16>
      %cst_79 = arith.constant dense<0.000000e+00> : vector<16x128xf32>
      %226 = tpu.matmul %223, %225, %cst_79 {dimension_numbers = #tpu.dot_dimension_numbers<[1], [0], [0], [1], [0, 0, 1, 1], [], []>} : vector<16x64xbf16>, vector<64x128xbf16>, vector<16x128xf32> -> vector<16x128xf32>
      %c0_80 = arith.constant 0 : index
      %c0_81 = arith.constant 0 : index
      %c0_82 = arith.constant 0 : index
      %227 = vector.load %arg17[%c0_80, %c0_81, %c0_82] : memref<2x1x128xf32, #tpu.memory_space<vmem>>, vector<1x1x128xf32>
      %228 = vector.shape_cast %227 : vector<1x1x128xf32> to vector<1x128xf32>
      %229 = vector.broadcast %228 : vector<1x128xf32> to vector<16x128xf32>
      %230 = arith.addf %226, %229 : vector<16x128xf32>
      %cst_83 = arith.constant 1.702000e+00 : f32
      %231 = vector.broadcast %cst_83 : f32 to vector<16x128xf32>
      %232 = arith.mulf %231, %230 : vector<16x128xf32>
      %233 = arith.negf %232 : vector<16x128xf32>
      %234 = math.exp %233 : vector<16x128xf32>
      %cst_84 = arith.constant 1.000000e+00 : f32
      %235 = vector.broadcast %cst_84 : f32 to vector<16x128xf32>
      %236 = arith.addf %235, %234 : vector<16x128xf32>
      %237 = arith.divf %235, %236 : vector<16x128xf32>
      %238 = arith.mulf %230, %237 : vector<16x128xf32>
      %239 = arith.truncf %238 : vector<16x128xf32> to vector<16x128xbf16>
      %c0_85 = arith.constant 0 : index
      %c0_86 = arith.constant 0 : index
      %c0_87 = arith.constant 0 : index
      %240 = vector.load %arg18[%c0_85, %c0_86, %c0_87] : memref<2x128x64xbf16, #tpu.memory_space<vmem>>, vector<1x128x64xbf16>
      %241 = vector.shape_cast %240 : vector<1x128x64xbf16> to vector<128x64xbf16>
      %cst_88 = arith.constant dense<0.000000e+00> : vector<16x64xf32>
      %242 = tpu.matmul %239, %241, %cst_88 {dimension_numbers = #tpu.dot_dimension_numbers<[1], [0], [0], [1], [0, 0, 1, 1], [], []>} : vector<16x128xbf16>, vector<128x64xbf16>, vector<16x64xf32> -> vector<16x64xf32>
      %c0_89 = arith.constant 0 : index
      %c0_90 = arith.constant 0 : index
      %c0_91 = arith.constant 0 : index
      %243 = vector.load %arg19[%c0_89, %c0_90, %c0_91] : memref<2x1x64xf32, #tpu.memory_space<vmem>>, vector<1x1x64xf32>
      %244 = vector.shape_cast %243 : vector<1x1x64xf32> to vector<1x64xf32>
      %245 = vector.broadcast %244 : vector<1x64xf32> to vector<16x64xf32>
      %246 = arith.addf %242, %245 : vector<16x64xf32>
      %247 = arith.addf %196, %246 : vector<16x64xf32>
      %c1 = arith.constant 1 : index
      %c0_92 = arith.constant 0 : index
      %c0_93 = arith.constant 0 : index
      %248 = vector.load %arg8[%c1, %c0_92, %c0_93] : memref<2x1x64xf32, #tpu.memory_space<vmem>>, vector<1x1x64xf32>
      %249 = vector.shape_cast %248 : vector<1x1x64xf32> to vector<1x64xf32>
      %c1_94 = arith.constant 1 : index
      %c0_95 = arith.constant 0 : index
      %c0_96 = arith.constant 0 : index
      %250 = vector.load %arg9[%c1_94, %c0_95, %c0_96] : memref<2x1x64xf32, #tpu.memory_space<vmem>>, vector<1x1x64xf32>
      %251 = vector.shape_cast %250 : vector<1x1x64xf32> to vector<1x64xf32>
      %cst_97 = arith.constant dense<0.000000e+00> : vector<16xf32>
      %252 = vector.multi_reduction <add>, %247, %cst_97 [1] : vector<16x64xf32> to vector<16xf32>
      %253 = vector.shape_cast %252 : vector<16xf32> to vector<16x1xf32>
      %cst_98 = arith.constant 6.400000e+01 : f32
      %254 = vector.broadcast %cst_98 : f32 to vector<16x1xf32>
      %255 = arith.divf %253, %254 : vector<16x1xf32>
      %256 = vector.broadcast %255 : vector<16x1xf32> to vector<16x64xf32>
      %257 = arith.subf %247, %256 : vector<16x64xf32>
      %258 = arith.mulf %257, %257 : vector<16x64xf32>
      %cst_99 = arith.constant dense<0.000000e+00> : vector<16xf32>
      %259 = vector.multi_reduction <add>, %258, %cst_99 [1] : vector<16x64xf32> to vector<16xf32>
      %260 = vector.shape_cast %259 : vector<16xf32> to vector<16x1xf32>
      %cst_100 = arith.constant 6.400000e+01 : f32
      %261 = vector.broadcast %cst_100 : f32 to vector<16x1xf32>
      %262 = arith.divf %260, %261 : vector<16x1xf32>
      %263 = vector.broadcast %255 : vector<16x1xf32> to vector<16x64xf32>
      %264 = arith.subf %247, %263 : vector<16x64xf32>
      %cst_101 = arith.constant 9.99999974E-6 : f32
      %265 = vector.broadcast %cst_101 : f32 to vector<16x1xf32>
      %266 = arith.addf %262, %265 : vector<16x1xf32>
      %267 = math.rsqrt %266 : vector<16x1xf32>
      %268 = vector.broadcast %267 : vector<16x1xf32> to vector<16x64xf32>
      %269 = arith.mulf %264, %268 : vector<16x64xf32>
      %270 = vector.broadcast %249 : vector<1x64xf32> to vector<16x64xf32>
      %271 = arith.mulf %269, %270 : vector<16x64xf32>
      %272 = vector.broadcast %251 : vector<1x64xf32> to vector<16x64xf32>
      %273 = arith.addf %271, %272 : vector<16x64xf32>
      %274 = arith.truncf %273 : vector<16x64xf32> to vector<16x64xbf16>
      %c1_102 = arith.constant 1 : index
      %c0_103 = arith.constant 0 : index
      %c0_104 = arith.constant 0 : index
      %275 = vector.load %arg10[%c1_102, %c0_103, %c0_104] : memref<2x64x192xbf16, #tpu.memory_space<vmem>>, vector<1x64x192xbf16>
      %276 = vector.shape_cast %275 : vector<1x64x192xbf16> to vector<64x192xbf16>
      %cst_105 = arith.constant dense<0.000000e+00> : vector<16x192xf32>
      %277 = tpu.matmul %274, %276, %cst_105 {dimension_numbers = #tpu.dot_dimension_numbers<[1], [0], [0], [1], [0, 0, 1, 1], [], []>} : vector<16x64xbf16>, vector<64x192xbf16>, vector<16x192xf32> -> vector<16x192xf32>
      %c1_106 = arith.constant 1 : index
      %c0_107 = arith.constant 0 : index
      %c0_108 = arith.constant 0 : index
      %278 = vector.load %arg11[%c1_106, %c0_107, %c0_108] : memref<2x1x192xf32, #tpu.memory_space<vmem>>, vector<1x1x192xf32>
      %279 = vector.shape_cast %278 : vector<1x1x192xf32> to vector<1x192xf32>
      %280 = vector.broadcast %279 : vector<1x192xf32> to vector<16x192xf32>
      %281 = arith.addf %277, %280 : vector<16x192xf32>
      %282 = vector.extract_strided_slice %281 {offsets = [0, 0], sizes = [16, 64], strides = [1, 1]} : vector<16x192xf32> to vector<16x64xf32>
      %cst_109 = arith.constant 2.500000e-01 : f32
      %283 = vector.broadcast %cst_109 : f32 to vector<16x64xf32>
      %284 = arith.mulf %282, %283 : vector<16x64xf32>
      %285 = vector.extract_strided_slice %281 {offsets = [0, 64], sizes = [16, 64], strides = [1, 1]} : vector<16x192xf32> to vector<16x64xf32>
      %286 = vector.extract_strided_slice %281 {offsets = [0, 128], sizes = [16, 64], strides = [1, 1]} : vector<16x192xf32> to vector<16x64xf32>
      %287 = vector.extract_strided_slice %284 {offsets = [0, 0], sizes = [8, 16], strides = [1, 1]} : vector<16x64xf32> to vector<8x16xf32>
      %288 = arith.truncf %287 : vector<8x16xf32> to vector<8x16xbf16>
      %289 = vector.extract_strided_slice %285 {offsets = [0, 0], sizes = [8, 16], strides = [1, 1]} : vector<16x64xf32> to vector<8x16xf32>
      %290 = arith.truncf %289 : vector<8x16xf32> to vector<8x16xbf16>
      %cst_110 = arith.constant dense<0.000000e+00> : vector<8x8xf32>
      %291 = tpu.matmul %288, %290, %cst_110 {dimension_numbers = #tpu.dot_dimension_numbers<[1], [1], [0], [0], [0, 0, 1, 0], [], []>} : vector<8x16xbf16>, vector<8x16xbf16>, vector<8x8xf32> -> vector<8x8xf32>
      %292 = vector.extract_strided_slice %284 {offsets = [0, 16], sizes = [8, 16], strides = [1, 1]} : vector<16x64xf32> to vector<8x16xf32>
      %293 = arith.truncf %292 : vector<8x16xf32> to vector<8x16xbf16>
      %294 = vector.extract_strided_slice %285 {offsets = [0, 16], sizes = [8, 16], strides = [1, 1]} : vector<16x64xf32> to vector<8x16xf32>
      %295 = arith.truncf %294 : vector<8x16xf32> to vector<8x16xbf16>
      %cst_111 = arith.constant dense<0.000000e+00> : vector<8x8xf32>
      %296 = tpu.matmul %293, %295, %cst_111 {dimension_numbers = #tpu.dot_dimension_numbers<[1], [1], [0], [0], [0, 0, 1, 0], [], []>} : vector<8x16xbf16>, vector<8x16xbf16>, vector<8x8xf32> -> vector<8x8xf32>
      %297 = vector.extract_strided_slice %284 {offsets = [0, 32], sizes = [8, 16], strides = [1, 1]} : vector<16x64xf32> to vector<8x16xf32>
      %298 = arith.truncf %297 : vector<8x16xf32> to vector<8x16xbf16>
      %299 = vector.extract_strided_slice %285 {offsets = [0, 32], sizes = [8, 16], strides = [1, 1]} : vector<16x64xf32> to vector<8x16xf32>
      %300 = arith.truncf %299 : vector<8x16xf32> to vector<8x16xbf16>
      %cst_112 = arith.constant dense<0.000000e+00> : vector<8x8xf32>
      %301 = tpu.matmul %298, %300, %cst_112 {dimension_numbers = #tpu.dot_dimension_numbers<[1], [1], [0], [0], [0, 0, 1, 0], [], []>} : vector<8x16xbf16>, vector<8x16xbf16>, vector<8x8xf32> -> vector<8x8xf32>
      %302 = vector.extract_strided_slice %284 {offsets = [0, 48], sizes = [8, 16], strides = [1, 1]} : vector<16x64xf32> to vector<8x16xf32>
      %303 = arith.truncf %302 : vector<8x16xf32> to vector<8x16xbf16>
      %304 = vector.extract_strided_slice %285 {offsets = [0, 48], sizes = [8, 16], strides = [1, 1]} : vector<16x64xf32> to vector<8x16xf32>
      %305 = arith.truncf %304 : vector<8x16xf32> to vector<8x16xbf16>
      %cst_113 = arith.constant dense<0.000000e+00> : vector<8x8xf32>
      %306 = tpu.matmul %303, %305, %cst_113 {dimension_numbers = #tpu.dot_dimension_numbers<[1], [1], [0], [0], [0, 0, 1, 0], [], []>} : vector<8x16xbf16>, vector<8x16xbf16>, vector<8x8xf32> -> vector<8x8xf32>
      %307 = vector.extract_strided_slice %284 {offsets = [8, 0], sizes = [8, 16], strides = [1, 1]} : vector<16x64xf32> to vector<8x16xf32>
      %308 = arith.truncf %307 : vector<8x16xf32> to vector<8x16xbf16>
      %309 = vector.extract_strided_slice %285 {offsets = [8, 0], sizes = [8, 16], strides = [1, 1]} : vector<16x64xf32> to vector<8x16xf32>
      %310 = arith.truncf %309 : vector<8x16xf32> to vector<8x16xbf16>
      %cst_114 = arith.constant dense<0.000000e+00> : vector<8x8xf32>
      %311 = tpu.matmul %308, %310, %cst_114 {dimension_numbers = #tpu.dot_dimension_numbers<[1], [1], [0], [0], [0, 0, 1, 0], [], []>} : vector<8x16xbf16>, vector<8x16xbf16>, vector<8x8xf32> -> vector<8x8xf32>
      %312 = vector.extract_strided_slice %284 {offsets = [8, 16], sizes = [8, 16], strides = [1, 1]} : vector<16x64xf32> to vector<8x16xf32>
      %313 = arith.truncf %312 : vector<8x16xf32> to vector<8x16xbf16>
      %314 = vector.extract_strided_slice %285 {offsets = [8, 16], sizes = [8, 16], strides = [1, 1]} : vector<16x64xf32> to vector<8x16xf32>
      %315 = arith.truncf %314 : vector<8x16xf32> to vector<8x16xbf16>
      %cst_115 = arith.constant dense<0.000000e+00> : vector<8x8xf32>
      %316 = tpu.matmul %313, %315, %cst_115 {dimension_numbers = #tpu.dot_dimension_numbers<[1], [1], [0], [0], [0, 0, 1, 0], [], []>} : vector<8x16xbf16>, vector<8x16xbf16>, vector<8x8xf32> -> vector<8x8xf32>
      %317 = vector.extract_strided_slice %284 {offsets = [8, 32], sizes = [8, 16], strides = [1, 1]} : vector<16x64xf32> to vector<8x16xf32>
      %318 = arith.truncf %317 : vector<8x16xf32> to vector<8x16xbf16>
      %319 = vector.extract_strided_slice %285 {offsets = [8, 32], sizes = [8, 16], strides = [1, 1]} : vector<16x64xf32> to vector<8x16xf32>
      %320 = arith.truncf %319 : vector<8x16xf32> to vector<8x16xbf16>
      %cst_116 = arith.constant dense<0.000000e+00> : vector<8x8xf32>
      %321 = tpu.matmul %318, %320, %cst_116 {dimension_numbers = #tpu.dot_dimension_numbers<[1], [1], [0], [0], [0, 0, 1, 0], [], []>} : vector<8x16xbf16>, vector<8x16xbf16>, vector<8x8xf32> -> vector<8x8xf32>
      %322 = vector.extract_strided_slice %284 {offsets = [8, 48], sizes = [8, 16], strides = [1, 1]} : vector<16x64xf32> to vector<8x16xf32>
      %323 = arith.truncf %322 : vector<8x16xf32> to vector<8x16xbf16>
      %324 = vector.extract_strided_slice %285 {offsets = [8, 48], sizes = [8, 16], strides = [1, 1]} : vector<16x64xf32> to vector<8x16xf32>
      %325 = arith.truncf %324 : vector<8x16xf32> to vector<8x16xbf16>
      %cst_117 = arith.constant dense<0.000000e+00> : vector<8x8xf32>
      %326 = tpu.matmul %323, %325, %cst_117 {dimension_numbers = #tpu.dot_dimension_numbers<[1], [1], [0], [0], [0, 0, 1, 0], [], []>} : vector<8x16xbf16>, vector<8x16xbf16>, vector<8x8xf32> -> vector<8x8xf32>
      %327 = tpu.concatenate %291, %296, %301, %306, %311, %316, %321, %326 in 0 : vector<8x8xf32>, vector<8x8xf32>, vector<8x8xf32>, vector<8x8xf32>, vector<8x8xf32>, vector<8x8xf32>, vector<8x8xf32>, vector<8x8xf32> -> vector<64x8xf32>
      %328 = arith.addf %327, %53 : vector<64x8xf32>
      %cst_118 = arith.constant dense<0xFF800000> : vector<64xf32>
      %329 = vector.multi_reduction <maximumf>, %328, %cst_118 [1] : vector<64x8xf32> to vector<64xf32>
      %330 = vector.shape_cast %329 : vector<64xf32> to vector<64x1xf32>
      %331 = vector.broadcast %330 : vector<64x1xf32> to vector<64x8xf32>
      %332 = arith.subf %328, %331 : vector<64x8xf32>
      %333 = math.exp %332 : vector<64x8xf32>
      %cst_119 = arith.constant dense<0.000000e+00> : vector<64xf32>
      %334 = vector.multi_reduction <add>, %333, %cst_119 [1] : vector<64x8xf32> to vector<64xf32>
      %335 = vector.shape_cast %334 : vector<64xf32> to vector<64x1xf32>
      %336 = tpu.reciprocal %335 {approx = true} : vector<64x1xf32> -> vector<64x1xf32>
      %337 = vector.broadcast %336 : vector<64x1xf32> to vector<64x8xf32>
      %338 = arith.mulf %333, %337 : vector<64x8xf32>
      %339 = vector.extract_strided_slice %338 {offsets = [0, 0], sizes = [8, 8], strides = [1, 1]} : vector<64x8xf32> to vector<8x8xf32>
      %340 = arith.truncf %339 : vector<8x8xf32> to vector<8x8xbf16>
      %341 = vector.extract_strided_slice %286 {offsets = [0, 0], sizes = [8, 16], strides = [1, 1]} : vector<16x64xf32> to vector<8x16xf32>
      %342 = arith.truncf %341 : vector<8x16xf32> to vector<8x16xbf16>
      %cst_120 = arith.constant dense<0.000000e+00> : vector<8x16xf32>
      %343 = tpu.matmul %340, %342, %cst_120 {dimension_numbers = #tpu.dot_dimension_numbers<[1], [0], [0], [1], [0, 0, 1, 1], [], []>} : vector<8x8xbf16>, vector<8x16xbf16>, vector<8x16xf32> -> vector<8x16xf32>
      %344 = vector.extract_strided_slice %338 {offsets = [8, 0], sizes = [8, 8], strides = [1, 1]} : vector<64x8xf32> to vector<8x8xf32>
      %345 = arith.truncf %344 : vector<8x8xf32> to vector<8x8xbf16>
      %346 = vector.extract_strided_slice %286 {offsets = [0, 16], sizes = [8, 16], strides = [1, 1]} : vector<16x64xf32> to vector<8x16xf32>
      %347 = arith.truncf %346 : vector<8x16xf32> to vector<8x16xbf16>
      %cst_121 = arith.constant dense<0.000000e+00> : vector<8x16xf32>
      %348 = tpu.matmul %345, %347, %cst_121 {dimension_numbers = #tpu.dot_dimension_numbers<[1], [0], [0], [1], [0, 0, 1, 1], [], []>} : vector<8x8xbf16>, vector<8x16xbf16>, vector<8x16xf32> -> vector<8x16xf32>
      %349 = vector.extract_strided_slice %338 {offsets = [16, 0], sizes = [8, 8], strides = [1, 1]} : vector<64x8xf32> to vector<8x8xf32>
      %350 = arith.truncf %349 : vector<8x8xf32> to vector<8x8xbf16>
      %351 = vector.extract_strided_slice %286 {offsets = [0, 32], sizes = [8, 16], strides = [1, 1]} : vector<16x64xf32> to vector<8x16xf32>
      %352 = arith.truncf %351 : vector<8x16xf32> to vector<8x16xbf16>
      %cst_122 = arith.constant dense<0.000000e+00> : vector<8x16xf32>
      %353 = tpu.matmul %350, %352, %cst_122 {dimension_numbers = #tpu.dot_dimension_numbers<[1], [0], [0], [1], [0, 0, 1, 1], [], []>} : vector<8x8xbf16>, vector<8x16xbf16>, vector<8x16xf32> -> vector<8x16xf32>
      %354 = vector.extract_strided_slice %338 {offsets = [24, 0], sizes = [8, 8], strides = [1, 1]} : vector<64x8xf32> to vector<8x8xf32>
      %355 = arith.truncf %354 : vector<8x8xf32> to vector<8x8xbf16>
      %356 = vector.extract_strided_slice %286 {offsets = [0, 48], sizes = [8, 16], strides = [1, 1]} : vector<16x64xf32> to vector<8x16xf32>
      %357 = arith.truncf %356 : vector<8x16xf32> to vector<8x16xbf16>
      %cst_123 = arith.constant dense<0.000000e+00> : vector<8x16xf32>
      %358 = tpu.matmul %355, %357, %cst_123 {dimension_numbers = #tpu.dot_dimension_numbers<[1], [0], [0], [1], [0, 0, 1, 1], [], []>} : vector<8x8xbf16>, vector<8x16xbf16>, vector<8x16xf32> -> vector<8x16xf32>
      %359 = tpu.concatenate %343, %348, %353, %358 in 1 : vector<8x16xf32>, vector<8x16xf32>, vector<8x16xf32>, vector<8x16xf32> -> vector<8x64xf32>
      %360 = vector.extract_strided_slice %338 {offsets = [32, 0], sizes = [8, 8], strides = [1, 1]} : vector<64x8xf32> to vector<8x8xf32>
      %361 = arith.truncf %360 : vector<8x8xf32> to vector<8x8xbf16>
      %362 = vector.extract_strided_slice %286 {offsets = [8, 0], sizes = [8, 16], strides = [1, 1]} : vector<16x64xf32> to vector<8x16xf32>
      %363 = arith.truncf %362 : vector<8x16xf32> to vector<8x16xbf16>
      %cst_124 = arith.constant dense<0.000000e+00> : vector<8x16xf32>
      %364 = tpu.matmul %361, %363, %cst_124 {dimension_numbers = #tpu.dot_dimension_numbers<[1], [0], [0], [1], [0, 0, 1, 1], [], []>} : vector<8x8xbf16>, vector<8x16xbf16>, vector<8x16xf32> -> vector<8x16xf32>
      %365 = vector.extract_strided_slice %338 {offsets = [40, 0], sizes = [8, 8], strides = [1, 1]} : vector<64x8xf32> to vector<8x8xf32>
      %366 = arith.truncf %365 : vector<8x8xf32> to vector<8x8xbf16>
      %367 = vector.extract_strided_slice %286 {offsets = [8, 16], sizes = [8, 16], strides = [1, 1]} : vector<16x64xf32> to vector<8x16xf32>
      %368 = arith.truncf %367 : vector<8x16xf32> to vector<8x16xbf16>
      %cst_125 = arith.constant dense<0.000000e+00> : vector<8x16xf32>
      %369 = tpu.matmul %366, %368, %cst_125 {dimension_numbers = #tpu.dot_dimension_numbers<[1], [0], [0], [1], [0, 0, 1, 1], [], []>} : vector<8x8xbf16>, vector<8x16xbf16>, vector<8x16xf32> -> vector<8x16xf32>
      %370 = vector.extract_strided_slice %338 {offsets = [48, 0], sizes = [8, 8], strides = [1, 1]} : vector<64x8xf32> to vector<8x8xf32>
      %371 = arith.truncf %370 : vector<8x8xf32> to vector<8x8xbf16>
      %372 = vector.extract_strided_slice %286 {offsets = [8, 32], sizes = [8, 16], strides = [1, 1]} : vector<16x64xf32> to vector<8x16xf32>
      %373 = arith.truncf %372 : vector<8x16xf32> to vector<8x16xbf16>
      %cst_126 = arith.constant dense<0.000000e+00> : vector<8x16xf32>
      %374 = tpu.matmul %371, %373, %cst_126 {dimension_numbers = #tpu.dot_dimension_numbers<[1], [0], [0], [1], [0, 0, 1, 1], [], []>} : vector<8x8xbf16>, vector<8x16xbf16>, vector<8x16xf32> -> vector<8x16xf32>
      %375 = vector.extract_strided_slice %338 {offsets = [56, 0], sizes = [8, 8], strides = [1, 1]} : vector<64x8xf32> to vector<8x8xf32>
      %376 = arith.truncf %375 : vector<8x8xf32> to vector<8x8xbf16>
      %377 = vector.extract_strided_slice %286 {offsets = [8, 48], sizes = [8, 16], strides = [1, 1]} : vector<16x64xf32> to vector<8x16xf32>
      %378 = arith.truncf %377 : vector<8x16xf32> to vector<8x16xbf16>
      %cst_127 = arith.constant dense<0.000000e+00> : vector<8x16xf32>
      %379 = tpu.matmul %376, %378, %cst_127 {dimension_numbers = #tpu.dot_dimension_numbers<[1], [0], [0], [1], [0, 0, 1, 1], [], []>} : vector<8x8xbf16>, vector<8x16xbf16>, vector<8x16xf32> -> vector<8x16xf32>
      %380 = tpu.concatenate %364, %369, %374, %379 in 1 : vector<8x16xf32>, vector<8x16xf32>, vector<8x16xf32>, vector<8x16xf32> -> vector<8x64xf32>
      %381 = tpu.concatenate %359, %380 in 0 : vector<8x64xf32>, vector<8x64xf32> -> vector<16x64xf32>
      %382 = arith.truncf %381 : vector<16x64xf32> to vector<16x64xbf16>
      %c1_128 = arith.constant 1 : index
      %c0_129 = arith.constant 0 : index
      %c0_130 = arith.constant 0 : index
      %383 = vector.load %arg12[%c1_128, %c0_129, %c0_130] : memref<2x64x64xbf16, #tpu.memory_space<vmem>>, vector<1x64x64xbf16>
      %384 = vector.shape_cast %383 : vector<1x64x64xbf16> to vector<64x64xbf16>
      %cst_131 = arith.constant dense<0.000000e+00> : vector<16x64xf32>
      %385 = tpu.matmul %382, %384, %cst_131 {dimension_numbers = #tpu.dot_dimension_numbers<[1], [0], [0], [1], [0, 0, 1, 1], [], []>} : vector<16x64xbf16>, vector<64x64xbf16>, vector<16x64xf32> -> vector<16x64xf32>
      %c1_132 = arith.constant 1 : index
      %c0_133 = arith.constant 0 : index
      %c0_134 = arith.constant 0 : index
      %386 = vector.load %arg13[%c1_132, %c0_133, %c0_134] : memref<2x1x64xf32, #tpu.memory_space<vmem>>, vector<1x1x64xf32>
      %387 = vector.shape_cast %386 : vector<1x1x64xf32> to vector<1x64xf32>
      %388 = vector.broadcast %387 : vector<1x64xf32> to vector<16x64xf32>
      %389 = arith.addf %385, %388 : vector<16x64xf32>
      %390 = arith.addf %247, %389 : vector<16x64xf32>
      %c1_135 = arith.constant 1 : index
      %c0_136 = arith.constant 0 : index
      %c0_137 = arith.constant 0 : index
      %391 = vector.load %arg14[%c1_135, %c0_136, %c0_137] : memref<2x1x64xf32, #tpu.memory_space<vmem>>, vector<1x1x64xf32>
      %392 = vector.shape_cast %391 : vector<1x1x64xf32> to vector<1x64xf32>
      %c1_138 = arith.constant 1 : index
      %c0_139 = arith.constant 0 : index
      %c0_140 = arith.constant 0 : index
      %393 = vector.load %arg15[%c1_138, %c0_139, %c0_140] : memref<2x1x64xf32, #tpu.memory_space<vmem>>, vector<1x1x64xf32>
      %394 = vector.shape_cast %393 : vector<1x1x64xf32> to vector<1x64xf32>
      %cst_141 = arith.constant dense<0.000000e+00> : vector<16xf32>
      %395 = vector.multi_reduction <add>, %390, %cst_141 [1] : vector<16x64xf32> to vector<16xf32>
      %396 = vector.shape_cast %395 : vector<16xf32> to vector<16x1xf32>
      %cst_142 = arith.constant 6.400000e+01 : f32
      %397 = vector.broadcast %cst_142 : f32 to vector<16x1xf32>
      %398 = arith.divf %396, %397 : vector<16x1xf32>
      %399 = vector.broadcast %398 : vector<16x1xf32> to vector<16x64xf32>
      %400 = arith.subf %390, %399 : vector<16x64xf32>
      %401 = arith.mulf %400, %400 : vector<16x64xf32>
      %cst_143 = arith.constant dense<0.000000e+00> : vector<16xf32>
      %402 = vector.multi_reduction <add>, %401, %cst_143 [1] : vector<16x64xf32> to vector<16xf32>
      %403 = vector.shape_cast %402 : vector<16xf32> to vector<16x1xf32>
      %cst_144 = arith.constant 6.400000e+01 : f32
      %404 = vector.broadcast %cst_144 : f32 to vector<16x1xf32>
      %405 = arith.divf %403, %404 : vector<16x1xf32>
      %406 = vector.broadcast %398 : vector<16x1xf32> to vector<16x64xf32>
      %407 = arith.subf %390, %406 : vector<16x64xf32>
      %cst_145 = arith.constant 9.99999974E-6 : f32
      %408 = vector.broadcast %cst_145 : f32 to vector<16x1xf32>
      %409 = arith.addf %405, %408 : vector<16x1xf32>
      %410 = math.rsqrt %409 : vector<16x1xf32>
      %411 = vector.broadcast %410 : vector<16x1xf32> to vector<16x64xf32>
      %412 = arith.mulf %407, %411 : vector<16x64xf32>
      %413 = vector.broadcast %392 : vector<1x64xf32> to vector<16x64xf32>
      %414 = arith.mulf %412, %413 : vector<16x64xf32>
      %415 = vector.broadcast %394 : vector<1x64xf32> to vector<16x64xf32>
      %416 = arith.addf %414, %415 : vector<16x64xf32>
      %417 = arith.truncf %416 : vector<16x64xf32> to vector<16x64xbf16>
      %c1_146 = arith.constant 1 : index
      %c0_147 = arith.constant 0 : index
      %c0_148 = arith.constant 0 : index
      %418 = vector.load %arg16[%c1_146, %c0_147, %c0_148] : memref<2x64x128xbf16, #tpu.memory_space<vmem>>, vector<1x64x128xbf16>
      %419 = vector.shape_cast %418 : vector<1x64x128xbf16> to vector<64x128xbf16>
      %cst_149 = arith.constant dense<0.000000e+00> : vector<16x128xf32>
      %420 = tpu.matmul %417, %419, %cst_149 {dimension_numbers = #tpu.dot_dimension_numbers<[1], [0], [0], [1], [0, 0, 1, 1], [], []>} : vector<16x64xbf16>, vector<64x128xbf16>, vector<16x128xf32> -> vector<16x128xf32>
      %c1_150 = arith.constant 1 : index
      %c0_151 = arith.constant 0 : index
      %c0_152 = arith.constant 0 : index
      %421 = vector.load %arg17[%c1_150, %c0_151, %c0_152] : memref<2x1x128xf32, #tpu.memory_space<vmem>>, vector<1x1x128xf32>
      %422 = vector.shape_cast %421 : vector<1x1x128xf32> to vector<1x128xf32>
      %423 = vector.broadcast %422 : vector<1x128xf32> to vector<16x128xf32>
      %424 = arith.addf %420, %423 : vector<16x128xf32>
      %cst_153 = arith.constant 1.702000e+00 : f32
      %425 = vector.broadcast %cst_153 : f32 to vector<16x128xf32>
      %426 = arith.mulf %425, %424 : vector<16x128xf32>
      %427 = arith.negf %426 : vector<16x128xf32>
      %428 = math.exp %427 : vector<16x128xf32>
      %cst_154 = arith.constant 1.000000e+00 : f32
      %429 = vector.broadcast %cst_154 : f32 to vector<16x128xf32>
      %430 = arith.addf %429, %428 : vector<16x128xf32>
      %431 = arith.divf %429, %430 : vector<16x128xf32>
      %432 = arith.mulf %424, %431 : vector<16x128xf32>
      %433 = arith.truncf %432 : vector<16x128xf32> to vector<16x128xbf16>
      %c1_155 = arith.constant 1 : index
      %c0_156 = arith.constant 0 : index
      %c0_157 = arith.constant 0 : index
      %434 = vector.load %arg18[%c1_155, %c0_156, %c0_157] : memref<2x128x64xbf16, #tpu.memory_space<vmem>>, vector<1x128x64xbf16>
      %435 = vector.shape_cast %434 : vector<1x128x64xbf16> to vector<128x64xbf16>
      %cst_158 = arith.constant dense<0.000000e+00> : vector<16x64xf32>
      %436 = tpu.matmul %433, %435, %cst_158 {dimension_numbers = #tpu.dot_dimension_numbers<[1], [0], [0], [1], [0, 0, 1, 1], [], []>} : vector<16x128xbf16>, vector<128x64xbf16>, vector<16x64xf32> -> vector<16x64xf32>
      %c1_159 = arith.constant 1 : index
      %c0_160 = arith.constant 0 : index
      %c0_161 = arith.constant 0 : index
      %437 = vector.load %arg19[%c1_159, %c0_160, %c0_161] : memref<2x1x64xf32, #tpu.memory_space<vmem>>, vector<1x1x64xf32>
      %438 = vector.shape_cast %437 : vector<1x1x64xf32> to vector<1x64xf32>
      %439 = vector.broadcast %438 : vector<1x64xf32> to vector<16x64xf32>
      %440 = arith.addf %436, %439 : vector<16x64xf32>
      %441 = arith.addf %390, %440 : vector<16x64xf32>
      %442 = vector.extract_strided_slice %441 {offsets = [0, 0], sizes = [1, 64], strides = [1, 1]} : vector<16x64xf32> to vector<1x64xf32>
      %443 = vector.extract_strided_slice %441 {offsets = [8, 0], sizes = [1, 64], strides = [1, 1]} : vector<16x64xf32> to vector<1x64xf32>
      %444 = tpu.concatenate %442, %443 in 0 : vector<1x64xf32>, vector<1x64xf32> -> vector<2x64xf32>
      %c0_162 = arith.constant 0 : index
      %c0_163 = arith.constant 0 : index
      %445 = vector.load %arg20[%c0_162, %c0_163] : memref<1x64xf32, #tpu.memory_space<vmem>>, vector<1x64xf32>
      %c0_164 = arith.constant 0 : index
      %c0_165 = arith.constant 0 : index
      %446 = vector.load %arg21[%c0_164, %c0_165] : memref<1x64xf32, #tpu.memory_space<vmem>>, vector<1x64xf32>
      %cst_166 = arith.constant dense<0.000000e+00> : vector<2xf32>
      %447 = vector.multi_reduction <add>, %444, %cst_166 [1] : vector<2x64xf32> to vector<2xf32>
      %448 = vector.shape_cast %447 : vector<2xf32> to vector<2x1xf32>
      %cst_167 = arith.constant 6.400000e+01 : f32
      %449 = vector.broadcast %cst_167 : f32 to vector<2x1xf32>
      %450 = arith.divf %448, %449 : vector<2x1xf32>
      %451 = vector.broadcast %450 : vector<2x1xf32> to vector<2x64xf32>
      %452 = arith.subf %444, %451 : vector<2x64xf32>
      %453 = arith.mulf %452, %452 : vector<2x64xf32>
      %cst_168 = arith.constant dense<0.000000e+00> : vector<2xf32>
      %454 = vector.multi_reduction <add>, %453, %cst_168 [1] : vector<2x64xf32> to vector<2xf32>
      %455 = vector.shape_cast %454 : vector<2xf32> to vector<2x1xf32>
      %cst_169 = arith.constant 6.400000e+01 : f32
      %456 = vector.broadcast %cst_169 : f32 to vector<2x1xf32>
      %457 = arith.divf %455, %456 : vector<2x1xf32>
      %458 = vector.broadcast %450 : vector<2x1xf32> to vector<2x64xf32>
      %459 = arith.subf %444, %458 : vector<2x64xf32>
      %cst_170 = arith.constant 9.99999974E-6 : f32
      %460 = vector.broadcast %cst_170 : f32 to vector<2x1xf32>
      %461 = arith.addf %457, %460 : vector<2x1xf32>
      %462 = math.rsqrt %461 : vector<2x1xf32>
      %463 = vector.broadcast %462 : vector<2x1xf32> to vector<2x64xf32>
      %464 = arith.mulf %459, %463 : vector<2x64xf32>
      %465 = vector.broadcast %445 : vector<1x64xf32> to vector<2x64xf32>
      %466 = arith.mulf %464, %465 : vector<2x64xf32>
      %467 = vector.broadcast %446 : vector<1x64xf32> to vector<2x64xf32>
      %468 = arith.addf %466, %467 : vector<2x64xf32>
      %469 = arith.truncf %468 : vector<2x64xf32> to vector<2x64xbf16>
      %c0_171 = arith.constant 0 : index
      %c0_172 = arith.constant 0 : index
      %470 = vector.load %arg22[%c0_171, %c0_172] : memref<64x128xbf16, #tpu.memory_space<vmem>>, vector<64x128xbf16>
      %cst_173 = arith.constant dense<0.000000e+00> : vector<2x128xf32>
      %471 = tpu.matmul %469, %470, %cst_173 {dimension_numbers = #tpu.dot_dimension_numbers<[1], [0], [0], [1], [0, 0, 1, 1], [], []>} : vector<2x64xbf16>, vector<64x128xbf16>, vector<2x128xf32> -> vector<2x128xf32>
      %472 = arith.mulf %471, %471 : vector<2x128xf32>
      %cst_174 = arith.constant dense<0.000000e+00> : vector<2xf32>
      %473 = vector.multi_reduction <add>, %472, %cst_174 [1] : vector<2x128xf32> to vector<2xf32>
      %474 = vector.shape_cast %473 : vector<2xf32> to vector<2x1xf32>
      %475 = math.rsqrt %474 : vector<2x1xf32>
      %476 = vector.broadcast %475 : vector<2x1xf32> to vector<2x128xf32>
      %477 = arith.mulf %471, %476 : vector<2x128xf32>
      %c0_175 = arith.constant 0 : index
      %c0_176 = arith.constant 0 : index
      %c0_177 = arith.constant 0 : index
      %478 = vector.load %arg40[%c0_175, %c0_176, %c0_177] : memref<1x2x128xf32, #tpu.memory_space<vmem>>, vector<1x2x128xf32>
      %479 = vector.shape_cast %478 : vector<1x2x128xf32> to vector<2x128xf32>
      %480 = vector.shape_cast %477 : vector<2x128xf32> to vector<1x2x128xf32>
      tpu.vector_store %arg40[%c0_175, %c0_176, %c0_177], %480 {strides = array<i32>} : memref<1x2x128xf32, #tpu.memory_space<vmem>>, vector<1x2x128xf32>,
    } else {
    }
    %c1_i32 = arith.constant 1 : i32
    %3 = arith.cmpi eq, %arg0, %c1_i32 : i32
    %4 = arith.extui %3 : i1 to i32
    %c0_i32_1 = arith.constant 0 : i32
    %5 = arith.cmpi ne, %4, %c0_i32_1 : i32
    scf.if %5 {
      %c0 = arith.constant 0 : index
      %c0_2 = arith.constant 0 : index
      %6 = vector.load %arg1[%c0, %c0_2] : memref<16x1xi32, #tpu.memory_space<vmem>>, vector<16x1xi32>
      %7 = tpu.iota {dimensions = array<i32: 1>} : vector<16x64xi32>
      %8 = vector.broadcast %6 : vector<16x1xi32> to vector<16x64xi32>
      %9 = arith.cmpi eq, %7, %8 : vector<16x64xi32>
      %10 = arith.extui %9 : vector<16x64xi1> to vector<16x64xi32>
      %11 = arith.sitofp %10 : vector<16x64xi32> to vector<16x64xf32>
      %c0_3 = arith.constant 0 : index
      %c0_4 = arith.constant 0 : index
      %12 = vector.load %arg23[%c0_3, %c0_4] : memref<64x64xf32, #tpu.memory_space<vmem>>, vector<64x64xf32>
      %cst = arith.constant dense<0.000000e+00> : vector<16x64xf32>
      %13 = tpu.matmul %11, %12, %cst {dimension_numbers = #tpu.dot_dimension_numbers<[1], [0], [0], [1], [0, 0, 1, 1], [], []>} : vector<16x64xf32>, vector<64x64xf32>, vector<16x64xf32> -> vector<16x64xf32>
      %c0_5 = arith.constant 0 : index
      %c0_6 = arith.constant 0 : index
      %14 = vector.load %arg24[%c0_5, %c0_6] : memref<8x64xf32, #tpu.memory_space<vmem>>, vector<8x64xf32>
      %15 = tpu.concatenate %14, %14 in 0 : vector<8x64xf32>, vector<8x64xf32> -> vector<16x64xf32>
      %16 = arith.addf %13, %15 : vector<16x64xf32>
      %17 = tpu.iota {dimensions = array<i32: 0>} : vector<8x8xi32>
      %18 = tpu.iota {dimensions = array<i32: 1>} : vector<8x8xi32>
      %19 = arith.cmpi sge, %17, %18 : vector<8x8xi32>
      %cst_7 = arith.constant 0.000000e+00 : f32
      %cst_8 = arith.constant -1.000000e+09 : f32
      %20 = vector.broadcast %cst_7 : f32 to vector<8x8xf32>
      %21 = vector.broadcast %cst_8 : f32 to vector<8x8xf32>
      %22 = arith.select %19, %20, %21 : vector<8x8xi1>, vector<8x8xf32>
      %23 = tpu.concatenate %22, %22, %22, %22, %22, %22, %22, %22 in 0 : vector<8x8xf32>, vector<8x8xf32>, vector<8x8xf32>, vector<8x8xf32>, vector<8x8xf32>, vector<8x8xf32>, vector<8x8xf32>, vector<8x8xf32> -> vector<64x8xf32>
      %c0_9 = arith.constant 0 : index
      %c0_10 = arith.constant 0 : index
      %c0_11 = arith.constant 0 : index
      %24 = vector.load %arg25[%c0_9, %c0_10, %c0_11] : memref<2x1x64xf32, #tpu.memory_space<vmem>>, vector<1x1x64xf32>
      %25 = vector.shape_cast %24 : vector<1x1x64xf32> to vector<1x64xf32>
      %c0_12 = arith.constant 0 : index
      %c0_13 = arith.constant 0 : index
      %c0_14 = arith.constant 0 : index
      %26 = vector.load %arg26[%c0_12, %c0_13, %c0_14] : memref<2x1x64xf32, #tpu.memory_space<vmem>>, vector<1x1x64xf32>
      %27 = vector.shape_cast %26 : vector<1x1x64xf32> to vector<1x64xf32>
      %cst_15 = arith.constant dense<0.000000e+00> : vector<16xf32>
      %28 = vector.multi_reduction <add>, %16, %cst_15 [1] : vector<16x64xf32> to vector<16xf32>
      %29 = vector.shape_cast %28 : vector<16xf32> to vector<16x1xf32>
      %cst_16 = arith.constant 6.400000e+01 : f32
      %30 = vector.broadcast %cst_16 : f32 to vector<16x1xf32>
      %31 = arith.divf %29, %30 : vector<16x1xf32>
      %32 = vector.broadcast %31 : vector<16x1xf32> to vector<16x64xf32>
      %33 = arith.subf %16, %32 : vector<16x64xf32>
      %34 = arith.mulf %33, %33 : vector<16x64xf32>
      %cst_17 = arith.constant dense<0.000000e+00> : vector<16xf32>
      %35 = vector.multi_reduction <add>, %34, %cst_17 [1] : vector<16x64xf32> to vector<16xf32>
      %36 = vector.shape_cast %35 : vector<16xf32> to vector<16x1xf32>
      %cst_18 = arith.constant 6.400000e+01 : f32
      %37 = vector.broadcast %cst_18 : f32 to vector<16x1xf32>
      %38 = arith.divf %36, %37 : vector<16x1xf32>
      %39 = vector.broadcast %31 : vector<16x1xf32> to vector<16x64xf32>
      %40 = arith.subf %16, %39 : vector<16x64xf32>
      %cst_19 = arith.constant 9.99999974E-6 : f32
      %41 = vector.broadcast %cst_19 : f32 to vector<16x1xf32>
      %42 = arith.addf %38, %41 : vector<16x1xf32>
      %43 = math.rsqrt %42 : vector<16x1xf32>
      %44 = vector.broadcast %43 : vector<16x1xf32> to vector<16x64xf32>
      %45 = arith.mulf %40, %44 : vector<16x64xf32>
      %46 = vector.broadcast %25 : vector<1x64xf32> to vector<16x64xf32>
      %47 = arith.mulf %45, %46 : vector<16x64xf32>
      %48 = vector.broadcast %27 : vector<1x64xf32> to vector<16x64xf32>
      %49 = arith.addf %47, %48 : vector<16x64xf32>
      %50 = arith.truncf %49 : vector<16x64xf32> to vector<16x64xbf16>
      %c0_20 = arith.constant 0 : index
      %c0_21 = arith.constant 0 : index
      %c0_22 = arith.constant 0 : index
      %51 = vector.load %arg27[%c0_20, %c0_21, %c0_22] : memref<2x64x192xbf16, #tpu.memory_space<vmem>>, vector<1x64x192xbf16>
      %52 = vector.shape_cast %51 : vector<1x64x192xbf16> to vector<64x192xbf16>
      %cst_23 = arith.constant dense<0.000000e+00> : vector<16x192xf32>
      %53 = tpu.matmul %50, %52, %cst_23 {dimension_numbers = #tpu.dot_dimension_numbers<[1], [0], [0], [1], [0, 0, 1, 1], [], []>} : vector<16x64xbf16>, vector<64x192xbf16>, vector<16x192xf32> -> vector<16x192xf32>
      %c0_24 = arith.constant 0 : index
      %c0_25 = arith.constant 0 : index
      %c0_26 = arith.constant 0 : index
      %54 = vector.load %arg28[%c0_24, %c0_25, %c0_26] : memref<2x1x192xf32, #tpu.memory_space<vmem>>, vector<1x1x192xf32>
      %55 = vector.shape_cast %54 : vector<1x1x192xf32> to vector<1x192xf32>
      %56 = vector.broadcast %55 : vector<1x192xf32> to vector<16x192xf32>
      %57 = arith.addf %53, %56 : vector<16x192xf32>
      %58 = vector.extract_strided_slice %57 {offsets = [0, 0], sizes = [16, 64], strides = [1, 1]} : vector<16x192xf32> to vector<16x64xf32>
      %cst_27 = arith.constant 2.500000e-01 : f32
      %59 = vector.broadcast %cst_27 : f32 to vector<16x64xf32>
      %60 = arith.mulf %58, %59 : vector<16x64xf32>
      %61 = vector.extract_strided_slice %57 {offsets = [0, 64], sizes = [16, 64], strides = [1, 1]} : vector<16x192xf32> to vector<16x64xf32>
      %62 = vector.extract_strided_slice %57 {offsets = [0, 128], sizes = [16, 64], strides = [1, 1]} : vector<16x192xf32> to vector<16x64xf32>
      %63 = vector.extract_strided_slice %60 {offsets = [0, 0], sizes = [8, 16], strides = [1, 1]} : vector<16x64xf32> to vector<8x16xf32>
      %64 = arith.truncf %63 : vector<8x16xf32> to vector<8x16xbf16>
      %65 = vector.extract_strided_slice %61 {offsets = [0, 0], sizes = [8, 16], strides = [1, 1]} : vector<16x64xf32> to vector<8x16xf32>
      %66 = arith.truncf %65 : vector<8x16xf32> to vector<8x16xbf16>
      %cst_28 = arith.constant dense<0.000000e+00> : vector<8x8xf32>
      %67 = tpu.matmul %64, %66, %cst_28 {dimension_numbers = #tpu.dot_dimension_numbers<[1], [1], [0], [0], [0, 0, 1, 0], [], []>} : vector<8x16xbf16>, vector<8x16xbf16>, vector<8x8xf32> -> vector<8x8xf32>
      %68 = vector.extract_strided_slice %60 {offsets = [0, 16], sizes = [8, 16], strides = [1, 1]} : vector<16x64xf32> to vector<8x16xf32>
      %69 = arith.truncf %68 : vector<8x16xf32> to vector<8x16xbf16>
      %70 = vector.extract_strided_slice %61 {offsets = [0, 16], sizes = [8, 16], strides = [1, 1]} : vector<16x64xf32> to vector<8x16xf32>
      %71 = arith.truncf %70 : vector<8x16xf32> to vector<8x16xbf16>
      %cst_29 = arith.constant dense<0.000000e+00> : vector<8x8xf32>
      %72 = tpu.matmul %69, %71, %cst_29 {dimension_numbers = #tpu.dot_dimension_numbers<[1], [1], [0], [0], [0, 0, 1, 0], [], []>} : vector<8x16xbf16>, vector<8x16xbf16>, vector<8x8xf32> -> vector<8x8xf32>
      %73 = vector.extract_strided_slice %60 {offsets = [0, 32], sizes = [8, 16], strides = [1, 1]} : vector<16x64xf32> to vector<8x16xf32>
      %74 = arith.truncf %73 : vector<8x16xf32> to vector<8x16xbf16>
      %75 = vector.extract_strided_slice %61 {offsets = [0, 32], sizes = [8, 16], strides = [1, 1]} : vector<16x64xf32> to vector<8x16xf32>
      %76 = arith.truncf %75 : vector<8x16xf32> to vector<8x16xbf16>
      %cst_30 = arith.constant dense<0.000000e+00> : vector<8x8xf32>
      %77 = tpu.matmul %74, %76, %cst_30 {dimension_numbers = #tpu.dot_dimension_numbers<[1], [1], [0], [0], [0, 0, 1, 0], [], []>} : vector<8x16xbf16>, vector<8x16xbf16>, vector<8x8xf32> -> vector<8x8xf32>
      %78 = vector.extract_strided_slice %60 {offsets = [0, 48], sizes = [8, 16], strides = [1, 1]} : vector<16x64xf32> to vector<8x16xf32>
      %79 = arith.truncf %78 : vector<8x16xf32> to vector<8x16xbf16>
      %80 = vector.extract_strided_slice %61 {offsets = [0, 48], sizes = [8, 16], strides = [1, 1]} : vector<16x64xf32> to vector<8x16xf32>
      %81 = arith.truncf %80 : vector<8x16xf32> to vector<8x16xbf16>
      %cst_31 = arith.constant dense<0.000000e+00> : vector<8x8xf32>
      %82 = tpu.matmul %79, %81, %cst_31 {dimension_numbers = #tpu.dot_dimension_numbers<[1], [1], [0], [0], [0, 0, 1, 0], [], []>} : vector<8x16xbf16>, vector<8x16xbf16>, vector<8x8xf32> -> vector<8x8xf32>
      %83 = vector.extract_strided_slice %60 {offsets = [8, 0], sizes = [8, 16], strides = [1, 1]} : vector<16x64xf32> to vector<8x16xf32>
      %84 = arith.truncf %83 : vector<8x16xf32> to vector<8x16xbf16>
      %85 = vector.extract_strided_slice %61 {offsets = [8, 0], sizes = [8, 16], strides = [1, 1]} : vector<16x64xf32> to vector<8x16xf32>
      %86 = arith.truncf %85 : vector<8x16xf32> to vector<8x16xbf16>
      %cst_32 = arith.constant dense<0.000000e+00> : vector<8x8xf32>
      %87 = tpu.matmul %84, %86, %cst_32 {dimension_numbers = #tpu.dot_dimension_numbers<[1], [1], [0], [0], [0, 0, 1, 0], [], []>} : vector<8x16xbf16>, vector<8x16xbf16>, vector<8x8xf32> -> vector<8x8xf32>
      %88 = vector.extract_strided_slice %60 {offsets = [8, 16], sizes = [8, 16], strides = [1, 1]} : vector<16x64xf32> to vector<8x16xf32>
      %89 = arith.truncf %88 : vector<8x16xf32> to vector<8x16xbf16>
      %90 = vector.extract_strided_slice %61 {offsets = [8, 16], sizes = [8, 16], strides = [1, 1]} : vector<16x64xf32> to vector<8x16xf32>
      %91 = arith.truncf %90 : vector<8x16xf32> to vector<8x16xbf16>
      %cst_33 = arith.constant dense<0.000000e+00> : vector<8x8xf32>
      %92 = tpu.matmul %89, %91, %cst_33 {dimension_numbers = #tpu.dot_dimension_numbers<[1], [1], [0], [0], [0, 0, 1, 0], [], []>} : vector<8x16xbf16>, vector<8x16xbf16>, vector<8x8xf32> -> vector<8x8xf32>
      %93 = vector.extract_strided_slice %60 {offsets = [8, 32], sizes = [8, 16], strides = [1, 1]} : vector<16x64xf32> to vector<8x16xf32>
      %94 = arith.truncf %93 : vector<8x16xf32> to vector<8x16xbf16>
      %95 = vector.extract_strided_slice %61 {offsets = [8, 32], sizes = [8, 16], strides = [1, 1]} : vector<16x64xf32> to vector<8x16xf32>
      %96 = arith.truncf %95 : vector<8x16xf32> to vector<8x16xbf16>
      %cst_34 = arith.constant dense<0.000000e+00> : vector<8x8xf32>
      %97 = tpu.matmul %94, %96, %cst_34 {dimension_numbers = #tpu.dot_dimension_numbers<[1], [1], [0], [0], [0, 0, 1, 0], [], []>} : vector<8x16xbf16>, vector<8x16xbf16>, vector<8x8xf32> -> vector<8x8xf32>
      %98 = vector.extract_strided_slice %60 {offsets = [8, 48], sizes = [8, 16], strides = [1, 1]} : vector<16x64xf32> to vector<8x16xf32>
      %99 = arith.truncf %98 : vector<8x16xf32> to vector<8x16xbf16>
      %100 = vector.extract_strided_slice %61 {offsets = [8, 48], sizes = [8, 16], strides = [1, 1]} : vector<16x64xf32> to vector<8x16xf32>
      %101 = arith.truncf %100 : vector<8x16xf32> to vector<8x16xbf16>
      %cst_35 = arith.constant dense<0.000000e+00> : vector<8x8xf32>
      %102 = tpu.matmul %99, %101, %cst_35 {dimension_numbers = #tpu.dot_dimension_numbers<[1], [1], [0], [0], [0, 0, 1, 0], [], []>} : vector<8x16xbf16>, vector<8x16xbf16>, vector<8x8xf32> -> vector<8x8xf32>
      %103 = tpu.concatenate %67, %72, %77, %82, %87, %92, %97, %102 in 0 : vector<8x8xf32>, vector<8x8xf32>, vector<8x8xf32>, vector<8x8xf32>, vector<8x8xf32>, vector<8x8xf32>, vector<8x8xf32>, vector<8x8xf32> -> vector<64x8xf32>
      %104 = arith.addf %103, %23 : vector<64x8xf32>
      %cst_36 = arith.constant dense<0xFF800000> : vector<64xf32>
      %105 = vector.multi_reduction <maximumf>, %104, %cst_36 [1] : vector<64x8xf32> to vector<64xf32>
      %106 = vector.shape_cast %105 : vector<64xf32> to vector<64x1xf32>
      %107 = vector.broadcast %106 : vector<64x1xf32> to vector<64x8xf32>
      %108 = arith.subf %104, %107 : vector<64x8xf32>
      %109 = math.exp %108 : vector<64x8xf32>
      %cst_37 = arith.constant dense<0.000000e+00> : vector<64xf32>
      %110 = vector.multi_reduction <add>, %109, %cst_37 [1] : vector<64x8xf32> to vector<64xf32>
      %111 = vector.shape_cast %110 : vector<64xf32> to vector<64x1xf32>
      %112 = tpu.reciprocal %111 {approx = true} : vector<64x1xf32> -> vector<64x1xf32>
      %113 = vector.broadcast %112 : vector<64x1xf32> to vector<64x8xf32>
      %114 = arith.mulf %109, %113 : vector<64x8xf32>
      %115 = vector.extract_strided_slice %114 {offsets = [0, 0], sizes = [8, 8], strides = [1, 1]} : vector<64x8xf32> to vector<8x8xf32>
      %116 = arith.truncf %115 : vector<8x8xf32> to vector<8x8xbf16>
      %117 = vector.extract_strided_slice %62 {offsets = [0, 0], sizes = [8, 16], strides = [1, 1]} : vector<16x64xf32> to vector<8x16xf32>
      %118 = arith.truncf %117 : vector<8x16xf32> to vector<8x16xbf16>
      %cst_38 = arith.constant dense<0.000000e+00> : vector<8x16xf32>
      %119 = tpu.matmul %116, %118, %cst_38 {dimension_numbers = #tpu.dot_dimension_numbers<[1], [0], [0], [1], [0, 0, 1, 1], [], []>} : vector<8x8xbf16>, vector<8x16xbf16>, vector<8x16xf32> -> vector<8x16xf32>
      %120 = vector.extract_strided_slice %114 {offsets = [8, 0], sizes = [8, 8], strides = [1, 1]} : vector<64x8xf32> to vector<8x8xf32>
      %121 = arith.truncf %120 : vector<8x8xf32> to vector<8x8xbf16>
      %122 = vector.extract_strided_slice %62 {offsets = [0, 16], sizes = [8, 16], strides = [1, 1]} : vector<16x64xf32> to vector<8x16xf32>
      %123 = arith.truncf %122 : vector<8x16xf32> to vector<8x16xbf16>
      %cst_39 = arith.constant dense<0.000000e+00> : vector<8x16xf32>
      %124 = tpu.matmul %121, %123, %cst_39 {dimension_numbers = #tpu.dot_dimension_numbers<[1], [0], [0], [1], [0, 0, 1, 1], [], []>} : vector<8x8xbf16>, vector<8x16xbf16>, vector<8x16xf32> -> vector<8x16xf32>
      %125 = vector.extract_strided_slice %114 {offsets = [16, 0], sizes = [8, 8], strides = [1, 1]} : vector<64x8xf32> to vector<8x8xf32>
      %126 = arith.truncf %125 : vector<8x8xf32> to vector<8x8xbf16>
      %127 = vector.extract_strided_slice %62 {offsets = [0, 32], sizes = [8, 16], strides = [1, 1]} : vector<16x64xf32> to vector<8x16xf32>
      %128 = arith.truncf %127 : vector<8x16xf32> to vector<8x16xbf16>
      %cst_40 = arith.constant dense<0.000000e+00> : vector<8x16xf32>
      %129 = tpu.matmul %126, %128, %cst_40 {dimension_numbers = #tpu.dot_dimension_numbers<[1], [0], [0], [1], [0, 0, 1, 1], [], []>} : vector<8x8xbf16>, vector<8x16xbf16>, vector<8x16xf32> -> vector<8x16xf32>
      %130 = vector.extract_strided_slice %114 {offsets = [24, 0], sizes = [8, 8], strides = [1, 1]} : vector<64x8xf32> to vector<8x8xf32>
      %131 = arith.truncf %130 : vector<8x8xf32> to vector<8x8xbf16>
      %132 = vector.extract_strided_slice %62 {offsets = [0, 48], sizes = [8, 16], strides = [1, 1]} : vector<16x64xf32> to vector<8x16xf32>
      %133 = arith.truncf %132 : vector<8x16xf32> to vector<8x16xbf16>
      %cst_41 = arith.constant dense<0.000000e+00> : vector<8x16xf32>
      %134 = tpu.matmul %131, %133, %cst_41 {dimension_numbers = #tpu.dot_dimension_numbers<[1], [0], [0], [1], [0, 0, 1, 1], [], []>} : vector<8x8xbf16>, vector<8x16xbf16>, vector<8x16xf32> -> vector<8x16xf32>
      %135 = tpu.concatenate %119, %124, %129, %134 in 1 : vector<8x16xf32>, vector<8x16xf32>, vector<8x16xf32>, vector<8x16xf32> -> vector<8x64xf32>
      %136 = vector.extract_strided_slice %114 {offsets = [32, 0], sizes = [8, 8], strides = [1, 1]} : vector<64x8xf32> to vector<8x8xf32>
      %137 = arith.truncf %136 : vector<8x8xf32> to vector<8x8xbf16>
      %138 = vector.extract_strided_slice %62 {offsets = [8, 0], sizes = [8, 16], strides = [1, 1]} : vector<16x64xf32> to vector<8x16xf32>
      %139 = arith.truncf %138 : vector<8x16xf32> to vector<8x16xbf16>
      %cst_42 = arith.constant dense<0.000000e+00> : vector<8x16xf32>
      %140 = tpu.matmul %137, %139, %cst_42 {dimension_numbers = #tpu.dot_dimension_numbers<[1], [0], [0], [1], [0, 0, 1, 1], [], []>} : vector<8x8xbf16>, vector<8x16xbf16>, vector<8x16xf32> -> vector<8x16xf32>
      %141 = vector.extract_strided_slice %114 {offsets = [40, 0], sizes = [8, 8], strides = [1, 1]} : vector<64x8xf32> to vector<8x8xf32>
      %142 = arith.truncf %141 : vector<8x8xf32> to vector<8x8xbf16>
      %143 = vector.extract_strided_slice %62 {offsets = [8, 16], sizes = [8, 16], strides = [1, 1]} : vector<16x64xf32> to vector<8x16xf32>
      %144 = arith.truncf %143 : vector<8x16xf32> to vector<8x16xbf16>
      %cst_43 = arith.constant dense<0.000000e+00> : vector<8x16xf32>
      %145 = tpu.matmul %142, %144, %cst_43 {dimension_numbers = #tpu.dot_dimension_numbers<[1], [0], [0], [1], [0, 0, 1, 1], [], []>} : vector<8x8xbf16>, vector<8x16xbf16>, vector<8x16xf32> -> vector<8x16xf32>
      %146 = vector.extract_strided_slice %114 {offsets = [48, 0], sizes = [8, 8], strides = [1, 1]} : vector<64x8xf32> to vector<8x8xf32>
      %147 = arith.truncf %146 : vector<8x8xf32> to vector<8x8xbf16>
      %148 = vector.extract_strided_slice %62 {offsets = [8, 32], sizes = [8, 16], strides = [1, 1]} : vector<16x64xf32> to vector<8x16xf32>
      %149 = arith.truncf %148 : vector<8x16xf32> to vector<8x16xbf16>
      %cst_44 = arith.constant dense<0.000000e+00> : vector<8x16xf32>
      %150 = tpu.matmul %147, %149, %cst_44 {dimension_numbers = #tpu.dot_dimension_numbers<[1], [0], [0], [1], [0, 0, 1, 1], [], []>} : vector<8x8xbf16>, vector<8x16xbf16>, vector<8x16xf32> -> vector<8x16xf32>
      %151 = vector.extract_strided_slice %114 {offsets = [56, 0], sizes = [8, 8], strides = [1, 1]} : vector<64x8xf32> to vector<8x8xf32>
      %152 = arith.truncf %151 : vector<8x8xf32> to vector<8x8xbf16>
      %153 = vector.extract_strided_slice %62 {offsets = [8, 48], sizes = [8, 16], strides = [1, 1]} : vector<16x64xf32> to vector<8x16xf32>
      %154 = arith.truncf %153 : vector<8x16xf32> to vector<8x16xbf16>
      %cst_45 = arith.constant dense<0.000000e+00> : vector<8x16xf32>
      %155 = tpu.matmul %152, %154, %cst_45 {dimension_numbers = #tpu.dot_dimension_numbers<[1], [0], [0], [1], [0, 0, 1, 1], [], []>} : vector<8x8xbf16>, vector<8x16xbf16>, vector<8x16xf32> -> vector<8x16xf32>
      %156 = tpu.concatenate %140, %145, %150, %155 in 1 : vector<8x16xf32>, vector<8x16xf32>, vector<8x16xf32>, vector<8x16xf32> -> vector<8x64xf32>
      %157 = tpu.concatenate %135, %156 in 0 : vector<8x64xf32>, vector<8x64xf32> -> vector<16x64xf32>
      %158 = arith.truncf %157 : vector<16x64xf32> to vector<16x64xbf16>
      %c0_46 = arith.constant 0 : index
      %c0_47 = arith.constant 0 : index
      %c0_48 = arith.constant 0 : index
      %159 = vector.load %arg29[%c0_46, %c0_47, %c0_48] : memref<2x64x64xbf16, #tpu.memory_space<vmem>>, vector<1x64x64xbf16>
      %160 = vector.shape_cast %159 : vector<1x64x64xbf16> to vector<64x64xbf16>
      %cst_49 = arith.constant dense<0.000000e+00> : vector<16x64xf32>
      %161 = tpu.matmul %158, %160, %cst_49 {dimension_numbers = #tpu.dot_dimension_numbers<[1], [0], [0], [1], [0, 0, 1, 1], [], []>} : vector<16x64xbf16>, vector<64x64xbf16>, vector<16x64xf32> -> vector<16x64xf32>
      %c0_50 = arith.constant 0 : index
      %c0_51 = arith.constant 0 : index
      %c0_52 = arith.constant 0 : index
      %162 = vector.load %arg30[%c0_50, %c0_51, %c0_52] : memref<2x1x64xf32, #tpu.memory_space<vmem>>, vector<1x1x64xf32>
      %163 = vector.shape_cast %162 : vector<1x1x64xf32> to vector<1x64xf32>
      %164 = vector.broadcast %163 : vector<1x64xf32> to vector<16x64xf32>
      %165 = arith.addf %161, %164 : vector<16x64xf32>
      %166 = arith.addf %16, %165 : vector<16x64xf32>
      %c0_53 = arith.constant 0 : index
      %c0_54 = arith.constant 0 : index
      %c0_55 = arith.constant 0 : index
      %167 = vector.load %arg31[%c0_53, %c0_54, %c0_55] : memref<2x1x64xf32, #tpu.memory_space<vmem>>, vector<1x1x64xf32>
      %168 = vector.shape_cast %167 : vector<1x1x64xf32> to vector<1x64xf32>
      %c0_56 = arith.constant 0 : index
      %c0_57 = arith.constant 0 : index
      %c0_58 = arith.constant 0 : index
      %169 = vector.load %arg32[%c0_56, %c0_57, %c0_58] : memref<2x1x64xf32, #tpu.memory_space<vmem>>, vector<1x1x64xf32>
      %170 = vector.shape_cast %169 : vector<1x1x64xf32> to vector<1x64xf32>
      %cst_59 = arith.constant dense<0.000000e+00> : vector<16xf32>
      %171 = vector.multi_reduction <add>, %166, %cst_59 [1] : vector<16x64xf32> to vector<16xf32>
      %172 = vector.shape_cast %171 : vector<16xf32> to vector<16x1xf32>
      %cst_60 = arith.constant 6.400000e+01 : f32
      %173 = vector.broadcast %cst_60 : f32 to vector<16x1xf32>
      %174 = arith.divf %172, %173 : vector<16x1xf32>
      %175 = vector.broadcast %174 : vector<16x1xf32> to vector<16x64xf32>
      %176 = arith.subf %166, %175 : vector<16x64xf32>
      %177 = arith.mulf %176, %176 : vector<16x64xf32>
      %cst_61 = arith.constant dense<0.000000e+00> : vector<16xf32>
      %178 = vector.multi_reduction <add>, %177, %cst_61 [1] : vector<16x64xf32> to vector<16xf32>
      %179 = vector.shape_cast %178 : vector<16xf32> to vector<16x1xf32>
      %cst_62 = arith.constant 6.400000e+01 : f32
      %180 = vector.broadcast %cst_62 : f32 to vector<16x1xf32>
      %181 = arith.divf %179, %180 : vector<16x1xf32>
      %182 = vector.broadcast %174 : vector<16x1xf32> to vector<16x64xf32>
      %183 = arith.subf %166, %182 : vector<16x64xf32>
      %cst_63 = arith.constant 9.99999974E-6 : f32
      %184 = vector.broadcast %cst_63 : f32 to vector<16x1xf32>
      %185 = arith.addf %181, %184 : vector<16x1xf32>
      %186 = math.rsqrt %185 : vector<16x1xf32>
      %187 = vector.broadcast %186 : vector<16x1xf32> to vector<16x64xf32>
      %188 = arith.mulf %183, %187 : vector<16x64xf32>
      %189 = vector.broadcast %168 : vector<1x64xf32> to vector<16x64xf32>
      %190 = arith.mulf %188, %189 : vector<16x64xf32>
      %191 = vector.broadcast %170 : vector<1x64xf32> to vector<16x64xf32>
      %192 = arith.addf %190, %191 : vector<16x64xf32>
      %193 = arith.truncf %192 : vector<16x64xf32> to vector<16x64xbf16>
      %c0_64 = arith.constant 0 : index
      %c0_65 = arith.constant 0 : index
      %c0_66 = arith.constant 0 : index
      %194 = vector.load %arg33[%c0_64, %c0_65, %c0_66] : memref<2x64x128xbf16, #tpu.memory_space<vmem>>, vector<1x64x128xbf16>
      %195 = vector.shape_cast %194 : vector<1x64x128xbf16> to vector<64x128xbf16>
      %cst_67 = arith.constant dense<0.000000e+00> : vector<16x128xf32>
      %196 = tpu.matmul %193, %195, %cst_67 {dimension_numbers = #tpu.dot_dimension_numbers<[1], [0], [0], [1], [0, 0, 1, 1], [], []>} : vector<16x64xbf16>, vector<64x128xbf16>, vector<16x128xf32> -> vector<16x128xf32>
      %c0_68 = arith.constant 0 : index
      %c0_69 = arith.constant 0 : index
      %c0_70 = arith.constant 0 : index
      %197 = vector.load %arg34[%c0_68, %c0_69, %c0_70] : memref<2x1x128xf32, #tpu.memory_space<vmem>>, vector<1x1x128xf32>
      %198 = vector.shape_cast %197 : vector<1x1x128xf32> to vector<1x128xf32>
      %199 = vector.broadcast %198 : vector<1x128xf32> to vector<16x128xf32>
      %200 = arith.addf %196, %199 : vector<16x128xf32>
      %cst_71 = arith.constant 1.702000e+00 : f32
      %201 = vector.broadcast %cst_71 : f32 to vector<16x128xf32>
      %202 = arith.mulf %201, %200 : vector<16x128xf32>
      %203 = arith.negf %202 : vector<16x128xf32>
      %204 = math.exp %203 : vector<16x128xf32>
      %cst_72 = arith.constant 1.000000e+00 : f32
      %205 = vector.broadcast %cst_72 : f32 to vector<16x128xf32>
      %206 = arith.addf %205, %204 : vector<16x128xf32>
      %207 = arith.divf %205, %206 : vector<16x128xf32>
      %208 = arith.mulf %200, %207 : vector<16x128xf32>
      %209 = arith.truncf %208 : vector<16x128xf32> to vector<16x128xbf16>
      %c0_73 = arith.constant 0 : index
      %c0_74 = arith.constant 0 : index
      %c0_75 = arith.constant 0 : index
      %210 = vector.load %arg35[%c0_73, %c0_74, %c0_75] : memref<2x128x64xbf16, #tpu.memory_space<vmem>>, vector<1x128x64xbf16>
      %211 = vector.shape_cast %210 : vector<1x128x64xbf16> to vector<128x64xbf16>
      %cst_76 = arith.constant dense<0.000000e+00> : vector<16x64xf32>
      %212 = tpu.matmul %209, %211, %cst_76 {dimension_numbers = #tpu.dot_dimension_numbers<[1], [0], [0], [1], [0, 0, 1, 1], [], []>} : vector<16x128xbf16>, vector<128x64xbf16>, vector<16x64xf32> -> vector<16x64xf32>
      %c0_77 = arith.constant 0 : index
      %c0_78 = arith.constant 0 : index
      %c0_79 = arith.constant 0 : index
      %213 = vector.load %arg36[%c0_77, %c0_78, %c0_79] : memref<2x1x64xf32, #tpu.memory_space<vmem>>, vector<1x1x64xf32>
      %214 = vector.shape_cast %213 : vector<1x1x64xf32> to vector<1x64xf32>
      %215 = vector.broadcast %214 : vector<1x64xf32> to vector<16x64xf32>
      %216 = arith.addf %212, %215 : vector<16x64xf32>
      %217 = arith.addf %166, %216 : vector<16x64xf32>
      %c1 = arith.constant 1 : index
      %c0_80 = arith.constant 0 : index
      %c0_81 = arith.constant 0 : index
      %218 = vector.load %arg25[%c1, %c0_80, %c0_81] : memref<2x1x64xf32, #tpu.memory_space<vmem>>, vector<1x1x64xf32>
      %219 = vector.shape_cast %218 : vector<1x1x64xf32> to vector<1x64xf32>
      %c1_82 = arith.constant 1 : index
      %c0_83 = arith.constant 0 : index
      %c0_84 = arith.constant 0 : index
      %220 = vector.load %arg26[%c1_82, %c0_83, %c0_84] : memref<2x1x64xf32, #tpu.memory_space<vmem>>, vector<1x1x64xf32>
      %221 = vector.shape_cast %220 : vector<1x1x64xf32> to vector<1x64xf32>
      %cst_85 = arith.constant dense<0.000000e+00> : vector<16xf32>
      %222 = vector.multi_reduction <add>, %217, %cst_85 [1] : vector<16x64xf32> to vector<16xf32>
      %223 = vector.shape_cast %222 : vector<16xf32> to vector<16x1xf32>
      %cst_86 = arith.constant 6.400000e+01 : f32
      %224 = vector.broadcast %cst_86 : f32 to vector<16x1xf32>
      %225 = arith.divf %223, %224 : vector<16x1xf32>
      %226 = vector.broadcast %225 : vector<16x1xf32> to vector<16x64xf32>
      %227 = arith.subf %217, %226 : vector<16x64xf32>
      %228 = arith.mulf %227, %227 : vector<16x64xf32>
      %cst_87 = arith.constant dense<0.000000e+00> : vector<16xf32>
      %229 = vector.multi_reduction <add>, %228, %cst_87 [1] : vector<16x64xf32> to vector<16xf32>
      %230 = vector.shape_cast %229 : vector<16xf32> to vector<16x1xf32>
      %cst_88 = arith.constant 6.400000e+01 : f32
      %231 = vector.broadcast %cst_88 : f32 to vector<16x1xf32>
      %232 = arith.divf %230, %231 : vector<16x1xf32>
      %233 = vector.broadcast %225 : vector<16x1xf32> to vector<16x64xf32>
      %234 = arith.subf %217, %233 : vector<16x64xf32>
      %cst_89 = arith.constant 9.99999974E-6 : f32
      %235 = vector.broadcast %cst_89 : f32 to vector<16x1xf32>
      %236 = arith.addf %232, %235 : vector<16x1xf32>
      %237 = math.rsqrt %236 : vector<16x1xf32>
      %238 = vector.broadcast %237 : vector<16x1xf32> to vector<16x64xf32>
      %239 = arith.mulf %234, %238 : vector<16x64xf32>
      %240 = vector.broadcast %219 : vector<1x64xf32> to vector<16x64xf32>
      %241 = arith.mulf %239, %240 : vector<16x64xf32>
      %242 = vector.broadcast %221 : vector<1x64xf32> to vector<16x64xf32>
      %243 = arith.addf %241, %242 : vector<16x64xf32>
      %244 = arith.truncf %243 : vector<16x64xf32> to vector<16x64xbf16>
      %c1_90 = arith.constant 1 : index
      %c0_91 = arith.constant 0 : index
      %c0_92 = arith.constant 0 : index
      %245 = vector.load %arg27[%c1_90, %c0_91, %c0_92] : memref<2x64x192xbf16, #tpu.memory_space<vmem>>, vector<1x64x192xbf16>
      %246 = vector.shape_cast %245 : vector<1x64x192xbf16> to vector<64x192xbf16>
      %cst_93 = arith.constant dense<0.000000e+00> : vector<16x192xf32>
      %247 = tpu.matmul %244, %246, %cst_93 {dimension_numbers = #tpu.dot_dimension_numbers<[1], [0], [0], [1], [0, 0, 1, 1], [], []>} : vector<16x64xbf16>, vector<64x192xbf16>, vector<16x192xf32> -> vector<16x192xf32>
      %c1_94 = arith.constant 1 : index
      %c0_95 = arith.constant 0 : index
      %c0_96 = arith.constant 0 : index
      %248 = vector.load %arg28[%c1_94, %c0_95, %c0_96] : memref<2x1x192xf32, #tpu.memory_space<vmem>>, vector<1x1x192xf32>
      %249 = vector.shape_cast %248 : vector<1x1x192xf32> to vector<1x192xf32>
      %250 = vector.broadcast %249 : vector<1x192xf32> to vector<16x192xf32>
      %251 = arith.addf %247, %250 : vector<16x192xf32>
      %252 = vector.extract_strided_slice %251 {offsets = [0, 0], sizes = [16, 64], strides = [1, 1]} : vector<16x192xf32> to vector<16x64xf32>
      %cst_97 = arith.constant 2.500000e-01 : f32
      %253 = vector.broadcast %cst_97 : f32 to vector<16x64xf32>
      %254 = arith.mulf %252, %253 : vector<16x64xf32>
      %255 = vector.extract_strided_slice %251 {offsets = [0, 64], sizes = [16, 64], strides = [1, 1]} : vector<16x192xf32> to vector<16x64xf32>
      %256 = vector.extract_strided_slice %251 {offsets = [0, 128], sizes = [16, 64], strides = [1, 1]} : vector<16x192xf32> to vector<16x64xf32>
      %257 = vector.extract_strided_slice %254 {offsets = [0, 0], sizes = [8, 16], strides = [1, 1]} : vector<16x64xf32> to vector<8x16xf32>
      %258 = arith.truncf %257 : vector<8x16xf32> to vector<8x16xbf16>
      %259 = vector.extract_strided_slice %255 {offsets = [0, 0], sizes = [8, 16], strides = [1, 1]} : vector<16x64xf32> to vector<8x16xf32>
      %260 = arith.truncf %259 : vector<8x16xf32> to vector<8x16xbf16>
      %cst_98 = arith.constant dense<0.000000e+00> : vector<8x8xf32>
      %261 = tpu.matmul %258, %260, %cst_98 {dimension_numbers = #tpu.dot_dimension_numbers<[1], [1], [0], [0], [0, 0, 1, 0], [], []>} : vector<8x16xbf16>, vector<8x16xbf16>, vector<8x8xf32> -> vector<8x8xf32>
      %262 = vector.extract_strided_slice %254 {offsets = [0, 16], sizes = [8, 16], strides = [1, 1]} : vector<16x64xf32> to vector<8x16xf32>
      %263 = arith.truncf %262 : vector<8x16xf32> to vector<8x16xbf16>
      %264 = vector.extract_strided_slice %255 {offsets = [0, 16], sizes = [8, 16], strides = [1, 1]} : vector<16x64xf32> to vector<8x16xf32>
      %265 = arith.truncf %264 : vector<8x16xf32> to vector<8x16xbf16>
      %cst_99 = arith.constant dense<0.000000e+00> : vector<8x8xf32>
      %266 = tpu.matmul %263, %265, %cst_99 {dimension_numbers = #tpu.dot_dimension_numbers<[1], [1], [0], [0], [0, 0, 1, 0], [], []>} : vector<8x16xbf16>, vector<8x16xbf16>, vector<8x8xf32> -> vector<8x8xf32>
      %267 = vector.extract_strided_slice %254 {offsets = [0, 32], sizes = [8, 16], strides = [1, 1]} : vector<16x64xf32> to vector<8x16xf32>
      %268 = arith.truncf %267 : vector<8x16xf32> to vector<8x16xbf16>
      %269 = vector.extract_strided_slice %255 {offsets = [0, 32], sizes = [8, 16], strides = [1, 1]} : vector<16x64xf32> to vector<8x16xf32>
      %270 = arith.truncf %269 : vector<8x16xf32> to vector<8x16xbf16>
      %cst_100 = arith.constant dense<0.000000e+00> : vector<8x8xf32>
      %271 = tpu.matmul %268, %270, %cst_100 {dimension_numbers = #tpu.dot_dimension_numbers<[1], [1], [0], [0], [0, 0, 1, 0], [], []>} : vector<8x16xbf16>, vector<8x16xbf16>, vector<8x8xf32> -> vector<8x8xf32>
      %272 = vector.extract_strided_slice %254 {offsets = [0, 48], sizes = [8, 16], strides = [1, 1]} : vector<16x64xf32> to vector<8x16xf32>
      %273 = arith.truncf %272 : vector<8x16xf32> to vector<8x16xbf16>
      %274 = vector.extract_strided_slice %255 {offsets = [0, 48], sizes = [8, 16], strides = [1, 1]} : vector<16x64xf32> to vector<8x16xf32>
      %275 = arith.truncf %274 : vector<8x16xf32> to vector<8x16xbf16>
      %cst_101 = arith.constant dense<0.000000e+00> : vector<8x8xf32>
      %276 = tpu.matmul %273, %275, %cst_101 {dimension_numbers = #tpu.dot_dimension_numbers<[1], [1], [0], [0], [0, 0, 1, 0], [], []>} : vector<8x16xbf16>, vector<8x16xbf16>, vector<8x8xf32> -> vector<8x8xf32>
      %277 = vector.extract_strided_slice %254 {offsets = [8, 0], sizes = [8, 16], strides = [1, 1]} : vector<16x64xf32> to vector<8x16xf32>
      %278 = arith.truncf %277 : vector<8x16xf32> to vector<8x16xbf16>
      %279 = vector.extract_strided_slice %255 {offsets = [8, 0], sizes = [8, 16], strides = [1, 1]} : vector<16x64xf32> to vector<8x16xf32>
      %280 = arith.truncf %279 : vector<8x16xf32> to vector<8x16xbf16>
      %cst_102 = arith.constant dense<0.000000e+00> : vector<8x8xf32>
      %281 = tpu.matmul %278, %280, %cst_102 {dimension_numbers = #tpu.dot_dimension_numbers<[1], [1], [0], [0], [0, 0, 1, 0], [], []>} : vector<8x16xbf16>, vector<8x16xbf16>, vector<8x8xf32> -> vector<8x8xf32>
      %282 = vector.extract_strided_slice %254 {offsets = [8, 16], sizes = [8, 16], strides = [1, 1]} : vector<16x64xf32> to vector<8x16xf32>
      %283 = arith.truncf %282 : vector<8x16xf32> to vector<8x16xbf16>
      %284 = vector.extract_strided_slice %255 {offsets = [8, 16], sizes = [8, 16], strides = [1, 1]} : vector<16x64xf32> to vector<8x16xf32>
      %285 = arith.truncf %284 : vector<8x16xf32> to vector<8x16xbf16>
      %cst_103 = arith.constant dense<0.000000e+00> : vector<8x8xf32>
      %286 = tpu.matmul %283, %285, %cst_103 {dimension_numbers = #tpu.dot_dimension_numbers<[1], [1], [0], [0], [0, 0, 1, 0], [], []>} : vector<8x16xbf16>, vector<8x16xbf16>, vector<8x8xf32> -> vector<8x8xf32>
      %287 = vector.extract_strided_slice %254 {offsets = [8, 32], sizes = [8, 16], strides = [1, 1]} : vector<16x64xf32> to vector<8x16xf32>
      %288 = arith.truncf %287 : vector<8x16xf32> to vector<8x16xbf16>
      %289 = vector.extract_strided_slice %255 {offsets = [8, 32], sizes = [8, 16], strides = [1, 1]} : vector<16x64xf32> to vector<8x16xf32>
      %290 = arith.truncf %289 : vector<8x16xf32> to vector<8x16xbf16>
      %cst_104 = arith.constant dense<0.000000e+00> : vector<8x8xf32>
      %291 = tpu.matmul %288, %290, %cst_104 {dimension_numbers = #tpu.dot_dimension_numbers<[1], [1], [0], [0], [0, 0, 1, 0], [], []>} : vector<8x16xbf16>, vector<8x16xbf16>, vector<8x8xf32> -> vector<8x8xf32>
      %292 = vector.extract_strided_slice %254 {offsets = [8, 48], sizes = [8, 16], strides = [1, 1]} : vector<16x64xf32> to vector<8x16xf32>
      %293 = arith.truncf %292 : vector<8x16xf32> to vector<8x16xbf16>
      %294 = vector.extract_strided_slice %255 {offsets = [8, 48], sizes = [8, 16], strides = [1, 1]} : vector<16x64xf32> to vector<8x16xf32>
      %295 = arith.truncf %294 : vector<8x16xf32> to vector<8x16xbf16>
      %cst_105 = arith.constant dense<0.000000e+00> : vector<8x8xf32>
      %296 = tpu.matmul %293, %295, %cst_105 {dimension_numbers = #tpu.dot_dimension_numbers<[1], [1], [0], [0], [0, 0, 1, 0], [], []>} : vector<8x16xbf16>, vector<8x16xbf16>, vector<8x8xf32> -> vector<8x8xf32>
      %297 = tpu.concatenate %261, %266, %271, %276, %281, %286, %291, %296 in 0 : vector<8x8xf32>, vector<8x8xf32>, vector<8x8xf32>, vector<8x8xf32>, vector<8x8xf32>, vector<8x8xf32>, vector<8x8xf32>, vector<8x8xf32> -> vector<64x8xf32>
      %298 = arith.addf %297, %23 : vector<64x8xf32>
      %cst_106 = arith.constant dense<0xFF800000> : vector<64xf32>
      %299 = vector.multi_reduction <maximumf>, %298, %cst_106 [1] : vector<64x8xf32> to vector<64xf32>
      %300 = vector.shape_cast %299 : vector<64xf32> to vector<64x1xf32>
      %301 = vector.broadcast %300 : vector<64x1xf32> to vector<64x8xf32>
      %302 = arith.subf %298, %301 : vector<64x8xf32>
      %303 = math.exp %302 : vector<64x8xf32>
      %cst_107 = arith.constant dense<0.000000e+00> : vector<64xf32>
      %304 = vector.multi_reduction <add>, %303, %cst_107 [1] : vector<64x8xf32> to vector<64xf32>
      %305 = vector.shape_cast %304 : vector<64xf32> to vector<64x1xf32>
      %306 = tpu.reciprocal %305 {approx = true} : vector<64x1xf32> -> vector<64x1xf32>
      %307 = vector.broadcast %306 : vector<64x1xf32> to vector<64x8xf32>
      %308 = arith.mulf %303, %307 : vector<64x8xf32>
      %309 = vector.extract_strided_slice %308 {offsets = [0, 0], sizes = [8, 8], strides = [1, 1]} : vector<64x8xf32> to vector<8x8xf32>
      %310 = arith.truncf %309 : vector<8x8xf32> to vector<8x8xbf16>
      %311 = vector.extract_strided_slice %256 {offsets = [0, 0], sizes = [8, 16], strides = [1, 1]} : vector<16x64xf32> to vector<8x16xf32>
      %312 = arith.truncf %311 : vector<8x16xf32> to vector<8x16xbf16>
      %cst_108 = arith.constant dense<0.000000e+00> : vector<8x16xf32>
      %313 = tpu.matmul %310, %312, %cst_108 {dimension_numbers = #tpu.dot_dimension_numbers<[1], [0], [0], [1], [0, 0, 1, 1], [], []>} : vector<8x8xbf16>, vector<8x16xbf16>, vector<8x16xf32> -> vector<8x16xf32>
      %314 = vector.extract_strided_slice %308 {offsets = [8, 0], sizes = [8, 8], strides = [1, 1]} : vector<64x8xf32> to vector<8x8xf32>
      %315 = arith.truncf %314 : vector<8x8xf32> to vector<8x8xbf16>
      %316 = vector.extract_strided_slice %256 {offsets = [0, 16], sizes = [8, 16], strides = [1, 1]} : vector<16x64xf32> to vector<8x16xf32>
      %317 = arith.truncf %316 : vector<8x16xf32> to vector<8x16xbf16>
      %cst_109 = arith.constant dense<0.000000e+00> : vector<8x16xf32>
      %318 = tpu.matmul %315, %317, %cst_109 {dimension_numbers = #tpu.dot_dimension_numbers<[1], [0], [0], [1], [0, 0, 1, 1], [], []>} : vector<8x8xbf16>, vector<8x16xbf16>, vector<8x16xf32> -> vector<8x16xf32>
      %319 = vector.extract_strided_slice %308 {offsets = [16, 0], sizes = [8, 8], strides = [1, 1]} : vector<64x8xf32> to vector<8x8xf32>
      %320 = arith.truncf %319 : vector<8x8xf32> to vector<8x8xbf16>
      %321 = vector.extract_strided_slice %256 {offsets = [0, 32], sizes = [8, 16], strides = [1, 1]} : vector<16x64xf32> to vector<8x16xf32>
      %322 = arith.truncf %321 : vector<8x16xf32> to vector<8x16xbf16>
      %cst_110 = arith.constant dense<0.000000e+00> : vector<8x16xf32>
      %323 = tpu.matmul %320, %322, %cst_110 {dimension_numbers = #tpu.dot_dimension_numbers<[1], [0], [0], [1], [0, 0, 1, 1], [], []>} : vector<8x8xbf16>, vector<8x16xbf16>, vector<8x16xf32> -> vector<8x16xf32>
      %324 = vector.extract_strided_slice %308 {offsets = [24, 0], sizes = [8, 8], strides = [1, 1]} : vector<64x8xf32> to vector<8x8xf32>
      %325 = arith.truncf %324 : vector<8x8xf32> to vector<8x8xbf16>
      %326 = vector.extract_strided_slice %256 {offsets = [0, 48], sizes = [8, 16], strides = [1, 1]} : vector<16x64xf32> to vector<8x16xf32>
      %327 = arith.truncf %326 : vector<8x16xf32> to vector<8x16xbf16>
      %cst_111 = arith.constant dense<0.000000e+00> : vector<8x16xf32>
      %328 = tpu.matmul %325, %327, %cst_111 {dimension_numbers = #tpu.dot_dimension_numbers<[1], [0], [0], [1], [0, 0, 1, 1], [], []>} : vector<8x8xbf16>, vector<8x16xbf16>, vector<8x16xf32> -> vector<8x16xf32>
      %329 = tpu.concatenate %313, %318, %323, %328 in 1 : vector<8x16xf32>, vector<8x16xf32>, vector<8x16xf32>, vector<8x16xf32> -> vector<8x64xf32>
      %330 = vector.extract_strided_slice %308 {offsets = [32, 0], sizes = [8, 8], strides = [1, 1]} : vector<64x8xf32> to vector<8x8xf32>
      %331 = arith.truncf %330 : vector<8x8xf32> to vector<8x8xbf16>
      %332 = vector.extract_strided_slice %256 {offsets = [8, 0], sizes = [8, 16], strides = [1, 1]} : vector<16x64xf32> to vector<8x16xf32>
      %333 = arith.truncf %332 : vector<8x16xf32> to vector<8x16xbf16>
      %cst_112 = arith.constant dense<0.000000e+00> : vector<8x16xf32>
      %334 = tpu.matmul %331, %333, %cst_112 {dimension_numbers = #tpu.dot_dimension_numbers<[1], [0], [0], [1], [0, 0, 1, 1], [], []>} : vector<8x8xbf16>, vector<8x16xbf16>, vector<8x16xf32> -> vector<8x16xf32>
      %335 = vector.extract_strided_slice %308 {offsets = [40, 0], sizes = [8, 8], strides = [1, 1]} : vector<64x8xf32> to vector<8x8xf32>
      %336 = arith.truncf %335 : vector<8x8xf32> to vector<8x8xbf16>
      %337 = vector.extract_strided_slice %256 {offsets = [8, 16], sizes = [8, 16], strides = [1, 1]} : vector<16x64xf32> to vector<8x16xf32>
      %338 = arith.truncf %337 : vector<8x16xf32> to vector<8x16xbf16>
      %cst_113 = arith.constant dense<0.000000e+00> : vector<8x16xf32>
      %339 = tpu.matmul %336, %338, %cst_113 {dimension_numbers = #tpu.dot_dimension_numbers<[1], [0], [0], [1], [0, 0, 1, 1], [], []>} : vector<8x8xbf16>, vector<8x16xbf16>, vector<8x16xf32> -> vector<8x16xf32>
      %340 = vector.extract_strided_slice %308 {offsets = [48, 0], sizes = [8, 8], strides = [1, 1]} : vector<64x8xf32> to vector<8x8xf32>
      %341 = arith.truncf %340 : vector<8x8xf32> to vector<8x8xbf16>
      %342 = vector.extract_strided_slice %256 {offsets = [8, 32], sizes = [8, 16], strides = [1, 1]} : vector<16x64xf32> to vector<8x16xf32>
      %343 = arith.truncf %342 : vector<8x16xf32> to vector<8x16xbf16>
      %cst_114 = arith.constant dense<0.000000e+00> : vector<8x16xf32>
      %344 = tpu.matmul %341, %343, %cst_114 {dimension_numbers = #tpu.dot_dimension_numbers<[1], [0], [0], [1], [0, 0, 1, 1], [], []>} : vector<8x8xbf16>, vector<8x16xbf16>, vector<8x16xf32> -> vector<8x16xf32>
      %345 = vector.extract_strided_slice %308 {offsets = [56, 0], sizes = [8, 8], strides = [1, 1]} : vector<64x8xf32> to vector<8x8xf32>
      %346 = arith.truncf %345 : vector<8x8xf32> to vector<8x8xbf16>
      %347 = vector.extract_strided_slice %256 {offsets = [8, 48], sizes = [8, 16], strides = [1, 1]} : vector<16x64xf32> to vector<8x16xf32>
      %348 = arith.truncf %347 : vector<8x16xf32> to vector<8x16xbf16>
      %cst_115 = arith.constant dense<0.000000e+00> : vector<8x16xf32>
      %349 = tpu.matmul %346, %348, %cst_115 {dimension_numbers = #tpu.dot_dimension_numbers<[1], [0], [0], [1], [0, 0, 1, 1], [], []>} : vector<8x8xbf16>, vector<8x16xbf16>, vector<8x16xf32> -> vector<8x16xf32>
      %350 = tpu.concatenate %334, %339, %344, %349 in 1 : vector<8x16xf32>, vector<8x16xf32>, vector<8x16xf32>, vector<8x16xf32> -> vector<8x64xf32>
      %351 = tpu.concatenate %329, %350 in 0 : vector<8x64xf32>, vector<8x64xf32> -> vector<16x64xf32>
      %352 = arith.truncf %351 : vector<16x64xf32> to vector<16x64xbf16>
      %c1_116 = arith.constant 1 : index
      %c0_117 = arith.constant 0 : index
      %c0_118 = arith.constant 0 : index
      %353 = vector.load %arg29[%c1_116, %c0_117, %c0_118] : memref<2x64x64xbf16, #tpu.memory_space<vmem>>, vector<1x64x64xbf16>
      %354 = vector.shape_cast %353 : vector<1x64x64xbf16> to vector<64x64xbf16>
      %cst_119 = arith.constant dense<0.000000e+00> : vector<16x64xf32>
      %355 = tpu.matmul %352, %354, %cst_119 {dimension_numbers = #tpu.dot_dimension_numbers<[1], [0], [0], [1], [0, 0, 1, 1], [], []>} : vector<16x64xbf16>, vector<64x64xbf16>, vector<16x64xf32> -> vector<16x64xf32>
      %c1_120 = arith.constant 1 : index
      %c0_121 = arith.constant 0 : index
      %c0_122 = arith.constant 0 : index
      %356 = vector.load %arg30[%c1_120, %c0_121, %c0_122] : memref<2x1x64xf32, #tpu.memory_space<vmem>>, vector<1x1x64xf32>
      %357 = vector.shape_cast %356 : vector<1x1x64xf32> to vector<1x64xf32>
      %358 = vector.broadcast %357 : vector<1x64xf32> to vector<16x64xf32>
      %359 = arith.addf %355, %358 : vector<16x64xf32>
      %360 = arith.addf %217, %359 : vector<16x64xf32>
      %c1_123 = arith.constant 1 : index
      %c0_124 = arith.constant 0 : index
      %c0_125 = arith.constant 0 : index
      %361 = vector.load %arg31[%c1_123, %c0_124, %c0_125] : memref<2x1x64xf32, #tpu.memory_space<vmem>>, vector<1x1x64xf32>
      %362 = vector.shape_cast %361 : vector<1x1x64xf32> to vector<1x64xf32>
      %c1_126 = arith.constant 1 : index
      %c0_127 = arith.constant 0 : index
      %c0_128 = arith.constant 0 : index
      %363 = vector.load %arg32[%c1_126, %c0_127, %c0_128] : memref<2x1x64xf32, #tpu.memory_space<vmem>>, vector<1x1x64xf32>
      %364 = vector.shape_cast %363 : vector<1x1x64xf32> to vector<1x64xf32>
      %cst_129 = arith.constant dense<0.000000e+00> : vector<16xf32>
      %365 = vector.multi_reduction <add>, %360, %cst_129 [1] : vector<16x64xf32> to vector<16xf32>
      %366 = vector.shape_cast %365 : vector<16xf32> to vector<16x1xf32>
      %cst_130 = arith.constant 6.400000e+01 : f32
      %367 = vector.broadcast %cst_130 : f32 to vector<16x1xf32>
      %368 = arith.divf %366, %367 : vector<16x1xf32>
      %369 = vector.broadcast %368 : vector<16x1xf32> to vector<16x64xf32>
      %370 = arith.subf %360, %369 : vector<16x64xf32>
      %371 = arith.mulf %370, %370 : vector<16x64xf32>
      %cst_131 = arith.constant dense<0.000000e+00> : vector<16xf32>
      %372 = vector.multi_reduction <add>, %371, %cst_131 [1] : vector<16x64xf32> to vector<16xf32>
      %373 = vector.shape_cast %372 : vector<16xf32> to vector<16x1xf32>
      %cst_132 = arith.constant 6.400000e+01 : f32
      %374 = vector.broadcast %cst_132 : f32 to vector<16x1xf32>
      %375 = arith.divf %373, %374 : vector<16x1xf32>
      %376 = vector.broadcast %368 : vector<16x1xf32> to vector<16x64xf32>
      %377 = arith.subf %360, %376 : vector<16x64xf32>
      %cst_133 = arith.constant 9.99999974E-6 : f32
      %378 = vector.broadcast %cst_133 : f32 to vector<16x1xf32>
      %379 = arith.addf %375, %378 : vector<16x1xf32>
      %380 = math.rsqrt %379 : vector<16x1xf32>
      %381 = vector.broadcast %380 : vector<16x1xf32> to vector<16x64xf32>
      %382 = arith.mulf %377, %381 : vector<16x64xf32>
      %383 = vector.broadcast %362 : vector<1x64xf32> to vector<16x64xf32>
      %384 = arith.mulf %382, %383 : vector<16x64xf32>
      %385 = vector.broadcast %364 : vector<1x64xf32> to vector<16x64xf32>
      %386 = arith.addf %384, %385 : vector<16x64xf32>
      %387 = arith.truncf %386 : vector<16x64xf32> to vector<16x64xbf16>
      %c1_134 = arith.constant 1 : index
      %c0_135 = arith.constant 0 : index
      %c0_136 = arith.constant 0 : index
      %388 = vector.load %arg33[%c1_134, %c0_135, %c0_136] : memref<2x64x128xbf16, #tpu.memory_space<vmem>>, vector<1x64x128xbf16>
      %389 = vector.shape_cast %388 : vector<1x64x128xbf16> to vector<64x128xbf16>
      %cst_137 = arith.constant dense<0.000000e+00> : vector<16x128xf32>
      %390 = tpu.matmul %387, %389, %cst_137 {dimension_numbers = #tpu.dot_dimension_numbers<[1], [0], [0], [1], [0, 0, 1, 1], [], []>} : vector<16x64xbf16>, vector<64x128xbf16>, vector<16x128xf32> -> vector<16x128xf32>
      %c1_138 = arith.constant 1 : index
      %c0_139 = arith.constant 0 : index
      %c0_140 = arith.constant 0 : index
      %391 = vector.load %arg34[%c1_138, %c0_139, %c0_140] : memref<2x1x128xf32, #tpu.memory_space<vmem>>, vector<1x1x128xf32>
      %392 = vector.shape_cast %391 : vector<1x1x128xf32> to vector<1x128xf32>
      %393 = vector.broadcast %392 : vector<1x128xf32> to vector<16x128xf32>
      %394 = arith.addf %390, %393 : vector<16x128xf32>
      %cst_141 = arith.constant 1.702000e+00 : f32
      %395 = vector.broadcast %cst_141 : f32 to vector<16x128xf32>
      %396 = arith.mulf %395, %394 : vector<16x128xf32>
      %397 = arith.negf %396 : vector<16x128xf32>
      %398 = math.exp %397 : vector<16x128xf32>
      %cst_142 = arith.constant 1.000000e+00 : f32
      %399 = vector.broadcast %cst_142 : f32 to vector<16x128xf32>
      %400 = arith.addf %399, %398 : vector<16x128xf32>
      %401 = arith.divf %399, %400 : vector<16x128xf32>
      %402 = arith.mulf %394, %401 : vector<16x128xf32>
      %403 = arith.truncf %402 : vector<16x128xf32> to vector<16x128xbf16>
      %c1_143 = arith.constant 1 : index
      %c0_144 = arith.constant 0 : index
      %c0_145 = arith.constant 0 : index
      %404 = vector.load %arg35[%c1_143, %c0_144, %c0_145] : memref<2x128x64xbf16, #tpu.memory_space<vmem>>, vector<1x128x64xbf16>
      %405 = vector.shape_cast %404 : vector<1x128x64xbf16> to vector<128x64xbf16>
      %cst_146 = arith.constant dense<0.000000e+00> : vector<16x64xf32>
      %406 = tpu.matmul %403, %405, %cst_146 {dimension_numbers = #tpu.dot_dimension_numbers<[1], [0], [0], [1], [0, 0, 1, 1], [], []>} : vector<16x128xbf16>, vector<128x64xbf16>, vector<16x64xf32> -> vector<16x64xf32>
      %c1_147 = arith.constant 1 : index
      %c0_148 = arith.constant 0 : index
      %c0_149 = arith.constant 0 : index
      %407 = vector.load %arg36[%c1_147, %c0_148, %c0_149] : memref<2x1x64xf32, #tpu.memory_space<vmem>>, vector<1x1x64xf32>
      %408 = vector.shape_cast %407 : vector<1x1x64xf32> to vector<1x64xf32>
      %409 = vector.broadcast %408 : vector<1x64xf32> to vector<16x64xf32>
      %410 = arith.addf %406, %409 : vector<16x64xf32>
      %411 = arith.addf %360, %410 : vector<16x64xf32>
      %c0_150 = arith.constant 0 : index
      %c0_151 = arith.constant 0 : index
      %412 = vector.load %arg37[%c0_150, %c0_151] : memref<1x64xf32, #tpu.memory_space<vmem>>, vector<1x64xf32>
      %c0_152 = arith.constant 0 : index
      %c0_153 = arith.constant 0 : index
      %413 = vector.load %arg38[%c0_152, %c0_153] : memref<1x64xf32, #tpu.memory_space<vmem>>, vector<1x64xf32>
      %cst_154 = arith.constant dense<0.000000e+00> : vector<16xf32>
      %414 = vector.multi_reduction <add>, %411, %cst_154 [1] : vector<16x64xf32> to vector<16xf32>
      %415 = vector.shape_cast %414 : vector<16xf32> to vector<16x1xf32>
      %cst_155 = arith.constant 6.400000e+01 : f32
      %416 = vector.broadcast %cst_155 : f32 to vector<16x1xf32>
      %417 = arith.divf %415, %416 : vector<16x1xf32>
      %418 = vector.broadcast %417 : vector<16x1xf32> to vector<16x64xf32>
      %419 = arith.subf %411, %418 : vector<16x64xf32>
      %420 = arith.mulf %419, %419 : vector<16x64xf32>
      %cst_156 = arith.constant dense<0.000000e+00> : vector<16xf32>
      %421 = vector.multi_reduction <add>, %420, %cst_156 [1] : vector<16x64xf32> to vector<16xf32>
      %422 = vector.shape_cast %421 : vector<16xf32> to vector<16x1xf32>
      %cst_157 = arith.constant 6.400000e+01 : f32
      %423 = vector.broadcast %cst_157 : f32 to vector<16x1xf32>
      %424 = arith.divf %422, %423 : vector<16x1xf32>
      %425 = vector.broadcast %417 : vector<16x1xf32> to vector<16x64xf32>
      %426 = arith.subf %411, %425 : vector<16x64xf32>
      %cst_158 = arith.constant 9.99999974E-6 : f32
      %427 = vector.broadcast %cst_158 : f32 to vector<16x1xf32>
      %428 = arith.addf %424, %427 : vector<16x1xf32>
      %429 = math.rsqrt %428 : vector<16x1xf32>
      %430 = vector.broadcast %429 : vector<16x1xf32> to vector<16x64xf32>
      %431 = arith.mulf %426, %430 : vector<16x64xf32>
      %432 = vector.broadcast %412 : vector<1x64xf32> to vector<16x64xf32>
      %433 = arith.mulf %431, %432 : vector<16x64xf32>
      %434 = vector.broadcast %413 : vector<1x64xf32> to vector<16x64xf32>
      %435 = arith.addf %433, %434 : vector<16x64xf32>
      %436 = vector.extract_strided_slice %435 {offsets = [7, 0], sizes = [1, 64], strides = [1, 1]} : vector<16x64xf32> to vector<1x64xf32>
      %437 = vector.extract_strided_slice %435 {offsets = [15, 0], sizes = [1, 64], strides = [1, 1]} : vector<16x64xf32> to vector<1x64xf32>
      %438 = tpu.concatenate %436, %437 in 0 : vector<1x64xf32>, vector<1x64xf32> -> vector<2x64xf32>
      %439 = arith.truncf %438 : vector<2x64xf32> to vector<2x64xbf16>
      %c0_159 = arith.constant 0 : index
      %c0_160 = arith.constant 0 : index
      %440 = vector.load %arg39[%c0_159, %c0_160] : memref<64x128xbf16, #tpu.memory_space<vmem>>, vector<64x128xbf16>
      %cst_161 = arith.constant dense<0.000000e+00> : vector<2x128xf32>
      %441 = tpu.matmul %439, %440, %cst_161 {dimension_numbers = #tpu.dot_dimension_numbers<[1], [0], [0], [1], [0, 0, 1, 1], [], []>} : vector<2x64xbf16>, vector<64x128xbf16>, vector<2x128xf32> -> vector<2x128xf32>
      %442 = arith.mulf %441, %441 : vector<2x128xf32>
      %cst_162 = arith.constant dense<0.000000e+00> : vector<2xf32>
      %443 = vector.multi_reduction <add>, %442, %cst_162 [1] : vector<2x128xf32> to vector<2xf32>
      %444 = vector.shape_cast %443 : vector<2xf32> to vector<2x1xf32>
      %445 = math.rsqrt %444 : vector<2x1xf32>
      %446 = vector.broadcast %445 : vector<2x1xf32> to vector<2x128xf32>
      %447 = arith.mulf %441, %446 : vector<2x128xf32>
      %c0_163 = arith.constant 0 : index
      %c0_164 = arith.constant 0 : index
      %c0_165 = arith.constant 0 : index
      %448 = vector.load %arg40[%c0_163, %c0_164, %c0_165] : memref<1x2x128xf32, #tpu.memory_space<vmem>>, vector<1x2x128xf32>
      %449 = vector.shape_cast %448 : vector<1x2x128xf32> to vector<2x128xf32>
      %450 = vector.shape_cast %447 : vector<2x128xf32> to vector<1x2x128xf32>
      tpu.vector_store %arg40[%c0_163, %c0_164, %c0_165], %450 {strides = array<i32>} : memref<1x2x128xf32, #tpu.memory_space<vmem>>, vector<1x2x128xf32>,
    } else {
    }
    return
  }
  func.func @transform_0(%arg0: i32) -> (i32, i32) {
    %c0_i32 = arith.constant 0 : i32
    %c0_i32_0 = arith.constant 0 : i32
    %c0_i32_1 = arith.constant 0 : i32
    return %c0_i32, %c0_i32_0 : i32, i32
  }
  func.func @transform_1(%arg0: i32) -> (i32, i32) {
    %c0_i32 = arith.constant 0 : i32
    %c0_i32_0 = arith.constant 0 : i32
    %c0_i32_1 = arith.constant 0 : i32
    return %c0_i32, %c0_i32_0 : i32, i32
  }
  func.func @transform_2(%arg0: i32) -> (i32, i32) {
    %c0_i32 = arith.constant 0 : i32
    %c0_i32_0 = arith.constant 0 : i32
    %c0_i32_1 = arith.constant 0 : i32
    return %c0_i32, %c0_i32_0 : i32, i32
  }
  func.func @transform_3(%arg0: i32) -> (i32, i32) {
    %c0_i32 = arith.constant 0 : i32
    %c0_i32_0 = arith.constant 0 : i32
    %c0_i32_1 = arith.constant 0 : i32
    return %c0_i32, %c0_i32_0 : i32, i32
  }
  func.func @transform_4(%arg0: i32) -> (i32, i32) {
    %c0_i32 = arith.constant 0 : i32
    %c0_i32_0 = arith.constant 0 : i32
    %c0_i32_1 = arith.constant 0 : i32
    return %c0_i32, %c0_i32_0 : i32, i32
  }
  func.func @transform_5(%arg0: i32) -> (i32, i32) {
    %c0_i32 = arith.constant 0 : i32
    %c0_i32_0 = arith.constant 0 : i32
    %c0_i32_1 = arith.constant 0 : i32
    return %c0_i32, %c0_i32_0 : i32, i32
  }
  func.func @transform_6(%arg0: i32) -> (i32, i32) {
    %c0_i32 = arith.constant 0 : i32
    %c0_i32_0 = arith.constant 0 : i32
    %c0_i32_1 = arith.constant 0 : i32
    return %c0_i32, %c0_i32_0 : i32, i32
  }
  func.func @transform_7(%arg0: i32) -> (i32, i32, i32) {
    %c0_i32 = arith.constant 0 : i32
    %c0_i32_0 = arith.constant 0 : i32
    %c0_i32_1 = arith.constant 0 : i32
    %c0_i32_2 = arith.constant 0 : i32
    return %c0_i32, %c0_i32_0, %c0_i32_1 : i32, i32, i32
  }
  func.func @transform_8(%arg0: i32) -> (i32, i32, i32) {
    %c0_i32 = arith.constant 0 : i32
    %c0_i32_0 = arith.constant 0 : i32
    %c0_i32_1 = arith.constant 0 : i32
    %c0_i32_2 = arith.constant 0 : i32
    return %c0_i32, %c0_i32_0, %c0_i32_1 : i32, i32, i32
  }
  func.func @transform_9(%arg0: i32) -> (i32, i32, i32) {
    %c0_i32 = arith.constant 0 : i32
    %c0_i32_0 = arith.constant 0 : i32
    %c0_i32_1 = arith.constant 0 : i32
    %c0_i32_2 = arith.constant 0 : i32
    return %c0_i32, %c0_i32_0, %c0_i32_1 : i32, i32, i32
  }
  func.func @transform_10(%arg0: i32) -> (i32, i32, i32) {
    %c0_i32 = arith.constant 0 : i32
    %c0_i32_0 = arith.constant 0 : i32
    %c0_i32_1 = arith.constant 0 : i32
    %c0_i32_2 = arith.constant 0 : i32
    return %c0_i32, %c0_i32_0, %c0_i32_1 : i32, i32, i32
  }
  func.func @transform_11(%arg0: i32) -> (i32, i32, i32) {
    %c0_i32 = arith.constant 0 : i32
    %c0_i32_0 = arith.constant 0 : i32
    %c0_i32_1 = arith.constant 0 : i32
    %c0_i32_2 = arith.constant 0 : i32
    return %c0_i32, %c0_i32_0, %c0_i32_1 : i32, i32, i32
  }
  func.func @transform_12(%arg0: i32) -> (i32, i32, i32) {
    %c0_i32 = arith.constant 0 : i32
    %c0_i32_0 = arith.constant 0 : i32
    %c0_i32_1 = arith.constant 0 : i32
    %c0_i32_2 = arith.constant 0 : i32
    return %c0_i32, %c0_i32_0, %c0_i32_1 : i32, i32, i32
  }
  func.func @transform_13(%arg0: i32) -> (i32, i32, i32) {
    %c0_i32 = arith.constant 0 : i32
    %c0_i32_0 = arith.constant 0 : i32
    %c0_i32_1 = arith.constant 0 : i32
    %c0_i32_2 = arith.constant 0 : i32
    return %c0_i32, %c0_i32_0, %c0_i32_1 : i32, i32, i32
  }
  func.func @transform_14(%arg0: i32) -> (i32, i32, i32) {
    %c0_i32 = arith.constant 0 : i32
    %c0_i32_0 = arith.constant 0 : i32
    %c0_i32_1 = arith.constant 0 : i32
    %c0_i32_2 = arith.constant 0 : i32
    return %c0_i32, %c0_i32_0, %c0_i32_1 : i32, i32, i32
  }
  func.func @transform_15(%arg0: i32) -> (i32, i32, i32) {
    %c0_i32 = arith.constant 0 : i32
    %c0_i32_0 = arith.constant 0 : i32
    %c0_i32_1 = arith.constant 0 : i32
    %c0_i32_2 = arith.constant 0 : i32
    return %c0_i32, %c0_i32_0, %c0_i32_1 : i32, i32, i32
  }
  func.func @transform_16(%arg0: i32) -> (i32, i32, i32) {
    %c0_i32 = arith.constant 0 : i32
    %c0_i32_0 = arith.constant 0 : i32
    %c0_i32_1 = arith.constant 0 : i32
    %c0_i32_2 = arith.constant 0 : i32
    return %c0_i32, %c0_i32_0, %c0_i32_1 : i32, i32, i32
  }
  func.func @transform_17(%arg0: i32) -> (i32, i32, i32) {
    %c0_i32 = arith.constant 0 : i32
    %c0_i32_0 = arith.constant 0 : i32
    %c0_i32_1 = arith.constant 0 : i32
    %c0_i32_2 = arith.constant 0 : i32
    return %c0_i32, %c0_i32_0, %c0_i32_1 : i32, i32, i32
  }
  func.func @transform_18(%arg0: i32) -> (i32, i32, i32) {
    %c0_i32 = arith.constant 0 : i32
    %c0_i32_0 = arith.constant 0 : i32
    %c0_i32_1 = arith.constant 0 : i32
    %c0_i32_2 = arith.constant 0 : i32
    return %c0_i32, %c0_i32_0, %c0_i32_1 : i32, i32, i32
  }
  func.func @transform_19(%arg0: i32) -> (i32, i32) {
    %c0_i32 = arith.constant 0 : i32
    %c0_i32_0 = arith.constant 0 : i32
    %c0_i32_1 = arith.constant 0 : i32
    return %c0_i32, %c0_i32_0 : i32, i32
  }
  func.func @transform_20(%arg0: i32) -> (i32, i32) {
    %c0_i32 = arith.constant 0 : i32
    %c0_i32_0 = arith.constant 0 : i32
    %c0_i32_1 = arith.constant 0 : i32
    return %c0_i32, %c0_i32_0 : i32, i32
  }
  func.func @transform_21(%arg0: i32) -> (i32, i32) {
    %c0_i32 = arith.constant 0 : i32
    %c0_i32_0 = arith.constant 0 : i32
    %c0_i32_1 = arith.constant 0 : i32
    return %c0_i32, %c0_i32_0 : i32, i32
  }
  func.func @transform_22(%arg0: i32) -> (i32, i32) {
    %c0_i32 = arith.constant 0 : i32
    %c0_i32_0 = arith.constant 0 : i32
    %c0_i32_1 = arith.constant 0 : i32
    return %c0_i32, %c0_i32_0 : i32, i32
  }
  func.func @transform_23(%arg0: i32) -> (i32, i32) {
    %c0_i32 = arith.constant 0 : i32
    %c0_i32_0 = arith.constant 0 : i32
    %c0_i32_1 = arith.constant 0 : i32
    return %c0_i32, %c0_i32_0 : i32, i32
  }
  func.func @transform_24(%arg0: i32) -> (i32, i32, i32) {
    %c0_i32 = arith.constant 0 : i32
    %c0_i32_0 = arith.constant 0 : i32
    %c0_i32_1 = arith.constant 0 : i32
    %c0_i32_2 = arith.constant 0 : i32
    return %c0_i32, %c0_i32_0, %c0_i32_1 : i32, i32, i32
  }
  func.func @transform_25(%arg0: i32) -> (i32, i32, i32) {
    %c0_i32 = arith.constant 0 : i32
    %c0_i32_0 = arith.constant 0 : i32
    %c0_i32_1 = arith.constant 0 : i32
    %c0_i32_2 = arith.constant 0 : i32
    return %c0_i32, %c0_i32_0, %c0_i32_1 : i32, i32, i32
  }
  func.func @transform_26(%arg0: i32) -> (i32, i32, i32) {
    %c0_i32 = arith.constant 0 : i32
    %c0_i32_0 = arith.constant 0 : i32
    %c0_i32_1 = arith.constant 0 : i32
    %c0_i32_2 = arith.constant 0 : i32
    return %c0_i32, %c0_i32_0, %c0_i32_1 : i32, i32, i32
  }
  func.func @transform_27(%arg0: i32) -> (i32, i32, i32) {
    %c0_i32 = arith.constant 0 : i32
    %c0_i32_0 = arith.constant 0 : i32
    %c0_i32_1 = arith.constant 0 : i32
    %c0_i32_2 = arith.constant 0 : i32
    return %c0_i32, %c0_i32_0, %c0_i32_1 : i32, i32, i32
  }
  func.func @transform_28(%arg0: i32) -> (i32, i32, i32) {
    %c0_i32 = arith.constant 0 : i32
    %c0_i32_0 = arith.constant 0 : i32
    %c0_i32_1 = arith.constant 0 : i32
    %c0_i32_2 = arith.constant 0 : i32
    return %c0_i32, %c0_i32_0, %c0_i32_1 : i32, i32, i32
  }
  func.func @transform_29(%arg0: i32) -> (i32, i32, i32) {
    %c0_i32 = arith.constant 0 : i32
    %c0_i32_0 = arith.constant 0 : i32
    %c0_i32_1 = arith.constant 0 : i32
    %c0_i32_2 = arith.constant 0 : i32
    return %c0_i32, %c0_i32_0, %c0_i32_1 : i32, i32, i32
  }
  func.func @transform_30(%arg0: i32) -> (i32, i32, i32) {
    %c0_i32 = arith.constant 0 : i32
    %c0_i32_0 = arith.constant 0 : i32
    %c0_i32_1 = arith.constant 0 : i32
    %c0_i32_2 = arith.constant 0 : i32
    return %c0_i32, %c0_i32_0, %c0_i32_1 : i32, i32, i32
  }
  func.func @transform_31(%arg0: i32) -> (i32, i32, i32) {
    %c0_i32 = arith.constant 0 : i32
    %c0_i32_0 = arith.constant 0 : i32
    %c0_i32_1 = arith.constant 0 : i32
    %c0_i32_2 = arith.constant 0 : i32
    return %c0_i32, %c0_i32_0, %c0_i32_1 : i32, i32, i32
  }
  func.func @transform_32(%arg0: i32) -> (i32, i32, i32) {
    %c0_i32 = arith.constant 0 : i32
    %c0_i32_0 = arith.constant 0 : i32
    %c0_i32_1 = arith.constant 0 : i32
    %c0_i32_2 = arith.constant 0 : i32
    return %c0_i32, %c0_i32_0, %c0_i32_1 : i32, i32, i32
  }
  func.func @transform_33(%arg0: i32) -> (i32, i32, i32) {
    %c0_i32 = arith.constant 0 : i32
    %c0_i32_0 = arith.constant 0 : i32
    %c0_i32_1 = arith.constant 0 : i32
    %c0_i32_2 = arith.constant 0 : i32
    return %c0_i32, %c0_i32_0, %c0_i32_1 : i32, i32, i32
  }
  func.func @transform_34(%arg0: i32) -> (i32, i32, i32) {
    %c0_i32 = arith.constant 0 : i32
    %c0_i32_0 = arith.constant 0 : i32
    %c0_i32_1 = arith.constant 0 : i32
    %c0_i32_2 = arith.constant 0 : i32
    return %c0_i32, %c0_i32_0, %c0_i32_1 : i32, i32, i32
  }
  func.func @transform_35(%arg0: i32) -> (i32, i32, i32) {
    %c0_i32 = arith.constant 0 : i32
    %c0_i32_0 = arith.constant 0 : i32
    %c0_i32_1 = arith.constant 0 : i32
    %c0_i32_2 = arith.constant 0 : i32
    return %c0_i32, %c0_i32_0, %c0_i32_1 : i32, i32, i32
  }
  func.func @transform_36(%arg0: i32) -> (i32, i32) {
    %c0_i32 = arith.constant 0 : i32
    %c0_i32_0 = arith.constant 0 : i32
    %c0_i32_1 = arith.constant 0 : i32
    return %c0_i32, %c0_i32_0 : i32, i32
  }
  func.func @transform_37(%arg0: i32) -> (i32, i32) {
    %c0_i32 = arith.constant 0 : i32
    %c0_i32_0 = arith.constant 0 : i32
    %c0_i32_1 = arith.constant 0 : i32
    return %c0_i32, %c0_i32_0 : i32, i32
  }
  func.func @transform_38(%arg0: i32) -> (i32, i32) {
    %c0_i32 = arith.constant 0 : i32
    %c0_i32_0 = arith.constant 0 : i32
    %c0_i32_1 = arith.constant 0 : i32
    return %c0_i32, %c0_i32_0 : i32, i32
  }
  func.func @transform_39(%arg0: i32) -> (i32, i32, i32) {
    %c0_i32 = arith.constant 0 : i32
    %c0_i32_0 = arith.constant 0 : i32
    %c0_i32_1 = arith.constant 0 : i32
    return %arg0, %c0_i32, %c0_i32_0 : i32, i32, i32
  }
}

</mosaic_0001>

<llo_original>
// kernel: tpu_custom_call.1
$region0: #{tpu_custom_call.1}
  #allocation0 [shape = 'u32[]', space=smem, size = 0x4, offset = 0x4, fixed_abs, tag = 'smem constant byte address 0x4 - core index']
  #allocation1 [shape = 'u32[144,128]{1,0:T(1,128)}', space=vmem, size = 0x12000, scoped, tag = 'internal scratch']
  %s0 = inlined_call_operand.smem [shape: u32[40], index: -1, kind: input, shape index: {}]
  %s1 = sld [smem:[%s0]]
  %s2 = scalar_lea.smem %s0, 1
  %s3 = sld [smem:[%s2]]
  %s4 = scalar_lea.smem %s0, 2
  %s5 = sld [smem:[%s4]]
  %s6 = scalar_lea.smem %s0, 3
  %s7 = sld [smem:[%s6]]
  %s8 = scalar_lea.smem %s0, 4
  %s9 = sld [smem:[%s8]]
  %s10 = scalar_lea.smem %s0, 5
  %s11 = sld [smem:[%s10]]
  %s12 = scalar_lea.smem %s0, 6
  %s13 = sld [smem:[%s12]]
  %s14 = scalar_lea.smem %s0, 7
  %s15 = sld [smem:[%s14]]
  %s16 = scalar_lea.smem %s0, 8
  %s17 = sld [smem:[%s16]]
  %s18 = scalar_lea.smem %s0, 9
  %s19 = sld [smem:[%s18]]
  %s20 = scalar_lea.smem %s0, 10
  %s21 = sld [smem:[%s20]]
  %s22 = scalar_lea.smem %s0, 11
  %s23 = sld [smem:[%s22]]
  %s24 = scalar_lea.smem %s0, 12
  %s25 = sld [smem:[%s24]]
  %s26 = scalar_lea.smem %s0, 13
  %s27 = sld [smem:[%s26]]
  %s28 = scalar_lea.smem %s0, 14
  %s29 = sld [smem:[%s28]]
  %s30 = scalar_lea.smem %s0, 15
  %s31 = sld [smem:[%s30]]
  %s32 = scalar_lea.smem %s0, 16
  %s33 = sld [smem:[%s32]]
  %s34 = scalar_lea.smem %s0, 17
  %s35 = sld [smem:[%s34]]
  %s36 = scalar_lea.smem %s0, 18
  %s37 = sld [smem:[%s36]]
  %s38 = scalar_lea.smem %s0, 19
  %s39 = sld [smem:[%s38]]
  %s40 = scalar_lea.smem %s0, 20
  %s41 = sld [smem:[%s40]]
  %s42 = scalar_lea.smem %s0, 21
  %s43 = sld [smem:[%s42]]
  %s44 = scalar_lea.smem %s0, 22
  %s45 = sld [smem:[%s44]]
  %s46 = scalar_lea.smem %s0, 23
  %s47 = sld [smem:[%s46]]
  %s48 = scalar_lea.smem %s0, 24
  %s49 = sld [smem:[%s48]]
  %s50 = scalar_lea.smem %s0, 25
  %s51 = sld [smem:[%s50]]
  %s52 = scalar_lea.smem %s0, 26
  %s53 = sld [smem:[%s52]]
  %s54 = scalar_lea.smem %s0, 27
  %s55 = sld [smem:[%s54]]
  %s56 = scalar_lea.smem %s0, 28
  %s57 = sld [smem:[%s56]]
  %s58 = scalar_lea.smem %s0, 29
  %s59 = sld [smem:[%s58]]
  %s60 = scalar_lea.smem %s0, 30
  %s61 = sld [smem:[%s60]]
  %s62 = scalar_lea.smem %s0, 31
  %s63 = sld [smem:[%s62]]
  %s64 = scalar_lea.smem %s0, 32
  %s65 = sld [smem:[%s64]]
  %s66 = scalar_lea.smem %s0, 33
  %s67 = sld [smem:[%s66]]
  %s68 = scalar_lea.smem %s0, 34
  %s69 = sld [smem:[%s68]]
  %s70 = scalar_lea.smem %s0, 35
  %s71 = sld [smem:[%s70]]
  %s72 = scalar_lea.smem %s0, 36
  %s73 = sld [smem:[%s72]]
  %s74 = scalar_lea.smem %s0, 37
  %s75 = sld [smem:[%s74]]
  %s76 = scalar_lea.smem %s0, 38
  %s77 = sld [smem:[%s76]]
  %s78 = scalar_lea.smem %s0, 39
  %s79 = sld [smem:[%s78]]
  %s80 = sld [smem:[#allocation0]]
  $region289: #{tpu_custom_call.1} parent=0
    _
  %s82 = ssub.s32 1, %s80
  %s83 = scalar_select 0, %s82, %s80
  $region1: #{tpu_custom_call.1} parent=0
    #allocation2 [shape = 'u8[8192]{0}', space=vmem, size = 0x2000, scoped, tag = 'input window, operand 1, single buffered']
    #allocation3 [shape = 's32[2]{0}', space=sflag, size = 0x8, scoped, tag = 'scoped memory for tpu_custom_call.1']
    #allocation4 [shape = 's32[2]{0}', space=sflag, size = 0x8, scoped, tag = 'scoped memory for tpu_custom_call.1']
    #allocation5 [shape = 'u8[512]{0}', space=vmem, size = 0x400, scoped, tag = 'input window, operand 3, single buffered']
    #allocation6 [shape = 's32[1]{0}', space=sflag, size = 0x4, scoped, tag = 'scoped memory for tpu_custom_call.1']
    #allocation7 [shape = 'u8[4096]{0}', space=vmem, size = 0x1000, scoped, tag = 'input window, operand 4, single buffered']
    #allocation8 [shape = 'u8[512]{0}', space=vmem, size = 0x400, scoped, tag = 'input window, operand 5, single buffered']
    #allocation9 [shape = 's32[1]{0}', space=sflag, size = 0x4, scoped, tag = 'scoped memory for tpu_custom_call.1']
    #allocation10 [shape = 'u8[512]{0}', space=vmem, size = 0x400, scoped, tag = 'input window, operand 6, single buffered']
    #allocation11 [shape = 'u8[1024]{0}', space=vmem, size = 0x400, scoped, tag = 'input window, operand 8, single buffered']
    #allocation12 [shape = 's32[1]{0}', space=sflag, size = 0x4, scoped, tag = 'scoped memory for tpu_custom_call.1']
    #allocation13 [shape = 'u8[2048]{0}', space=vmem, size = 0x800, scoped, tag = 'input window, operand 10, single buffered']
    #allocation14 [shape = 'u8[1024]{0}', space=vmem, size = 0x400, scoped, tag = 'input window, operand 12, single buffered']
    #allocation15 [shape = 's32[1]{0}', space=sflag, size = 0x4, scoped, tag = 'scoped memory for tpu_custom_call.1']
    #allocation16 [shape = 'u8[1024]{0}', space=vmem, size = 0x400, scoped, tag = 'input window, operand 13, single buffered']
    #allocation17 [shape = 'u8[1024]{0}', space=vmem, size = 0x400, scoped, tag = 'input window, operand 14, single buffered']
    #allocation18 [shape = 's32[1]{0}', space=sflag, size = 0x4, scoped, tag = 'scoped memory for tpu_custom_call.1']
    #allocation19 [shape = 'u8[1024]{0}', space=vmem, size = 0x400, scoped, tag = 'input window, operand 16, single buffered']
    #allocation20 [shape = 'u8[1024]{0}', space=vmem, size = 0x400, scoped, tag = 'input window, operand 18, single buffered']
    #allocation21 [shape = 's32[1]{0}', space=sflag, size = 0x4, scoped, tag = 'scoped memory for tpu_custom_call.1']
    #allocation22 [shape = 'u8[512]{0}', space=vmem, size = 0x400, scoped, tag = 'input window, operand 19, single buffered']
    #allocation23 [shape = 'u8[512]{0}', space=vmem, size = 0x400, scoped, tag = 'input window, operand 20, single buffered']
    #allocation24 [shape = 's32[1]{0}', space=sflag, size = 0x4, scoped, tag = 'scoped memory for tpu_custom_call.1']
    #allocation25 [shape = 'u8[16384]{0}', space=vmem, size = 0x4000, scoped, tag = 'input window, operand 21, single buffered']
    #allocation26 [shape = 'u8[4096]{0}', space=vmem, size = 0x1000, scoped, tag = 'input window, operand 23, single buffered']
    #allocation27 [shape = 's32[1]{0}', space=sflag, size = 0x4, scoped, tag = 'scoped memory for tpu_custom_call.1']
    #allocation28 [shape = 'u8[1024]{0}', space=vmem, size = 0x400, scoped, tag = 'input window, operand 24, single buffered']
    #allocation29 [shape = 'u8[1024]{0}', space=vmem, size = 0x400, scoped, tag = 'input window, operand 25, single buffered']
    #allocation30 [shape = 's32[1]{0}', space=sflag, size = 0x4, scoped, tag = 'scoped memory for tpu_custom_call.1']
    #allocation31 [shape = 'u8[2048]{0}', space=vmem, size = 0x800, scoped, tag = 'input window, operand 27, single buffered']
    #allocation32 [shape = 'u8[1024]{0}', space=vmem, size = 0x400, scoped, tag = 'input window, operand 29, single buffered']
    #allocation33 [shape = 's32[1]{0}', space=sflag, size = 0x4, scoped, tag = 'scoped memory for tpu_custom_call.1']
    #allocation34 [shape = 'u8[1024]{0}', space=vmem, size = 0x400, scoped, tag = 'input window, operand 30, single buffered']
    #allocation35 [shape = 'u8[1024]{0}', space=vmem, size = 0x400, scoped, tag = 'input window, operand 31, single buffered']
    #allocation36 [shape = 's32[1]{0}', space=sflag, size = 0x4, scoped, tag = 'scoped memory for tpu_custom_call.1']
    #allocation37 [shape = 'u8[32768]{0}', space=vmem, size = 0x8000, scoped, tag = 'input window, operand 32, single buffered']
    #allocation38 [shape = 'u8[2048]{0}', space=vmem, size = 0x800, scoped, tag = 'output window, operand 0']
    %84 = vsyncpa [#allocation3], 0
    %85 = vsyncpa [#allocation6], 0
    %86 = vsyncpa [#allocation9], 0
    %87 = vsyncpa [#allocation12], 0
    %88 = vsyncpa [#allocation15], 0
    %89 = vsyncpa [#allocation18], 0
    %90 = vsyncpa [#allocation21], 0
    %91 = vsyncpa [#allocation24], 0
    %92 = vsyncpa [#allocation27], 0
    %93 = vsyncpa [#allocation30], 0
    %94 = vsyncpa [#allocation33], 0
    %95 = vsyncpa [#allocation36], 0
    %96 = vsyncpa [#allocation4], 0
    %s97 = scalar_lea.sflag [#allocation4], 1
    %98 = vsyncpa %s97, 0
    loop: start=0, step=1, limit=4
    $region2: #{tpu_custom_call.1} parent=1 // loop_pre_header
      _
    $region3: #{tpu_custom_call.1} parent=1 // loop_header
      %s100 = sphi 0, %s104
      %p101 = scmp.ge.s32.totalorder %s100, 4
      %s108 = sphi 0, %s108
      %s110 = sphi 0, %s108
      %s111 = sphi 0, %s110
      %s125 = sphi 0, %s111
      %s129 = sphi 0, %s129
      %s131 = sphi 0, %s129
      %s132 = sphi 0, %s131
      %s146 = sphi 0, %s132
      %s150 = sphi 0, %s150
      %s152 = sphi 0, %s150
      %s153 = sphi 0, %s152
      %s167 = sphi 0, %s153
      %s171 = sphi 0, %s171
      %s173 = sphi 0, %s171
      %s174 = sphi 0, %s173
      %s188 = sphi 0, %s174
      %s192 = sphi 0, %s192
      %s194 = sphi 0, %s192
      %s195 = sphi 0, %s194
      %s209 = sphi 0, %s195
      %s213 = sphi 0, %s213
      %s215 = sphi 0, %s213
      %s216 = sphi 0, %s215
      %s230 = sphi 0, %s216
      %s234 = sphi 0, %s234
      %s236 = sphi 0, %s234
      %s237 = sphi 0, %s236
      %s251 = sphi 0, %s237
      %s255 = sphi 0, %s255
      %s257 = sphi 0, %s255
      %s258 = sphi 0, %s257
      %s272 = sphi 0, %s258
      %s276 = sphi 0, %s276
      %s278 = sphi 0, %s276
      %s279 = sphi 0, %s278
      %s293 = sphi 0, %s279
      %s297 = sphi 0, %s297
      %s299 = sphi 0, %s297
      %s300 = sphi 0, %s299
      %s314 = sphi 0, %s300
      %s318 = sphi 0, %s318
      %s320 = sphi 0, %s318
      %s321 = sphi 0, %s320
      %s335 = sphi 0, %s321
      %s339 = sphi 0, %s339
      %s341 = sphi 0, %s339
      %s342 = sphi 0, %s341
      %s356 = sphi 0, %s342
      %s360 = sphi 0, %s360
      %s362 = sphi 0, %s360
      %s363 = sphi 0, %s362
      %s377 = sphi 0, %s363
      %s381 = sphi 0, %s381
      %s383 = sphi 0, %s381
      %s384 = sphi 0, %s383
      %s398 = sphi 0, %s384
      %s402 = sphi 0, %s402
      %s404 = sphi 0, %s402
      %s405 = sphi 0, %s404
      %s419 = sphi 0, %s405
      %s423 = sphi 0, %s423
      %s425 = sphi 0, %s423
      %s426 = sphi 0, %s425
      %s440 = sphi 0, %s426
      %s444 = sphi 0, %s444
      %s446 = sphi 0, %s444
      %s447 = sphi 0, %s446
      %s461 = sphi 0, %s447
      %s465 = sphi 0, %s465
      %s467 = sphi 0, %s465
      %s468 = sphi 0, %s467
      %s482 = sphi 0, %s468
      %s486 = sphi 0, %s486
      %s488 = sphi 0, %s486
      %s489 = sphi 0, %s488
      %s503 = sphi 0, %s489
      %s507 = sphi 0, %s507
      %s509 = sphi 0, %s507
      %s510 = sphi 0, %s509
      %s524 = sphi 0, %s510
      %s528 = sphi 0, %s528
      %s530 = sphi 0, %s528
      %s531 = sphi 0, %s530
      %s545 = sphi 0, %s531
      %s549 = sphi 0, %s549
      %s551 = sphi 0, %s549
      %s552 = sphi 0, %s551
      %s566 = sphi 0, %s552
      %s570 = sphi 0, %s570
      %s572 = sphi 0, %s570
      %s573 = sphi 0, %s572
      %s587 = sphi 0, %s573
      %s591 = sphi 0, %s591
      %s593 = sphi 0, %s591
      %s594 = sphi 0, %s593
      %s608 = sphi 0, %s594
      %s612 = sphi 0, %s612
      %s614 = sphi 0, %s612
      %s615 = sphi 0, %s614
      %s629 = sphi 0, %s615
      %s633 = sphi 0, %s633
      %s635 = sphi 0, %s633
      %s636 = sphi 0, %s635
      %s650 = sphi 0, %s636
      %s654 = sphi 0, %s654
      %s656 = sphi 0, %s654
      %s657 = sphi 0, %s656
      %s671 = sphi 0, %s657
      %s675 = sphi 0, %s675
      %s677 = sphi 0, %s675
      %s678 = sphi 0, %s677
      %s692 = sphi 0, %s678
      %s696 = sphi 0, %s696
      %s698 = sphi 0, %s696
      %s699 = sphi 0, %s698
      %s713 = sphi 0, %s699
      %s717 = sphi 0, %s717
      %s719 = sphi 0, %s717
      %s720 = sphi 0, %s719
      %s734 = sphi 0, %s720
      %s738 = sphi 0, %s738
      %s740 = sphi 0, %s738
      %s741 = sphi 0, %s740
      %s755 = sphi 0, %s741
      %s759 = sphi 0, %s759
      %s761 = sphi 0, %s759
      %s762 = sphi 0, %s761
      %s776 = sphi 0, %s762
      %s780 = sphi 0, %s780
      %s782 = sphi 0, %s780
      %s783 = sphi 0, %s782
      %s797 = sphi 0, %s783
      %s801 = sphi 0, %s801
      %s803 = sphi 0, %s801
      %s804 = sphi 0, %s803
      %s818 = sphi 0, %s804
      %s822 = sphi 0, %s822
      %s824 = sphi 0, %s822
      %s825 = sphi 0, %s824
      %s839 = sphi 0, %s825
      %s843 = sphi 0, %s843
      %s845 = sphi 0, %s843
      %s846 = sphi 0, %s845
      %s860 = sphi 0, %s846
      %s864 = sphi 0, %s864
      %s866 = sphi 0, %s864
      %s867 = sphi 0, %s866
      %s881 = sphi 0, %s867
      %s885 = sphi 0, %s885
      %s887 = sphi 0, %s885
      %s888 = sphi 0, %s887
      %s902 = sphi 0, %s888
      %s906 = sphi 0, %s906
      %s908 = sphi 0, %s906
      %s909 = sphi 0, %s908
      %s923 = sphi 0, %s909
      %s929 = sphi 0, %s931
      %s932 = sphi 0, %s929
      %s933 = sphi 0, %s932
      %s949 = sphi 0, %s933
    $region4: #{tpu_custom_call.1} parent=1 // loop_header_branch
      %103 = sbr.rel (%p101) target = $region8
    $region5: #{tpu_custom_call.1} parent=1 // loop_body
      %s105 = ssub.s32 %s100, 1
      %s106 = ssub.s32 %s100, 2
      %s107 = sadd.s32 %s100, 1
      %s109 = sadd.s32 %s108, 1
      %p112 = scmp.eq.s32.totalorder %s100, 1
      %p113 = scmp.ne.s32.totalorder %s108, %s110
      %p114 = scmp.eq.s32.totalorder %s100, 0
      %p115 = por %p113, %p114
      %p116 = scmp.ne.s32.totalorder %s108, %s110
      %p117 = scmp.eq.s32.totalorder %s105, 1
      %p118 = por %p116, %p117
      %p119 = scmp.ne.s32.totalorder %s110, %s111
      %p120 = scmp.eq.s32.totalorder %s105, 0
      %p121 = por %p119, %p120
      %p122 = scmp.ne.s32.totalorder %s110, %s111
      %p123 = scmp.eq.s32.totalorder %s106, 1
      %p124 = por %p122, %p123
      %p126 = scmp.ne.s32.totalorder %s111, %s125
      %p127 = scmp.eq.s32.totalorder %s106, 0
      %p128 = por %p126, %p127
      %s130 = sadd.s32 %s129, 1
      %p133 = scmp.eq.s32.totalorder %s100, 1
      %p134 = scmp.ne.s32.totalorder %s129, %s131
      %p135 = scmp.eq.s32.totalorder %s100, 0
      %p136 = por %p134, %p135
      %p137 = scmp.ne.s32.totalorder %s129, %s131
      %p138 = scmp.eq.s32.totalorder %s105, 1
      %p139 = por %p137, %p138
      %p140 = scmp.ne.s32.totalorder %s131, %s132
      %p141 = scmp.eq.s32.totalorder %s105, 0
      %p142 = por %p140, %p141
      %p143 = scmp.ne.s32.totalorder %s131, %s132
      %p144 = scmp.eq.s32.totalorder %s106, 1
      %p145 = por %p143, %p144
      %p147 = scmp.ne.s32.totalorder %s132, %s146
      %p148 = scmp.eq.s32.totalorder %s106, 0
      %p149 = por %p147, %p148
      %s151 = sadd.s32 %s150, 1
      %p154 = scmp.eq.s32.totalorder %s100, 1
      %p155 = scmp.ne.s32.totalorder %s150, %s152
      %p156 = scmp.eq.s32.totalorder %s100, 0
      %p157 = por %p155, %p156
      %p158 = scmp.ne.s32.totalorder %s150, %s152
      %p159 = scmp.eq.s32.totalorder %s105, 1
      %p160 = por %p158, %p159
      %p161 = scmp.ne.s32.totalorder %s152, %s153
      %p162 = scmp.eq.s32.totalorder %s105, 0
      %p163 = por %p161, %p162
      %p164 = scmp.ne.s32.totalorder %s152, %s153
      %p165 = scmp.eq.s32.totalorder %s106, 1
      %p166 = por %p164, %p165
      %p168 = scmp.ne.s32.totalorder %s153, %s167
      %p169 = scmp.eq.s32.totalorder %s106, 0
      %p170 = por %p168, %p169
      %s172 = sadd.s32 %s171, 1
      %p175 = scmp.eq.s32.totalorder %s100, 1
      %p176 = scmp.ne.s32.totalorder %s171, %s173
      %p177 = scmp.eq.s32.totalorder %s100, 0
      %p178 = por %p176, %p177
      %p179 = scmp.ne.s32.totalorder %s171, %s173
      %p180 = scmp.eq.s32.totalorder %s105, 1
      %p181 = por %p179, %p180
      %p182 = scmp.ne.s32.totalorder %s173, %s174
      %p183 = scmp.eq.s32.totalorder %s105, 0
      %p184 = por %p182, %p183
      %p185 = scmp.ne.s32.totalorder %s173, %s174
      %p186 = scmp.eq.s32.totalorder %s106, 1
      %p187 = por %p185, %p186
      %p189 = scmp.ne.s32.totalorder %s174, %s188
      %p190 = scmp.eq.s32.totalorder %s106, 0
      %p191 = por %p189, %p190
      %s193 = sadd.s32 %s192, 1
      %p196 = scmp.eq.s32.totalorder %s100, 1
      %p197 = scmp.ne.s32.totalorder %s192, %s194
      %p198 = scmp.eq.s32.totalorder %s100, 0
      %p199 = por %p197, %p198
      %p200 = scmp.ne.s32.totalorder %s192, %s194
      %p201 = scmp.eq.s32.totalorder %s105, 1
      %p202 = por %p200, %p201
      %p203 = scmp.ne.s32.totalorder %s194, %s195
      %p204 = scmp.eq.s32.totalorder %s105, 0
      %p205 = por %p203, %p204
      %p206 = scmp.ne.s32.totalorder %s194, %s195
      %p207 = scmp.eq.s32.totalorder %s106, 1
      %p208 = por %p206, %p207
      %p210 = scmp.ne.s32.totalorder %s195, %s209
      %p211 = scmp.eq.s32.totalorder %s106, 0
      %p212 = por %p210, %p211
      %s214 = sadd.s32 %s213, 1
      %p217 = scmp.eq.s32.totalorder %s100, 1
      %p218 = scmp.ne.s32.totalorder %s213, %s215
      %p219 = scmp.eq.s32.totalorder %s100, 0
      %p220 = por %p218, %p219
      %p221 = scmp.ne.s32.totalorder %s213, %s215
      %p222 = scmp.eq.s32.totalorder %s105, 1
      %p223 = por %p221, %p222
      %p224 = scmp.ne.s32.totalorder %s215, %s216
      %p225 = scmp.eq.s32.totalorder %s105, 0
      %p226 = por %p224, %p225
      %p227 = scmp.ne.s32.totalorder %s215, %s216
      %p228 = scmp.eq.s32.totalorder %s106, 1
      %p229 = por %p227, %p228
      %p231 = scmp.ne.s32.totalorder %s216, %s230
      %p232 = scmp.eq.s32.totalorder %s106, 0
      %p233 = por %p231, %p232
      %s235 = sadd.s32 %s234, 1
      %p238 = scmp.eq.s32.totalorder %s100, 1
      %p239 = scmp.ne.s32.totalorder %s234, %s236
      %p240 = scmp.eq.s32.totalorder %s100, 0
      %p241 = por %p239, %p240
      %p242 = scmp.ne.s32.totalorder %s234, %s236
      %p243 = scmp.eq.s32.totalorder %s105, 1
      %p244 = por %p242, %p243
      %p245 = scmp.ne.s32.totalorder %s236, %s237
      %p246 = scmp.eq.s32.totalorder %s105, 0
      %p247 = por %p245, %p246
      %p248 = scmp.ne.s32.totalorder %s236, %s237
      %p249 = scmp.eq.s32.totalorder %s106, 1
      %p250 = por %p248, %p249
      %p252 = scmp.ne.s32.totalorder %s237, %s251
      %p253 = scmp.eq.s32.totalorder %s106, 0
      %p254 = por %p252, %p253
      %s256 = sadd.s32 %s255, 1
      %p259 = scmp.eq.s32.totalorder %s100, 1
      %p260 = scmp.ne.s32.totalorder %s255, %s257
      %p261 = scmp.eq.s32.totalorder %s100, 0
      %p262 = por %p260, %p261
      %p263 = scmp.ne.s32.totalorder %s255, %s257
      %p264 = scmp.eq.s32.totalorder %s105, 1
      %p265 = por %p263, %p264
      %p266 = scmp.ne.s32.totalorder %s257, %s258
      %p267 = scmp.eq.s32.totalorder %s105, 0
      %p268 = por %p266, %p267
      %p269 = scmp.ne.s32.totalorder %s257, %s258
      %p270 = scmp.eq.s32.totalorder %s106, 1
      %p271 = por %p269, %p270
      %p273 = scmp.ne.s32.totalorder %s258, %s272
      %p274 = scmp.eq.s32.totalorder %s106, 0
      %p275 = por %p273, %p274
      %s277 = sadd.s32 %s276, 1
      %p280 = scmp.eq.s32.totalorder %s100, 1
      %p281 = scmp.ne.s32.totalorder %s276, %s278
      %p282 = scmp.eq.s32.totalorder %s100, 0
      %p283 = por %p281, %p282
      %p284 = scmp.ne.s32.totalorder %s276, %s278
      %p285 = scmp.eq.s32.totalorder %s105, 1
      %p286 = por %p284, %p285
      %p287 = scmp.ne.s32.totalorder %s278, %s279
      %p288 = scmp.eq.s32.totalorder %s105, 0
      %p289 = por %p287, %p288
      %p290 = scmp.ne.s32.totalorder %s278, %s279
      %p291 = scmp.eq.s32.totalorder %s106, 1
      %p292 = por %p290, %p291
      %p294 = scmp.ne.s32.totalorder %s279, %s293
      %p295 = scmp.eq.s32.totalorder %s106, 0
      %p296 = por %p294, %p295
      %s298 = sadd.s32 %s297, 1
      %p301 = scmp.eq.s32.totalorder %s100, 1
      %p302 = scmp.ne.s32.totalorder %s297, %s299
      %p303 = scmp.eq.s32.totalorder %s100, 0
      %p304 = por %p302, %p303
      %p305 = scmp.ne.s32.totalorder %s297, %s299
      %p306 = scmp.eq.s32.totalorder %s105, 1
      %p307 = por %p305, %p306
      %p308 = scmp.ne.s32.totalorder %s299, %s300
      %p309 = scmp.eq.s32.totalorder %s105, 0
      %p310 = por %p308, %p309
      %p311 = scmp.ne.s32.totalorder %s299, %s300
      %p312 = scmp.eq.s32.totalorder %s106, 1
      %p313 = por %p311, %p312
      %p315 = scmp.ne.s32.totalorder %s300, %s314
      %p316 = scmp.eq.s32.totalorder %s106, 0
      %p317 = por %p315, %p316
      %s319 = sadd.s32 %s318, 1
      %p322 = scmp.eq.s32.totalorder %s100, 1
      %p323 = scmp.ne.s32.totalorder %s318, %s320
      %p324 = scmp.eq.s32.totalorder %s100, 0
      %p325 = por %p323, %p324
      %p326 = scmp.ne.s32.totalorder %s318, %s320
      %p327 = scmp.eq.s32.totalorder %s105, 1
      %p328 = por %p326, %p327
      %p329 = scmp.ne.s32.totalorder %s320, %s321
      %p330 = scmp.eq.s32.totalorder %s105, 0
      %p331 = por %p329, %p330
      %p332 = scmp.ne.s32.totalorder %s320, %s321
      %p333 = scmp.eq.s32.totalorder %s106, 1
      %p334 = por %p332, %p333
      %p336 = scmp.ne.s32.totalorder %s321, %s335
      %p337 = scmp.eq.s32.totalorder %s106, 0
      %p338 = por %p336, %p337
      %s340 = sadd.s32 %s339, 1
      %p343 = scmp.eq.s32.totalorder %s100, 1
      %p344 = scmp.ne.s32.totalorder %s339, %s341
      %p345 = scmp.eq.s32.totalorder %s100, 0
      %p346 = por %p344, %p345
      %p347 = scmp.ne.s32.totalorder %s339, %s341
      %p348 = scmp.eq.s32.totalorder %s105, 1
      %p349 = por %p347, %p348
      %p350 = scmp.ne.s32.totalorder %s341, %s342
      %p351 = scmp.eq.s32.totalorder %s105, 0
      %p352 = por %p350, %p351
      %p353 = scmp.ne.s32.totalorder %s341, %s342
      %p354 = scmp.eq.s32.totalorder %s106, 1
      %p355 = por %p353, %p354
      %p357 = scmp.ne.s32.totalorder %s342, %s356
      %p358 = scmp.eq.s32.totalorder %s106, 0
      %p359 = por %p357, %p358
      %s361 = sadd.s32 %s360, 1
      %p364 = scmp.eq.s32.totalorder %s100, 1
      %p365 = scmp.ne.s32.totalorder %s360, %s362
      %p366 = scmp.eq.s32.totalorder %s100, 0
      %p367 = por %p365, %p366
      %p368 = scmp.ne.s32.totalorder %s360, %s362
      %p369 = scmp.eq.s32.totalorder %s105, 1
      %p370 = por %p368, %p369
      %p371 = scmp.ne.s32.totalorder %s362, %s363
      %p372 = scmp.eq.s32.totalorder %s105, 0
      %p373 = por %p371, %p372
      %p374 = scmp.ne.s32.totalorder %s362, %s363
      %p375 = scmp.eq.s32.totalorder %s106, 1
      %p376 = por %p374, %p375
      %p378 = scmp.ne.s32.totalorder %s363, %s377
      %p379 = scmp.eq.s32.totalorder %s106, 0
      %p380 = por %p378, %p379
      %s382 = sadd.s32 %s381, 1
      %p385 = scmp.eq.s32.totalorder %s100, 1
      %p386 = scmp.ne.s32.totalorder %s381, %s383
      %p387 = scmp.eq.s32.totalorder %s100, 0
      %p388 = por %p386, %p387
      %p389 = scmp.ne.s32.totalorder %s381, %s383
      %p390 = scmp.eq.s32.totalorder %s105, 1
      %p391 = por %p389, %p390
      %p392 = scmp.ne.s32.totalorder %s383, %s384
      %p393 = scmp.eq.s32.totalorder %s105, 0
      %p394 = por %p392, %p393
      %p395 = scmp.ne.s32.totalorder %s383, %s384
      %p396 = scmp.eq.s32.totalorder %s106, 1
      %p397 = por %p395, %p396
      %p399 = scmp.ne.s32.totalorder %s384, %s398
      %p400 = scmp.eq.s32.totalorder %s106, 0
      %p401 = por %p399, %p400
      %s403 = sadd.s32 %s402, 1
      %p406 = scmp.eq.s32.totalorder %s100, 1
      %p407 = scmp.ne.s32.totalorder %s402, %s404
      %p408 = scmp.eq.s32.totalorder %s100, 0
      %p409 = por %p407, %p408
      %p410 = scmp.ne.s32.totalorder %s402, %s404
      %p411 = scmp.eq.s32.totalorder %s105, 1
      %p412 = por %p410, %p411
      %p413 = scmp.ne.s32.totalorder %s404, %s405
      %p414 = scmp.eq.s32.totalorder %s105, 0
      %p415 = por %p413, %p414
      %p416 = scmp.ne.s32.totalorder %s404, %s405
      %p417 = scmp.eq.s32.totalorder %s106, 1
      %p418 = por %p416, %p417
      %p420 = scmp.ne.s32.totalorder %s405, %s419
      %p421 = scmp.eq.s32.totalorder %s106, 0
      %p422 = por %p420, %p421
      %s424 = sadd.s32 %s423, 1
      %p427 = scmp.eq.s32.totalorder %s100, 1
      %p428 = scmp.ne.s32.totalorder %s423, %s425
      %p429 = scmp.eq.s32.totalorder %s100, 0
      %p430 = por %p428, %p429
      %p431 = scmp.ne.s32.totalorder %s423, %s425
      %p432 = scmp.eq.s32.totalorder %s105, 1
      %p433 = por %p431, %p432
      %p434 = scmp.ne.s32.totalorder %s425, %s426
      %p435 = scmp.eq.s32.totalorder %s105, 0
      %p436 = por %p434, %p435
      %p437 = scmp.ne.s32.totalorder %s425, %s426
      %p438 = scmp.eq.s32.totalorder %s106, 1
      %p439 = por %p437, %p438
      %p441 = scmp.ne.s32.totalorder %s426, %s440
      %p442 = scmp.eq.s32.totalorder %s106, 0
      %p443 = por %p441, %p442
      %s445 = sadd.s32 %s444, 1
      %p448 = scmp.eq.s32.totalorder %s100, 1
      %p449 = scmp.ne.s32.totalorder %s444, %s446
      %p450 = scmp.eq.s32.totalorder %s100, 0
      %p451 = por %p449, %p450
      %p452 = scmp.ne.s32.totalorder %s444, %s446
      %p453 = scmp.eq.s32.totalorder %s105, 1
      %p454 = por %p452, %p453
      %p455 = scmp.ne.s32.totalorder %s446, %s447
      %p456 = scmp.eq.s32.totalorder %s105, 0
      %p457 = por %p455, %p456
      %p458 = scmp.ne.s32.totalorder %s446, %s447
      %p459 = scmp.eq.s32.totalorder %s106, 1
      %p460 = por %p458, %p459
      %p462 = scmp.ne.s32.totalorder %s447, %s461
      %p463 = scmp.eq.s32.totalorder %s106, 0
      %p464 = por %p462, %p463
      %s466 = sadd.s32 %s465, 1
      %p469 = scmp.eq.s32.totalorder %s100, 1
      %p470 = scmp.ne.s32.totalorder %s465, %s467
      %p471 = scmp.eq.s32.totalorder %s100, 0
      %p472 = por %p470, %p471
      %p473 = scmp.ne.s32.totalorder %s465, %s467
      %p474 = scmp.eq.s32.totalorder %s105, 1
      %p475 = por %p473, %p474
      %p476 = scmp.ne.s32.totalorder %s467, %s468
      %p477 = scmp.eq.s32.totalorder %s105, 0
      %p478 = por %p476, %p477
      %p479 = scmp.ne.s32.totalorder %s467, %s468
      %p480 = scmp.eq.s32.totalorder %s106, 1
      %p481 = por %p479, %p480
      %p483 = scmp.ne.s32.totalorder %s468, %s482
      %p484 = scmp.eq.s32.totalorder %s106, 0
      %p485 = por %p483, %p484
      %s487 = sadd.s32 %s486, 1
      %p490 = scmp.eq.s32.totalorder %s100, 1
      %p491 = scmp.ne.s32.totalorder %s486, %s488
      %p492 = scmp.eq.s32.totalorder %s100, 0
      %p493 = por %p491, %p492
      %p494 = scmp.ne.s32.totalorder %s486, %s488
      %p495 = scmp.eq.s32.totalorder %s105, 1
      %p496 = por %p494, %p495
      %p497 = scmp.ne.s32.totalorder %s488, %s489
      %p498 = scmp.eq.s32.totalorder %s105, 0
      %p499 = por %p497, %p498
      %p500 = scmp.ne.s32.totalorder %s488, %s489
      %p501 = scmp.eq.s32.totalorder %s106, 1
      %p502 = por %p500, %p501
      %p504 = scmp.ne.s32.totalorder %s489, %s503
      %p505 = scmp.eq.s32.totalorder %s106, 0
      %p506 = por %p504, %p505
      %s508 = sadd.s32 %s507, 1
      %p511 = scmp.eq.s32.totalorder %s100, 1
      %p512 = scmp.ne.s32.totalorder %s507, %s509
      %p513 = scmp.eq.s32.totalorder %s100, 0
      %p514 = por %p512, %p513
      %p515 = scmp.ne.s32.totalorder %s507, %s509
      %p516 = scmp.eq.s32.totalorder %s105, 1
      %p517 = por %p515, %p516
      %p518 = scmp.ne.s32.totalorder %s509, %s510
      %p519 = scmp.eq.s32.totalorder %s105, 0
      %p520 = por %p518, %p519
      %p521 = scmp.ne.s32.totalorder %s509, %s510
      %p522 = scmp.eq.s32.totalorder %s106, 1
      %p523 = por %p521, %p522
      %p525 = scmp.ne.s32.totalorder %s510, %s524
      %p526 = scmp.eq.s32.totalorder %s106, 0
      %p527 = por %p525, %p526
      %s529 = sadd.s32 %s528, 1
      %p532 = scmp.eq.s32.totalorder %s100, 1
      %p533 = scmp.ne.s32.totalorder %s528, %s530
      %p534 = scmp.eq.s32.totalorder %s100, 0
      %p535 = por %p533, %p534
      %p536 = scmp.ne.s32.totalorder %s528, %s530
      %p537 = scmp.eq.s32.totalorder %s105, 1
      %p538 = por %p536, %p537
      %p539 = scmp.ne.s32.totalorder %s530, %s531
      %p540 = scmp.eq.s32.totalorder %s105, 0
      %p541 = por %p539, %p540
      %p542 = scmp.ne.s32.totalorder %s530, %s531
      %p543 = scmp.eq.s32.totalorder %s106, 1
      %p544 = por %p542, %p543
      %p546 = scmp.ne.s32.totalorder %s531, %s545
      %p547 = scmp.eq.s32.totalorder %s106, 0
      %p548 = por %p546, %p547
      %s550 = sadd.s32 %s549, 1
      %p553 = scmp.eq.s32.totalorder %s100, 1
      %p554 = scmp.ne.s32.totalorder %s549, %s551
      %p555 = scmp.eq.s32.totalorder %s100, 0
      %p556 = por %p554, %p555
      %p557 = scmp.ne.s32.totalorder %s549, %s551
      %p558 = scmp.eq.s32.totalorder %s105, 1
      %p559 = por %p557, %p558
      %p560 = scmp.ne.s32.totalorder %s551, %s552
      %p561 = scmp.eq.s32.totalorder %s105, 0
      %p562 = por %p560, %p561
      %p563 = scmp.ne.s32.totalorder %s551, %s552
      %p564 = scmp.eq.s32.totalorder %s106, 1
      %p565 = por %p563, %p564
      %p567 = scmp.ne.s32.totalorder %s552, %s566
      %p568 = scmp.eq.s32.totalorder %s106, 0
      %p569 = por %p567, %p568
      %s571 = sadd.s32 %s570, 1
      %p574 = scmp.eq.s32.totalorder %s100, 1
      %p575 = scmp.ne.s32.totalorder %s570, %s572
      %p576 = scmp.eq.s32.totalorder %s100, 0
      %p577 = por %p575, %p576
      %p578 = scmp.ne.s32.totalorder %s570, %s572
      %p579 = scmp.eq.s32.totalorder %s105, 1
      %p580 = por %p578, %p579
      %p581 = scmp.ne.s32.totalorder %s572, %s573
      %p582 = scmp.eq.s32.totalorder %s105, 0
      %p583 = por %p581, %p582
      %p584 = scmp.ne.s32.totalorder %s572, %s573
      %p585 = scmp.eq.s32.totalorder %s106, 1
      %p586 = por %p584, %p585
      %p588 = scmp.ne.s32.totalorder %s573, %s587
      %p589 = scmp.eq.s32.totalorder %s106, 0
      %p590 = por %p588, %p589
      %s592 = sadd.s32 %s591, 1
      %p595 = scmp.eq.s32.totalorder %s100, 1
      %p596 = scmp.ne.s32.totalorder %s591, %s593
      %p597 = scmp.eq.s32.totalorder %s100, 0
      %p598 = por %p596, %p597
      %p599 = scmp.ne.s32.totalorder %s591, %s593
      %p600 = scmp.eq.s32.totalorder %s105, 1
      %p601 = por %p599, %p600
      %p602 = scmp.ne.s32.totalorder %s593, %s594
      %p603 = scmp.eq.s32.totalorder %s105, 0
      %p604 = por %p602, %p603
      %p605 = scmp.ne.s32.totalorder %s593, %s594
      %p606 = scmp.eq.s32.totalorder %s106, 1
      %p607 = por %p605, %p606
      %p609 = scmp.ne.s32.totalorder %s594, %s608
      %p610 = scmp.eq.s32.totalorder %s106, 0
      %p611 = por %p609, %p610
      %s613 = sadd.s32 %s612, 1
      %p616 = scmp.eq.s32.totalorder %s100, 1
      %p617 = scmp.ne.s32.totalorder %s612, %s614
      %p618 = scmp.eq.s32.totalorder %s100, 0
      %p619 = por %p617, %p618
      %p620 = scmp.ne.s32.totalorder %s612, %s614
      %p621 = scmp.eq.s32.totalorder %s105, 1
      %p622 = por %p620, %p621
      %p623 = scmp.ne.s32.totalorder %s614, %s615
      %p624 = scmp.eq.s32.totalorder %s105, 0
      %p625 = por %p623, %p624
      %p626 = scmp.ne.s32.totalorder %s614, %s615
      %p627 = scmp.eq.s32.totalorder %s106, 1
      %p628 = por %p626, %p627
      %p630 = scmp.ne.s32.totalorder %s615, %s629
      %p631 = scmp.eq.s32.totalorder %s106, 0
      %p632 = por %p630, %p631
      %s634 = sadd.s32 %s633, 1
      %p637 = scmp.eq.s32.totalorder %s100, 1
      %p638 = scmp.ne.s32.totalorder %s633, %s635
      %p639 = scmp.eq.s32.totalorder %s100, 0
      %p640 = por %p638, %p639
      %p641 = scmp.ne.s32.totalorder %s633, %s635
      %p642 = scmp.eq.s32.totalorder %s105, 1
      %p643 = por %p641, %p642
      %p644 = scmp.ne.s32.totalorder %s635, %s636
      %p645 = scmp.eq.s32.totalorder %s105, 0
      %p646 = por %p644, %p645
      %p647 = scmp.ne.s32.totalorder %s635, %s636
      %p648 = scmp.eq.s32.totalorder %s106, 1
      %p649 = por %p647, %p648
      %p651 = scmp.ne.s32.totalorder %s636, %s650
      %p652 = scmp.eq.s32.totalorder %s106, 0
      %p653 = por %p651, %p652
      %s655 = sadd.s32 %s654, 1
      %p658 = scmp.eq.s32.totalorder %s100, 1
      %p659 = scmp.ne.s32.totalorder %s654, %s656
      %p660 = scmp.eq.s32.totalorder %s100, 0
      %p661 = por %p659, %p660
      %p662 = scmp.ne.s32.totalorder %s654, %s656
      %p663 = scmp.eq.s32.totalorder %s105, 1
      %p664 = por %p662, %p663
      %p665 = scmp.ne.s32.totalorder %s656, %s657
      %p666 = scmp.eq.s32.totalorder %s105, 0
      %p667 = por %p665, %p666
      %p668 = scmp.ne.s32.totalorder %s656, %s657
      %p669 = scmp.eq.s32.totalorder %s106, 1
      %p670 = por %p668, %p669
      %p672 = scmp.ne.s32.totalorder %s657, %s671
      %p673 = scmp.eq.s32.totalorder %s106, 0
      %p674 = por %p672, %p673
      %s676 = sadd.s32 %s675, 1
      %p679 = scmp.eq.s32.totalorder %s100, 1
      %p680 = scmp.ne.s32.totalorder %s675, %s677
      %p681 = scmp.eq.s32.totalorder %s100, 0
      %p682 = por %p680, %p681
      %p683 = scmp.ne.s32.totalorder %s675, %s677
      %p684 = scmp.eq.s32.totalorder %s105, 1
      %p685 = por %p683, %p684
      %p686 = scmp.ne.s32.totalorder %s677, %s678
      %p687 = scmp.eq.s32.totalorder %s105, 0
      %p688 = por %p686, %p687
      %p689 = scmp.ne.s32.totalorder %s677, %s678
      %p690 = scmp.eq.s32.totalorder %s106, 1
      %p691 = por %p689, %p690
      %p693 = scmp.ne.s32.totalorder %s678, %s692
      %p694 = scmp.eq.s32.totalorder %s106, 0
      %p695 = por %p693, %p694
      %s697 = sadd.s32 %s696, 1
      %p700 = scmp.eq.s32.totalorder %s100, 1
      %p701 = scmp.ne.s32.totalorder %s696, %s698
      %p702 = scmp.eq.s32.totalorder %s100, 0
      %p703 = por %p701, %p702
      %p704 = scmp.ne.s32.totalorder %s696, %s698
      %p705 = scmp.eq.s32.totalorder %s105, 1
      %p706 = por %p704, %p705
      %p707 = scmp.ne.s32.totalorder %s698, %s699
      %p708 = scmp.eq.s32.totalorder %s105, 0
      %p709 = por %p707, %p708
      %p710 = scmp.ne.s32.totalorder %s698, %s699
      %p711 = scmp.eq.s32.totalorder %s106, 1
      %p712 = por %p710, %p711
      %p714 = scmp.ne.s32.totalorder %s699, %s713
      %p715 = scmp.eq.s32.totalorder %s106, 0
      %p716 = por %p714, %p715
      %s718 = sadd.s32 %s717, 1
      %p721 = scmp.eq.s32.totalorder %s100, 1
      %p722 = scmp.ne.s32.totalorder %s717, %s719
      %p723 = scmp.eq.s32.totalorder %s100, 0
      %p724 = por %p722, %p723
      %p725 = scmp.ne.s32.totalorder %s717, %s719
      %p726 = scmp.eq.s32.totalorder %s105, 1
      %p727 = por %p725, %p726
      %p728 = scmp.ne.s32.totalorder %s719, %s720
      %p729 = scmp.eq.s32.totalorder %s105, 0
      %p730 = por %p728, %p729
      %p731 = scmp.ne.s32.totalorder %s719, %s720
      %p732 = scmp.eq.s32.totalorder %s106, 1
      %p733 = por %p731, %p732
      %p735 = scmp.ne.s32.totalorder %s720, %s734
      %p736 = scmp.eq.s32.totalorder %s106, 0
      %p737 = por %p735, %p736
      %s739 = sadd.s32 %s738, 1
      %p742 = scmp.eq.s32.totalorder %s100, 1
      %p743 = scmp.ne.s32.totalorder %s738, %s740
      %p744 = scmp.eq.s32.totalorder %s100, 0
      %p745 = por %p743, %p744
      %p746 = scmp.ne.s32.totalorder %s738, %s740
      %p747 = scmp.eq.s32.totalorder %s105, 1
      %p748 = por %p746, %p747
      %p749 = scmp.ne.s32.totalorder %s740, %s741
      %p750 = scmp.eq.s32.totalorder %s105, 0
      %p751 = por %p749, %p750
      %p752 = scmp.ne.s32.totalorder %s740, %s741
      %p753 = scmp.eq.s32.totalorder %s106, 1
      %p754 = por %p752, %p753
      %p756 = scmp.ne.s32.totalorder %s741, %s755
      %p757 = scmp.eq.s32.totalorder %s106, 0
      %p758 = por %p756, %p757
      %s760 = sadd.s32 %s759, 1
      %p763 = scmp.eq.s32.totalorder %s100, 1
      %p764 = scmp.ne.s32.totalorder %s759, %s761
      %p765 = scmp.eq.s32.totalorder %s100, 0
      %p766 = por %p764, %p765
      %p767 = scmp.ne.s32.totalorder %s759, %s761
      %p768 = scmp.eq.s32.totalorder %s105, 1
      %p769 = por %p767, %p768
      %p770 = scmp.ne.s32.totalorder %s761, %s762
      %p771 = scmp.eq.s32.totalorder %s105, 0
      %p772 = por %p770, %p771
      %p773 = scmp.ne.s32.totalorder %s761, %s762
      %p774 = scmp.eq.s32.totalorder %s106, 1
      %p775 = por %p773, %p774
      %p777 = scmp.ne.s32.totalorder %s762, %s776
      %p778 = scmp.eq.s32.totalorder %s106, 0
      %p779 = por %p777, %p778
      %s781 = sadd.s32 %s780, 1
      %p784 = scmp.eq.s32.totalorder %s100, 1
      %p785 = scmp.ne.s32.totalorder %s780, %s782
      %p786 = scmp.eq.s32.totalorder %s100, 0
      %p787 = por %p785, %p786
      %p788 = scmp.ne.s32.totalorder %s780, %s782
      %p789 = scmp.eq.s32.totalorder %s105, 1
      %p790 = por %p788, %p789
      %p791 = scmp.ne.s32.totalorder %s782, %s783
      %p792 = scmp.eq.s32.totalorder %s105, 0
      %p793 = por %p791, %p792
      %p794 = scmp.ne.s32.totalorder %s782, %s783
      %p795 = scmp.eq.s32.totalorder %s106, 1
      %p796 = por %p794, %p795
      %p798 = scmp.ne.s32.totalorder %s783, %s797
      %p799 = scmp.eq.s32.totalorder %s106, 0
      %p800 = por %p798, %p799
      %s802 = sadd.s32 %s801, 1
      %p805 = scmp.eq.s32.totalorder %s100, 1
      %p806 = scmp.ne.s32.totalorder %s801, %s803
      %p807 = scmp.eq.s32.totalorder %s100, 0
      %p808 = por %p806, %p807
      %p809 = scmp.ne.s32.totalorder %s801, %s803
      %p810 = scmp.eq.s32.totalorder %s105, 1
      %p811 = por %p809, %p810
      %p812 = scmp.ne.s32.totalorder %s803, %s804
      %p813 = scmp.eq.s32.totalorder %s105, 0
      %p814 = por %p812, %p813
      %p815 = scmp.ne.s32.totalorder %s803, %s804
      %p816 = scmp.eq.s32.totalorder %s106, 1
      %p817 = por %p815, %p816
      %p819 = scmp.ne.s32.totalorder %s804, %s818
      %p820 = scmp.eq.s32.totalorder %s106, 0
      %p821 = por %p819, %p820
      %s823 = sadd.s32 %s822, 1
      %p826 = scmp.eq.s32.totalorder %s100, 1
      %p827 = scmp.ne.s32.totalorder %s822, %s824
      %p828 = scmp.eq.s32.totalorder %s100, 0
      %p829 = por %p827, %p828
      %p830 = scmp.ne.s32.totalorder %s822, %s824
      %p831 = scmp.eq.s32.totalorder %s105, 1
      %p832 = por %p830, %p831
      %p833 = scmp.ne.s32.totalorder %s824, %s825
      %p834 = scmp.eq.s32.totalorder %s105, 0
      %p835 = por %p833, %p834
      %p836 = scmp.ne.s32.totalorder %s824, %s825
      %p837 = scmp.eq.s32.totalorder %s106, 1
      %p838 = por %p836, %p837
      %p840 = scmp.ne.s32.totalorder %s825, %s839
      %p841 = scmp.eq.s32.totalorder %s106, 0
      %p842 = por %p840, %p841
      %s844 = sadd.s32 %s843, 1
      %p847 = scmp.eq.s32.totalorder %s100, 1
      %p848 = scmp.ne.s32.totalorder %s843, %s845
      %p849 = scmp.eq.s32.totalorder %s100, 0
      %p850 = por %p848, %p849
      %p851 = scmp.ne.s32.totalorder %s843, %s845
      %p852 = scmp.eq.s32.totalorder %s105, 1
      %p853 = por %p851, %p852
      %p854 = scmp.ne.s32.totalorder %s845, %s846
      %p855 = scmp.eq.s32.totalorder %s105, 0
      %p856 = por %p854, %p855
      %p857 = scmp.ne.s32.totalorder %s845, %s846
      %p858 = scmp.eq.s32.totalorder %s106, 1
      %p859 = por %p857, %p858
      %p861 = scmp.ne.s32.totalorder %s846, %s860
      %p862 = scmp.eq.s32.totalorder %s106, 0
      %p863 = por %p861, %p862
      %s865 = sadd.s32 %s864, 1
      %p868 = scmp.eq.s32.totalorder %s100, 1
      %p869 = scmp.ne.s32.totalorder %s864, %s866
      %p870 = scmp.eq.s32.totalorder %s100, 0
      %p871 = por %p869, %p870
      %p872 = scmp.ne.s32.totalorder %s864, %s866
      %p873 = scmp.eq.s32.totalorder %s105, 1
      %p874 = por %p872, %p873
      %p875 = scmp.ne.s32.totalorder %s866, %s867
      %p876 = scmp.eq.s32.totalorder %s105, 0
      %p877 = por %p875, %p876
      %p878 = scmp.ne.s32.totalorder %s866, %s867
      %p879 = scmp.eq.s32.totalorder %s106, 1
      %p880 = por %p878, %p879
      %p882 = scmp.ne.s32.totalorder %s867, %s881
      %p883 = scmp.eq.s32.totalorder %s106, 0
      %p884 = por %p882, %p883
      %s886 = sadd.s32 %s885, 1
      %p889 = scmp.eq.s32.totalorder %s100, 1
      %p890 = scmp.ne.s32.totalorder %s885, %s887
      %p891 = scmp.eq.s32.totalorder %s100, 0
      %p892 = por %p890, %p891
      %p893 = scmp.ne.s32.totalorder %s885, %s887
      %p894 = scmp.eq.s32.totalorder %s105, 1
      %p895 = por %p893, %p894
      %p896 = scmp.ne.s32.totalorder %s887, %s888
      %p897 = scmp.eq.s32.totalorder %s105, 0
      %p898 = por %p896, %p897
      %p899 = scmp.ne.s32.totalorder %s887, %s888
      %p900 = scmp.eq.s32.totalorder %s106, 1
      %p901 = por %p899, %p900
      %p903 = scmp.ne.s32.totalorder %s888, %s902
      %p904 = scmp.eq.s32.totalorder %s106, 0
      %p905 = por %p903, %p904
      %s907 = sadd.s32 %s906, 1
      %p910 = scmp.eq.s32.totalorder %s100, 1
      %p911 = scmp.ne.s32.totalorder %s906, %s908
      %p912 = scmp.eq.s32.totalorder %s100, 0
      %p913 = por %p911, %p912
      %p914 = scmp.ne.s32.totalorder %s906, %s908
      %p915 = scmp.eq.s32.totalorder %s105, 1
      %p916 = por %p914, %p915
      %p917 = scmp.ne.s32.totalorder %s908, %s909
      %p918 = scmp.eq.s32.totalorder %s105, 0
      %p919 = por %p917, %p918
      %p920 = scmp.ne.s32.totalorder %s908, %s909
      %p921 = scmp.eq.s32.totalorder %s106, 1
      %p922 = por %p920, %p921
      %p924 = scmp.ne.s32.totalorder %s909, %s923
      %p925 = scmp.eq.s32.totalorder %s106, 0
      %p926 = por %p924, %p925
      %s927 = ssub.s32 %s100, %s107
      %p928 = scmp.eq.s32.totalorder %s927, 0
      %s930 = sadd.s32 %s929, 1
      %s931 = scalar_select %p928, %s929, %s930
      %p934 = pneg %p928
      %p935 = scmp.eq.s32.totalorder %s100, 1
      %p936 = por %p934, %p935
      %p937 = scmp.ne.s32.totalorder %s929, %s932
      %p938 = scmp.eq.s32.totalorder %s100, 0
      %p939 = por %p937, %p938
      %p940 = scmp.ne.s32.totalorder %s929, %s932
      %p941 = scmp.eq.s32.totalorder %s105, 1
      %p942 = por %p940, %p941
      %p943 = scmp.ne.s32.totalorder %s932, %s933
      %p944 = scmp.eq.s32.totalorder %s105, 0
      %p945 = por %p943, %p944
      %p946 = scmp.ne.s32.totalorder %s932, %s933
      %p947 = scmp.eq.s32.totalorder %s106, 1
      %p948 = por %p946, %p947
      %p950 = scmp.ne.s32.totalorder %s933, %s949
      %p951 = scmp.eq.s32.totalorder %s106, 0
      %p952 = por %p950, %p951
      %p953 = scmp.le.s32.totalorder 1, %s100
      %p954 = scmp.lt.s32.totalorder %s100, 3
      %p955 = pnand %p953, %p954
      %p956 = pneg %p955
      // Predicated region
      $region9: #{tpu_custom_call.1} parent=5 // pred_check
        _
      $region10: #{tpu_custom_call.1} parent=5 // pred_check_branch
        %958 = sbr.rel (%p955) target = $region12
      $region11: #{tpu_custom_call.1} parent=5 // pred_region
        %s959 = ssub.s32 %s100, 1
        // Predicated region
        $region13: #{tpu_custom_call.1} parent=11 // pred_check
          %p960 = pneg %p121
        $region14: #{tpu_custom_call.1} parent=11 // pred_check_branch
          %962 = sbr.rel (%p960) target = $region16
        $region15: #{tpu_custom_call.1} parent=11 // pred_region
          _
        $region16: #{tpu_custom_call.1} parent=11 // pred_fallthru
          _
        // Predicated region
        $region17: #{tpu_custom_call.1} parent=11 // pred_check
          %p963 = pneg %p142
        $region18: #{tpu_custom_call.1} parent=11 // pred_check_branch
          %965 = sbr.rel (%p963) target = $region20
        $region19: #{tpu_custom_call.1} parent=11 // pred_region
          %s967 = ssub.s32 256, 256
          %968 = vsyncadd [#allocation3], %s967
          %s970 = sshll.u32 [#allocation2], 4
          %s971 = int_to_ptr.vmem [resolvable:$true] %s970
          %973 = dma.hbm_to_vmem [thread:$0]  %s3, 256, %s971, [#allocation3]
        $region20: #{tpu_custom_call.1} parent=11 // pred_fallthru
          _
        // Predicated region
        $region21: #{tpu_custom_call.1} parent=11 // pred_check
          %p974 = pneg %p163
        $region22: #{tpu_custom_call.1} parent=11 // pred_check_branch
          %976 = sbr.rel (%p974) target = $region24
        $region23: #{tpu_custom_call.1} parent=11 // pred_region
          _
        $region24: #{tpu_custom_call.1} parent=11 // pred_fallthru
          _
        // Predicated region
        $region25: #{tpu_custom_call.1} parent=11 // pred_check
          %p977 = pneg %p184
        $region26: #{tpu_custom_call.1} parent=11 // pred_check_branch
          %979 = sbr.rel (%p977) target = $region28
        $region27: #{tpu_custom_call.1} parent=11 // pred_region
          %s981 = ssub.s32 16, 16
          %982 = vsyncadd [#allocation6], %s981
          %s984 = sshll.u32 [#allocation5], 4
          %s985 = int_to_ptr.vmem [resolvable:$true] %s984
          %987 = dma.hbm_to_vmem [thread:$0]  %s7, 16, %s985, [#allocation6]
        $region28: #{tpu_custom_call.1} parent=11 // pred_fallthru
          _
        // Predicated region
        $region29: #{tpu_custom_call.1} parent=11 // pred_check
          %p988 = pneg %p205
        $region30: #{tpu_custom_call.1} parent=11 // pred_check_branch
          %990 = sbr.rel (%p988) target = $region32
        $region31: #{tpu_custom_call.1} parent=11 // pred_region
          %s992 = ssub.s32 128, 128
          %993 = vsyncadd [#allocation6], %s992
          %s995 = sshll.u32 [#allocation7], 4
          %s996 = int_to_ptr.vmem [resolvable:$true] %s995
          %998 = dma.hbm_to_vmem [thread:$0]  %s9, 128, %s996, [#allocation6]
        $region32: #{tpu_custom_call.1} parent=11 // pred_fallthru
          _
        // Predicated region
        $region33: #{tpu_custom_call.1} parent=11 // pred_check
          %p999 = pneg %p226
        $region34: #{tpu_custom_call.1} parent=11 // pred_check_branch
          %1001 = sbr.rel (%p999) target = $region36
        $region35: #{tpu_custom_call.1} parent=11 // pred_region
          %s1003 = ssub.s32 16, 16
          %1004 = vsyncadd [#allocation9], %s1003
          %s1006 = sshll.u32 [#allocation8], 4
          %s1007 = int_to_ptr.vmem [resolvable:$true] %s1006
          %1009 = dma.hbm_to_vmem [thread:$0]  %s11, 16, %s1007, [#allocation9]
        $region36: #{tpu_custom_call.1} parent=11 // pred_fallthru
          _
        // Predicated region
        $region37: #{tpu_custom_call.1} parent=11 // pred_check
          %p1010 = pneg %p247
        $region38: #{tpu_custom_call.1} parent=11 // pred_check_branch
          %1012 = sbr.rel (%p1010) target = $region40
        $region39: #{tpu_custom_call.1} parent=11 // pred_region
          %s1014 = ssub.s32 16, 16
          %1015 = vsyncadd [#allocation9], %s1014
          %s1017 = sshll.u32 [#allocation10], 4
          %s1018 = int_to_ptr.vmem [resolvable:$true] %s1017
          %1020 = dma.hbm_to_vmem [thread:$0]  %s13, 16, %s1018, [#allocation9]
        $region40: #{tpu_custom_call.1} parent=11 // pred_fallthru
          _
        // Predicated region
        $region41: #{tpu_custom_call.1} parent=11 // pred_check
          %p1021 = pneg %p268
        $region42: #{tpu_custom_call.1} parent=11 // pred_check_branch
          %1023 = sbr.rel (%p1021) target = $region44
        $region43: #{tpu_custom_call.1} parent=11 // pred_region
          _
        $region44: #{tpu_custom_call.1} parent=11 // pred_fallthru
          _
        // Predicated region
        $region45: #{tpu_custom_call.1} parent=11 // pred_check
          %p1024 = pneg %p289
        $region46: #{tpu_custom_call.1} parent=11 // pred_check_branch
          %1026 = sbr.rel (%p1024) target = $region48
        $region47: #{tpu_custom_call.1} parent=11 // pred_region
          %s1028 = ssub.s32 32, 32
          %1029 = vsyncadd [#allocation12], %s1028
          %s1030 = sshll.u32 [#allocation11], 4
          %s1031 = int_to_ptr.vmem [resolvable:$true] %s1030
          %1036 = dma.hbm_to_vmem [thread:$0]  %s17, 32, %s1031, [#allocation12], 16, 16, 1
        $region48: #{tpu_custom_call.1} parent=11 // pred_fallthru
          _
        // Predicated region
        $region49: #{tpu_custom_call.1} parent=11 // pred_check
          %p1037 = pneg %p310
        $region50: #{tpu_custom_call.1} parent=11 // pred_check_branch
          %1039 = sbr.rel (%p1037) target = $region52
        $region51: #{tpu_custom_call.1} parent=11 // pred_region
          _
        $region52: #{tpu_custom_call.1} parent=11 // pred_fallthru
          _
        // Predicated region
        $region53: #{tpu_custom_call.1} parent=11 // pred_check
          %p1040 = pneg %p331
        $region54: #{tpu_custom_call.1} parent=11 // pred_check_branch
          %1042 = sbr.rel (%p1040) target = $region56
        $region55: #{tpu_custom_call.1} parent=11 // pred_region
          %s1044 = ssub.s32 64, 64
          %1045 = vsyncadd [#allocation12], %s1044
          %s1046 = sshll.u32 [#allocation13], 4
          %s1047 = int_to_ptr.vmem [resolvable:$true] %s1046
          %1052 = dma.hbm_to_vmem [thread:$0]  %s21, 64, %s1047, [#allocation12], 32, 32, 2
        $region56: #{tpu_custom_call.1} parent=11 // pred_fallthru
          _
        // Predicated region
        $region57: #{tpu_custom_call.1} parent=11 // pred_check
          %p1053 = pneg %p352
        $region58: #{tpu_custom_call.1} parent=11 // pred_check_branch
          %1055 = sbr.rel (%p1053) target = $region60
        $region59: #{tpu_custom_call.1} parent=11 // pred_region
          _
        $region60: #{tpu_custom_call.1} parent=11 // pred_fallthru
          _
        // Predicated region
        $region61: #{tpu_custom_call.1} parent=11 // pred_check
          %p1056 = pneg %p373
        $region62: #{tpu_custom_call.1} parent=11 // pred_check_branch
          %1058 = sbr.rel (%p1056) target = $region64
        $region63: #{tpu_custom_call.1} parent=11 // pred_region
          %s1060 = ssub.s32 32, 32
          %1061 = vsyncadd [#allocation15], %s1060
          %s1062 = sshll.u32 [#allocation14], 4
          %s1063 = int_to_ptr.vmem [resolvable:$true] %s1062
          %1068 = dma.hbm_to_vmem [thread:$0]  %s25, 32, %s1063, [#allocation15], 16, 16, 1
        $region64: #{tpu_custom_call.1} parent=11 // pred_fallthru
          _
        // Predicated region
        $region65: #{tpu_custom_call.1} parent=11 // pred_check
          %p1069 = pneg %p394
        $region66: #{tpu_custom_call.1} parent=11 // pred_check_branch
          %1071 = sbr.rel (%p1069) target = $region68
        $region67: #{tpu_custom_call.1} parent=11 // pred_region
          %s1073 = ssub.s32 32, 32
          %1074 = vsyncadd [#allocation15], %s1073
          %s1075 = sshll.u32 [#allocation16], 4
          %s1076 = int_to_ptr.vmem [resolvable:$true] %s1075
          %1081 = dma.hbm_to_vmem [thread:$0]  %s27, 32, %s1076, [#allocation15], 16, 16, 1
        $region68: #{tpu_custom_call.1} parent=11 // pred_fallthru
          _
        // Predicated region
        $region69: #{tpu_custom_call.1} parent=11 // pred_check
          %p1082 = pneg %p415
        $region70: #{tpu_custom_call.1} parent=11 // pred_check_branch
          %1084 = sbr.rel (%p1082) target = $region72
        $region71: #{tpu_custom_call.1} parent=11 // pred_region
          %s1086 = ssub.s32 32, 32
          %1087 = vsyncadd [#allocation18], %s1086
          %s1088 = sshll.u32 [#allocation17], 4
          %s1089 = int_to_ptr.vmem [resolvable:$true] %s1088
          %1094 = dma.hbm_to_vmem [thread:$0]  %s29, 32, %s1089, [#allocation18], 16, 16, 1
        $region72: #{tpu_custom_call.1} parent=11 // pred_fallthru
          _
        // Predicated region
        $region73: #{tpu_custom_call.1} parent=11 // pred_check
          %p1095 = pneg %p436
        $region74: #{tpu_custom_call.1} parent=11 // pred_check_branch
          %1097 = sbr.rel (%p1095) target = $region76
        $region75: #{tpu_custom_call.1} parent=11 // pred_region
          _
        $region76: #{tpu_custom_call.1} parent=11 // pred_fallthru
          _
        // Predicated region
        $region77: #{tpu_custom_call.1} parent=11 // pred_check
          %p1098 = pneg %p457
        $region78: #{tpu_custom_call.1} parent=11 // pred_check_branch
          %1100 = sbr.rel (%p1098) target = $region80
        $region79: #{tpu_custom_call.1} parent=11 // pred_region
          %s1102 = ssub.s32 32, 32
          %1103 = vsyncadd [#allocation18], %s1102
          %s1104 = sshll.u32 [#allocation19], 4
          %s1105 = int_to_ptr.vmem [resolvable:$true] %s1104
          %1110 = dma.hbm_to_vmem [thread:$0]  %s33, 32, %s1105, [#allocation18], 16, 16, 1
        $region80: #{tpu_custom_call.1} parent=11 // pred_fallthru
          _
        // Predicated region
        $region81: #{tpu_custom_call.1} parent=11 // pred_check
          %p1111 = pneg %p478
        $region82: #{tpu_custom_call.1} parent=11 // pred_check_branch
          %1113 = sbr.rel (%p1111) target = $region84
        $region83: #{tpu_custom_call.1} parent=11 // pred_region
          _
        $region84: #{tpu_custom_call.1} parent=11 // pred_fallthru
          _
        // Predicated region
        $region85: #{tpu_custom_call.1} parent=11 // pred_check
          %p1114 = pneg %p499
        $region86: #{tpu_custom_call.1} parent=11 // pred_check_branch
          %1116 = sbr.rel (%p1114) target = $region88
        $region87: #{tpu_custom_call.1} parent=11 // pred_region
          %s1118 = ssub.s32 32, 32
          %1119 = vsyncadd [#allocation21], %s1118
          %s1120 = sshll.u32 [#allocation20], 4
          %s1121 = int_to_ptr.vmem [resolvable:$true] %s1120
          %1126 = dma.hbm_to_vmem [thread:$0]  %s37, 32, %s1121, [#allocation21], 16, 16, 1
        $region88: #{tpu_custom_call.1} parent=11 // pred_fallthru
          _
        // Predicated region
        $region89: #{tpu_custom_call.1} parent=11 // pred_check
          %p1127 = pneg %p520
        $region90: #{tpu_custom_call.1} parent=11 // pred_check_branch
          %1129 = sbr.rel (%p1127) target = $region92
        $region91: #{tpu_custom_call.1} parent=11 // pred_region
          %s1131 = ssub.s32 16, 16
          %1132 = vsyncadd [#allocation21], %s1131
          %s1134 = sshll.u32 [#allocation22], 4
          %s1135 = int_to_ptr.vmem [resolvable:$true] %s1134
          %1137 = dma.hbm_to_vmem [thread:$0]  %s39, 16, %s1135, [#allocation21]
        $region92: #{tpu_custom_call.1} parent=11 // pred_fallthru
          _
        // Predicated region
        $region93: #{tpu_custom_call.1} parent=11 // pred_check
          %p1138 = pneg %p541
        $region94: #{tpu_custom_call.1} parent=11 // pred_check_branch
          %1140 = sbr.rel (%p1138) target = $region96
        $region95: #{tpu_custom_call.1} parent=11 // pred_region
          %s1142 = ssub.s32 16, 16
          %1143 = vsyncadd [#allocation24], %s1142
          %s1145 = sshll.u32 [#allocation23], 4
          %s1146 = int_to_ptr.vmem [resolvable:$true] %s1145
          %1148 = dma.hbm_to_vmem [thread:$0]  %s41, 16, %s1146, [#allocation24]
        $region96: #{tpu_custom_call.1} parent=11 // pred_fallthru
          _
        // Predicated region
        $region97: #{tpu_custom_call.1} parent=11 // pred_check
          %p1149 = pneg %p562
        $region98: #{tpu_custom_call.1} parent=11 // pred_check_branch
          %1151 = sbr.rel (%p1149) target = $region100
        $region99: #{tpu_custom_call.1} parent=11 // pred_region
          %s1153 = ssub.s32 512, 512
          %1154 = vsyncadd [#allocation24], %s1153
          %s1155 = sshll.u32 [#allocation25], 4
          %s1156 = int_to_ptr.vmem [resolvable:$true] %s1155
          %1161 = dma.hbm_to_vmem [thread:$0]  %s43, 512, %s1156, [#allocation24], 64, 64, 4
        $region100: #{tpu_custom_call.1} parent=11 // pred_fallthru
          _
        // Predicated region
        $region101: #{tpu_custom_call.1} parent=11 // pred_check
          %p1162 = pneg %p583
        $region102: #{tpu_custom_call.1} parent=11 // pred_check_branch
          %1164 = sbr.rel (%p1162) target = $region104
        $region103: #{tpu_custom_call.1} parent=11 // pred_region
          _
        $region104: #{tpu_custom_call.1} parent=11 // pred_fallthru
          _
        // Predicated region
        $region105: #{tpu_custom_call.1} parent=11 // pred_check
          %p1165 = pneg %p604
        $region106: #{tpu_custom_call.1} parent=11 // pred_check_branch
          %1167 = sbr.rel (%p1165) target = $region108
        $region107: #{tpu_custom_call.1} parent=11 // pred_region
          %s1169 = ssub.s32 128, 128
          %1170 = vsyncadd [#allocation27], %s1169
          %s1172 = sshll.u32 [#allocation26], 4
          %s1173 = int_to_ptr.vmem [resolvable:$true] %s1172
          %1175 = dma.hbm_to_vmem [thread:$0]  %s47, 128, %s1173, [#allocation27]
        $region108: #{tpu_custom_call.1} parent=11 // pred_fallthru
          _
        // Predicated region
        $region109: #{tpu_custom_call.1} parent=11 // pred_check
          %p1176 = pneg %p625
        $region110: #{tpu_custom_call.1} parent=11 // pred_check_branch
          %1178 = sbr.rel (%p1176) target = $region112
        $region111: #{tpu_custom_call.1} parent=11 // pred_region
          %s1180 = ssub.s32 32, 32
          %1181 = vsyncadd [#allocation27], %s1180
          %s1182 = sshll.u32 [#allocation28], 4
          %s1183 = int_to_ptr.vmem [resolvable:$true] %s1182
          %1188 = dma.hbm_to_vmem [thread:$0]  %s49, 32, %s1183, [#allocation27], 16, 16, 1
        $region112: #{tpu_custom_call.1} parent=11 // pred_fallthru
          _
        // Predicated region
        $region113: #{tpu_custom_call.1} parent=11 // pred_check
          %p1189 = pneg %p646
        $region114: #{tpu_custom_call.1} parent=11 // pred_check_branch
          %1191 = sbr.rel (%p1189) target = $region116
        $region115: #{tpu_custom_call.1} parent=11 // pred_region
          %s1193 = ssub.s32 32, 32
          %1194 = vsyncadd [#allocation30], %s1193
          %s1195 = sshll.u32 [#allocation29], 4
          %s1196 = int_to_ptr.vmem [resolvable:$true] %s1195
          %1201 = dma.hbm_to_vmem [thread:$0]  %s51, 32, %s1196, [#allocation30], 16, 16, 1
        $region116: #{tpu_custom_call.1} parent=11 // pred_fallthru
          _
        // Predicated region
        $region117: #{tpu_custom_call.1} parent=11 // pred_check
          %p1202 = pneg %p667
        $region118: #{tpu_custom_call.1} parent=11 // pred_check_branch
          %1204 = sbr.rel (%p1202) target = $region120
        $region119: #{tpu_custom_call.1} parent=11 // pred_region
          _
        $region120: #{tpu_custom_call.1} parent=11 // pred_fallthru
          _
        // Predicated region
        $region121: #{tpu_custom_call.1} parent=11 // pred_check
          %p1205 = pneg %p688
        $region122: #{tpu_custom_call.1} parent=11 // pred_check_branch
          %1207 = sbr.rel (%p1205) target = $region124
        $region123: #{tpu_custom_call.1} parent=11 // pred_region
          %s1209 = ssub.s32 64, 64
          %1210 = vsyncadd [#allocation30], %s1209
          %s1211 = sshll.u32 [#allocation31], 4
          %s1212 = int_to_ptr.vmem [resolvable:$true] %s1211
          %1217 = dma.hbm_to_vmem [thread:$0]  %s55, 64, %s1212, [#allocation30], 32, 32, 2
        $region124: #{tpu_custom_call.1} parent=11 // pred_fallthru
          _
        // Predicated region
        $region125: #{tpu_custom_call.1} parent=11 // pred_check
          %p1218 = pneg %p709
        $region126: #{tpu_custom_call.1} parent=11 // pred_check_branch
          %1220 = sbr.rel (%p1218) target = $region128
        $region127: #{tpu_custom_call.1} parent=11 // pred_region
          _
        $region128: #{tpu_custom_call.1} parent=11 // pred_fallthru
          _
        // Predicated region
        $region129: #{tpu_custom_call.1} parent=11 // pred_check
          %p1221 = pneg %p730
        $region130: #{tpu_custom_call.1} parent=11 // pred_check_branch
          %1223 = sbr.rel (%p1221) target = $region132
        $region131: #{tpu_custom_call.1} parent=11 // pred_region
          %s1225 = ssub.s32 32, 32
          %1226 = vsyncadd [#allocation33], %s1225
          %s1227 = sshll.u32 [#allocation32], 4
          %s1228 = int_to_ptr.vmem [resolvable:$true] %s1227
          %1233 = dma.hbm_to_vmem [thread:$0]  %s59, 32, %s1228, [#allocation33], 16, 16, 1
        $region132: #{tpu_custom_call.1} parent=11 // pred_fallthru
          _
        // Predicated region
        $region133: #{tpu_custom_call.1} parent=11 // pred_check
          %p1234 = pneg %p751
        $region134: #{tpu_custom_call.1} parent=11 // pred_check_branch
          %1236 = sbr.rel (%p1234) target = $region136
        $region135: #{tpu_custom_call.1} parent=11 // pred_region
          %s1238 = ssub.s32 32, 32
          %1239 = vsyncadd [#allocation33], %s1238
          %s1240 = sshll.u32 [#allocation34], 4
          %s1241 = int_to_ptr.vmem [resolvable:$true] %s1240
          %1246 = dma.hbm_to_vmem [thread:$0]  %s61, 32, %s1241, [#allocation33], 16, 16, 1
        $region136: #{tpu_custom_call.1} parent=11 // pred_fallthru
          _
        // Predicated region
        $region137: #{tpu_custom_call.1} parent=11 // pred_check
          %p1247 = pneg %p772
        $region138: #{tpu_custom_call.1} parent=11 // pred_check_branch
          %1249 = sbr.rel (%p1247) target = $region140
        $region139: #{tpu_custom_call.1} parent=11 // pred_region
          %s1251 = ssub.s32 32, 32
          %1252 = vsyncadd [#allocation36], %s1251
          %s1253 = sshll.u32 [#allocation35], 4
          %s1254 = int_to_ptr.vmem [resolvable:$true] %s1253
          %1259 = dma.hbm_to_vmem [thread:$0]  %s63, 32, %s1254, [#allocation36], 16, 16, 1
        $region140: #{tpu_custom_call.1} parent=11 // pred_fallthru
          _
        // Predicated region
        $region141: #{tpu_custom_call.1} parent=11 // pred_check
          %p1260 = pneg %p793
        $region142: #{tpu_custom_call.1} parent=11 // pred_check_branch
          %1262 = sbr.rel (%p1260) target = $region144
        $region143: #{tpu_custom_call.1} parent=11 // pred_region
          %s1264 = ssub.s32 1024, 1024
          %1265 = vsyncadd [#allocation36], %s1264
          %s1266 = sshll.u32 [#allocation37], 4
          %s1267 = int_to_ptr.vmem [resolvable:$true] %s1266
          %1272 = dma.hbm_to_vmem [thread:$0]  %s65, 1024, %s1267, [#allocation36], 64, 64, 4
        $region144: #{tpu_custom_call.1} parent=11 // pred_fallthru
          _
        // Predicated region
        $region145: #{tpu_custom_call.1} parent=11 // pred_check
          %p1273 = pneg %p814
        $region146: #{tpu_custom_call.1} parent=11 // pred_check_branch
          %1275 = sbr.rel (%p1273) target = $region148
        $region147: #{tpu_custom_call.1} parent=11 // pred_region
          _
        $region148: #{tpu_custom_call.1} parent=11 // pred_fallthru
          _
        // Predicated region
        $region149: #{tpu_custom_call.1} parent=11 // pred_check
          %p1276 = pneg %p835
        $region150: #{tpu_custom_call.1} parent=11 // pred_check_branch
          %1278 = sbr.rel (%p1276) target = $region152
        $region151: #{tpu_custom_call.1} parent=11 // pred_region
          _
        $region152: #{tpu_custom_call.1} parent=11 // pred_fallthru
          _
        // Predicated region
        $region153: #{tpu_custom_call.1} parent=11 // pred_check
          %p1279 = pneg %p856
        $region154: #{tpu_custom_call.1} parent=11 // pred_check_branch
          %1281 = sbr.rel (%p1279) target = $region156
        $region155: #{tpu_custom_call.1} parent=11 // pred_region
          _
        $region156: #{tpu_custom_call.1} parent=11 // pred_fallthru
          _
        // Predicated region
        $region157: #{tpu_custom_call.1} parent=11 // pred_check
          %p1282 = pneg %p877
        $region158: #{tpu_custom_call.1} parent=11 // pred_check_branch
          %1284 = sbr.rel (%p1282) target = $region160
        $region159: #{tpu_custom_call.1} parent=11 // pred_region
          _
        $region160: #{tpu_custom_call.1} parent=11 // pred_fallthru
          _
        // Predicated region
        $region161: #{tpu_custom_call.1} parent=11 // pred_check
          %p1285 = pneg %p898
        $region162: #{tpu_custom_call.1} parent=11 // pred_check_branch
          %1287 = sbr.rel (%p1285) target = $region164
        $region163: #{tpu_custom_call.1} parent=11 // pred_region
          _
        $region164: #{tpu_custom_call.1} parent=11 // pred_fallthru
          _
        // Predicated region
        $region165: #{tpu_custom_call.1} parent=11 // pred_check
          %p1288 = pneg %p919
        $region166: #{tpu_custom_call.1} parent=11 // pred_check_branch
          %1290 = sbr.rel (%p1288) target = $region168
        $region167: #{tpu_custom_call.1} parent=11 // pred_region
          _
        $region168: #{tpu_custom_call.1} parent=11 // pred_fallthru
          _
      $region12: #{tpu_custom_call.1} parent=5 // pred_fallthru
        _
      %p1291 = scmp.lt.s32.totalorder %s100, 2
      // Predicated region
      $region169: #{tpu_custom_call.1} parent=5 // pred_check
        %p1292 = pneg %p1291
      $region170: #{tpu_custom_call.1} parent=5 // pred_check_branch
        %1294 = sbr.rel (%p1292) target = $region172
      $region171: #{tpu_custom_call.1} parent=5 // pred_region
        _
      $region172: #{tpu_custom_call.1} parent=5 // pred_fallthru
        _
      %p1295 = scmp.le.s32.totalorder 1, %s100
      %p1296 = scmp.lt.s32.totalorder %s100, 3
      %p1297 = pnand %p1295, %p1296
      %p1298 = pneg %p1297
      // Predicated region
      $region173: #{tpu_custom_call.1} parent=5 // pred_check
        _
      $region174: #{tpu_custom_call.1} parent=5 // pred_check_branch
        %1300 = sbr.rel (%p1297) target = $region176
      $region175: #{tpu_custom_call.1} parent=5 // pred_region
        %s1301 = ssub.s32 %s100, 1
        // Predicated region
        $region177: #{tpu_custom_call.1} parent=175 // pred_check
          %p1302 = pneg %p142
        $region178: #{tpu_custom_call.1} parent=175 // pred_check_branch
          %1304 = sbr.rel (%p1302) target = $region180
        $region179: #{tpu_custom_call.1} parent=175 // pred_region
          %1305 = dma.done [#allocation3], 256
        $region180: #{tpu_custom_call.1} parent=175 // pred_fallthru
          _
        // Predicated region
        $region181: #{tpu_custom_call.1} parent=175 // pred_check
          %p1306 = pneg %p184
        $region182: #{tpu_custom_call.1} parent=175 // pred_check_branch
          %1308 = sbr.rel (%p1306) target = $region184
        $region183: #{tpu_custom_call.1} parent=175 // pred_region
          %1309 = dma.done [#allocation6], 16
        $region184: #{tpu_custom_call.1} parent=175 // pred_fallthru
          _
        // Predicated region
        $region185: #{tpu_custom_call.1} parent=175 // pred_check
          %p1310 = pneg %p205
        $region186: #{tpu_custom_call.1} parent=175 // pred_check_branch
          %1312 = sbr.rel (%p1310) target = $region188
        $region187: #{tpu_custom_call.1} parent=175 // pred_region
          %1313 = dma.done [#allocation6], 128
        $region188: #{tpu_custom_call.1} parent=175 // pred_fallthru
          _
        // Predicated region
        $region189: #{tpu_custom_call.1} parent=175 // pred_check
          %p1314 = pneg %p226
        $region190: #{tpu_custom_call.1} parent=175 // pred_check_branch
          %1316 = sbr.rel (%p1314) target = $region192
        $region191: #{tpu_custom_call.1} parent=175 // pred_region
          %1317 = dma.done [#allocation9], 16
        $region192: #{tpu_custom_call.1} parent=175 // pred_fallthru
          _
        // Predicated region
        $region193: #{tpu_custom_call.1} parent=175 // pred_check
          %p1318 = pneg %p247
        $region194: #{tpu_custom_call.1} parent=175 // pred_check_branch
          %1320 = sbr.rel (%p1318) target = $region196
        $region195: #{tpu_custom_call.1} parent=175 // pred_region
          %1321 = dma.done [#allocation9], 16
        $region196: #{tpu_custom_call.1} parent=175 // pred_fallthru
          _
        // Predicated region
        $region197: #{tpu_custom_call.1} parent=175 // pred_check
          %p1322 = pneg %p289
        $region198: #{tpu_custom_call.1} parent=175 // pred_check_branch
          %1324 = sbr.rel (%p1322) target = $region200
        $region199: #{tpu_custom_call.1} parent=175 // pred_region
          %1325 = dma.done [#allocation12], 32
        $region200: #{tpu_custom_call.1} parent=175 // pred_fallthru
          _
        // Predicated region
        $region201: #{tpu_custom_call.1} parent=175 // pred_check
          %p1326 = pneg %p331
        $region202: #{tpu_custom_call.1} parent=175 // pred_check_branch
          %1328 = sbr.rel (%p1326) target = $region204
        $region203: #{tpu_custom_call.1} parent=175 // pred_region
          %1329 = dma.done [#allocation12], 64
        $region204: #{tpu_custom_call.1} parent=175 // pred_fallthru
          _
        // Predicated region
        $region205: #{tpu_custom_call.1} parent=175 // pred_check
          %p1330 = pneg %p373
        $region206: #{tpu_custom_call.1} parent=175 // pred_check_branch
          %1332 = sbr.rel (%p1330) target = $region208
        $region207: #{tpu_custom_call.1} parent=175 // pred_region
          %1333 = dma.done [#allocation15], 32
        $region208: #{tpu_custom_call.1} parent=175 // pred_fallthru
          _
        // Predicated region
        $region209: #{tpu_custom_call.1} parent=175 // pred_check
          %p1334 = pneg %p394
        $region210: #{tpu_custom_call.1} parent=175 // pred_check_branch
          %1336 = sbr.rel (%p1334) target = $region212
        $region211: #{tpu_custom_call.1} parent=175 // pred_region
          %1337 = dma.done [#allocation15], 32
        $region212: #{tpu_custom_call.1} parent=175 // pred_fallthru
          _
        // Predicated region
        $region213: #{tpu_custom_call.1} parent=175 // pred_check
          %p1338 = pneg %p415
        $region214: #{tpu_custom_call.1} parent=175 // pred_check_branch
          %1340 = sbr.rel (%p1338) target = $region216
        $region215: #{tpu_custom_call.1} parent=175 // pred_region
          %1341 = dma.done [#allocation18], 32
        $region216: #{tpu_custom_call.1} parent=175 // pred_fallthru
          _
        // Predicated region
        $region217: #{tpu_custom_call.1} parent=175 // pred_check
          %p1342 = pneg %p457
        $region218: #{tpu_custom_call.1} parent=175 // pred_check_branch
          %1344 = sbr.rel (%p1342) target = $region220
        $region219: #{tpu_custom_call.1} parent=175 // pred_region
          %1345 = dma.done [#allocation18], 32
        $region220: #{tpu_custom_call.1} parent=175 // pred_fallthru
          _
        // Predicated region
        $region221: #{tpu_custom_call.1} parent=175 // pred_check
          %p1346 = pneg %p499
        $region222: #{tpu_custom_call.1} parent=175 // pred_check_branch
          %1348 = sbr.rel (%p1346) target = $region224
        $region223: #{tpu_custom_call.1} parent=175 // pred_region
          %1349 = dma.done [#allocation21], 32
        $region224: #{tpu_custom_call.1} parent=175 // pred_fallthru
          _
        // Predicated region
        $region225: #{tpu_custom_call.1} parent=175 // pred_check
          %p1350 = pneg %p520
        $region226: #{tpu_custom_call.1} parent=175 // pred_check_branch
          %1352 = sbr.rel (%p1350) target = $region228
        $region227: #{tpu_custom_call.1} parent=175 // pred_region
          %1353 = dma.done [#allocation21], 16
        $region228: #{tpu_custom_call.1} parent=175 // pred_fallthru
          _
        // Predicated region
        $region229: #{tpu_custom_call.1} parent=175 // pred_check
          %p1354 = pneg %p541
        $region230: #{tpu_custom_call.1} parent=175 // pred_check_branch
          %1356 = sbr.rel (%p1354) target = $region232
        $region231: #{tpu_custom_call.1} parent=175 // pred_region
          %1357 = dma.done [#allocation24], 16
        $region232: #{tpu_custom_call.1} parent=175 // pred_fallthru
          _
        // Predicated region
        $region233: #{tpu_custom_call.1} parent=175 // pred_check
          %p1358 = pneg %p562
        $region234: #{tpu_custom_call.1} parent=175 // pred_check_branch
          %1360 = sbr.rel (%p1358) target = $region236
        $region235: #{tpu_custom_call.1} parent=175 // pred_region
          %1361 = dma.done [#allocation24], 512
        $region236: #{tpu_custom_call.1} parent=175 // pred_fallthru
          _
        // Predicated region
        $region237: #{tpu_custom_call.1} parent=175 // pred_check
          %p1362 = pneg %p604
        $region238: #{tpu_custom_call.1} parent=175 // pred_check_branch
          %1364 = sbr.rel (%p1362) target = $region240
        $region239: #{tpu_custom_call.1} parent=175 // pred_region
          %1365 = dma.done [#allocation27], 128
        $region240: #{tpu_custom_call.1} parent=175 // pred_fallthru
          _
        // Predicated region
        $region241: #{tpu_custom_call.1} parent=175 // pred_check
          %p1366 = pneg %p625
        $region242: #{tpu_custom_call.1} parent=175 // pred_check_branch
          %1368 = sbr.rel (%p1366) target = $region244
        $region243: #{tpu_custom_call.1} parent=175 // pred_region
          %1369 = dma.done [#allocation27], 32
        $region244: #{tpu_custom_call.1} parent=175 // pred_fallthru
          _
        // Predicated region
        $region245: #{tpu_custom_call.1} parent=175 // pred_check
          %p1370 = pneg %p646
        $region246: #{tpu_custom_call.1} parent=175 // pred_check_branch
          %1372 = sbr.rel (%p1370) target = $region248
        $region247: #{tpu_custom_call.1} parent=175 // pred_region
          %1373 = dma.done [#allocation30], 32
        $region248: #{tpu_custom_call.1} parent=175 // pred_fallthru
          _
        // Predicated region
        $region249: #{tpu_custom_call.1} parent=175 // pred_check
          %p1374 = pneg %p688
        $region250: #{tpu_custom_call.1} parent=175 // pred_check_branch
          %1376 = sbr.rel (%p1374) target = $region252
        $region251: #{tpu_custom_call.1} parent=175 // pred_region
          %1377 = dma.done [#allocation30], 64
        $region252: #{tpu_custom_call.1} parent=175 // pred_fallthru
          _
        // Predicated region
        $region253: #{tpu_custom_call.1} parent=175 // pred_check
          %p1378 = pneg %p730
        $region254: #{tpu_custom_call.1} parent=175 // pred_check_branch
          %1380 = sbr.rel (%p1378) target = $region256
        $region255: #{tpu_custom_call.1} parent=175 // pred_region
          %1381 = dma.done [#allocation33], 32
        $region256: #{tpu_custom_call.1} parent=175 // pred_fallthru
          _
        // Predicated region
        $region257: #{tpu_custom_call.1} parent=175 // pred_check
          %p1382 = pneg %p751
        $region258: #{tpu_custom_call.1} parent=175 // pred_check_branch
          %1384 = sbr.rel (%p1382) target = $region260
        $region259: #{tpu_custom_call.1} parent=175 // pred_region
          %1385 = dma.done [#allocation33], 32
        $region260: #{tpu_custom_call.1} parent=175 // pred_fallthru
          _
        // Predicated region
        $region261: #{tpu_custom_call.1} parent=175 // pred_check
          %p1386 = pneg %p772
        $region262: #{tpu_custom_call.1} parent=175 // pred_check_branch
          %1388 = sbr.rel (%p1386) target = $region264
        $region263: #{tpu_custom_call.1} parent=175 // pred_region
          %1389 = dma.done [#allocation36], 32
        $region264: #{tpu_custom_call.1} parent=175 // pred_fallthru
          _
        // Predicated region
        $region265: #{tpu_custom_call.1} parent=175 // pred_check
          %p1390 = pneg %p793
        $region266: #{tpu_custom_call.1} parent=175 // pred_check_branch
          %1392 = sbr.rel (%p1390) target = $region268
        $region267: #{tpu_custom_call.1} parent=175 // pred_region
          %1393 = dma.done [#allocation36], 1024
        $region268: #{tpu_custom_call.1} parent=175 // pred_fallthru
          _
        %p1394 = pneg %p121
        %p1395 = pneg %p118
        %p1396 = pneg %p142
        %p1397 = pneg %p139
        %p1398 = pneg %p163
        %p1399 = pneg %p160
        %p1400 = pneg %p184
        %p1401 = pneg %p181
        %p1402 = pneg %p205
        %p1403 = pneg %p202
        %p1404 = pneg %p226
        %p1405 = pneg %p223
        %p1406 = pneg %p247
        %p1407 = pneg %p244
        %p1408 = pneg %p268
        %p1409 = pneg %p265
        %p1410 = pneg %p289
        %p1411 = pneg %p286
        %p1412 = pneg %p310
        %p1413 = pneg %p307
        %p1414 = pneg %p331
        %p1415 = pneg %p328
        %p1416 = pneg %p352
        %p1417 = pneg %p349
        %p1418 = pneg %p373
        %p1419 = pneg %p370
        %p1420 = pneg %p394
        %p1421 = pneg %p391
        %p1422 = pneg %p415
        %p1423 = pneg %p412
        %p1424 = pneg %p436
        %p1425 = pneg %p433
        %p1426 = pneg %p457
        %p1427 = pneg %p454
        %p1428 = pneg %p478
        %p1429 = pneg %p475
        %p1430 = pneg %p499
        %p1431 = pneg %p496
        %p1432 = pneg %p520
        %p1433 = pneg %p517
        %p1434 = pneg %p541
        %p1435 = pneg %p538
        %p1436 = pneg %p562
        %p1437 = pneg %p559
        %p1438 = pneg %p583
        %p1439 = pneg %p580
        %p1440 = pneg %p604
        %p1441 = pneg %p601
        %p1442 = pneg %p625
        %p1443 = pneg %p622
        %p1444 = pneg %p646
        %p1445 = pneg %p643
        %p1446 = pneg %p667
        %p1447 = pneg %p664
        %p1448 = pneg %p688
        %p1449 = pneg %p685
        %p1450 = pneg %p709
        %p1451 = pneg %p706
        %p1452 = pneg %p730
        %p1453 = pneg %p727
        %p1454 = pneg %p751
        %p1455 = pneg %p748
        %p1456 = pneg %p772
        %p1457 = pneg %p769
        %p1458 = pneg %p793
        %p1459 = pneg %p790
        %p1460 = pneg %p814
        %p1461 = pneg %p811
        %p1462 = pneg %p835
        %p1463 = pneg %p832
        %p1464 = pneg %p856
        %p1465 = pneg %p853
        %p1466 = pneg %p877
        %p1467 = pneg %p874
        %p1468 = pneg %p898
        %p1469 = pneg %p895
        %p1470 = pneg %p919
        %p1471 = pneg %p916
        %p1472 = pneg %p945
        %p1473 = pneg %p942
        %s1474 = sand.u32 %s932, 1
        %s1475 = scalar_lea.sflag [#allocation4], %s1474
        %s1476 = sand.u32 %s932, 1
        %s1477 = smul.addr %s1476, 2
        %s1478 = scalar_lea.vmem [#allocation38], %s1477
        %p1480 = scmp.eq.s32.totalorder %s105, 0
        // Predicated region
        $region269: #{tpu_custom_call.1} parent=175 // pred_check
          %p1481 = pneg %p1480
        $region270: #{tpu_custom_call.1} parent=175 // pred_check_branch
          %1483 = sbr.rel (%p1481) target = $region272
        $region271: #{tpu_custom_call.1} parent=175 // pred_region
          %v1484 = vld [vmem:[#allocation2] sm:$0xff]
          %v1485 = vld [vmem:[#allocation2 + $0x8] sm:$0xff]
          %v1486 = vpack.c.bf16 %v1484, %v1484
          %v1487 = vpack.c.bf16 %v1485, %v1485
          %v1488 = vld [vmem:[%s5] sm:$0xf]
          %v1489 = vld [vmem:[%s5 + $0x4] sm:$0xf]
          %v1490 = vld [vmem:[%s5 + $0x8] sm:$0xf]
          %v1491 = vld [vmem:[%s5 + $0xc] sm:$0xf]
          %v1492 = vld [vmem:[%s5 + $0x10] sm:$0xf]
          %v1493 = vld [vmem:[%s5 + $0x14] sm:$0xf]
          %v1494 = vld [vmem:[%s5 + $0x18] sm:$0xf]
          %v1495 = vld [vmem:[%s5 + $0x1c] sm:$0xf]
          %v1496 = vld [vmem:[%s5 + $0x20] sm:$0xf]
          %v1497 = vld [vmem:[%s5 + $0x24] sm:$0xf]
          %v1498 = vld [vmem:[%s5 + $0x28] sm:$0xf]
          %v1499 = vld [vmem:[%s5 + $0x2c] sm:$0xf]
          %v1500 = vld [vmem:[%s5 + $0x30] sm:$0xf]
          %v1501 = vld [vmem:[%s5 + $0x34] sm:$0xf]
          %v1502 = vld [vmem:[%s5 + $0x38] sm:$0xf]
          %v1503 = vld [vmem:[%s5 + $0x3c] sm:$0xf]
          %v1504 = vld [vmem:[%s5 + $0x40] sm:$0xf]
          %v1505 = vld [vmem:[%s5 + $0x44] sm:$0xf]
          %v1506 = vld [vmem:[%s5 + $0x48] sm:$0xf]
          %v1507 = vld [vmem:[%s5 + $0x4c] sm:$0xf]
          %v1508 = vld [vmem:[%s5 + $0x50] sm:$0xf]
          %v1509 = vld [vmem:[%s5 + $0x54] sm:$0xf]
          %v1510 = vld [vmem:[%s5 + $0x58] sm:$0xf]
          %v1511 = vld [vmem:[%s5 + $0x5c] sm:$0xf]
          %v1536 = vunpack.c.l.b16 %v1488
          %v1537 = vunpack.c.l.b16 %v1489
          %v1538 = vunpack.c.l.b16 %v1490
          %v1539 = vunpack.c.l.b16 %v1491
          %v1540 = vunpack.c.l.b16 %v1492
          %v1541 = vunpack.c.l.b16 %v1493
          %v1542 = vunpack.c.l.b16 %v1494
          %v1543 = vunpack.c.l.b16 %v1495
          %v1544 = vunpack.c.l.b16 %v1496
          %v1545 = vunpack.c.l.b16 %v1497
          %v1546 = vunpack.c.l.b16 %v1498
          %v1547 = vunpack.c.l.b16 %v1499
          %v1548 = vunpack.c.l.b16 %v1500
          %v1549 = vunpack.c.l.b16 %v1501
          %v1550 = vunpack.c.l.b16 %v1502
          %v1551 = vunpack.c.l.b16 %v1503
          %v1552 = vunpack.c.l.b16 %v1504
          %v1553 = vunpack.c.l.b16 %v1505
          %v1554 = vunpack.c.l.b16 %v1506
          %v1555 = vunpack.c.l.b16 %v1507
          %v1556 = vunpack.c.l.b16 %v1508
          %v1557 = vunpack.c.l.b16 %v1509
          %v1558 = vunpack.c.l.b16 %v1510
          %v1559 = vunpack.c.l.b16 %v1511
          %v1560 = vpack.c.b16 %v1537, %v1536
          %v1561 = vpack.c.b16 %v1539, %v1538
          %v1562 = vpack.c.b16 %v1541, %v1540
          %v1563 = vpack.c.b16 %v1543, %v1542
          %v1564 = vpack.c.b16 %v1545, %v1544
          %v1565 = vpack.c.b16 %v1547, %v1546
          %v1566 = vpack.c.b16 %v1549, %v1548
          %v1567 = vpack.c.b16 %v1551, %v1550
          %v1568 = vpack.c.b16 %v1553, %v1552
          %v1569 = vpack.c.b16 %v1555, %v1554
          %v1570 = vpack.c.b16 %v1557, %v1556
          %v1571 = vpack.c.b16 %v1559, %v1558
          %vm1584 = vcmask 523264
          %v1586 = vsel %vm1584, %v1487, 0
          %1588 = vmatprep.subr.bf16.mxu0 0
          %1589 = vmatpush1.bf16.msra.mxu0 %v1560
          %1590 = vmatprep.subr.bf16.mxu0 0
          %1591 = vmatpush1.bf16.msra.mxu0 %v1561
          %1592 = vmatprep.subr.bf16.mxu0 0
          %1593 = vmatpush1.bf16.msra.mxu0 %v1562
          %1594 = vmatprep.subr.bf16.mxu0 0
          %1595 = vmatpush1.bf16.msra.mxu0 %v1563
          %1596 = vmatprep.subr.bf16.mxu0 0
          %1597 = vmatpush1.bf16.msra.mxu0 %v1564
          %1598 = vmatprep.subr.bf16.mxu0 0
          %1599 = vmatpush1.bf16.msra.mxu0 %v1565
          %1600 = vmatprep.subr.bf16.mxu0 0
          %1601 = vmatpush1.bf16.msra.mxu0 %v1566
          %1602 = vmatprep.subr.bf16.mxu0 0
          %1603 = vmatpush1.bf16.msra.mxu0 %v1567
          %1604 = vmatprep.subr.bf16.mxu0 0
          %1605 = vmatpush1.bf16.msra.mxu0 %v1568
          %1606 = vmatprep.subr.bf16.mxu0 0
          %1607 = vmatpush1.bf16.msra.mxu0 %v1569
          %1608 = vmatprep.subr.bf16.mxu0 0
          %1609 = vmatpush1.bf16.msra.mxu0 %v1570
          %1610 = vmatprep.subr.bf16.mxu0 0
          %1611 = vmatpush1.bf16.msra.mxu0 %v1571
          %1612 = vmatprep.subr.bf16.mxu0 0
          %1613 = vmatpush1.bf16.msra.mxu0 0
          %1614 = vmatprep.subr.bf16.mxu0 0
          %1615 = vmatpush1.bf16.msra.mxu0 0
          %1616 = vmatprep.subr.bf16.mxu0 0
          %1617 = vmatpush1.bf16.msra.mxu0 0
          %1618 = vmatprep.subr.bf16.mxu0 0
          %1619 = vmatpush1.bf16.msra.mxu0 0
          %1620 = vmatprep.mubr.bf16.mxu0 %v1586
          %1621 = vmatmul.mubr.bf16.gmra.mrb[0].mxu0 %v1486
          %v1622 = vpop.f32.mrb[0].mxu0
          %v1623 = vadd.f32 0.0, %v1622
          %v1624 = vpop.f32.mrb[0].mxu0
          %v1625 = vpop.f32.mrb[0].mxu0
          %v1626 = vpop.f32.mrb[0].mxu0
          %1627 = vdwg.mxu0
          %v1628 = vld [vmem:[#allocation7] sm:$0x1f]
          %v1629 = vld [vmem:[#allocation5] sm:$0x1]
          %v1630 = vadd.f32 %v1629, %v1628
          %v1632 = vrot.slane %v1628, 1
          %v1634 = vadd.f32 %v1623, %v1632
          %v1636 = vrot.slane %v1634, 7
          %vm1638 = vcmask 1040384
          %v1639 = vsel %vm1638, %v1630, %v1636
          %vm1640 = vcmask 1044480
          %v1641 = vsel %vm1640, %v1639, 0.0
          %v1642 = vrot.slane %v1628, 5
          %v1644 = vadd.f32 %v1623, %v1642
          %v1646 = vrot.slane %v1644, 3
          %v1648 = vsel %vm1638, %v1630, %v1646
          %v1649 = vsel %vm1640, %v1648, 0.0
          %v1650 = vld [vmem:[#allocation8] sm:$0x1]
          %v1651 = vld [vmem:[#allocation10] sm:$0x1]
          %v1652 = vsel %vm1584, %v1641, 0.0
          %1653 = vadd.xlane.f32.xlu0 %v1652
          %v1654 = vpop.xlane.xlu0 %1653
          %v1655 = vsel %vm1584, %v1649, 0.0
          %1656 = vadd.xlane.f32.xlu0 %v1655
          %v1657 = vpop.xlane.xlu0 %1656
          %v1658 = vrcp.pop 64.0
          %v1659 = vmul.f32 %v1654, %v1658
          %v1660 = vmul.f32 %v1657, %v1658
          %v1661 = vsub.f32 %v1641, %v1659
          %v1662 = vsub.f32 %v1649, %v1660
          %v1663 = vmul.f32 %v1661, %v1661
          %v1664 = vmul.f32 %v1662, %v1662
          %v1665 = vsel %vm1584, %v1663, 0.0
          %1666 = vadd.xlane.f32.xlu0 %v1665
          %v1667 = vpop.xlane.xlu0 %1666
          %v1668 = vsel %vm1584, %v1664, 0.0
          %1669 = vadd.xlane.f32.xlu0 %v1668
          %v1670 = vpop.xlane.xlu0 %1669
          %v1671 = vmul.f32 %v1667, %v1658
          %v1672 = vmul.f32 %v1670, %v1658
          %v1673 = vadd.f32 %v1671, 1e-05
          %v1674 = vadd.f32 %v1672, 1e-05
          %v1675 = vrsqrt.pop %v1673
          %v1676 = vrsqrt.pop %v1674
          %v1677 = vmul.f32 %v1661, %v1675
          %v1678 = vmul.f32 %v1662, %v1676
          %v1680 = vlaneseq
          %v1681 = vshrl.u32 %v1680, 7
          %v1682 = vsub.s32 0, %v1681
          %v1683 = vrot.slane %v1650, %v1682
          %v1685 = vmul.f32 %v1677, %v1683
          %v1686 = vmul.f32 %v1678, %v1683
          %v1688 = vlaneseq
          %v1689 = vshrl.u32 %v1688, 7
          %v1690 = vsub.s32 0, %v1689
          %v1691 = vrot.slane %v1651, %v1690
          %v1693 = vadd.f32 %v1685, %v1691
          %v1694 = vadd.f32 %v1686, %v1691
          %v1695 = vlaneseq
          %v1696 = vand.u32 %v1695, 127
          %vm1697 = vcmp.lt.s32.totalorder %v1696, 5
          %v1698 = vsel %vm1697, 0.0, -1e+09
          %v1699 = vld [vmem:[%s15] sm:$0x1]
          %v1700 = vld [vmem:[#allocation11] sm:$0x1]
          %v1701 = vsel %vm1584, %v1693, 0.0
          %1702 = vadd.xlane.f32.xlu0 %v1701
          %v1703 = vpop.xlane.xlu0 %1702
          %v1704 = vsel %vm1584, %v1694, 0.0
          %1705 = vadd.xlane.f32.xlu0 %v1704
          %v1706 = vpop.xlane.xlu0 %1705
          %v1707 = vmul.f32 %v1703, %v1658
          %v1708 = vmul.f32 %v1706, %v1658
          %v1709 = vsub.f32 %v1693, %v1707
          %v1710 = vsub.f32 %v1694, %v1708
          %v1711 = vmul.f32 %v1709, %v1709
          %v1712 = vmul.f32 %v1710, %v1710
          %v1713 = vsel %vm1584, %v1711, 0.0
          %1714 = vadd.xlane.f32.xlu0 %v1713
          %v1715 = vpop.xlane.xlu0 %1714
          %v1716 = vsel %vm1584, %v1712, 0.0
          %1717 = vadd.xlane.f32.xlu0 %v1716
          %v1718 = vpop.xlane.xlu0 %1717
          %v1719 = vmul.f32 %v1715, %v1658
          %v1720 = vmul.f32 %v1718, %v1658
          %v1721 = vadd.f32 %v1719, 1e-05
          %v1722 = vadd.f32 %v1720, 1e-05
          %v1723 = vrsqrt.pop %v1721
          %v1724 = vrsqrt.pop %v1722
          %v1725 = vmul.f32 %v1709, %v1723
          %v1726 = vmul.f32 %v1710, %v1724
          %v1728 = vlaneseq
          %v1729 = vshrl.u32 %v1728, 7
          %v1730 = vsub.s32 0, %v1729
          %v1731 = vrot.slane %v1699, %v1730
          %v1733 = vmul.f32 %v1725, %v1731
          %v1734 = vmul.f32 %v1726, %v1731
          %v1736 = vlaneseq
          %v1737 = vshrl.u32 %v1736, 7
          %v1738 = vsub.s32 0, %v1737
          %v1739 = vrot.slane %v1700, %v1738
          %v1741 = vadd.f32 %v1733, %v1739
          %v1742 = vadd.f32 %v1734, %v1739
          %v1743 = vpack.c.bf16 %v1742, %v1741
          %v1744 = vld [vmem:[%s19] sm:$0xff]
          %v1745 = vld [vmem:[%s19 + $0x8] sm:$0xff]
          %v1746 = vld [vmem:[%s19 + $0x10] sm:$0xff]
          %v1747 = vld [vmem:[%s19 + $0x18] sm:$0xff]
          %v1748 = vld [vmem:[%s19 + $0x20] sm:$0xff]
          %v1749 = vld [vmem:[%s19 + $0x28] sm:$0xff]
          %v1750 = vld [vmem:[%s19 + $0x30] sm:$0xff]
          %v1751 = vld [vmem:[%s19 + $0x38] sm:$0xff]
          %v1752 = vld [vmem:[#allocation13] sm:$0x3]
          %v1754 = vlaneseq
          %v1755 = vshrl.u32 %v1754, 7
          %v1756 = vsub.s32 0, %v1755
          %v1757 = vrot.slane %v1752, %v1756
          %v1758 = vlaneseq
          %v1759 = vshrl.u32 %v1758, 7
          %v1760 = vsub.s32 1, %v1759
          %v1761 = vrot.slane %v1752, %v1760
          %v1772 = vunpack.c.l.b16 %v1744
          %v1773 = vunpack.c.h.b16 %v1744
          %v1774 = vunpack.c.l.b16 %v1745
          %v1775 = vunpack.c.h.b16 %v1745
          %v1776 = vunpack.c.l.b16 %v1746
          %v1777 = vunpack.c.h.b16 %v1746
          %v1778 = vunpack.c.l.b16 %v1747
          %v1779 = vunpack.c.h.b16 %v1747
          %v1780 = vunpack.c.l.b16 %v1748
          %v1781 = vunpack.c.h.b16 %v1748
          %v1782 = vunpack.c.l.b16 %v1749
          %v1783 = vunpack.c.h.b16 %v1749
          %v1784 = vunpack.c.l.b16 %v1750
          %v1785 = vunpack.c.h.b16 %v1750
          %v1786 = vunpack.c.l.b16 %v1751
          %v1787 = vunpack.c.h.b16 %v1751
          %v1788 = vpack.c.b16 %v1774, %v1772
          %v1789 = vpack.c.b16 %v1775, %v1773
          %v1790 = vpack.c.b16 %v1778, %v1776
          %v1791 = vpack.c.b16 %v1779, %v1777
          %v1792 = vpack.c.b16 %v1782, %v1780
          %v1793 = vpack.c.b16 %v1783, %v1781
          %v1794 = vpack.c.b16 %v1786, %v1784
          %v1795 = vpack.c.b16 %v1787, %v1785
          %v1805 = vsel %vm1584, %v1743, 0
          %1807 = vmatprep.subr.bf16.mxu0 %v1789
          %1808 = vmatpush1.bf16.msra.mxu0 %v1788
          %1809 = vmatprep.subr.bf16.mxu0 %v1791
          %1810 = vmatpush1.bf16.msra.mxu0 %v1790
          %1811 = vmatprep.subr.bf16.mxu0 %v1793
          %1812 = vmatpush1.bf16.msra.mxu0 %v1792
          %1813 = vmatprep.subr.bf16.mxu0 %v1795
          %1814 = vmatpush1.bf16.msra.mxu0 %v1794
          %1815 = vmatprep.subr.bf16.mxu0 0
          %1816 = vmatpush1.bf16.msra.mxu0 0
          %1817 = vmatprep.subr.bf16.mxu0 0
          %1818 = vmatpush1.bf16.msra.mxu0 0
          %1819 = vmatprep.subr.bf16.mxu0 0
          %1820 = vmatpush1.bf16.msra.mxu0 0
          %1821 = vmatprep.subr.bf16.mxu0 0
          %1822 = vmatpush1.bf16.msra.mxu0 0
          %1823 = vmatprep.subr.bf16.mxu0 0
          %1824 = vmatpush1.bf16.msra.mxu0 0
          %1825 = vmatprep.subr.bf16.mxu0 0
          %1826 = vmatpush1.bf16.msra.mxu0 0
          %1827 = vmatprep.subr.bf16.mxu0 0
          %1828 = vmatpush1.bf16.msra.mxu0 0
          %1829 = vmatprep.subr.bf16.mxu0 0
          %1830 = vmatpush1.bf16.msra.mxu0 0
          %1831 = vmatprep.subr.bf16.mxu0 0
          %1832 = vmatpush1.bf16.msra.mxu0 0
          %1833 = vmatprep.subr.bf16.mxu0 0
          %1834 = vmatpush1.bf16.msra.mxu0 0
          %1835 = vmatprep.subr.bf16.mxu0 0
          %1836 = vmatpush1.bf16.msra.mxu0 0
          %1837 = vmatprep.subr.bf16.mxu0 0
          %1838 = vmatpush1.bf16.msra.mxu0 0
          %1839 = vmatprep.mubr.bf16.mxu0 0
          %1840 = vmatmul.mubr.bf16.gmra.mrb[0].mxu0 %v1805
          %v1841 = vpop.f32.mrb[0].mxu0
          %v1842 = vadd.f32 %v1757, %v1841
          %v1843 = vpop.f32.mrb[0].mxu0
          %v1844 = vadd.f32 %v1761, %v1843
          %v1845 = vpop.f32.mrb[0].mxu0
          %v1846 = vadd.f32 %v1757, %v1845
          %v1847 = vpop.f32.mrb[0].mxu0
          %v1848 = vadd.f32 %v1761, %v1847
          %1849 = vdwg.mxu0
          %v1850 = vmul.f32 %v1842, 0.25
          %v1851 = vmul.f32 %v1846, 0.25
          %v1852 = vpack.c.bf16 %v1850, %v1850
          %v1853 = vpack.c.bf16 %v1842, %v1842
          %1855 = vrot.lane.b32.xlu0 %v1853, 64
          %v1856 = vpop.permute.xlu0 %1855
          %vm1857 = vcmask 130048
          %v1859 = vsel %vm1857, %v1852, 0
          %v1862 = vsel %vm1857, %v1856, 0
          %1864 = vmatprep.subr.bf16.mxu0 0
          %1865 = vmatpush1.bf16.xpose.msra.mxu0 %v1862
          %1866 = vmatprep.subr.bf16.mxu0 0
          %1867 = vmatpush1.bf16.xpose.msra.mxu0 0
          %1868 = vmatprep.subr.bf16.mxu0 0
          %1869 = vmatpush1.bf16.xpose.msra.mxu0 0
          %1870 = vmatprep.subr.bf16.mxu0 0
          %1871 = vmatpush1.bf16.xpose.msra.mxu0 0
          %1872 = vmatprep.subr.bf16.mxu0 0
          %1873 = vmatpush1.bf16.xpose.msra.mxu0 0
          %1874 = vmatprep.subr.bf16.mxu0 0
          %1875 = vmatpush1.bf16.xpose.msra.mxu0 0
          %1876 = vmatprep.subr.bf16.mxu0 0
          %1877 = vmatpush1.bf16.xpose.msra.mxu0 0
          %1878 = vmatprep.subr.bf16.mxu0 0
          %1879 = vmatpush1.bf16.xpose.msra.mxu0 0
          %1880 = vmatprep.subr.bf16.mxu0 0
          %1881 = vmatpush1.bf16.xpose.msra.mxu0 0
          %1882 = vmatprep.subr.bf16.mxu0 0
          %1883 = vmatpush1.bf16.xpose.msra.mxu0 0
          %1884 = vmatprep.subr.bf16.mxu0 0
          %1885 = vmatpush1.bf16.xpose.msra.mxu0 0
          %1886 = vmatprep.subr.bf16.mxu0 0
          %1887 = vmatpush1.bf16.xpose.msra.mxu0 0
          %1888 = vmatprep.subr.bf16.mxu0 0
          %1889 = vmatpush1.bf16.xpose.msra.mxu0 0
          %1890 = vmatprep.subr.bf16.mxu0 0
          %1891 = vmatpush1.bf16.xpose.msra.mxu0 0
          %1892 = vmatprep.subr.bf16.mxu0 0
          %1893 = vmatpush1.bf16.xpose.msra.mxu0 0
          %1894 = vmatprep.subr.bf16.mxu0 0
          %1895 = vmatpush1.bf16.xpose.msra.mxu0 0
          %1896 = vmatprep.mubr.bf16.mxu0 0
          %1897 = vmatmul.mubr.bf16.gmra.mrb[0].mxu0 %v1859
          %v1898 = vpop.f32.mrb[0].mxu0
          %v1899 = vadd.f32 0.0, %v1898
          %v1900 = vpop.f32.mrb[0].mxu0
          %v1901 = vpop.f32.mrb[0].mxu0
          %v1902 = vpop.f32.mrb[0].mxu0
          %1903 = vdwg.mxu0
          %1905 = vrot.lane.b32.xlu0 %v1852, 112
          %v1906 = vpop.permute.xlu0 %1905
          %1907 = vrot.lane.b32.xlu0 %v1853, 48
          %v1908 = vpop.permute.xlu0 %1907
          %v1910 = vsel %vm1857, %v1906, 0
          %v1913 = vsel %vm1857, %v1908, 0
          %1915 = vmatprep.subr.bf16.mxu0 0
          %1916 = vmatpush1.bf16.xpose.msra.mxu0 %v1913
          %1917 = vmatprep.subr.bf16.mxu0 0
          %1918 = vmatpush1.bf16.xpose.msra.mxu0 0
          %1919 = vmatprep.subr.bf16.mxu0 0
          %1920 = vmatpush1.bf16.xpose.msra.mxu0 0
          %1921 = vmatprep.subr.bf16.mxu0 0
          %1922 = vmatpush1.bf16.xpose.msra.mxu0 0
          %1923 = vmatprep.subr.bf16.mxu0 0
          %1924 = vmatpush1.bf16.xpose.msra.mxu0 0
          %1925 = vmatprep.subr.bf16.mxu0 0
          %1926 = vmatpush1.bf16.xpose.msra.mxu0 0
          %1927 = vmatprep.subr.bf16.mxu0 0
          %1928 = vmatpush1.bf16.xpose.msra.mxu0 0
          %1929 = vmatprep.subr.bf16.mxu0 0
          %1930 = vmatpush1.bf16.xpose.msra.mxu0 0
          %1931 = vmatprep.subr.bf16.mxu0 0
          %1932 = vmatpush1.bf16.xpose.msra.mxu0 0
          %1933 = vmatprep.subr.bf16.mxu0 0
          %1934 = vmatpush1.bf16.xpose.msra.mxu0 0
          %1935 = vmatprep.subr.bf16.mxu0 0
          %1936 = vmatpush1.bf16.xpose.msra.mxu0 0
          %1937 = vmatprep.subr.bf16.mxu0 0
          %1938 = vmatpush1.bf16.xpose.msra.mxu0 0
          %1939 = vmatprep.subr.bf16.mxu0 0
          %1940 = vmatpush1.bf16.xpose.msra.mxu0 0
          %1941 = vmatprep.subr.bf16.mxu0 0
          %1942 = vmatpush1.bf16.xpose.msra.mxu0 0
          %1943 = vmatprep.subr.bf16.mxu0 0
          %1944 = vmatpush1.bf16.xpose.msra.mxu0 0
          %1945 = vmatprep.subr.bf16.mxu0 0
          %1946 = vmatpush1.bf16.xpose.msra.mxu0 0
          %1947 = vmatprep.mubr.bf16.mxu0 0
          %1948 = vmatmul.mubr.bf16.gmra.mrb[0].mxu0 %v1910
          %v1949 = vpop.f32.mrb[0].mxu0
          %v1950 = vadd.f32 0.0, %v1949
          %v1951 = vpop.f32.mrb[0].mxu0
          %v1952 = vpop.f32.mrb[0].mxu0
          %v1953 = vpop.f32.mrb[0].mxu0
          %1954 = vdwg.mxu0
          %1955 = vrot.lane.b32.xlu0 %v1852, 96
          %v1956 = vpop.permute.xlu0 %1955
          %1957 = vrot.lane.b32.xlu0 %v1853, 32
          %v1958 = vpop.permute.xlu0 %1957
          %v1960 = vsel %vm1857, %v1956, 0
          %v1963 = vsel %vm1857, %v1958, 0
          %1965 = vmatprep.subr.bf16.mxu0 0
          %1966 = vmatpush1.bf16.xpose.msra.mxu0 %v1963
          %1967 = vmatprep.subr.bf16.mxu0 0
          %1968 = vmatpush1.bf16.xpose.msra.mxu0 0
          %1969 = vmatprep.subr.bf16.mxu0 0
          %1970 = vmatpush1.bf16.xpose.msra.mxu0 0
          %1971 = vmatprep.subr.bf16.mxu0 0
          %1972 = vmatpush1.bf16.xpose.msra.mxu0 0
          %1973 = vmatprep.subr.bf16.mxu0 0
          %1974 = vmatpush1.bf16.xpose.msra.mxu0 0
          %1975 = vmatprep.subr.bf16.mxu0 0
          %1976 = vmatpush1.bf16.xpose.msra.mxu0 0
          %1977 = vmatprep.subr.bf16.mxu0 0
          %1978 = vmatpush1.bf16.xpose.msra.mxu0 0
          %1979 = vmatprep.subr.bf16.mxu0 0
          %1980 = vmatpush1.bf16.xpose.msra.mxu0 0
          %1981 = vmatprep.subr.bf16.mxu0 0
          %1982 = vmatpush1.bf16.xpose.msra.mxu0 0
          %1983 = vmatprep.subr.bf16.mxu0 0
          %1984 = vmatpush1.bf16.xpose.msra.mxu0 0
          %1985 = vmatprep.subr.bf16.mxu0 0
          %1986 = vmatpush1.bf16.xpose.msra.mxu0 0
          %1987 = vmatprep.subr.bf16.mxu0 0
          %1988 = vmatpush1.bf16.xpose.msra.mxu0 0
          %1989 = vmatprep.subr.bf16.mxu0 0
          %1990 = vmatpush1.bf16.xpose.msra.mxu0 0
          %1991 = vmatprep.subr.bf16.mxu0 0
          %1992 = vmatpush1.bf16.xpose.msra.mxu0 0
          %1993 = vmatprep.subr.bf16.mxu0 0
          %1994 = vmatpush1.bf16.xpose.msra.mxu0 0
          %1995 = vmatprep.subr.bf16.mxu0 0
          %1996 = vmatpush1.bf16.xpose.msra.mxu0 0
          %1997 = vmatprep.mubr.bf16.mxu0 0
          %1998 = vmatmul.mubr.bf16.gmra.mrb[0].mxu0 %v1960
          %v1999 = vpop.f32.mrb[0].mxu0
          %v2000 = vadd.f32 0.0, %v1999
          %v2001 = vpop.f32.mrb[0].mxu0
          %v2002 = vpop.f32.mrb[0].mxu0
          %v2003 = vpop.f32.mrb[0].mxu0
          %2004 = vdwg.mxu0
          %2005 = vrot.lane.b32.xlu0 %v1852, 80
          %v2006 = vpop.permute.xlu0 %2005
          %2007 = vrot.lane.b32.xlu0 %v1853, 16
          %v2008 = vpop.permute.xlu0 %2007
          %v2010 = vsel %vm1857, %v2006, 0
          %v2013 = vsel %vm1857, %v2008, 0
          %2015 = vmatprep.subr.bf16.mxu0 0
          %2016 = vmatpush1.bf16.xpose.msra.mxu0 %v2013
          %2017 = vmatprep.subr.bf16.mxu0 0
          %2018 = vmatpush1.bf16.xpose.msra.mxu0 0
          %2019 = vmatprep.subr.bf16.mxu0 0
          %2020 = vmatpush1.bf16.xpose.msra.mxu0 0
          %2021 = vmatprep.subr.bf16.mxu0 0
          %2022 = vmatpush1.bf16.xpose.msra.mxu0 0
          %2023 = vmatprep.subr.bf16.mxu0 0
          %2024 = vmatpush1.bf16.xpose.msra.mxu0 0
          %2025 = vmatprep.subr.bf16.mxu0 0
          %2026 = vmatpush1.bf16.xpose.msra.mxu0 0
          %2027 = vmatprep.subr.bf16.mxu0 0
          %2028 = vmatpush1.bf16.xpose.msra.mxu0 0
          %2029 = vmatprep.subr.bf16.mxu0 0
          %2030 = vmatpush1.bf16.xpose.msra.mxu0 0
          %2031 = vmatprep.subr.bf16.mxu0 0
          %2032 = vmatpush1.bf16.xpose.msra.mxu0 0
          %2033 = vmatprep.subr.bf16.mxu0 0
          %2034 = vmatpush1.bf16.xpose.msra.mxu0 0
          %2035 = vmatprep.subr.bf16.mxu0 0
          %2036 = vmatpush1.bf16.xpose.msra.mxu0 0
          %2037 = vmatprep.subr.bf16.mxu0 0
          %2038 = vmatpush1.bf16.xpose.msra.mxu0 0
          %2039 = vmatprep.subr.bf16.mxu0 0
          %2040 = vmatpush1.bf16.xpose.msra.mxu0 0
          %2041 = vmatprep.subr.bf16.mxu0 0
          %2042 = vmatpush1.bf16.xpose.msra.mxu0 0
          %2043 = vmatprep.subr.bf16.mxu0 0
          %2044 = vmatpush1.bf16.xpose.msra.mxu0 0
          %2045 = vmatprep.subr.bf16.mxu0 0
          %2046 = vmatpush1.bf16.xpose.msra.mxu0 0
          %2047 = vmatprep.mubr.bf16.mxu0 0
          %2048 = vmatmul.mubr.bf16.gmra.mrb[0].mxu0 %v2010
          %v2049 = vpop.f32.mrb[0].mxu0
          %v2050 = vadd.f32 0.0, %v2049
          %v2051 = vpop.f32.mrb[0].mxu0
          %v2052 = vpop.f32.mrb[0].mxu0
          %v2053 = vpop.f32.mrb[0].mxu0
          %2054 = vdwg.mxu0
          %v2055 = vpack.c.bf16 %v1851, %v1851
          %v2056 = vpack.c.bf16 %v1846, %v1846
          %2058 = vrot.lane.b32.xlu0 %v2056, 64
          %v2059 = vpop.permute.xlu0 %2058
          %v2061 = vsel %vm1857, %v2055, 0
          %v2064 = vsel %vm1857, %v2059, 0
          %2066 = vmatprep.subr.bf16.mxu0 0
          %2067 = vmatpush1.bf16.xpose.msra.mxu0 %v2064
          %2068 = vmatprep.subr.bf16.mxu0 0
          %2069 = vmatpush1.bf16.xpose.msra.mxu0 0
          %2070 = vmatprep.subr.bf16.mxu0 0
          %2071 = vmatpush1.bf16.xpose.msra.mxu0 0
          %2072 = vmatprep.subr.bf16.mxu0 0
          %2073 = vmatpush1.bf16.xpose.msra.mxu0 0
          %2074 = vmatprep.subr.bf16.mxu0 0
          %2075 = vmatpush1.bf16.xpose.msra.mxu0 0
          %2076 = vmatprep.subr.bf16.mxu0 0
          %2077 = vmatpush1.bf16.xpose.msra.mxu0 0
          %2078 = vmatprep.subr.bf16.mxu0 0
          %2079 = vmatpush1.bf16.xpose.msra.mxu0 0
          %2080 = vmatprep.subr.bf16.mxu0 0
          %2081 = vmatpush1.bf16.xpose.msra.mxu0 0
          %2082 = vmatprep.subr.bf16.mxu0 0
          %2083 = vmatpush1.bf16.xpose.msra.mxu0 0
          %2084 = vmatprep.subr.bf16.mxu0 0
          %2085 = vmatpush1.bf16.xpose.msra.mxu0 0
          %2086 = vmatprep.subr.bf16.mxu0 0
          %2087 = vmatpush1.bf16.xpose.msra.mxu0 0
          %2088 = vmatprep.subr.bf16.mxu0 0
          %2089 = vmatpush1.bf16.xpose.msra.mxu0 0
          %2090 = vmatprep.subr.bf16.mxu0 0
          %2091 = vmatpush1.bf16.xpose.msra.mxu0 0
          %2092 = vmatprep.subr.bf16.mxu0 0
          %2093 = vmatpush1.bf16.xpose.msra.mxu0 0
          %2094 = vmatprep.subr.bf16.mxu0 0
          %2095 = vmatpush1.bf16.xpose.msra.mxu0 0
          %2096 = vmatprep.subr.bf16.mxu0 0
          %2097 = vmatpush1.bf16.xpose.msra.mxu0 0
          %2098 = vmatprep.mubr.bf16.mxu0 0
          %2099 = vmatmul.mubr.bf16.gmra.mrb[0].mxu0 %v2061
          %v2100 = vpop.f32.mrb[0].mxu0
          %v2101 = vadd.f32 0.0, %v2100
          %v2102 = vpop.f32.mrb[0].mxu0
          %v2103 = vpop.f32.mrb[0].mxu0
          %v2104 = vpop.f32.mrb[0].mxu0
          %2105 = vdwg.mxu0
          %2107 = vrot.lane.b32.xlu0 %v2055, 112
          %v2108 = vpop.permute.xlu0 %2107
          %2109 = vrot.lane.b32.xlu0 %v2056, 48
          %v2110 = vpop.permute.xlu0 %2109
          %v2112 = vsel %vm1857, %v2108, 0
          %v2115 = vsel %vm1857, %v2110, 0
          %2117 = vmatprep.subr.bf16.mxu0 0
          %2118 = vmatpush1.bf16.xpose.msra.mxu0 %v2115
          %2119 = vmatprep.subr.bf16.mxu0 0
          %2120 = vmatpush1.bf16.xpose.msra.mxu0 0
          %2121 = vmatprep.subr.bf16.mxu0 0
          %2122 = vmatpush1.bf16.xpose.msra.mxu0 0
          %2123 = vmatprep.subr.bf16.mxu0 0
          %2124 = vmatpush1.bf16.xpose.msra.mxu0 0
          %2125 = vmatprep.subr.bf16.mxu0 0
          %2126 = vmatpush1.bf16.xpose.msra.mxu0 0
          %2127 = vmatprep.subr.bf16.mxu0 0
          %2128 = vmatpush1.bf16.xpose.msra.mxu0 0
          %2129 = vmatprep.subr.bf16.mxu0 0
          %2130 = vmatpush1.bf16.xpose.msra.mxu0 0
          %2131 = vmatprep.subr.bf16.mxu0 0
          %2132 = vmatpush1.bf16.xpose.msra.mxu0 0
          %2133 = vmatprep.subr.bf16.mxu0 0
          %2134 = vmatpush1.bf16.xpose.msra.mxu0 0
          %2135 = vmatprep.subr.bf16.mxu0 0
          %2136 = vmatpush1.bf16.xpose.msra.mxu0 0
          %2137 = vmatprep.subr.bf16.mxu0 0
          %2138 = vmatpush1.bf16.xpose.msra.mxu0 0
          %2139 = vmatprep.subr.bf16.mxu0 0
          %2140 = vmatpush1.bf16.xpose.msra.mxu0 0
          %2141 = vmatprep.subr.bf16.mxu0 0
          %2142 = vmatpush1.bf16.xpose.msra.mxu0 0
          %2143 = vmatprep.subr.bf16.mxu0 0
          %2144 = vmatpush1.bf16.xpose.msra.mxu0 0
          %2145 = vmatprep.subr.bf16.mxu0 0
          %2146 = vmatpush1.bf16.xpose.msra.mxu0 0
          %2147 = vmatprep.subr.bf16.mxu0 0
          %2148 = vmatpush1.bf16.xpose.msra.mxu0 0
          %2149 = vmatprep.mubr.bf16.mxu0 0
          %2150 = vmatmul.mubr.bf16.gmra.mrb[0].mxu0 %v2112
          %v2151 = vpop.f32.mrb[0].mxu0
          %v2152 = vadd.f32 0.0, %v2151
          %v2153 = vpop.f32.mrb[0].mxu0
          %v2154 = vpop.f32.mrb[0].mxu0
          %v2155 = vpop.f32.mrb[0].mxu0
          %2156 = vdwg.mxu0
          %2157 = vrot.lane.b32.xlu0 %v2055, 96
          %v2158 = vpop.permute.xlu0 %2157
          %2159 = vrot.lane.b32.xlu0 %v2056, 32
          %v2160 = vpop.permute.xlu0 %2159
          %v2162 = vsel %vm1857, %v2158, 0
          %v2165 = vsel %vm1857, %v2160, 0
          %2167 = vmatprep.subr.bf16.mxu0 0
          %2168 = vmatpush1.bf16.xpose.msra.mxu0 %v2165
          %2169 = vmatprep.subr.bf16.mxu0 0
          %2170 = vmatpush1.bf16.xpose.msra.mxu0 0
          %2171 = vmatprep.subr.bf16.mxu0 0
          %2172 = vmatpush1.bf16.xpose.msra.mxu0 0
          %2173 = vmatprep.subr.bf16.mxu0 0
          %2174 = vmatpush1.bf16.xpose.msra.mxu0 0
          %2175 = vmatprep.subr.bf16.mxu0 0
          %2176 = vmatpush1.bf16.xpose.msra.mxu0 0
          %2177 = vmatprep.subr.bf16.mxu0 0
          %2178 = vmatpush1.bf16.xpose.msra.mxu0 0
          %2179 = vmatprep.subr.bf16.mxu0 0
          %2180 = vmatpush1.bf16.xpose.msra.mxu0 0
          %2181 = vmatprep.subr.bf16.mxu0 0
          %2182 = vmatpush1.bf16.xpose.msra.mxu0 0
          %2183 = vmatprep.subr.bf16.mxu0 0
          %2184 = vmatpush1.bf16.xpose.msra.mxu0 0
          %2185 = vmatprep.subr.bf16.mxu0 0
          %2186 = vmatpush1.bf16.xpose.msra.mxu0 0
          %2187 = vmatprep.subr.bf16.mxu0 0
          %2188 = vmatpush1.bf16.xpose.msra.mxu0 0
          %2189 = vmatprep.subr.bf16.mxu0 0
          %2190 = vmatpush1.bf16.xpose.msra.mxu0 0
          %2191 = vmatprep.subr.bf16.mxu0 0
          %2192 = vmatpush1.bf16.xpose.msra.mxu0 0
          %2193 = vmatprep.subr.bf16.mxu0 0
          %2194 = vmatpush1.bf16.xpose.msra.mxu0 0
          %2195 = vmatprep.subr.bf16.mxu0 0
          %2196 = vmatpush1.bf16.xpose.msra.mxu0 0
          %2197 = vmatprep.subr.bf16.mxu0 0
          %2198 = vmatpush1.bf16.xpose.msra.mxu0 0
          %2199 = vmatprep.mubr.bf16.mxu0 0
          %2200 = vmatmul.mubr.bf16.gmra.mrb[0].mxu0 %v2162
          %v2201 = vpop.f32.mrb[0].mxu0
          %v2202 = vadd.f32 0.0, %v2201
          %v2203 = vpop.f32.mrb[0].mxu0
          %v2204 = vpop.f32.mrb[0].mxu0
          %v2205 = vpop.f32.mrb[0].mxu0
          %2206 = vdwg.mxu0
          %2207 = vrot.lane.b32.xlu0 %v2055, 80
          %v2208 = vpop.permute.xlu0 %2207
          %2209 = vrot.lane.b32.xlu0 %v2056, 16
          %v2210 = vpop.permute.xlu0 %2209
          %v2212 = vsel %vm1857, %v2208, 0
          %v2215 = vsel %vm1857, %v2210, 0
          %2217 = vmatprep.subr.bf16.mxu0 0
          %2218 = vmatpush1.bf16.xpose.msra.mxu0 %v2215
          %2219 = vmatprep.subr.bf16.mxu0 0
          %2220 = vmatpush1.bf16.xpose.msra.mxu0 0
          %2221 = vmatprep.subr.bf16.mxu0 0
          %2222 = vmatpush1.bf16.xpose.msra.mxu0 0
          %2223 = vmatprep.subr.bf16.mxu0 0
          %2224 = vmatpush1.bf16.xpose.msra.mxu0 0
          %2225 = vmatprep.subr.bf16.mxu0 0
          %2226 = vmatpush1.bf16.xpose.msra.mxu0 0
          %2227 = vmatprep.subr.bf16.mxu0 0
          %2228 = vmatpush1.bf16.xpose.msra.mxu0 0
          %2229 = vmatprep.subr.bf16.mxu0 0
          %2230 = vmatpush1.bf16.xpose.msra.mxu0 0
          %2231 = vmatprep.subr.bf16.mxu0 0
          %2232 = vmatpush1.bf16.xpose.msra.mxu0 0
          %2233 = vmatprep.subr.bf16.mxu0 0
          %2234 = vmatpush1.bf16.xpose.msra.mxu0 0
          %2235 = vmatprep.subr.bf16.mxu0 0
          %2236 = vmatpush1.bf16.xpose.msra.mxu0 0
          %2237 = vmatprep.subr.bf16.mxu0 0
          %2238 = vmatpush1.bf16.xpose.msra.mxu0 0
          %2239 = vmatprep.subr.bf16.mxu0 0
          %2240 = vmatpush1.bf16.xpose.msra.mxu0 0
          %2241 = vmatprep.subr.bf16.mxu0 0
          %2242 = vmatpush1.bf16.xpose.msra.mxu0 0
          %2243 = vmatprep.subr.bf16.mxu0 0
          %2244 = vmatpush1.bf16.xpose.msra.mxu0 0
          %2245 = vmatprep.subr.bf16.mxu0 0
          %2246 = vmatpush1.bf16.xpose.msra.mxu0 0
          %2247 = vmatprep.subr.bf16.mxu0 0
          %2248 = vmatpush1.bf16.xpose.msra.mxu0 0
          %2249 = vmatprep.mubr.bf16.mxu0 0
          %2250 = vmatmul.mubr.bf16.gmra.mrb[0].mxu0 %v2212
          %v2251 = vpop.f32.mrb[0].mxu0
          %v2252 = vadd.f32 0.0, %v2251
          %v2253 = vpop.f32.mrb[0].mxu0
          %v2254 = vpop.f32.mrb[0].mxu0
          %v2255 = vpop.f32.mrb[0].mxu0
          %2256 = vdwg.mxu0
          %v2257 = vadd.f32 %v1899, %v1698
          %v2258 = vadd.f32 %v1950, %v1698
          %v2259 = vadd.f32 %v2000, %v1698
          %v2260 = vadd.f32 %v2050, %v1698
          %v2261 = vadd.f32 %v2101, %v1698
          %v2262 = vadd.f32 %v2152, %v1698
          %v2263 = vadd.f32 %v2202, %v1698
          %v2264 = vadd.f32 %v2252, %v1698
          %vm2265 = vcmask 64512
          %v2266 = vsel %vm2265, %v2257, -inf
          %2267 = vmax.xlane.f32.xlu0 %v2266
          %v2268 = vpop.xlane.xlu0 %2267
          %v2269 = vsel %vm2265, %v2258, -inf
          %2270 = vmax.xlane.f32.xlu0 %v2269
          %v2271 = vpop.xlane.xlu0 %2270
          %v2272 = vsel %vm2265, %v2259, -inf
          %2273 = vmax.xlane.f32.xlu0 %v2272
          %v2274 = vpop.xlane.xlu0 %2273
          %v2275 = vsel %vm2265, %v2260, -inf
          %2276 = vmax.xlane.f32.xlu0 %v2275
          %v2277 = vpop.xlane.xlu0 %2276
          %v2278 = vsel %vm2265, %v2261, -inf
          %2279 = vmax.xlane.f32.xlu0 %v2278
          %v2280 = vpop.xlane.xlu0 %2279
          %v2281 = vsel %vm2265, %v2262, -inf
          %2282 = vmax.xlane.f32.xlu0 %v2281
          %v2283 = vpop.xlane.xlu0 %2282
          %v2284 = vsel %vm2265, %v2263, -inf
          %2285 = vmax.xlane.f32.xlu0 %v2284
          %v2286 = vpop.xlane.xlu0 %2285
          %v2287 = vsel %vm2265, %v2264, -inf
          %2288 = vmax.xlane.f32.xlu0 %v2287
          %v2289 = vpop.xlane.xlu0 %2288
          %v2290 = vsub.f32 %v2257, %v2268
          %v2291 = vsub.f32 %v2258, %v2271
          %v2292 = vsub.f32 %v2259, %v2274
          %v2293 = vsub.f32 %v2260, %v2277
          %v2294 = vsub.f32 %v2261, %v2280
          %v2295 = vsub.f32 %v2262, %v2283
          %v2296 = vsub.f32 %v2263, %v2286
          %v2297 = vsub.f32 %v2264, %v2289
          %v2298 = vmul.f32 %v2290, 1.442695
          %v2299 = vpow.pop %v2298
          %v2300 = vmul.f32 %v2291, 1.442695
          %v2301 = vpow.pop %v2300
          %v2302 = vmul.f32 %v2292, 1.442695
          %v2303 = vpow.pop %v2302
          %v2304 = vmul.f32 %v2293, 1.442695
          %v2305 = vpow.pop %v2304
          %v2306 = vmul.f32 %v2294, 1.442695
          %v2307 = vpow.pop %v2306
          %v2308 = vmul.f32 %v2295, 1.442695
          %v2309 = vpow.pop %v2308
          %v2310 = vmul.f32 %v2296, 1.442695
          %v2311 = vpow.pop %v2310
          %v2312 = vmul.f32 %v2297, 1.442695
          %v2313 = vpow.pop %v2312
          %v2314 = vsel %vm2265, %v2299, 0.0
          %2315 = vadd.xlane.f32.xlu0 %v2314
          %v2316 = vpop.xlane.xlu0 %2315
          %v2317 = vsel %vm2265, %v2301, 0.0
          %2318 = vadd.xlane.f32.xlu0 %v2317
          %v2319 = vpop.xlane.xlu0 %2318
          %v2320 = vsel %vm2265, %v2303, 0.0
          %2321 = vadd.xlane.f32.xlu0 %v2320
          %v2322 = vpop.xlane.xlu0 %2321
          %v2323 = vsel %vm2265, %v2305, 0.0
          %2324 = vadd.xlane.f32.xlu0 %v2323
          %v2325 = vpop.xlane.xlu0 %2324
          %v2326 = vsel %vm2265, %v2307, 0.0
          %2327 = vadd.xlane.f32.xlu0 %v2326
          %v2328 = vpop.xlane.xlu0 %2327
          %v2329 = vsel %vm2265, %v2309, 0.0
          %2330 = vadd.xlane.f32.xlu0 %v2329
          %v2331 = vpop.xlane.xlu0 %2330
          %v2332 = vsel %vm2265, %v2311, 0.0
          %2333 = vadd.xlane.f32.xlu0 %v2332
          %v2334 = vpop.xlane.xlu0 %2333
          %v2335 = vsel %vm2265, %v2313, 0.0
          %2336 = vadd.xlane.f32.xlu0 %v2335
          %v2337 = vpop.xlane.xlu0 %2336
          %v2338 = vrcp.pop %v2316
          %v2339 = vrcp.pop %v2319
          %v2340 = vrcp.pop %v2322
          %v2341 = vrcp.pop %v2325
          %v2342 = vrcp.pop %v2328
          %v2343 = vrcp.pop %v2331
          %v2344 = vrcp.pop %v2334
          %v2345 = vrcp.pop %v2337
          %v2346 = vmul.f32 %v2299, %v2338
          %v2347 = vmul.f32 %v2301, %v2339
          %v2348 = vmul.f32 %v2303, %v2340
          %v2349 = vmul.f32 %v2305, %v2341
          %v2350 = vmul.f32 %v2307, %v2342
          %v2351 = vmul.f32 %v2309, %v2343
          %v2352 = vmul.f32 %v2311, %v2344
          %v2353 = vmul.f32 %v2313, %v2345
          %v2354 = vpack.c.bf16 %v2346, %v2346
          %v2355 = vpack.c.bf16 %v1844, %v1844
          %v2357 = vsel %vm2265, %v2354, 0
          %vm2359 = vcmask 1043456
          %v2361 = vsel %vm2359, %v2355, 0
          %2363 = vmatprep.subr.bf16.mxu0 0
          %2364 = vmatpush1.bf16.msra.mxu0 %v2361
          %2365 = vmatprep.subr.bf16.mxu0 0
          %2366 = vmatpush1.bf16.msra.mxu0 0
          %2367 = vmatprep.subr.bf16.mxu0 0
          %2368 = vmatpush1.bf16.msra.mxu0 0
          %2369 = vmatprep.subr.bf16.mxu0 0
          %2370 = vmatpush1.bf16.msra.mxu0 0
          %2371 = vmatprep.subr.bf16.mxu0 0
          %2372 = vmatpush1.bf16.msra.mxu0 0
          %2373 = vmatprep.subr.bf16.mxu0 0
          %2374 = vmatpush1.bf16.msra.mxu0 0
          %2375 = vmatprep.subr.bf16.mxu0 0
          %2376 = vmatpush1.bf16.msra.mxu0 0
          %2377 = vmatprep.subr.bf16.mxu0 0
          %2378 = vmatpush1.bf16.msra.mxu0 0
          %2379 = vmatprep.subr.bf16.mxu0 0
          %2380 = vmatpush1.bf16.msra.mxu0 0
          %2381 = vmatprep.subr.bf16.mxu0 0
          %2382 = vmatpush1.bf16.msra.mxu0 0
          %2383 = vmatprep.subr.bf16.mxu0 0
          %2384 = vmatpush1.bf16.msra.mxu0 0
          %2385 = vmatprep.subr.bf16.mxu0 0
          %2386 = vmatpush1.bf16.msra.mxu0 0
          %2387 = vmatprep.subr.bf16.mxu0 0
          %2388 = vmatpush1.bf16.msra.mxu0 0
          %2389 = vmatprep.subr.bf16.mxu0 0
          %2390 = vmatpush1.bf16.msra.mxu0 0
          %2391 = vmatprep.subr.bf16.mxu0 0
          %2392 = vmatpush1.bf16.msra.mxu0 0
          %2393 = vmatprep.subr.bf16.mxu0 0
          %2394 = vmatpush1.bf16.msra.mxu0 0
          %2395 = vmatprep.mubr.bf16.mxu0 0
          %2396 = vmatmul.mubr.bf16.gmra.mrb[0].mxu0 %v2357
          %v2397 = vpop.f32.mrb[0].mxu0
          %v2398 = vadd.f32 0.0, %v2397
          %v2399 = vpop.f32.mrb[0].mxu0
          %v2400 = vpop.f32.mrb[0].mxu0
          %v2401 = vpop.f32.mrb[0].mxu0
          %2402 = vdwg.mxu0
          %v2403 = vpack.c.bf16 %v2347, %v2347
          %2405 = vrot.lane.b32.xlu0 %v2355, 112
          %v2406 = vpop.permute.xlu0 %2405
          %v2408 = vsel %vm2265, %v2403, 0
          %v2411 = vsel %vm2359, %v2406, 0
          %2413 = vmatprep.subr.bf16.mxu0 0
          %2414 = vmatpush1.bf16.msra.mxu0 %v2411
          %2415 = vmatprep.subr.bf16.mxu0 0
          %2416 = vmatpush1.bf16.msra.mxu0 0
          %2417 = vmatprep.subr.bf16.mxu0 0
          %2418 = vmatpush1.bf16.msra.mxu0 0
          %2419 = vmatprep.subr.bf16.mxu0 0
          %2420 = vmatpush1.bf16.msra.mxu0 0
          %2421 = vmatprep.subr.bf16.mxu0 0
          %2422 = vmatpush1.bf16.msra.mxu0 0
          %2423 = vmatprep.subr.bf16.mxu0 0
          %2424 = vmatpush1.bf16.msra.mxu0 0
          %2425 = vmatprep.subr.bf16.mxu0 0
          %2426 = vmatpush1.bf16.msra.mxu0 0
          %2427 = vmatprep.subr.bf16.mxu0 0
          %2428 = vmatpush1.bf16.msra.mxu0 0
          %2429 = vmatprep.subr.bf16.mxu0 0
          %2430 = vmatpush1.bf16.msra.mxu0 0
          %2431 = vmatprep.subr.bf16.mxu0 0
          %2432 = vmatpush1.bf16.msra.mxu0 0
          %2433 = vmatprep.subr.bf16.mxu0 0
          %2434 = vmatpush1.bf16.msra.mxu0 0
          %2435 = vmatprep.subr.bf16.mxu0 0
          %2436 = vmatpush1.bf16.msra.mxu0 0
          %2437 = vmatprep.subr.bf16.mxu0 0
          %2438 = vmatpush1.bf16.msra.mxu0 0
          %2439 = vmatprep.subr.bf16.mxu0 0
          %2440 = vmatpush1.bf16.msra.mxu0 0
          %2441 = vmatprep.subr.bf16.mxu0 0
          %2442 = vmatpush1.bf16.msra.mxu0 0
          %2443 = vmatprep.subr.bf16.mxu0 0
          %2444 = vmatpush1.bf16.msra.mxu0 0
          %2445 = vmatprep.mubr.bf16.mxu0 0
          %2446 = vmatmul.mubr.bf16.gmra.mrb[0].mxu0 %v2408
          %v2447 = vpop.f32.mrb[0].mxu0
          %v2448 = vadd.f32 0.0, %v2447
          %v2449 = vpop.f32.mrb[0].mxu0
          %v2450 = vpop.f32.mrb[0].mxu0
          %v2451 = vpop.f32.mrb[0].mxu0
          %2452 = vdwg.mxu0
          %v2453 = vpack.c.bf16 %v2348, %v2348
          %2454 = vrot.lane.b32.xlu0 %v2355, 96
          %v2455 = vpop.permute.xlu0 %2454
          %v2457 = vsel %vm2265, %v2453, 0
          %v2460 = vsel %vm2359, %v2455, 0
          %2462 = vmatprep.subr.bf16.mxu0 0
          %2463 = vmatpush1.bf16.msra.mxu0 %v2460
          %2464 = vmatprep.subr.bf16.mxu0 0
          %2465 = vmatpush1.bf16.msra.mxu0 0
          %2466 = vmatprep.subr.bf16.mxu0 0
          %2467 = vmatpush1.bf16.msra.mxu0 0
          %2468 = vmatprep.subr.bf16.mxu0 0
          %2469 = vmatpush1.bf16.msra.mxu0 0
          %2470 = vmatprep.subr.bf16.mxu0 0
          %2471 = vmatpush1.bf16.msra.mxu0 0
          %2472 = vmatprep.subr.bf16.mxu0 0
          %2473 = vmatpush1.bf16.msra.mxu0 0
          %2474 = vmatprep.subr.bf16.mxu0 0
          %2475 = vmatpush1.bf16.msra.mxu0 0
          %2476 = vmatprep.subr.bf16.mxu0 0
          %2477 = vmatpush1.bf16.msra.mxu0 0
          %2478 = vmatprep.subr.bf16.mxu0 0
          %2479 = vmatpush1.bf16.msra.mxu0 0
          %2480 = vmatprep.subr.bf16.mxu0 0
          %2481 = vmatpush1.bf16.msra.mxu0 0
          %2482 = vmatprep.subr.bf16.mxu0 0
          %2483 = vmatpush1.bf16.msra.mxu0 0
          %2484 = vmatprep.subr.bf16.mxu0 0
          %2485 = vmatpush1.bf16.msra.mxu0 0
          %2486 = vmatprep.subr.bf16.mxu0 0
          %2487 = vmatpush1.bf16.msra.mxu0 0
          %2488 = vmatprep.subr.bf16.mxu0 0
          %2489 = vmatpush1.bf16.msra.mxu0 0
          %2490 = vmatprep.subr.bf16.mxu0 0
          %2491 = vmatpush1.bf16.msra.mxu0 0
          %2492 = vmatprep.subr.bf16.mxu0 0
          %2493 = vmatpush1.bf16.msra.mxu0 0
          %2494 = vmatprep.mubr.bf16.mxu0 0
          %2495 = vmatmul.mubr.bf16.gmra.mrb[0].mxu0 %v2457
          %v2496 = vpop.f32.mrb[0].mxu0
          %v2497 = vadd.f32 0.0, %v2496
          %v2498 = vpop.f32.mrb[0].mxu0
          %v2499 = vpop.f32.mrb[0].mxu0
          %v2500 = vpop.f32.mrb[0].mxu0
          %2501 = vdwg.mxu0
          %v2502 = vpack.c.bf16 %v2349, %v2349
          %2503 = vrot.lane.b32.xlu0 %v2355, 80
          %v2504 = vpop.permute.xlu0 %2503
          %v2506 = vsel %vm2265, %v2502, 0
          %v2509 = vsel %vm2359, %v2504, 0
          %2511 = vmatprep.subr.bf16.mxu0 0
          %2512 = vmatpush1.bf16.msra.mxu0 %v2509
          %2513 = vmatprep.subr.bf16.mxu0 0
          %2514 = vmatpush1.bf16.msra.mxu0 0
          %2515 = vmatprep.subr.bf16.mxu0 0
          %2516 = vmatpush1.bf16.msra.mxu0 0
          %2517 = vmatprep.subr.bf16.mxu0 0
          %2518 = vmatpush1.bf16.msra.mxu0 0
          %2519 = vmatprep.subr.bf16.mxu0 0
          %2520 = vmatpush1.bf16.msra.mxu0 0
          %2521 = vmatprep.subr.bf16.mxu0 0
          %2522 = vmatpush1.bf16.msra.mxu0 0
          %2523 = vmatprep.subr.bf16.mxu0 0
          %2524 = vmatpush1.bf16.msra.mxu0 0
          %2525 = vmatprep.subr.bf16.mxu0 0
          %2526 = vmatpush1.bf16.msra.mxu0 0
          %2527 = vmatprep.subr.bf16.mxu0 0
          %2528 = vmatpush1.bf16.msra.mxu0 0
          %2529 = vmatprep.subr.bf16.mxu0 0
          %2530 = vmatpush1.bf16.msra.mxu0 0
          %2531 = vmatprep.subr.bf16.mxu0 0
          %2532 = vmatpush1.bf16.msra.mxu0 0
          %2533 = vmatprep.subr.bf16.mxu0 0
          %2534 = vmatpush1.bf16.msra.mxu0 0
          %2535 = vmatprep.subr.bf16.mxu0 0
          %2536 = vmatpush1.bf16.msra.mxu0 0
          %2537 = vmatprep.subr.bf16.mxu0 0
          %2538 = vmatpush1.bf16.msra.mxu0 0
          %2539 = vmatprep.subr.bf16.mxu0 0
          %2540 = vmatpush1.bf16.msra.mxu0 0
          %2541 = vmatprep.subr.bf16.mxu0 0
          %2542 = vmatpush1.bf16.msra.mxu0 0
          %2543 = vmatprep.mubr.bf16.mxu0 0
          %2544 = vmatmul.mubr.bf16.gmra.mrb[0].mxu0 %v2506
          %v2545 = vpop.f32.mrb[0].mxu0
          %v2546 = vadd.f32 0.0, %v2545
          %v2547 = vpop.f32.mrb[0].mxu0
          %v2548 = vpop.f32.mrb[0].mxu0
          %v2549 = vpop.f32.mrb[0].mxu0
          %2550 = vdwg.mxu0
          %2552 = vrot.lane.b32.xlu0 %v2448, 16
          %v2553 = vpop.permute.xlu0 %2552
          %2556 = vrot.lane.b32.xlu0 %v2497, 32
          %v2557 = vpop.permute.xlu0 %2556
          %2560 = vrot.lane.b32.xlu0 %v2546, 48
          %v2561 = vpop.permute.xlu0 %2560
          %v2563 = vsel %vm1857, %v2398, %v2553
          %vm2564 = vcmask 261120
          %v2565 = vsel %vm2564, %v2563, %v2557
          %vm2566 = vcmask 392192
          %v2567 = vsel %vm2566, %v2565, %v2561
          %v2568 = vpack.c.bf16 %v2350, %v2350
          %v2569 = vpack.c.bf16 %v1848, %v1848
          %v2571 = vsel %vm2265, %v2568, 0
          %v2574 = vsel %vm2359, %v2569, 0
          %2576 = vmatprep.subr.bf16.mxu0 0
          %2577 = vmatpush1.bf16.msra.mxu0 %v2574
          %2578 = vmatprep.subr.bf16.mxu0 0
          %2579 = vmatpush1.bf16.msra.mxu0 0
          %2580 = vmatprep.subr.bf16.mxu0 0
          %2581 = vmatpush1.bf16.msra.mxu0 0
          %2582 = vmatprep.subr.bf16.mxu0 0
          %2583 = vmatpush1.bf16.msra.mxu0 0
          %2584 = vmatprep.subr.bf16.mxu0 0
          %2585 = vmatpush1.bf16.msra.mxu0 0
          %2586 = vmatprep.subr.bf16.mxu0 0
          %2587 = vmatpush1.bf16.msra.mxu0 0
          %2588 = vmatprep.subr.bf16.mxu0 0
          %2589 = vmatpush1.bf16.msra.mxu0 0
          %2590 = vmatprep.subr.bf16.mxu0 0
          %2591 = vmatpush1.bf16.msra.mxu0 0
          %2592 = vmatprep.subr.bf16.mxu0 0
          %2593 = vmatpush1.bf16.msra.mxu0 0
          %2594 = vmatprep.subr.bf16.mxu0 0
          %2595 = vmatpush1.bf16.msra.mxu0 0
          %2596 = vmatprep.subr.bf16.mxu0 0
          %2597 = vmatpush1.bf16.msra.mxu0 0
          %2598 = vmatprep.subr.bf16.mxu0 0
          %2599 = vmatpush1.bf16.msra.mxu0 0
          %2600 = vmatprep.subr.bf16.mxu0 0
          %2601 = vmatpush1.bf16.msra.mxu0 0
          %2602 = vmatprep.subr.bf16.mxu0 0
          %2603 = vmatpush1.bf16.msra.mxu0 0
          %2604 = vmatprep.subr.bf16.mxu0 0
          %2605 = vmatpush1.bf16.msra.mxu0 0
          %2606 = vmatprep.subr.bf16.mxu0 0
          %2607 = vmatpush1.bf16.msra.mxu0 0
          %2608 = vmatprep.mubr.bf16.mxu0 0
          %2609 = vmatmul.mubr.bf16.gmra.mrb[0].mxu0 %v2571
          %v2610 = vpop.f32.mrb[0].mxu0
          %v2611 = vadd.f32 0.0, %v2610
          %v2612 = vpop.f32.mrb[0].mxu0
          %v2613 = vpop.f32.mrb[0].mxu0
          %v2614 = vpop.f32.mrb[0].mxu0
          %2615 = vdwg.mxu0
          %v2616 = vpack.c.bf16 %v2351, %v2351
          %2618 = vrot.lane.b32.xlu0 %v2569, 112
          %v2619 = vpop.permute.xlu0 %2618
          %v2621 = vsel %vm2265, %v2616, 0
          %v2624 = vsel %vm2359, %v2619, 0
          %2626 = vmatprep.subr.bf16.mxu0 0
          %2627 = vmatpush1.bf16.msra.mxu0 %v2624
          %2628 = vmatprep.subr.bf16.mxu0 0
          %2629 = vmatpush1.bf16.msra.mxu0 0
          %2630 = vmatprep.subr.bf16.mxu0 0
          %2631 = vmatpush1.bf16.msra.mxu0 0
          %2632 = vmatprep.subr.bf16.mxu0 0
          %2633 = vmatpush1.bf16.msra.mxu0 0
          %2634 = vmatprep.subr.bf16.mxu0 0
          %2635 = vmatpush1.bf16.msra.mxu0 0
          %2636 = vmatprep.subr.bf16.mxu0 0
          %2637 = vmatpush1.bf16.msra.mxu0 0
          %2638 = vmatprep.subr.bf16.mxu0 0
          %2639 = vmatpush1.bf16.msra.mxu0 0
          %2640 = vmatprep.subr.bf16.mxu0 0
          %2641 = vmatpush1.bf16.msra.mxu0 0
          %2642 = vmatprep.subr.bf16.mxu0 0
          %2643 = vmatpush1.bf16.msra.mxu0 0
          %2644 = vmatprep.subr.bf16.mxu0 0
          %2645 = vmatpush1.bf16.msra.mxu0 0
          %2646 = vmatprep.subr.bf16.mxu0 0
          %2647 = vmatpush1.bf16.msra.mxu0 0
          %2648 = vmatprep.subr.bf16.mxu0 0
          %2649 = vmatpush1.bf16.msra.mxu0 0
          %2650 = vmatprep.subr.bf16.mxu0 0
          %2651 = vmatpush1.bf16.msra.mxu0 0
          %2652 = vmatprep.subr.bf16.mxu0 0
          %2653 = vmatpush1.bf16.msra.mxu0 0
          %2654 = vmatprep.subr.bf16.mxu0 0
          %2655 = vmatpush1.bf16.msra.mxu0 0
          %2656 = vmatprep.subr.bf16.mxu0 0
          %2657 = vmatpush1.bf16.msra.mxu0 0
          %2658 = vmatprep.mubr.bf16.mxu0 0
          %2659 = vmatmul.mubr.bf16.gmra.mrb[0].mxu0 %v2621
          %v2660 = vpop.f32.mrb[0].mxu0
          %v2661 = vadd.f32 0.0, %v2660
          %v2662 = vpop.f32.mrb[0].mxu0
          %v2663 = vpop.f32.mrb[0].mxu0
          %v2664 = vpop.f32.mrb[0].mxu0
          %2665 = vdwg.mxu0
          %v2666 = vpack.c.bf16 %v2352, %v2352
          %2667 = vrot.lane.b32.xlu0 %v2569, 96
          %v2668 = vpop.permute.xlu0 %2667
          %v2670 = vsel %vm2265, %v2666, 0
          %v2673 = vsel %vm2359, %v2668, 0
          %2675 = vmatprep.subr.bf16.mxu0 0
          %2676 = vmatpush1.bf16.msra.mxu0 %v2673
          %2677 = vmatprep.subr.bf16.mxu0 0
          %2678 = vmatpush1.bf16.msra.mxu0 0
          %2679 = vmatprep.subr.bf16.mxu0 0
          %2680 = vmatpush1.bf16.msra.mxu0 0
          %2681 = vmatprep.subr.bf16.mxu0 0
          %2682 = vmatpush1.bf16.msra.mxu0 0
          %2683 = vmatprep.subr.bf16.mxu0 0
          %2684 = vmatpush1.bf16.msra.mxu0 0
          %2685 = vmatprep.subr.bf16.mxu0 0
          %2686 = vmatpush1.bf16.msra.mxu0 0
          %2687 = vmatprep.subr.bf16.mxu0 0
          %2688 = vmatpush1.bf16.msra.mxu0 0
          %2689 = vmatprep.subr.bf16.mxu0 0
          %2690 = vmatpush1.bf16.msra.mxu0 0
          %2691 = vmatprep.subr.bf16.mxu0 0
          %2692 = vmatpush1.bf16.msra.mxu0 0
          %2693 = vmatprep.subr.bf16.mxu0 0
          %2694 = vmatpush1.bf16.msra.mxu0 0
          %2695 = vmatprep.subr.bf16.mxu0 0
          %2696 = vmatpush1.bf16.msra.mxu0 0
          %2697 = vmatprep.subr.bf16.mxu0 0
          %2698 = vmatpush1.bf16.msra.mxu0 0
          %2699 = vmatprep.subr.bf16.mxu0 0
          %2700 = vmatpush1.bf16.msra.mxu0 0
          %2701 = vmatprep.subr.bf16.mxu0 0
          %2702 = vmatpush1.bf16.msra.mxu0 0
          %2703 = vmatprep.subr.bf16.mxu0 0
          %2704 = vmatpush1.bf16.msra.mxu0 0
          %2705 = vmatprep.subr.bf16.mxu0 0
          %2706 = vmatpush1.bf16.msra.mxu0 0
          %2707 = vmatprep.mubr.bf16.mxu0 0
          %2708 = vmatmul.mubr.bf16.gmra.mrb[0].mxu0 %v2670
          %v2709 = vpop.f32.mrb[0].mxu0
          %v2710 = vadd.f32 0.0, %v2709
          %v2711 = vpop.f32.mrb[0].mxu0
          %v2712 = vpop.f32.mrb[0].mxu0
          %v2713 = vpop.f32.mrb[0].mxu0
          %2714 = vdwg.mxu0
          %v2715 = vpack.c.bf16 %v2353, %v2353
          %2716 = vrot.lane.b32.xlu0 %v2569, 80
          %v2717 = vpop.permute.xlu0 %2716
          %v2719 = vsel %vm2265, %v2715, 0
          %v2722 = vsel %vm2359, %v2717, 0
          %2724 = vmatprep.subr.bf16.mxu0 0
          %2725 = vmatpush1.bf16.msra.mxu0 %v2722
          %2726 = vmatprep.subr.bf16.mxu0 0
          %2727 = vmatpush1.bf16.msra.mxu0 0
          %2728 = vmatprep.subr.bf16.mxu0 0
          %2729 = vmatpush1.bf16.msra.mxu0 0
          %2730 = vmatprep.subr.bf16.mxu0 0
          %2731 = vmatpush1.bf16.msra.mxu0 0
          %2732 = vmatprep.subr.bf16.mxu0 0
          %2733 = vmatpush1.bf16.msra.mxu0 0
          %2734 = vmatprep.subr.bf16.mxu0 0
          %2735 = vmatpush1.bf16.msra.mxu0 0
          %2736 = vmatprep.subr.bf16.mxu0 0
          %2737 = vmatpush1.bf16.msra.mxu0 0
          %2738 = vmatprep.subr.bf16.mxu0 0
          %2739 = vmatpush1.bf16.msra.mxu0 0
          %2740 = vmatprep.subr.bf16.mxu0 0
          %2741 = vmatpush1.bf16.msra.mxu0 0
          %2742 = vmatprep.subr.bf16.mxu0 0
          %2743 = vmatpush1.bf16.msra.mxu0 0
          %2744 = vmatprep.subr.bf16.mxu0 0
          %2745 = vmatpush1.bf16.msra.mxu0 0
          %2746 = vmatprep.subr.bf16.mxu0 0
          %2747 = vmatpush1.bf16.msra.mxu0 0
          %2748 = vmatprep.subr.bf16.mxu0 0
          %2749 = vmatpush1.bf16.msra.mxu0 0
          %2750 = vmatprep.subr.bf16.mxu0 0
          %2751 = vmatpush1.bf16.msra.mxu0 0
          %2752 = vmatprep.subr.bf16.mxu0 0
          %2753 = vmatpush1.bf16.msra.mxu0 0
          %2754 = vmatprep.subr.bf16.mxu0 0
          %2755 = vmatpush1.bf16.msra.mxu0 0
          %2756 = vmatprep.mubr.bf16.mxu0 0
          %2757 = vmatmul.mubr.bf16.gmra.mrb[0].mxu0 %v2719
          %v2758 = vpop.f32.mrb[0].mxu0
          %v2759 = vadd.f32 0.0, %v2758
          %v2760 = vpop.f32.mrb[0].mxu0
          %v2761 = vpop.f32.mrb[0].mxu0
          %v2762 = vpop.f32.mrb[0].mxu0
          %2763 = vdwg.mxu0
          %2765 = vrot.lane.b32.xlu0 %v2661, 16
          %v2766 = vpop.permute.xlu0 %2765
          %2769 = vrot.lane.b32.xlu0 %v2710, 32
          %v2770 = vpop.permute.xlu0 %2769
          %2773 = vrot.lane.b32.xlu0 %v2759, 48
          %v2774 = vpop.permute.xlu0 %2773
          %v2776 = vsel %vm1857, %v2611, %v2766
          %v2777 = vsel %vm2564, %v2776, %v2770
          %v2778 = vsel %vm2566, %v2777, %v2774
          %v2779 = vpack.c.bf16 %v2778, %v2567
          %v2780 = vld [vmem:[%s23] sm:$0xf]
          %v2781 = vld [vmem:[%s23 + $0x4] sm:$0xf]
          %v2782 = vld [vmem:[%s23 + $0x8] sm:$0xf]
          %v2783 = vld [vmem:[%s23 + $0xc] sm:$0xf]
          %v2784 = vld [vmem:[%s23 + $0x10] sm:$0xf]
          %v2785 = vld [vmem:[%s23 + $0x14] sm:$0xf]
          %v2786 = vld [vmem:[%s23 + $0x18] sm:$0xf]
          %v2787 = vld [vmem:[%s23 + $0x1c] sm:$0xf]
          %v2788 = vld [vmem:[#allocation14] sm:$0x1]
          %v2790 = vlaneseq
          %v2791 = vshrl.u32 %v2790, 7
          %v2792 = vsub.s32 0, %v2791
          %v2793 = vrot.slane %v2788, %v2792
          %v2803 = vunpack.c.l.b16 %v2780
          %v2804 = vunpack.c.l.b16 %v2781
          %v2805 = vunpack.c.l.b16 %v2782
          %v2806 = vunpack.c.l.b16 %v2783
          %v2807 = vunpack.c.l.b16 %v2784
          %v2808 = vunpack.c.l.b16 %v2785
          %v2809 = vunpack.c.l.b16 %v2786
          %v2810 = vunpack.c.l.b16 %v2787
          %v2811 = vpack.c.b16 %v2804, %v2803
          %v2812 = vpack.c.b16 %v2806, %v2805
          %v2813 = vpack.c.b16 %v2808, %v2807
          %v2814 = vpack.c.b16 %v2810, %v2809
          %v2820 = vsel %vm1584, %v2779, 0
          %2822 = vmatprep.subr.bf16.mxu0 0
          %2823 = vmatpush1.bf16.msra.mxu0 %v2811
          %2824 = vmatprep.subr.bf16.mxu0 0
          %2825 = vmatpush1.bf16.msra.mxu0 %v2812
          %2826 = vmatprep.subr.bf16.mxu0 0
          %2827 = vmatpush1.bf16.msra.mxu0 %v2813
          %2828 = vmatprep.subr.bf16.mxu0 0
          %2829 = vmatpush1.bf16.msra.mxu0 %v2814
          %2830 = vmatprep.subr.bf16.mxu0 0
          %2831 = vmatpush1.bf16.msra.mxu0 0
          %2832 = vmatprep.subr.bf16.mxu0 0
          %2833 = vmatpush1.bf16.msra.mxu0 0
          %2834 = vmatprep.subr.bf16.mxu0 0
          %2835 = vmatpush1.bf16.msra.mxu0 0
          %2836 = vmatprep.subr.bf16.mxu0 0
          %2837 = vmatpush1.bf16.msra.mxu0 0
          %2838 = vmatprep.subr.bf16.mxu0 0
          %2839 = vmatpush1.bf16.msra.mxu0 0
          %2840 = vmatprep.subr.bf16.mxu0 0
          %2841 = vmatpush1.bf16.msra.mxu0 0
          %2842 = vmatprep.subr.bf16.mxu0 0
          %2843 = vmatpush1.bf16.msra.mxu0 0
          %2844 = vmatprep.subr.bf16.mxu0 0
          %2845 = vmatpush1.bf16.msra.mxu0 0
          %2846 = vmatprep.subr.bf16.mxu0 0
          %2847 = vmatpush1.bf16.msra.mxu0 0
          %2848 = vmatprep.subr.bf16.mxu0 0
          %2849 = vmatpush1.bf16.msra.mxu0 0
          %2850 = vmatprep.subr.bf16.mxu0 0
          %2851 = vmatpush1.bf16.msra.mxu0 0
          %2852 = vmatprep.subr.bf16.mxu0 0
          %2853 = vmatpush1.bf16.msra.mxu0 0
          %2854 = vmatprep.mubr.bf16.mxu0 0
          %2855 = vmatmul.mubr.bf16.gmra.mrb[0].mxu0 %v2820
          %v2856 = vpop.f32.mrb[0].mxu0
          %v2857 = vadd.f32 %v2793, %v2856
          %v2858 = vpop.f32.mrb[0].mxu0
          %v2859 = vpop.f32.mrb[0].mxu0
          %v2860 = vadd.f32 %v2793, %v2859
          %v2861 = vpop.f32.mrb[0].mxu0
          %2862 = vdwg.mxu0
          %v2863 = vadd.f32 %v1693, %v2857
          %v2864 = vadd.f32 %v1694, %v2860
          %v2865 = vld [vmem:[#allocation16] sm:$0x1]
          %v2866 = vld [vmem:[#allocation17] sm:$0x1]
          %v2867 = vsel %vm1584, %v2863, 0.0
          %2868 = vadd.xlane.f32.xlu0 %v2867
          %v2869 = vpop.xlane.xlu0 %2868
          %v2870 = vsel %vm1584, %v2864, 0.0
          %2871 = vadd.xlane.f32.xlu0 %v2870
          %v2872 = vpop.xlane.xlu0 %2871
          %v2873 = vmul.f32 %v2869, %v1658
          %v2874 = vmul.f32 %v2872, %v1658
          %v2875 = vsub.f32 %v2863, %v2873
          %v2876 = vsub.f32 %v2864, %v2874
          %v2877 = vmul.f32 %v2875, %v2875
          %v2878 = vmul.f32 %v2876, %v2876
          %v2879 = vsel %vm1584, %v2877, 0.0
          %2880 = vadd.xlane.f32.xlu0 %v2879
          %v2881 = vpop.xlane.xlu0 %2880
          %v2882 = vsel %vm1584, %v2878, 0.0
          %2883 = vadd.xlane.f32.xlu0 %v2882
          %v2884 = vpop.xlane.xlu0 %2883
          %v2885 = vmul.f32 %v2881, %v1658
          %v2886 = vmul.f32 %v2884, %v1658
          %v2887 = vadd.f32 %v2885, 1e-05
          %v2888 = vadd.f32 %v2886, 1e-05
          %v2889 = vrsqrt.pop %v2887
          %v2890 = vrsqrt.pop %v2888
          %v2891 = vmul.f32 %v2875, %v2889
          %v2892 = vmul.f32 %v2876, %v2890
          %v2894 = vlaneseq
          %v2895 = vshrl.u32 %v2894, 7
          %v2896 = vsub.s32 0, %v2895
          %v2897 = vrot.slane %v2865, %v2896
          %v2899 = vmul.f32 %v2891, %v2897
          %v2900 = vmul.f32 %v2892, %v2897
          %v2902 = vlaneseq
          %v2903 = vshrl.u32 %v2902, 7
          %v2904 = vsub.s32 0, %v2903
          %v2905 = vrot.slane %v2866, %v2904
          %v2907 = vadd.f32 %v2899, %v2905
          %v2908 = vadd.f32 %v2900, %v2905
          %v2909 = vpack.c.bf16 %v2908, %v2907
          %v2910 = vld [vmem:[%s31] sm:$0xf]
          %v2911 = vld [vmem:[%s31 + $0x4] sm:$0xf]
          %v2912 = vld [vmem:[%s31 + $0x8] sm:$0xf]
          %v2913 = vld [vmem:[%s31 + $0xc] sm:$0xf]
          %v2914 = vld [vmem:[%s31 + $0x10] sm:$0xf]
          %v2915 = vld [vmem:[%s31 + $0x14] sm:$0xf]
          %v2916 = vld [vmem:[%s31 + $0x18] sm:$0xf]
          %v2917 = vld [vmem:[%s31 + $0x1c] sm:$0xf]
          %v2918 = vld [vmem:[#allocation19] sm:$0x1]
          %v2920 = vlaneseq
          %v2921 = vshrl.u32 %v2920, 7
          %v2922 = vsub.s32 0, %v2921
          %v2923 = vrot.slane %v2918, %v2922
          %v2933 = vunpack.c.l.b16 %v2910
          %v2934 = vunpack.c.l.b16 %v2911
          %v2935 = vunpack.c.l.b16 %v2912
          %v2936 = vunpack.c.l.b16 %v2913
          %v2937 = vunpack.c.l.b16 %v2914
          %v2938 = vunpack.c.l.b16 %v2915
          %v2939 = vunpack.c.l.b16 %v2916
          %v2940 = vunpack.c.l.b16 %v2917
          %v2941 = vpack.c.b16 %v2934, %v2933
          %v2942 = vpack.c.b16 %v2936, %v2935
          %v2943 = vpack.c.b16 %v2938, %v2937
          %v2944 = vpack.c.b16 %v2940, %v2939
          %v2950 = vsel %vm1584, %v2909, 0
          %2952 = vmatprep.subr.bf16.mxu0 0
          %2953 = vmatpush1.bf16.msra.mxu0 %v2941
          %2954 = vmatprep.subr.bf16.mxu0 0
          %2955 = vmatpush1.bf16.msra.mxu0 %v2942
          %2956 = vmatprep.subr.bf16.mxu0 0
          %2957 = vmatpush1.bf16.msra.mxu0 %v2943
          %2958 = vmatprep.subr.bf16.mxu0 0
          %2959 = vmatpush1.bf16.msra.mxu0 %v2944
          %2960 = vmatprep.subr.bf16.mxu0 0
          %2961 = vmatpush1.bf16.msra.mxu0 0
          %2962 = vmatprep.subr.bf16.mxu0 0
          %2963 = vmatpush1.bf16.msra.mxu0 0
          %2964 = vmatprep.subr.bf16.mxu0 0
          %2965 = vmatpush1.bf16.msra.mxu0 0
          %2966 = vmatprep.subr.bf16.mxu0 0
          %2967 = vmatpush1.bf16.msra.mxu0 0
          %2968 = vmatprep.subr.bf16.mxu0 0
          %2969 = vmatpush1.bf16.msra.mxu0 0
          %2970 = vmatprep.subr.bf16.mxu0 0
          %2971 = vmatpush1.bf16.msra.mxu0 0
          %2972 = vmatprep.subr.bf16.mxu0 0
          %2973 = vmatpush1.bf16.msra.mxu0 0
          %2974 = vmatprep.subr.bf16.mxu0 0
          %2975 = vmatpush1.bf16.msra.mxu0 0
          %2976 = vmatprep.subr.bf16.mxu0 0
          %2977 = vmatpush1.bf16.msra.mxu0 0
          %2978 = vmatprep.subr.bf16.mxu0 0
          %2979 = vmatpush1.bf16.msra.mxu0 0
          %2980 = vmatprep.subr.bf16.mxu0 0
          %2981 = vmatpush1.bf16.msra.mxu0 0
          %2982 = vmatprep.subr.bf16.mxu0 0
          %2983 = vmatpush1.bf16.msra.mxu0 0
          %2984 = vmatprep.mubr.bf16.mxu0 0
          %2985 = vmatmul.mubr.bf16.gmra.mrb[0].mxu0 %v2950
          %v2986 = vpop.f32.mrb[0].mxu0
          %v2987 = vadd.f32 %v2923, %v2986
          %v2988 = vpop.f32.mrb[0].mxu0
          %v2989 = vpop.f32.mrb[0].mxu0
          %v2990 = vadd.f32 %v2923, %v2989
          %v2991 = vpop.f32.mrb[0].mxu0
          %2992 = vdwg.mxu0
          %v2993 = vmul.f32 %v2987, 1.702
          %v2994 = vmul.f32 %v2990, 1.702
          %v2995 = vxor.u32 %v2993, 2147483648
          %v2996 = vxor.u32 %v2994, 2147483648
          %v2997 = vmul.f32 %v2995, 1.442695
          %v2998 = vpow.pop %v2997
          %v2999 = vmul.f32 %v2996, 1.442695
          %v3000 = vpow.pop %v2999
          %v3001 = vadd.f32 %v2998, 1.0
          %v3002 = vadd.f32 %v3000, 1.0
          %v3003 = vrcp.pop %v3001
          %v3004 = vmul.f32 1.0, %v3003
          %v3005 = vrcp.pop %v3002
          %v3006 = vmul.f32 1.0, %v3005
          %v3007 = vmul.f32 %v2987, %v3004
          %v3008 = vmul.f32 %v2990, %v3006
          %v3009 = vpack.c.bf16 %v3008, %v3007
          %v3010 = vld [vmem:[%s35] sm:$0xf]
          %v3011 = vld [vmem:[%s35 + $0x4] sm:$0xf]
          %v3012 = vld [vmem:[%s35 + $0x8] sm:$0xf]
          %v3013 = vld [vmem:[%s35 + $0xc] sm:$0xf]
          %v3014 = vld [vmem:[%s35 + $0x10] sm:$0xf]
          %v3015 = vld [vmem:[%s35 + $0x14] sm:$0xf]
          %v3016 = vld [vmem:[%s35 + $0x18] sm:$0xf]
          %v3017 = vld [vmem:[%s35 + $0x1c] sm:$0xf]
          %v3018 = vld [vmem:[%s35 + $0x20] sm:$0xf]
          %v3019 = vld [vmem:[%s35 + $0x24] sm:$0xf]
          %v3020 = vld [vmem:[%s35 + $0x28] sm:$0xf]
          %v3021 = vld [vmem:[%s35 + $0x2c] sm:$0xf]
          %v3022 = vld [vmem:[%s35 + $0x30] sm:$0xf]
          %v3023 = vld [vmem:[%s35 + $0x34] sm:$0xf]
          %v3024 = vld [vmem:[%s35 + $0x38] sm:$0xf]
          %v3025 = vld [vmem:[%s35 + $0x3c] sm:$0xf]
          %v3026 = vld [vmem:[#allocation20] sm:$0x1]
          %v3028 = vlaneseq
          %v3029 = vshrl.u32 %v3028, 7
          %v3030 = vsub.s32 0, %v3029
          %v3031 = vrot.slane %v3026, %v3030
          %v3049 = vunpack.c.l.b16 %v3010
          %v3050 = vunpack.c.l.b16 %v3011
          %v3051 = vunpack.c.l.b16 %v3012
          %v3052 = vunpack.c.l.b16 %v3013
          %v3053 = vunpack.c.l.b16 %v3014
          %v3054 = vunpack.c.l.b16 %v3015
          %v3055 = vunpack.c.l.b16 %v3016
          %v3056 = vunpack.c.l.b16 %v3017
          %v3057 = vunpack.c.l.b16 %v3018
          %v3058 = vunpack.c.l.b16 %v3019
          %v3059 = vunpack.c.l.b16 %v3020
          %v3060 = vunpack.c.l.b16 %v3021
          %v3061 = vunpack.c.l.b16 %v3022
          %v3062 = vunpack.c.l.b16 %v3023
          %v3063 = vunpack.c.l.b16 %v3024
          %v3064 = vunpack.c.l.b16 %v3025
          %v3065 = vpack.c.b16 %v3050, %v3049
          %v3066 = vpack.c.b16 %v3052, %v3051
          %v3067 = vpack.c.b16 %v3054, %v3053
          %v3068 = vpack.c.b16 %v3056, %v3055
          %v3069 = vpack.c.b16 %v3058, %v3057
          %v3070 = vpack.c.b16 %v3060, %v3059
          %v3071 = vpack.c.b16 %v3062, %v3061
          %v3072 = vpack.c.b16 %v3064, %v3063
          %3081 = vmatprep.subr.bf16.mxu0 0
          %3082 = vmatpush1.bf16.msra.mxu0 %v3065
          %3083 = vmatprep.subr.bf16.mxu0 0
          %3084 = vmatpush1.bf16.msra.mxu0 %v3066
          %3085 = vmatprep.subr.bf16.mxu0 0
          %3086 = vmatpush1.bf16.msra.mxu0 %v3067
          %3087 = vmatprep.subr.bf16.mxu0 0
          %3088 = vmatpush1.bf16.msra.mxu0 %v3068
          %3089 = vmatprep.subr.bf16.mxu0 0
          %3090 = vmatpush1.bf16.msra.mxu0 %v3069
          %3091 = vmatprep.subr.bf16.mxu0 0
          %3092 = vmatpush1.bf16.msra.mxu0 %v3070
          %3093 = vmatprep.subr.bf16.mxu0 0
          %3094 = vmatpush1.bf16.msra.mxu0 %v3071
          %3095 = vmatprep.subr.bf16.mxu0 0
          %3096 = vmatpush1.bf16.msra.mxu0 %v3072
          %3097 = vmatprep.subr.bf16.mxu0 0
          %3098 = vmatpush1.bf16.msra.mxu0 0
          %3099 = vmatprep.subr.bf16.mxu0 0
          %3100 = vmatpush1.bf16.msra.mxu0 0
          %3101 = vmatprep.subr.bf16.mxu0 0
          %3102 = vmatpush1.bf16.msra.mxu0 0
          %3103 = vmatprep.subr.bf16.mxu0 0
          %3104 = vmatpush1.bf16.msra.mxu0 0
          %3105 = vmatprep.subr.bf16.mxu0 0
          %3106 = vmatpush1.bf16.msra.mxu0 0
          %3107 = vmatprep.subr.bf16.mxu0 0
          %3108 = vmatpush1.bf16.msra.mxu0 0
          %3109 = vmatprep.subr.bf16.mxu0 0
          %3110 = vmatpush1.bf16.msra.mxu0 0
          %3111 = vmatprep.subr.bf16.mxu0 0
          %3112 = vmatpush1.bf16.msra.mxu0 0
          %3113 = vmatprep.mubr.bf16.mxu0 0
          %3114 = vmatmul.mubr.bf16.gmra.mrb[0].mxu0 %v3009
          %v3115 = vpop.f32.mrb[0].mxu0
          %v3116 = vadd.f32 %v3031, %v3115
          %v3117 = vpop.f32.mrb[0].mxu0
          %v3118 = vpop.f32.mrb[0].mxu0
          %v3119 = vadd.f32 %v3031, %v3118
          %v3120 = vpop.f32.mrb[0].mxu0
          %3121 = vdwg.mxu0
          %v3122 = vadd.f32 %v2863, %v3116
          %v3123 = vadd.f32 %v2864, %v3119
          %s3124 = scalar_lea.vmem %s15, 1
          %v3125 = vld [vmem:[%s3124] sm:$0x1]
          %s3126 = scalar_lea.vmem [#allocation11], 1
          %v3127 = vld [vmem:[%s3126] sm:$0x1]
          %v3128 = vsel %vm1584, %v3122, 0.0
          %3129 = vadd.xlane.f32.xlu0 %v3128
          %v3130 = vpop.xlane.xlu0 %3129
          %v3131 = vsel %vm1584, %v3123, 0.0
          %3132 = vadd.xlane.f32.xlu0 %v3131
          %v3133 = vpop.xlane.xlu0 %3132
          %v3134 = vmul.f32 %v3130, %v1658
          %v3135 = vmul.f32 %v3133, %v1658
          %v3136 = vsub.f32 %v3122, %v3134
          %v3137 = vsub.f32 %v3123, %v3135
          %v3138 = vmul.f32 %v3136, %v3136
          %v3139 = vmul.f32 %v3137, %v3137
          %v3140 = vsel %vm1584, %v3138, 0.0
          %3141 = vadd.xlane.f32.xlu0 %v3140
          %v3142 = vpop.xlane.xlu0 %3141
          %v3143 = vsel %vm1584, %v3139, 0.0
          %3144 = vadd.xlane.f32.xlu0 %v3143
          %v3145 = vpop.xlane.xlu0 %3144
          %v3146 = vmul.f32 %v3142, %v1658
          %v3147 = vmul.f32 %v3145, %v1658
          %v3148 = vadd.f32 %v3146, 1e-05
          %v3149 = vadd.f32 %v3147, 1e-05
          %v3150 = vrsqrt.pop %v3148
          %v3151 = vrsqrt.pop %v3149
          %v3152 = vmul.f32 %v3136, %v3150
          %v3153 = vmul.f32 %v3137, %v3151
          %v3155 = vlaneseq
          %v3156 = vshrl.u32 %v3155, 7
          %v3157 = vsub.s32 0, %v3156
          %v3158 = vrot.slane %v3125, %v3157
          %v3160 = vmul.f32 %v3152, %v3158
          %v3161 = vmul.f32 %v3153, %v3158
          %v3163 = vlaneseq
          %v3164 = vshrl.u32 %v3163, 7
          %v3165 = vsub.s32 0, %v3164
          %v3166 = vrot.slane %v3127, %v3165
          %v3168 = vadd.f32 %v3160, %v3166
          %v3169 = vadd.f32 %v3161, %v3166
          %v3170 = vpack.c.bf16 %v3169, %v3168
          %s3171 = scalar_lea.vmem %s19, 64
          %v3172 = vld [vmem:[%s3171] sm:$0xff]
          %v3173 = vld [vmem:[%s3171 + $0x8] sm:$0xff]
          %v3174 = vld [vmem:[%s3171 + $0x10] sm:$0xff]
          %v3175 = vld [vmem:[%s3171 + $0x18] sm:$0xff]
          %v3176 = vld [vmem:[%s3171 + $0x20] sm:$0xff]
          %v3177 = vld [vmem:[%s3171 + $0x28] sm:$0xff]
          %v3178 = vld [vmem:[%s3171 + $0x30] sm:$0xff]
          %v3179 = vld [vmem:[%s3171 + $0x38] sm:$0xff]
          %s3180 = scalar_lea.vmem [#allocation13], 2
          %v3181 = vld [vmem:[%s3180] sm:$0x3]
          %v3183 = vlaneseq
          %v3184 = vshrl.u32 %v3183, 7
          %v3185 = vsub.s32 0, %v3184
          %v3186 = vrot.slane %v3181, %v3185
          %v3187 = vlaneseq
          %v3188 = vshrl.u32 %v3187, 7
          %v3189 = vsub.s32 1, %v3188
          %v3190 = vrot.slane %v3181, %v3189
          %v3201 = vunpack.c.l.b16 %v3172
          %v3202 = vunpack.c.h.b16 %v3172
          %v3203 = vunpack.c.l.b16 %v3173
          %v3204 = vunpack.c.h.b16 %v3173
          %v3205 = vunpack.c.l.b16 %v3174
          %v3206 = vunpack.c.h.b16 %v3174
          %v3207 = vunpack.c.l.b16 %v3175
          %v3208 = vunpack.c.h.b16 %v3175
          %v3209 = vunpack.c.l.b16 %v3176
          %v3210 = vunpack.c.h.b16 %v3176
          %v3211 = vunpack.c.l.b16 %v3177
          %v3212 = vunpack.c.h.b16 %v3177
          %v3213 = vunpack.c.l.b16 %v3178
          %v3214 = vunpack.c.h.b16 %v3178
          %v3215 = vunpack.c.l.b16 %v3179
          %v3216 = vunpack.c.h.b16 %v3179
          %v3217 = vpack.c.b16 %v3203, %v3201
          %v3218 = vpack.c.b16 %v3204, %v3202
          %v3219 = vpack.c.b16 %v3207, %v3205
          %v3220 = vpack.c.b16 %v3208, %v3206
          %v3221 = vpack.c.b16 %v3211, %v3209
          %v3222 = vpack.c.b16 %v3212, %v3210
          %v3223 = vpack.c.b16 %v3215, %v3213
          %v3224 = vpack.c.b16 %v3216, %v3214
          %v3234 = vsel %vm1584, %v3170, 0
          %3236 = vmatprep.subr.bf16.mxu0 %v3218
          %3237 = vmatpush1.bf16.msra.mxu0 %v3217
          %3238 = vmatprep.subr.bf16.mxu0 %v3220
          %3239 = vmatpush1.bf16.msra.mxu0 %v3219
          %3240 = vmatprep.subr.bf16.mxu0 %v3222
          %3241 = vmatpush1.bf16.msra.mxu0 %v3221
          %3242 = vmatprep.subr.bf16.mxu0 %v3224
          %3243 = vmatpush1.bf16.msra.mxu0 %v3223
          %3244 = vmatprep.subr.bf16.mxu0 0
          %3245 = vmatpush1.bf16.msra.mxu0 0
          %3246 = vmatprep.subr.bf16.mxu0 0
          %3247 = vmatpush1.bf16.msra.mxu0 0
          %3248 = vmatprep.subr.bf16.mxu0 0
          %3249 = vmatpush1.bf16.msra.mxu0 0
          %3250 = vmatprep.subr.bf16.mxu0 0
          %3251 = vmatpush1.bf16.msra.mxu0 0
          %3252 = vmatprep.subr.bf16.mxu0 0
          %3253 = vmatpush1.bf16.msra.mxu0 0
          %3254 = vmatprep.subr.bf16.mxu0 0
          %3255 = vmatpush1.bf16.msra.mxu0 0
          %3256 = vmatprep.subr.bf16.mxu0 0
          %3257 = vmatpush1.bf16.msra.mxu0 0
          %3258 = vmatprep.subr.bf16.mxu0 0
          %3259 = vmatpush1.bf16.msra.mxu0 0
          %3260 = vmatprep.subr.bf16.mxu0 0
          %3261 = vmatpush1.bf16.msra.mxu0 0
          %3262 = vmatprep.subr.bf16.mxu0 0
          %3263 = vmatpush1.bf16.msra.mxu0 0
          %3264 = vmatprep.subr.bf16.mxu0 0
          %3265 = vmatpush1.bf16.msra.mxu0 0
          %3266 = vmatprep.subr.bf16.mxu0 0
          %3267 = vmatpush1.bf16.msra.mxu0 0
          %3268 = vmatprep.mubr.bf16.mxu0 0
          %3269 = vmatmul.mubr.bf16.gmra.mrb[0].mxu0 %v3234
          %v3270 = vpop.f32.mrb[0].mxu0
          %v3271 = vadd.f32 %v3186, %v3270
          %v3272 = vpop.f32.mrb[0].mxu0
          %v3273 = vadd.f32 %v3190, %v3272
          %v3274 = vpop.f32.mrb[0].mxu0
          %v3275 = vadd.f32 %v3186, %v3274
          %v3276 = vpop.f32.mrb[0].mxu0
          %v3277 = vadd.f32 %v3190, %v3276
          %3278 = vdwg.mxu0
          %v3279 = vmul.f32 %v3271, 0.25
          %v3280 = vmul.f32 %v3275, 0.25
          %v3281 = vpack.c.bf16 %v3279, %v3279
          %v3282 = vpack.c.bf16 %v3271, %v3271
          %3284 = vrot.lane.b32.xlu0 %v3282, 64
          %v3285 = vpop.permute.xlu0 %3284
          %v3287 = vsel %vm1857, %v3281, 0
          %v3290 = vsel %vm1857, %v3285, 0
          %3292 = vmatprep.subr.bf16.mxu0 0
          %3293 = vmatpush1.bf16.xpose.msra.mxu0 %v3290
          %3294 = vmatprep.subr.bf16.mxu0 0
          %3295 = vmatpush1.bf16.xpose.msra.mxu0 0
          %3296 = vmatprep.subr.bf16.mxu0 0
          %3297 = vmatpush1.bf16.xpose.msra.mxu0 0
          %3298 = vmatprep.subr.bf16.mxu0 0
          %3299 = vmatpush1.bf16.xpose.msra.mxu0 0
          %3300 = vmatprep.subr.bf16.mxu0 0
          %3301 = vmatpush1.bf16.xpose.msra.mxu0 0
          %3302 = vmatprep.subr.bf16.mxu0 0
          %3303 = vmatpush1.bf16.xpose.msra.mxu0 0
          %3304 = vmatprep.subr.bf16.mxu0 0
          %3305 = vmatpush1.bf16.xpose.msra.mxu0 0
          %3306 = vmatprep.subr.bf16.mxu0 0
          %3307 = vmatpush1.bf16.xpose.msra.mxu0 0
          %3308 = vmatprep.subr.bf16.mxu0 0
          %3309 = vmatpush1.bf16.xpose.msra.mxu0 0
          %3310 = vmatprep.subr.bf16.mxu0 0
          %3311 = vmatpush1.bf16.xpose.msra.mxu0 0
          %3312 = vmatprep.subr.bf16.mxu0 0
          %3313 = vmatpush1.bf16.xpose.msra.mxu0 0
          %3314 = vmatprep.subr.bf16.mxu0 0
          %3315 = vmatpush1.bf16.xpose.msra.mxu0 0
          %3316 = vmatprep.subr.bf16.mxu0 0
          %3317 = vmatpush1.bf16.xpose.msra.mxu0 0
          %3318 = vmatprep.subr.bf16.mxu0 0
          %3319 = vmatpush1.bf16.xpose.msra.mxu0 0
          %3320 = vmatprep.subr.bf16.mxu0 0
          %3321 = vmatpush1.bf16.xpose.msra.mxu0 0
          %3322 = vmatprep.subr.bf16.mxu0 0
          %3323 = vmatpush1.bf16.xpose.msra.mxu0 0
          %3324 = vmatprep.mubr.bf16.mxu0 0
          %3325 = vmatmul.mubr.bf16.gmra.mrb[0].mxu0 %v3287
          %v3326 = vpop.f32.mrb[0].mxu0
          %v3327 = vadd.f32 0.0, %v3326
          %v3328 = vpop.f32.mrb[0].mxu0
          %v3329 = vpop.f32.mrb[0].mxu0
          %v3330 = vpop.f32.mrb[0].mxu0
          %3331 = vdwg.mxu0
          %3333 = vrot.lane.b32.xlu0 %v3281, 112
          %v3334 = vpop.permute.xlu0 %3333
          %3335 = vrot.lane.b32.xlu0 %v3282, 48
          %v3336 = vpop.permute.xlu0 %3335
          %v3338 = vsel %vm1857, %v3334, 0
          %v3341 = vsel %vm1857, %v3336, 0
          %3343 = vmatprep.subr.bf16.mxu0 0
          %3344 = vmatpush1.bf16.xpose.msra.mxu0 %v3341
          %3345 = vmatprep.subr.bf16.mxu0 0
          %3346 = vmatpush1.bf16.xpose.msra.mxu0 0
          %3347 = vmatprep.subr.bf16.mxu0 0
          %3348 = vmatpush1.bf16.xpose.msra.mxu0 0
          %3349 = vmatprep.subr.bf16.mxu0 0
          %3350 = vmatpush1.bf16.xpose.msra.mxu0 0
          %3351 = vmatprep.subr.bf16.mxu0 0
          %3352 = vmatpush1.bf16.xpose.msra.mxu0 0
          %3353 = vmatprep.subr.bf16.mxu0 0
          %3354 = vmatpush1.bf16.xpose.msra.mxu0 0
          %3355 = vmatprep.subr.bf16.mxu0 0
          %3356 = vmatpush1.bf16.xpose.msra.mxu0 0
          %3357 = vmatprep.subr.bf16.mxu0 0
          %3358 = vmatpush1.bf16.xpose.msra.mxu0 0
          %3359 = vmatprep.subr.bf16.mxu0 0
          %3360 = vmatpush1.bf16.xpose.msra.mxu0 0
          %3361 = vmatprep.subr.bf16.mxu0 0
          %3362 = vmatpush1.bf16.xpose.msra.mxu0 0
          %3363 = vmatprep.subr.bf16.mxu0 0
          %3364 = vmatpush1.bf16.xpose.msra.mxu0 0
          %3365 = vmatprep.subr.bf16.mxu0 0
          %3366 = vmatpush1.bf16.xpose.msra.mxu0 0
          %3367 = vmatprep.subr.bf16.mxu0 0
          %3368 = vmatpush1.bf16.xpose.msra.mxu0 0
          %3369 = vmatprep.subr.bf16.mxu0 0
          %3370 = vmatpush1.bf16.xpose.msra.mxu0 0
          %3371 = vmatprep.subr.bf16.mxu0 0
          %3372 = vmatpush1.bf16.xpose.msra.mxu0 0
          %3373 = vmatprep.subr.bf16.mxu0 0
          %3374 = vmatpush1.bf16.xpose.msra.mxu0 0
          %3375 = vmatprep.mubr.bf16.mxu0 0
          %3376 = vmatmul.mubr.bf16.gmra.mrb[0].mxu0 %v3338
          %v3377 = vpop.f32.mrb[0].mxu0
          %v3378 = vadd.f32 0.0, %v3377
          %v3379 = vpop.f32.mrb[0].mxu0
          %v3380 = vpop.f32.mrb[0].mxu0
          %v3381 = vpop.f32.mrb[0].mxu0
          %3382 = vdwg.mxu0
          %3383 = vrot.lane.b32.xlu0 %v3281, 96
          %v3384 = vpop.permute.xlu0 %3383
          %3385 = vrot.lane.b32.xlu0 %v3282, 32
          %v3386 = vpop.permute.xlu0 %3385
          %v3388 = vsel %vm1857, %v3384, 0
          %v3391 = vsel %vm1857, %v3386, 0
          %3393 = vmatprep.subr.bf16.mxu0 0
          %3394 = vmatpush1.bf16.xpose.msra.mxu0 %v3391
          %3395 = vmatprep.subr.bf16.mxu0 0
          %3396 = vmatpush1.bf16.xpose.msra.mxu0 0
          %3397 = vmatprep.subr.bf16.mxu0 0
          %3398 = vmatpush1.bf16.xpose.msra.mxu0 0
          %3399 = vmatprep.subr.bf16.mxu0 0
          %3400 = vmatpush1.bf16.xpose.msra.mxu0 0
          %3401 = vmatprep.subr.bf16.mxu0 0
          %3402 = vmatpush1.bf16.xpose.msra.mxu0 0
          %3403 = vmatprep.subr.bf16.mxu0 0
          %3404 = vmatpush1.bf16.xpose.msra.mxu0 0
          %3405 = vmatprep.subr.bf16.mxu0 0
          %3406 = vmatpush1.bf16.xpose.msra.mxu0 0
          %3407 = vmatprep.subr.bf16.mxu0 0
          %3408 = vmatpush1.bf16.xpose.msra.mxu0 0
          %3409 = vmatprep.subr.bf16.mxu0 0
          %3410 = vmatpush1.bf16.xpose.msra.mxu0 0
          %3411 = vmatprep.subr.bf16.mxu0 0
          %3412 = vmatpush1.bf16.xpose.msra.mxu0 0
          %3413 = vmatprep.subr.bf16.mxu0 0
          %3414 = vmatpush1.bf16.xpose.msra.mxu0 0
          %3415 = vmatprep.subr.bf16.mxu0 0
          %3416 = vmatpush1.bf16.xpose.msra.mxu0 0
          %3417 = vmatprep.subr.bf16.mxu0 0
          %3418 = vmatpush1.bf16.xpose.msra.mxu0 0
          %3419 = vmatprep.subr.bf16.mxu0 0
          %3420 = vmatpush1.bf16.xpose.msra.mxu0 0
          %3421 = vmatprep.subr.bf16.mxu0 0
          %3422 = vmatpush1.bf16.xpose.msra.mxu0 0
          %3423 = vmatprep.subr.bf16.mxu0 0
          %3424 = vmatpush1.bf16.xpose.msra.mxu0 0
          %3425 = vmatprep.mubr.bf16.mxu0 0
          %3426 = vmatmul.mubr.bf16.gmra.mrb[0].mxu0 %v3388
          %v3427 = vpop.f32.mrb[0].mxu0
          %v3428 = vadd.f32 0.0, %v3427
          %v3429 = vpop.f32.mrb[0].mxu0
          %v3430 = vpop.f32.mrb[0].mxu0
          %v3431 = vpop.f32.mrb[0].mxu0
          %3432 = vdwg.mxu0
          %3433 = vrot.lane.b32.xlu0 %v3281, 80
          %v3434 = vpop.permute.xlu0 %3433
          %3435 = vrot.lane.b32.xlu0 %v3282, 16
          %v3436 = vpop.permute.xlu0 %3435
          %v3438 = vsel %vm1857, %v3434, 0
          %v3441 = vsel %vm1857, %v3436, 0
          %3443 = vmatprep.subr.bf16.mxu0 0
          %3444 = vmatpush1.bf16.xpose.msra.mxu0 %v3441
          %3445 = vmatprep.subr.bf16.mxu0 0
          %3446 = vmatpush1.bf16.xpose.msra.mxu0 0
          %3447 = vmatprep.subr.bf16.mxu0 0
          %3448 = vmatpush1.bf16.xpose.msra.mxu0 0
          %3449 = vmatprep.subr.bf16.mxu0 0
          %3450 = vmatpush1.bf16.xpose.msra.mxu0 0
          %3451 = vmatprep.subr.bf16.mxu0 0
          %3452 = vmatpush1.bf16.xpose.msra.mxu0 0
          %3453 = vmatprep.subr.bf16.mxu0 0
          %3454 = vmatpush1.bf16.xpose.msra.mxu0 0
          %3455 = vmatprep.subr.bf16.mxu0 0
          %3456 = vmatpush1.bf16.xpose.msra.mxu0 0
          %3457 = vmatprep.subr.bf16.mxu0 0
          %3458 = vmatpush1.bf16.xpose.msra.mxu0 0
          %3459 = vmatprep.subr.bf16.mxu0 0
          %3460 = vmatpush1.bf16.xpose.msra.mxu0 0
          %3461 = vmatprep.subr.bf16.mxu0 0
          %3462 = vmatpush1.bf16.xpose.msra.mxu0 0
          %3463 = vmatprep.subr.bf16.mxu0 0
          %3464 = vmatpush1.bf16.xpose.msra.mxu0 0
          %3465 = vmatprep.subr.bf16.mxu0 0
          %3466 = vmatpush1.bf16.xpose.msra.mxu0 0
          %3467 = vmatprep.subr.bf16.mxu0 0
          %3468 = vmatpush1.bf16.xpose.msra.mxu0 0
          %3469 = vmatprep.subr.bf16.mxu0 0
          %3470 = vmatpush1.bf16.xpose.msra.mxu0 0
          %3471 = vmatprep.subr.bf16.mxu0 0
          %3472 = vmatpush1.bf16.xpose.msra.mxu0 0
          %3473 = vmatprep.subr.bf16.mxu0 0
          %3474 = vmatpush1.bf16.xpose.msra.mxu0 0
          %3475 = vmatprep.mubr.bf16.mxu0 0
          %3476 = vmatmul.mubr.bf16.gmra.mrb[0].mxu0 %v3438
          %v3477 = vpop.f32.mrb[0].mxu0
          %v3478 = vadd.f32 0.0, %v3477
          %v3479 = vpop.f32.mrb[0].mxu0
          %v3480 = vpop.f32.mrb[0].mxu0
          %v3481 = vpop.f32.mrb[0].mxu0
          %3482 = vdwg.mxu0
          %v3483 = vpack.c.bf16 %v3280, %v3280
          %v3484 = vpack.c.bf16 %v3275, %v3275
          %3486 = vrot.lane.b32.xlu0 %v3484, 64
          %v3487 = vpop.permute.xlu0 %3486
          %v3489 = vsel %vm1857, %v3483, 0
          %v3492 = vsel %vm1857, %v3487, 0
          %3494 = vmatprep.subr.bf16.mxu0 0
          %3495 = vmatpush1.bf16.xpose.msra.mxu0 %v3492
          %3496 = vmatprep.subr.bf16.mxu0 0
          %3497 = vmatpush1.bf16.xpose.msra.mxu0 0
          %3498 = vmatprep.subr.bf16.mxu0 0
          %3499 = vmatpush1.bf16.xpose.msra.mxu0 0
          %3500 = vmatprep.subr.bf16.mxu0 0
          %3501 = vmatpush1.bf16.xpose.msra.mxu0 0
          %3502 = vmatprep.subr.bf16.mxu0 0
          %3503 = vmatpush1.bf16.xpose.msra.mxu0 0
          %3504 = vmatprep.subr.bf16.mxu0 0
          %3505 = vmatpush1.bf16.xpose.msra.mxu0 0
          %3506 = vmatprep.subr.bf16.mxu0 0
          %3507 = vmatpush1.bf16.xpose.msra.mxu0 0
          %3508 = vmatprep.subr.bf16.mxu0 0
          %3509 = vmatpush1.bf16.xpose.msra.mxu0 0
          %3510 = vmatprep.subr.bf16.mxu0 0
          %3511 = vmatpush1.bf16.xpose.msra.mxu0 0
          %3512 = vmatprep.subr.bf16.mxu0 0
          %3513 = vmatpush1.bf16.xpose.msra.mxu0 0
          %3514 = vmatprep.subr.bf16.mxu0 0
          %3515 = vmatpush1.bf16.xpose.msra.mxu0 0
          %3516 = vmatprep.subr.bf16.mxu0 0
          %3517 = vmatpush1.bf16.xpose.msra.mxu0 0
          %3518 = vmatprep.subr.bf16.mxu0 0
          %3519 = vmatpush1.bf16.xpose.msra.mxu0 0
          %3520 = vmatprep.subr.bf16.mxu0 0
          %3521 = vmatpush1.bf16.xpose.msra.mxu0 0
          %3522 = vmatprep.subr.bf16.mxu0 0
          %3523 = vmatpush1.bf16.xpose.msra.mxu0 0
          %3524 = vmatprep.subr.bf16.mxu0 0
          %3525 = vmatpush1.bf16.xpose.msra.mxu0 0
          %3526 = vmatprep.mubr.bf16.mxu0 0
          %3527 = vmatmul.mubr.bf16.gmra.mrb[0].mxu0 %v3489
          %v3528 = vpop.f32.mrb[0].mxu0
          %v3529 = vadd.f32 0.0, %v3528
          %v3530 = vpop.f32.mrb[0].mxu0
          %v3531 = vpop.f32.mrb[0].mxu0
          %v3532 = vpop.f32.mrb[0].mxu0
          %3533 = vdwg.mxu0
          %3535 = vrot.lane.b32.xlu0 %v3483, 112
          %v3536 = vpop.permute.xlu0 %3535
          %3537 = vrot.lane.b32.xlu0 %v3484, 48
          %v3538 = vpop.permute.xlu0 %3537
          %v3540 = vsel %vm1857, %v3536, 0
          %v3543 = vsel %vm1857, %v3538, 0
          %3545 = vmatprep.subr.bf16.mxu0 0
          %3546 = vmatpush1.bf16.xpose.msra.mxu0 %v3543
          %3547 = vmatprep.subr.bf16.mxu0 0
          %3548 = vmatpush1.bf16.xpose.msra.mxu0 0
          %3549 = vmatprep.subr.bf16.mxu0 0
          %3550 = vmatpush1.bf16.xpose.msra.mxu0 0
          %3551 = vmatprep.subr.bf16.mxu0 0
          %3552 = vmatpush1.bf16.xpose.msra.mxu0 0
          %3553 = vmatprep.subr.bf16.mxu0 0
          %3554 = vmatpush1.bf16.xpose.msra.mxu0 0
          %3555 = vmatprep.subr.bf16.mxu0 0
          %3556 = vmatpush1.bf16.xpose.msra.mxu0 0
          %3557 = vmatprep.subr.bf16.mxu0 0
          %3558 = vmatpush1.bf16.xpose.msra.mxu0 0
          %3559 = vmatprep.subr.bf16.mxu0 0
          %3560 = vmatpush1.bf16.xpose.msra.mxu0 0
          %3561 = vmatprep.subr.bf16.mxu0 0
          %3562 = vmatpush1.bf16.xpose.msra.mxu0 0
          %3563 = vmatprep.subr.bf16.mxu0 0
          %3564 = vmatpush1.bf16.xpose.msra.mxu0 0
          %3565 = vmatprep.subr.bf16.mxu0 0
          %3566 = vmatpush1.bf16.xpose.msra.mxu0 0
          %3567 = vmatprep.subr.bf16.mxu0 0
          %3568 = vmatpush1.bf16.xpose.msra.mxu0 0
          %3569 = vmatprep.subr.bf16.mxu0 0
          %3570 = vmatpush1.bf16.xpose.msra.mxu0 0
          %3571 = vmatprep.subr.bf16.mxu0 0
          %3572 = vmatpush1.bf16.xpose.msra.mxu0 0
          %3573 = vmatprep.subr.bf16.mxu0 0
          %3574 = vmatpush1.bf16.xpose.msra.mxu0 0
          %3575 = vmatprep.subr.bf16.mxu0 0
          %3576 = vmatpush1.bf16.xpose.msra.mxu0 0
          %3577 = vmatprep.mubr.bf16.mxu0 0
          %3578 = vmatmul.mubr.bf16.gmra.mrb[0].mxu0 %v3540
          %v3579 = vpop.f32.mrb[0].mxu0
          %v3580 = vadd.f32 0.0, %v3579
          %v3581 = vpop.f32.mrb[0].mxu0
          %v3582 = vpop.f32.mrb[0].mxu0
          %v3583 = vpop.f32.mrb[0].mxu0
          %3584 = vdwg.mxu0
          %3585 = vrot.lane.b32.xlu0 %v3483, 96
          %v3586 = vpop.permute.xlu0 %3585
          %3587 = vrot.lane.b32.xlu0 %v3484, 32
          %v3588 = vpop.permute.xlu0 %3587
          %v3590 = vsel %vm1857, %v3586, 0
          %v3593 = vsel %vm1857, %v3588, 0
          %3595 = vmatprep.subr.bf16.mxu0 0
          %3596 = vmatpush1.bf16.xpose.msra.mxu0 %v3593
          %3597 = vmatprep.subr.bf16.mxu0 0
          %3598 = vmatpush1.bf16.xpose.msra.mxu0 0
          %3599 = vmatprep.subr.bf16.mxu0 0
          %3600 = vmatpush1.bf16.xpose.msra.mxu0 0
          %3601 = vmatprep.subr.bf16.mxu0 0
          %3602 = vmatpush1.bf16.xpose.msra.mxu0 0
          %3603 = vmatprep.subr.bf16.mxu0 0
          %3604 = vmatpush1.bf16.xpose.msra.mxu0 0
          %3605 = vmatprep.subr.bf16.mxu0 0
          %3606 = vmatpush1.bf16.xpose.msra.mxu0 0
          %3607 = vmatprep.subr.bf16.mxu0 0
          %3608 = vmatpush1.bf16.xpose.msra.mxu0 0
          %3609 = vmatprep.subr.bf16.mxu0 0
          %3610 = vmatpush1.bf16.xpose.msra.mxu0 0
          %3611 = vmatprep.subr.bf16.mxu0 0
          %3612 = vmatpush1.bf16.xpose.msra.mxu0 0
          %3613 = vmatprep.subr.bf16.mxu0 0
          %3614 = vmatpush1.bf16.xpose.msra.mxu0 0
          %3615 = vmatprep.subr.bf16.mxu0 0
          %3616 = vmatpush1.bf16.xpose.msra.mxu0 0
          %3617 = vmatprep.subr.bf16.mxu0 0
          %3618 = vmatpush1.bf16.xpose.msra.mxu0 0
          %3619 = vmatprep.subr.bf16.mxu0 0
          %3620 = vmatpush1.bf16.xpose.msra.mxu0 0
          %3621 = vmatprep.subr.bf16.mxu0 0
          %3622 = vmatpush1.bf16.xpose.msra.mxu0 0
          %3623 = vmatprep.subr.bf16.mxu0 0
          %3624 = vmatpush1.bf16.xpose.msra.mxu0 0
          %3625 = vmatprep.subr.bf16.mxu0 0
          %3626 = vmatpush1.bf16.xpose.msra.mxu0 0
          %3627 = vmatprep.mubr.bf16.mxu0 0
          %3628 = vmatmul.mubr.bf16.gmra.mrb[0].mxu0 %v3590
          %v3629 = vpop.f32.mrb[0].mxu0
          %v3630 = vadd.f32 0.0, %v3629
          %v3631 = vpop.f32.mrb[0].mxu0
          %v3632 = vpop.f32.mrb[0].mxu0
          %v3633 = vpop.f32.mrb[0].mxu0
          %3634 = vdwg.mxu0
          %3635 = vrot.lane.b32.xlu0 %v3483, 80
          %v3636 = vpop.permute.xlu0 %3635
          %3637 = vrot.lane.b32.xlu0 %v3484, 16
          %v3638 = vpop.permute.xlu0 %3637
          %v3640 = vsel %vm1857, %v3636, 0
          %v3643 = vsel %vm1857, %v3638, 0
          %3645 = vmatprep.subr.bf16.mxu0 0
          %3646 = vmatpush1.bf16.xpose.msra.mxu0 %v3643
          %3647 = vmatprep.subr.bf16.mxu0 0
          %3648 = vmatpush1.bf16.xpose.msra.mxu0 0
          %3649 = vmatprep.subr.bf16.mxu0 0
          %3650 = vmatpush1.bf16.xpose.msra.mxu0 0
          %3651 = vmatprep.subr.bf16.mxu0 0
          %3652 = vmatpush1.bf16.xpose.msra.mxu0 0
          %3653 = vmatprep.subr.bf16.mxu0 0
          %3654 = vmatpush1.bf16.xpose.msra.mxu0 0
          %3655 = vmatprep.subr.bf16.mxu0 0
          %3656 = vmatpush1.bf16.xpose.msra.mxu0 0
          %3657 = vmatprep.subr.bf16.mxu0 0
          %3658 = vmatpush1.bf16.xpose.msra.mxu0 0
          %3659 = vmatprep.subr.bf16.mxu0 0
          %3660 = vmatpush1.bf16.xpose.msra.mxu0 0
          %3661 = vmatprep.subr.bf16.mxu0 0
          %3662 = vmatpush1.bf16.xpose.msra.mxu0 0
          %3663 = vmatprep.subr.bf16.mxu0 0
          %3664 = vmatpush1.bf16.xpose.msra.mxu0 0
          %3665 = vmatprep.subr.bf16.mxu0 0
          %3666 = vmatpush1.bf16.xpose.msra.mxu0 0
          %3667 = vmatprep.subr.bf16.mxu0 0
          %3668 = vmatpush1.bf16.xpose.msra.mxu0 0
          %3669 = vmatprep.subr.bf16.mxu0 0
          %3670 = vmatpush1.bf16.xpose.msra.mxu0 0
          %3671 = vmatprep.subr.bf16.mxu0 0
          %3672 = vmatpush1.bf16.xpose.msra.mxu0 0
          %3673 = vmatprep.subr.bf16.mxu0 0
          %3674 = vmatpush1.bf16.xpose.msra.mxu0 0
          %3675 = vmatprep.subr.bf16.mxu0 0
          %3676 = vmatpush1.bf16.xpose.msra.mxu0 0
          %3677 = vmatprep.mubr.bf16.mxu0 0
          %3678 = vmatmul.mubr.bf16.gmra.mrb[0].mxu0 %v3640
          %v3679 = vpop.f32.mrb[0].mxu0
          %v3680 = vadd.f32 0.0, %v3679
          %v3681 = vpop.f32.mrb[0].mxu0
          %v3682 = vpop.f32.mrb[0].mxu0
          %v3683 = vpop.f32.mrb[0].mxu0
          %3684 = vdwg.mxu0
          %v3685 = vadd.f32 %v3327, %v1698
          %v3686 = vadd.f32 %v3378, %v1698
          %v3687 = vadd.f32 %v3428, %v1698
          %v3688 = vadd.f32 %v3478, %v1698
          %v3689 = vadd.f32 %v3529, %v1698
          %v3690 = vadd.f32 %v3580, %v1698
          %v3691 = vadd.f32 %v3630, %v1698
          %v3692 = vadd.f32 %v3680, %v1698
          %v3693 = vsel %vm2265, %v3685, -inf
          %3694 = vmax.xlane.f32.xlu0 %v3693
          %v3695 = vpop.xlane.xlu0 %3694
          %v3696 = vsel %vm2265, %v3686, -inf
          %3697 = vmax.xlane.f32.xlu0 %v3696
          %v3698 = vpop.xlane.xlu0 %3697
          %v3699 = vsel %vm2265, %v3687, -inf
          %3700 = vmax.xlane.f32.xlu0 %v3699
          %v3701 = vpop.xlane.xlu0 %3700
          %v3702 = vsel %vm2265, %v3688, -inf
          %3703 = vmax.xlane.f32.xlu0 %v3702
          %v3704 = vpop.xlane.xlu0 %3703
          %v3705 = vsel %vm2265, %v3689, -inf
          %3706 = vmax.xlane.f32.xlu0 %v3705
          %v3707 = vpop.xlane.xlu0 %3706
          %v3708 = vsel %vm2265, %v3690, -inf
          %3709 = vmax.xlane.f32.xlu0 %v3708
          %v3710 = vpop.xlane.xlu0 %3709
          %v3711 = vsel %vm2265, %v3691, -inf
          %3712 = vmax.xlane.f32.xlu0 %v3711
          %v3713 = vpop.xlane.xlu0 %3712
          %v3714 = vsel %vm2265, %v3692, -inf
          %3715 = vmax.xlane.f32.xlu0 %v3714
          %v3716 = vpop.xlane.xlu0 %3715
          %v3717 = vsub.f32 %v3685, %v3695
          %v3718 = vsub.f32 %v3686, %v3698
          %v3719 = vsub.f32 %v3687, %v3701
          %v3720 = vsub.f32 %v3688, %v3704
          %v3721 = vsub.f32 %v3689, %v3707
          %v3722 = vsub.f32 %v3690, %v3710
          %v3723 = vsub.f32 %v3691, %v3713
          %v3724 = vsub.f32 %v3692, %v3716
          %v3725 = vmul.f32 %v3717, 1.442695
          %v3726 = vpow.pop %v3725
          %v3727 = vmul.f32 %v3718, 1.442695
          %v3728 = vpow.pop %v3727
          %v3729 = vmul.f32 %v3719, 1.442695
          %v3730 = vpow.pop %v3729
          %v3731 = vmul.f32 %v3720, 1.442695
          %v3732 = vpow.pop %v3731
          %v3733 = vmul.f32 %v3721, 1.442695
          %v3734 = vpow.pop %v3733
          %v3735 = vmul.f32 %v3722, 1.442695
          %v3736 = vpow.pop %v3735
          %v3737 = vmul.f32 %v3723, 1.442695
          %v3738 = vpow.pop %v3737
          %v3739 = vmul.f32 %v3724, 1.442695
          %v3740 = vpow.pop %v3739
          %v3741 = vsel %vm2265, %v3726, 0.0
          %3742 = vadd.xlane.f32.xlu0 %v3741
          %v3743 = vpop.xlane.xlu0 %3742
          %v3744 = vsel %vm2265, %v3728, 0.0
          %3745 = vadd.xlane.f32.xlu0 %v3744
          %v3746 = vpop.xlane.xlu0 %3745
          %v3747 = vsel %vm2265, %v3730, 0.0
          %3748 = vadd.xlane.f32.xlu0 %v3747
          %v3749 = vpop.xlane.xlu0 %3748
          %v3750 = vsel %vm2265, %v3732, 0.0
          %3751 = vadd.xlane.f32.xlu0 %v3750
          %v3752 = vpop.xlane.xlu0 %3751
          %v3753 = vsel %vm2265, %v3734, 0.0
          %3754 = vadd.xlane.f32.xlu0 %v3753
          %v3755 = vpop.xlane.xlu0 %3754
          %v3756 = vsel %vm2265, %v3736, 0.0
          %3757 = vadd.xlane.f32.xlu0 %v3756
          %v3758 = vpop.xlane.xlu0 %3757
          %v3759 = vsel %vm2265, %v3738, 0.0
          %3760 = vadd.xlane.f32.xlu0 %v3759
          %v3761 = vpop.xlane.xlu0 %3760
          %v3762 = vsel %vm2265, %v3740, 0.0
          %3763 = vadd.xlane.f32.xlu0 %v3762
          %v3764 = vpop.xlane.xlu0 %3763
          %v3765 = vrcp.pop %v3743
          %v3766 = vrcp.pop %v3746
          %v3767 = vrcp.pop %v3749
          %v3768 = vrcp.pop %v3752
          %v3769 = vrcp.pop %v3755
          %v3770 = vrcp.pop %v3758
          %v3771 = vrcp.pop %v3761
          %v3772 = vrcp.pop %v3764
          %v3773 = vmul.f32 %v3726, %v3765
          %v3774 = vmul.f32 %v3728, %v3766
          %v3775 = vmul.f32 %v3730, %v3767
          %v3776 = vmul.f32 %v3732, %v3768
          %v3777 = vmul.f32 %v3734, %v3769
          %v3778 = vmul.f32 %v3736, %v3770
          %v3779 = vmul.f32 %v3738, %v3771
          %v3780 = vmul.f32 %v3740, %v3772
          %v3781 = vpack.c.bf16 %v3773, %v3773
          %v3782 = vpack.c.bf16 %v3273, %v3273
          %v3784 = vsel %vm2265, %v3781, 0
          %v3787 = vsel %vm2359, %v3782, 0
          %3789 = vmatprep.subr.bf16.mxu0 0
          %3790 = vmatpush1.bf16.msra.mxu0 %v3787
          %3791 = vmatprep.subr.bf16.mxu0 0
          %3792 = vmatpush1.bf16.msra.mxu0 0
          %3793 = vmatprep.subr.bf16.mxu0 0
          %3794 = vmatpush1.bf16.msra.mxu0 0
          %3795 = vmatprep.subr.bf16.mxu0 0
          %3796 = vmatpush1.bf16.msra.mxu0 0
          %3797 = vmatprep.subr.bf16.mxu0 0
          %3798 = vmatpush1.bf16.msra.mxu0 0
          %3799 = vmatprep.subr.bf16.mxu0 0
          %3800 = vmatpush1.bf16.msra.mxu0 0
          %3801 = vmatprep.subr.bf16.mxu0 0
          %3802 = vmatpush1.bf16.msra.mxu0 0
          %3803 = vmatprep.subr.bf16.mxu0 0
          %3804 = vmatpush1.bf16.msra.mxu0 0
          %3805 = vmatprep.subr.bf16.mxu0 0
          %3806 = vmatpush1.bf16.msra.mxu0 0
          %3807 = vmatprep.subr.bf16.mxu0 0
          %3808 = vmatpush1.bf16.msra.mxu0 0
          %3809 = vmatprep.subr.bf16.mxu0 0
          %3810 = vmatpush1.bf16.msra.mxu0 0
          %3811 = vmatprep.subr.bf16.mxu0 0
          %3812 = vmatpush1.bf16.msra.mxu0 0
          %3813 = vmatprep.subr.bf16.mxu0 0
          %3814 = vmatpush1.bf16.msra.mxu0 0
          %3815 = vmatprep.subr.bf16.mxu0 0
          %3816 = vmatpush1.bf16.msra.mxu0 0
          %3817 = vmatprep.subr.bf16.mxu0 0
          %3818 = vmatpush1.bf16.msra.mxu0 0
          %3819 = vmatprep.subr.bf16.mxu0 0
          %3820 = vmatpush1.bf16.msra.mxu0 0
          %3821 = vmatprep.mubr.bf16.mxu0 0
          %3822 = vmatmul.mubr.bf16.gmra.mrb[0].mxu0 %v3784
          %v3823 = vpop.f32.mrb[0].mxu0
          %v3824 = vadd.f32 0.0, %v3823
          %v3825 = vpop.f32.mrb[0].mxu0
          %v3826 = vpop.f32.mrb[0].mxu0
          %v3827 = vpop.f32.mrb[0].mxu0
          %3828 = vdwg.mxu0
          %v3829 = vpack.c.bf16 %v3774, %v3774
          %3831 = vrot.lane.b32.xlu0 %v3782, 112
          %v3832 = vpop.permute.xlu0 %3831
          %v3834 = vsel %vm2265, %v3829, 0
          %v3837 = vsel %vm2359, %v3832, 0
          %3839 = vmatprep.subr.bf16.mxu0 0
          %3840 = vmatpush1.bf16.msra.mxu0 %v3837
          %3841 = vmatprep.subr.bf16.mxu0 0
          %3842 = vmatpush1.bf16.msra.mxu0 0
          %3843 = vmatprep.subr.bf16.mxu0 0
          %3844 = vmatpush1.bf16.msra.mxu0 0
          %3845 = vmatprep.subr.bf16.mxu0 0
          %3846 = vmatpush1.bf16.msra.mxu0 0
          %3847 = vmatprep.subr.bf16.mxu0 0
          %3848 = vmatpush1.bf16.msra.mxu0 0
          %3849 = vmatprep.subr.bf16.mxu0 0
          %3850 = vmatpush1.bf16.msra.mxu0 0
          %3851 = vmatprep.subr.bf16.mxu0 0
          %3852 = vmatpush1.bf16.msra.mxu0 0
          %3853 = vmatprep.subr.bf16.mxu0 0
          %3854 = vmatpush1.bf16.msra.mxu0 0
          %3855 = vmatprep.subr.bf16.mxu0 0
          %3856 = vmatpush1.bf16.msra.mxu0 0
          %3857 = vmatprep.subr.bf16.mxu0 0
          %3858 = vmatpush1.bf16.msra.mxu0 0
          %3859 = vmatprep.subr.bf16.mxu0 0
          %3860 = vmatpush1.bf16.msra.mxu0 0
          %3861 = vmatprep.subr.bf16.mxu0 0
          %3862 = vmatpush1.bf16.msra.mxu0 0
          %3863 = vmatprep.subr.bf16.mxu0 0
          %3864 = vmatpush1.bf16.msra.mxu0 0
          %3865 = vmatprep.subr.bf16.mxu0 0
          %3866 = vmatpush1.bf16.msra.mxu0 0
          %3867 = vmatprep.subr.bf16.mxu0 0
          %3868 = vmatpush1.bf16.msra.mxu0 0
          %3869 = vmatprep.subr.bf16.mxu0 0
          %3870 = vmatpush1.bf16.msra.mxu0 0
          %3871 = vmatprep.mubr.bf16.mxu0 0
          %3872 = vmatmul.mubr.bf16.gmra.mrb[0].mxu0 %v3834
          %v3873 = vpop.f32.mrb[0].mxu0
          %v3874 = vadd.f32 0.0, %v3873
          %v3875 = vpop.f32.mrb[0].mxu0
          %v3876 = vpop.f32.mrb[0].mxu0
          %v3877 = vpop.f32.mrb[0].mxu0
          %3878 = vdwg.mxu0
          %v3879 = vpack.c.bf16 %v3775, %v3775
          %3880 = vrot.lane.b32.xlu0 %v3782, 96
          %v3881 = vpop.permute.xlu0 %3880
          %v3883 = vsel %vm2265, %v3879, 0
          %v3886 = vsel %vm2359, %v3881, 0
          %3888 = vmatprep.subr.bf16.mxu0 0
          %3889 = vmatpush1.bf16.msra.mxu0 %v3886
          %3890 = vmatprep.subr.bf16.mxu0 0
          %3891 = vmatpush1.bf16.msra.mxu0 0
          %3892 = vmatprep.subr.bf16.mxu0 0
          %3893 = vmatpush1.bf16.msra.mxu0 0
          %3894 = vmatprep.subr.bf16.mxu0 0
          %3895 = vmatpush1.bf16.msra.mxu0 0
          %3896 = vmatprep.subr.bf16.mxu0 0
          %3897 = vmatpush1.bf16.msra.mxu0 0
          %3898 = vmatprep.subr.bf16.mxu0 0
          %3899 = vmatpush1.bf16.msra.mxu0 0
          %3900 = vmatprep.subr.bf16.mxu0 0
          %3901 = vmatpush1.bf16.msra.mxu0 0
          %3902 = vmatprep.subr.bf16.mxu0 0
          %3903 = vmatpush1.bf16.msra.mxu0 0
          %3904 = vmatprep.subr.bf16.mxu0 0
          %3905 = vmatpush1.bf16.msra.mxu0 0
          %3906 = vmatprep.subr.bf16.mxu0 0
          %3907 = vmatpush1.bf16.msra.mxu0 0
          %3908 = vmatprep.subr.bf16.mxu0 0
          %3909 = vmatpush1.bf16.msra.mxu0 0
          %3910 = vmatprep.subr.bf16.mxu0 0
          %3911 = vmatpush1.bf16.msra.mxu0 0
          %3912 = vmatprep.subr.bf16.mxu0 0
          %3913 = vmatpush1.bf16.msra.mxu0 0
          %3914 = vmatprep.subr.bf16.mxu0 0
          %3915 = vmatpush1.bf16.msra.mxu0 0
          %3916 = vmatprep.subr.bf16.mxu0 0
          %3917 = vmatpush1.bf16.msra.mxu0 0
          %3918 = vmatprep.subr.bf16.mxu0 0
          %3919 = vmatpush1.bf16.msra.mxu0 0
          %3920 = vmatprep.mubr.bf16.mxu0 0
          %3921 = vmatmul.mubr.bf16.gmra.mrb[0].mxu0 %v3883
          %v3922 = vpop.f32.mrb[0].mxu0
          %v3923 = vadd.f32 0.0, %v3922
          %v3924 = vpop.f32.mrb[0].mxu0
          %v3925 = vpop.f32.mrb[0].mxu0
          %v3926 = vpop.f32.mrb[0].mxu0
          %3927 = vdwg.mxu0
          %v3928 = vpack.c.bf16 %v3776, %v3776
          %3929 = vrot.lane.b32.xlu0 %v3782, 80
          %v3930 = vpop.permute.xlu0 %3929
          %v3932 = vsel %vm2265, %v3928, 0
          %v3935 = vsel %vm2359, %v3930, 0
          %3937 = vmatprep.subr.bf16.mxu0 0
          %3938 = vmatpush1.bf16.msra.mxu0 %v3935
          %3939 = vmatprep.subr.bf16.mxu0 0
          %3940 = vmatpush1.bf16.msra.mxu0 0
          %3941 = vmatprep.subr.bf16.mxu0 0
          %3942 = vmatpush1.bf16.msra.mxu0 0
          %3943 = vmatprep.subr.bf16.mxu0 0
          %3944 = vmatpush1.bf16.msra.mxu0 0
          %3945 = vmatprep.subr.bf16.mxu0 0
          %3946 = vmatpush1.bf16.msra.mxu0 0
          %3947 = vmatprep.subr.bf16.mxu0 0
          %3948 = vmatpush1.bf16.msra.mxu0 0
          %3949 = vmatprep.subr.bf16.mxu0 0
          %3950 = vmatpush1.bf16.msra.mxu0 0
          %3951 = vmatprep.subr.bf16.mxu0 0
          %3952 = vmatpush1.bf16.msra.mxu0 0
          %3953 = vmatprep.subr.bf16.mxu0 0
          %3954 = vmatpush1.bf16.msra.mxu0 0
          %3955 = vmatprep.subr.bf16.mxu0 0
          %3956 = vmatpush1.bf16.msra.mxu0 0
          %3957 = vmatprep.subr.bf16.mxu0 0
          %3958 = vmatpush1.bf16.msra.mxu0 0
          %3959 = vmatprep.subr.bf16.mxu0 0
          %3960 = vmatpush1.bf16.msra.mxu0 0
          %3961 = vmatprep.subr.bf16.mxu0 0
          %3962 = vmatpush1.bf16.msra.mxu0 0
          %3963 = vmatprep.subr.bf16.mxu0 0
          %3964 = vmatpush1.bf16.msra.mxu0 0
          %3965 = vmatprep.subr.bf16.mxu0 0
          %3966 = vmatpush1.bf16.msra.mxu0 0
          %3967 = vmatprep.subr.bf16.mxu0 0
          %3968 = vmatpush1.bf16.msra.mxu0 0
          %3969 = vmatprep.mubr.bf16.mxu0 0
          %3970 = vmatmul.mubr.bf16.gmra.mrb[0].mxu0 %v3932
          %v3971 = vpop.f32.mrb[0].mxu0
          %v3972 = vadd.f32 0.0, %v3971
          %v3973 = vpop.f32.mrb[0].mxu0
          %v3974 = vpop.f32.mrb[0].mxu0
          %v3975 = vpop.f32.mrb[0].mxu0
          %3976 = vdwg.mxu0
          %3978 = vrot.lane.b32.xlu0 %v3874, 16
          %v3979 = vpop.permute.xlu0 %3978
          %3982 = vrot.lane.b32.xlu0 %v3923, 32
          %v3983 = vpop.permute.xlu0 %3982
          %3986 = vrot.lane.b32.xlu0 %v3972, 48
          %v3987 = vpop.permute.xlu0 %3986
          %v3989 = vsel %vm1857, %v3824, %v3979
          %v3990 = vsel %vm2564, %v3989, %v3983
          %v3991 = vsel %vm2566, %v3990, %v3987
          %v3992 = vpack.c.bf16 %v3777, %v3777
          %v3993 = vpack.c.bf16 %v3277, %v3277
          %v3995 = vsel %vm2265, %v3992, 0
          %v3998 = vsel %vm2359, %v3993, 0
          %4000 = vmatprep.subr.bf16.mxu0 0
          %4001 = vmatpush1.bf16.msra.mxu0 %v3998
          %4002 = vmatprep.subr.bf16.mxu0 0
          %4003 = vmatpush1.bf16.msra.mxu0 0
          %4004 = vmatprep.subr.bf16.mxu0 0
          %4005 = vmatpush1.bf16.msra.mxu0 0
          %4006 = vmatprep.subr.bf16.mxu0 0
          %4007 = vmatpush1.bf16.msra.mxu0 0
          %4008 = vmatprep.subr.bf16.mxu0 0
          %4009 = vmatpush1.bf16.msra.mxu0 0
          %4010 = vmatprep.subr.bf16.mxu0 0
          %4011 = vmatpush1.bf16.msra.mxu0 0
          %4012 = vmatprep.subr.bf16.mxu0 0
          %4013 = vmatpush1.bf16.msra.mxu0 0
          %4014 = vmatprep.subr.bf16.mxu0 0
          %4015 = vmatpush1.bf16.msra.mxu0 0
          %4016 = vmatprep.subr.bf16.mxu0 0
          %4017 = vmatpush1.bf16.msra.mxu0 0
          %4018 = vmatprep.subr.bf16.mxu0 0
          %4019 = vmatpush1.bf16.msra.mxu0 0
          %4020 = vmatprep.subr.bf16.mxu0 0
          %4021 = vmatpush1.bf16.msra.mxu0 0
          %4022 = vmatprep.subr.bf16.mxu0 0
          %4023 = vmatpush1.bf16.msra.mxu0 0
          %4024 = vmatprep.subr.bf16.mxu0 0
          %4025 = vmatpush1.bf16.msra.mxu0 0
          %4026 = vmatprep.subr.bf16.mxu0 0
          %4027 = vmatpush1.bf16.msra.mxu0 0
          %4028 = vmatprep.subr.bf16.mxu0 0
          %4029 = vmatpush1.bf16.msra.mxu0 0
          %4030 = vmatprep.subr.bf16.mxu0 0
          %4031 = vmatpush1.bf16.msra.mxu0 0
          %4032 = vmatprep.mubr.bf16.mxu0 0
          %4033 = vmatmul.mubr.bf16.gmra.mrb[0].mxu0 %v3995
          %v4034 = vpop.f32.mrb[0].mxu0
          %v4035 = vadd.f32 0.0, %v4034
          %v4036 = vpop.f32.mrb[0].mxu0
          %v4037 = vpop.f32.mrb[0].mxu0
          %v4038 = vpop.f32.mrb[0].mxu0
          %4039 = vdwg.mxu0
          %v4040 = vpack.c.bf16 %v3778, %v3778
          %4042 = vrot.lane.b32.xlu0 %v3993, 112
          %v4043 = vpop.permute.xlu0 %4042
          %v4045 = vsel %vm2265, %v4040, 0
          %v4048 = vsel %vm2359, %v4043, 0
          %4050 = vmatprep.subr.bf16.mxu0 0
          %4051 = vmatpush1.bf16.msra.mxu0 %v4048
          %4052 = vmatprep.subr.bf16.mxu0 0
          %4053 = vmatpush1.bf16.msra.mxu0 0
          %4054 = vmatprep.subr.bf16.mxu0 0
          %4055 = vmatpush1.bf16.msra.mxu0 0
          %4056 = vmatprep.subr.bf16.mxu0 0
          %4057 = vmatpush1.bf16.msra.mxu0 0
          %4058 = vmatprep.subr.bf16.mxu0 0
          %4059 = vmatpush1.bf16.msra.mxu0 0
          %4060 = vmatprep.subr.bf16.mxu0 0
          %4061 = vmatpush1.bf16.msra.mxu0 0
          %4062 = vmatprep.subr.bf16.mxu0 0
          %4063 = vmatpush1.bf16.msra.mxu0 0
          %4064 = vmatprep.subr.bf16.mxu0 0
          %4065 = vmatpush1.bf16.msra.mxu0 0
          %4066 = vmatprep.subr.bf16.mxu0 0
          %4067 = vmatpush1.bf16.msra.mxu0 0
          %4068 = vmatprep.subr.bf16.mxu0 0
          %4069 = vmatpush1.bf16.msra.mxu0 0
          %4070 = vmatprep.subr.bf16.mxu0 0
          %4071 = vmatpush1.bf16.msra.mxu0 0
          %4072 = vmatprep.subr.bf16.mxu0 0
          %4073 = vmatpush1.bf16.msra.mxu0 0
          %4074 = vmatprep.subr.bf16.mxu0 0
          %4075 = vmatpush1.bf16.msra.mxu0 0
          %4076 = vmatprep.subr.bf16.mxu0 0
          %4077 = vmatpush1.bf16.msra.mxu0 0
          %4078 = vmatprep.subr.bf16.mxu0 0
          %4079 = vmatpush1.bf16.msra.mxu0 0
          %4080 = vmatprep.subr.bf16.mxu0 0
          %4081 = vmatpush1.bf16.msra.mxu0 0
          %4082 = vmatprep.mubr.bf16.mxu0 0
          %4083 = vmatmul.mubr.bf16.gmra.mrb[0].mxu0 %v4045
          %v4084 = vpop.f32.mrb[0].mxu0
          %v4085 = vadd.f32 0.0, %v4084
          %v4086 = vpop.f32.mrb[0].mxu0
          %v4087 = vpop.f32.mrb[0].mxu0
          %v4088 = vpop.f32.mrb[0].mxu0
          %4089 = vdwg.mxu0
          %v4090 = vpack.c.bf16 %v3779, %v3779
          %4091 = vrot.lane.b32.xlu0 %v3993, 96
          %v4092 = vpop.permute.xlu0 %4091
          %v4094 = vsel %vm2265, %v4090, 0
          %v4097 = vsel %vm2359, %v4092, 0
          %4099 = vmatprep.subr.bf16.mxu0 0
          %4100 = vmatpush1.bf16.msra.mxu0 %v4097
          %4101 = vmatprep.subr.bf16.mxu0 0
          %4102 = vmatpush1.bf16.msra.mxu0 0
          %4103 = vmatprep.subr.bf16.mxu0 0
          %4104 = vmatpush1.bf16.msra.mxu0 0
          %4105 = vmatprep.subr.bf16.mxu0 0
          %4106 = vmatpush1.bf16.msra.mxu0 0
          %4107 = vmatprep.subr.bf16.mxu0 0
          %4108 = vmatpush1.bf16.msra.mxu0 0
          %4109 = vmatprep.subr.bf16.mxu0 0
          %4110 = vmatpush1.bf16.msra.mxu0 0
          %4111 = vmatprep.subr.bf16.mxu0 0
          %4112 = vmatpush1.bf16.msra.mxu0 0
          %4113 = vmatprep.subr.bf16.mxu0 0
          %4114 = vmatpush1.bf16.msra.mxu0 0
          %4115 = vmatprep.subr.bf16.mxu0 0
          %4116 = vmatpush1.bf16.msra.mxu0 0
          %4117 = vmatprep.subr.bf16.mxu0 0
          %4118 = vmatpush1.bf16.msra.mxu0 0
          %4119 = vmatprep.subr.bf16.mxu0 0
          %4120 = vmatpush1.bf16.msra.mxu0 0
          %4121 = vmatprep.subr.bf16.mxu0 0
          %4122 = vmatpush1.bf16.msra.mxu0 0
          %4123 = vmatprep.subr.bf16.mxu0 0
          %4124 = vmatpush1.bf16.msra.mxu0 0
          %4125 = vmatprep.subr.bf16.mxu0 0
          %4126 = vmatpush1.bf16.msra.mxu0 0
          %4127 = vmatprep.subr.bf16.mxu0 0
          %4128 = vmatpush1.bf16.msra.mxu0 0
          %4129 = vmatprep.subr.bf16.mxu0 0
          %4130 = vmatpush1.bf16.msra.mxu0 0
          %4131 = vmatprep.mubr.bf16.mxu0 0
          %4132 = vmatmul.mubr.bf16.gmra.mrb[0].mxu0 %v4094
          %v4133 = vpop.f32.mrb[0].mxu0
          %v4134 = vadd.f32 0.0, %v4133
          %v4135 = vpop.f32.mrb[0].mxu0
          %v4136 = vpop.f32.mrb[0].mxu0
          %v4137 = vpop.f32.mrb[0].mxu0
          %4138 = vdwg.mxu0
          %v4139 = vpack.c.bf16 %v3780, %v3780
          %4140 = vrot.lane.b32.xlu0 %v3993, 80
          %v4141 = vpop.permute.xlu0 %4140
          %v4143 = vsel %vm2265, %v4139, 0
          %v4146 = vsel %vm2359, %v4141, 0
          %4148 = vmatprep.subr.bf16.mxu0 0
          %4149 = vmatpush1.bf16.msra.mxu0 %v4146
          %4150 = vmatprep.subr.bf16.mxu0 0
          %4151 = vmatpush1.bf16.msra.mxu0 0
          %4152 = vmatprep.subr.bf16.mxu0 0
          %4153 = vmatpush1.bf16.msra.mxu0 0
          %4154 = vmatprep.subr.bf16.mxu0 0
          %4155 = vmatpush1.bf16.msra.mxu0 0
          %4156 = vmatprep.subr.bf16.mxu0 0
          %4157 = vmatpush1.bf16.msra.mxu0 0
          %4158 = vmatprep.subr.bf16.mxu0 0
          %4159 = vmatpush1.bf16.msra.mxu0 0
          %4160 = vmatprep.subr.bf16.mxu0 0
          %4161 = vmatpush1.bf16.msra.mxu0 0
          %4162 = vmatprep.subr.bf16.mxu0 0
          %4163 = vmatpush1.bf16.msra.mxu0 0
          %4164 = vmatprep.subr.bf16.mxu0 0
          %4165 = vmatpush1.bf16.msra.mxu0 0
          %4166 = vmatprep.subr.bf16.mxu0 0
          %4167 = vmatpush1.bf16.msra.mxu0 0
          %4168 = vmatprep.subr.bf16.mxu0 0
          %4169 = vmatpush1.bf16.msra.mxu0 0
          %4170 = vmatprep.subr.bf16.mxu0 0
          %4171 = vmatpush1.bf16.msra.mxu0 0
          %4172 = vmatprep.subr.bf16.mxu0 0
          %4173 = vmatpush1.bf16.msra.mxu0 0
          %4174 = vmatprep.subr.bf16.mxu0 0
          %4175 = vmatpush1.bf16.msra.mxu0 0
          %4176 = vmatprep.subr.bf16.mxu0 0
          %4177 = vmatpush1.bf16.msra.mxu0 0
          %4178 = vmatprep.subr.bf16.mxu0 0
          %4179 = vmatpush1.bf16.msra.mxu0 0
          %4180 = vmatprep.mubr.bf16.mxu0 0
          %4181 = vmatmul.mubr.bf16.gmra.mrb[0].mxu0 %v4143
          %v4182 = vpop.f32.mrb[0].mxu0
          %v4183 = vadd.f32 0.0, %v4182
          %v4184 = vpop.f32.mrb[0].mxu0
          %v4185 = vpop.f32.mrb[0].mxu0
          %v4186 = vpop.f32.mrb[0].mxu0
          %4187 = vdwg.mxu0
          %4189 = vrot.lane.b32.xlu0 %v4085, 16
          %v4190 = vpop.permute.xlu0 %4189
          %4193 = vrot.lane.b32.xlu0 %v4134, 32
          %v4194 = vpop.permute.xlu0 %4193
          %4197 = vrot.lane.b32.xlu0 %v4183, 48
          %v4198 = vpop.permute.xlu0 %4197
          %v4200 = vsel %vm1857, %v4035, %v4190
          %v4201 = vsel %vm2564, %v4200, %v4194
          %v4202 = vsel %vm2566, %v4201, %v4198
          %v4203 = vpack.c.bf16 %v4202, %v3991
          %s4204 = scalar_lea.vmem %s23, 32
          %v4205 = vld [vmem:[%s4204] sm:$0xf]
          %v4206 = vld [vmem:[%s4204 + $0x4] sm:$0xf]
          %v4207 = vld [vmem:[%s4204 + $0x8] sm:$0xf]
          %v4208 = vld [vmem:[%s4204 + $0xc] sm:$0xf]
          %v4209 = vld [vmem:[%s4204 + $0x10] sm:$0xf]
          %v4210 = vld [vmem:[%s4204 + $0x14] sm:$0xf]
          %v4211 = vld [vmem:[%s4204 + $0x18] sm:$0xf]
          %v4212 = vld [vmem:[%s4204 + $0x1c] sm:$0xf]
          %s4213 = scalar_lea.vmem [#allocation14], 1
          %v4214 = vld [vmem:[%s4213] sm:$0x1]
          %v4216 = vlaneseq
          %v4217 = vshrl.u32 %v4216, 7
          %v4218 = vsub.s32 0, %v4217
          %v4219 = vrot.slane %v4214, %v4218
          %v4229 = vunpack.c.l.b16 %v4205
          %v4230 = vunpack.c.l.b16 %v4206
          %v4231 = vunpack.c.l.b16 %v4207
          %v4232 = vunpack.c.l.b16 %v4208
          %v4233 = vunpack.c.l.b16 %v4209
          %v4234 = vunpack.c.l.b16 %v4210
          %v4235 = vunpack.c.l.b16 %v4211
          %v4236 = vunpack.c.l.b16 %v4212
          %v4237 = vpack.c.b16 %v4230, %v4229
          %v4238 = vpack.c.b16 %v4232, %v4231
          %v4239 = vpack.c.b16 %v4234, %v4233
          %v4240 = vpack.c.b16 %v4236, %v4235
          %v4246 = vsel %vm1584, %v4203, 0
          %4248 = vmatprep.subr.bf16.mxu0 0
          %4249 = vmatpush1.bf16.msra.mxu0 %v4237
          %4250 = vmatprep.subr.bf16.mxu0 0
          %4251 = vmatpush1.bf16.msra.mxu0 %v4238
          %4252 = vmatprep.subr.bf16.mxu0 0
          %4253 = vmatpush1.bf16.msra.mxu0 %v4239
          %4254 = vmatprep.subr.bf16.mxu0 0
          %4255 = vmatpush1.bf16.msra.mxu0 %v4240
          %4256 = vmatprep.subr.bf16.mxu0 0
          %4257 = vmatpush1.bf16.msra.mxu0 0
          %4258 = vmatprep.subr.bf16.mxu0 0
          %4259 = vmatpush1.bf16.msra.mxu0 0
          %4260 = vmatprep.subr.bf16.mxu0 0
          %4261 = vmatpush1.bf16.msra.mxu0 0
          %4262 = vmatprep.subr.bf16.mxu0 0
          %4263 = vmatpush1.bf16.msra.mxu0 0
          %4264 = vmatprep.subr.bf16.mxu0 0
          %4265 = vmatpush1.bf16.msra.mxu0 0
          %4266 = vmatprep.subr.bf16.mxu0 0
          %4267 = vmatpush1.bf16.msra.mxu0 0
          %4268 = vmatprep.subr.bf16.mxu0 0
          %4269 = vmatpush1.bf16.msra.mxu0 0
          %4270 = vmatprep.subr.bf16.mxu0 0
          %4271 = vmatpush1.bf16.msra.mxu0 0
          %4272 = vmatprep.subr.bf16.mxu0 0
          %4273 = vmatpush1.bf16.msra.mxu0 0
          %4274 = vmatprep.subr.bf16.mxu0 0
          %4275 = vmatpush1.bf16.msra.mxu0 0
          %4276 = vmatprep.subr.bf16.mxu0 0
          %4277 = vmatpush1.bf16.msra.mxu0 0
          %4278 = vmatprep.subr.bf16.mxu0 0
          %4279 = vmatpush1.bf16.msra.mxu0 0
          %4280 = vmatprep.mubr.bf16.mxu0 0
          %4281 = vmatmul.mubr.bf16.gmra.mrb[0].mxu0 %v4246
          %v4282 = vpop.f32.mrb[0].mxu0
          %v4283 = vadd.f32 %v4219, %v4282
          %v4284 = vpop.f32.mrb[0].mxu0
          %v4285 = vpop.f32.mrb[0].mxu0
          %v4286 = vadd.f32 %v4219, %v4285
          %v4287 = vpop.f32.mrb[0].mxu0
          %4288 = vdwg.mxu0
          %v4289 = vadd.f32 %v3122, %v4283
          %v4290 = vadd.f32 %v3123, %v4286
          %s4291 = scalar_lea.vmem [#allocation16], 1
          %v4292 = vld [vmem:[%s4291] sm:$0x1]
          %s4293 = scalar_lea.vmem [#allocation17], 1
          %v4294 = vld [vmem:[%s4293] sm:$0x1]
          %v4295 = vsel %vm1584, %v4289, 0.0
          %4296 = vadd.xlane.f32.xlu0 %v4295
          %v4297 = vpop.xlane.xlu0 %4296
          %v4298 = vsel %vm1584, %v4290, 0.0
          %4299 = vadd.xlane.f32.xlu0 %v4298
          %v4300 = vpop.xlane.xlu0 %4299
          %v4301 = vmul.f32 %v4297, %v1658
          %v4302 = vmul.f32 %v4300, %v1658
          %v4303 = vsub.f32 %v4289, %v4301
          %v4304 = vsub.f32 %v4290, %v4302
          %v4305 = vmul.f32 %v4303, %v4303
          %v4306 = vmul.f32 %v4304, %v4304
          %v4307 = vsel %vm1584, %v4305, 0.0
          %4308 = vadd.xlane.f32.xlu0 %v4307
          %v4309 = vpop.xlane.xlu0 %4308
          %v4310 = vsel %vm1584, %v4306, 0.0
          %4311 = vadd.xlane.f32.xlu0 %v4310
          %v4312 = vpop.xlane.xlu0 %4311
          %v4313 = vmul.f32 %v4309, %v1658
          %v4314 = vmul.f32 %v4312, %v1658
          %v4315 = vadd.f32 %v4313, 1e-05
          %v4316 = vadd.f32 %v4314, 1e-05
          %v4317 = vrsqrt.pop %v4315
          %v4318 = vrsqrt.pop %v4316
          %v4319 = vmul.f32 %v4303, %v4317
          %v4320 = vmul.f32 %v4304, %v4318
          %v4322 = vlaneseq
          %v4323 = vshrl.u32 %v4322, 7
          %v4324 = vsub.s32 0, %v4323
          %v4325 = vrot.slane %v4292, %v4324
          %v4327 = vmul.f32 %v4319, %v4325
          %v4328 = vmul.f32 %v4320, %v4325
          %v4330 = vlaneseq
          %v4331 = vshrl.u32 %v4330, 7
          %v4332 = vsub.s32 0, %v4331
          %v4333 = vrot.slane %v4294, %v4332
          %v4335 = vadd.f32 %v4327, %v4333
          %v4336 = vadd.f32 %v4328, %v4333
          %v4337 = vpack.c.bf16 %v4336, %v4335
          %s4338 = scalar_lea.vmem %s31, 32
          %v4339 = vld [vmem:[%s4338] sm:$0xf]
          %v4340 = vld [vmem:[%s4338 + $0x4] sm:$0xf]
          %v4341 = vld [vmem:[%s4338 + $0x8] sm:$0xf]
          %v4342 = vld [vmem:[%s4338 + $0xc] sm:$0xf]
          %v4343 = vld [vmem:[%s4338 + $0x10] sm:$0xf]
          %v4344 = vld [vmem:[%s4338 + $0x14] sm:$0xf]
          %v4345 = vld [vmem:[%s4338 + $0x18] sm:$0xf]
          %v4346 = vld [vmem:[%s4338 + $0x1c] sm:$0xf]
          %s4347 = scalar_lea.vmem [#allocation19], 1
          %v4348 = vld [vmem:[%s4347] sm:$0x1]
          %v4350 = vlaneseq
          %v4351 = vshrl.u32 %v4350, 7
          %v4352 = vsub.s32 0, %v4351
          %v4353 = vrot.slane %v4348, %v4352
          %v4363 = vunpack.c.l.b16 %v4339
          %v4364 = vunpack.c.l.b16 %v4340
          %v4365 = vunpack.c.l.b16 %v4341
          %v4366 = vunpack.c.l.b16 %v4342
          %v4367 = vunpack.c.l.b16 %v4343
          %v4368 = vunpack.c.l.b16 %v4344
          %v4369 = vunpack.c.l.b16 %v4345
          %v4370 = vunpack.c.l.b16 %v4346
          %v4371 = vpack.c.b16 %v4364, %v4363
          %v4372 = vpack.c.b16 %v4366, %v4365
          %v4373 = vpack.c.b16 %v4368, %v4367
          %v4374 = vpack.c.b16 %v4370, %v4369
          %v4380 = vsel %vm1584, %v4337, 0
          %4382 = vmatprep.subr.bf16.mxu0 0
          %4383 = vmatpush1.bf16.msra.mxu0 %v4371
          %4384 = vmatprep.subr.bf16.mxu0 0
          %4385 = vmatpush1.bf16.msra.mxu0 %v4372
          %4386 = vmatprep.subr.bf16.mxu0 0
          %4387 = vmatpush1.bf16.msra.mxu0 %v4373
          %4388 = vmatprep.subr.bf16.mxu0 0
          %4389 = vmatpush1.bf16.msra.mxu0 %v4374
          %4390 = vmatprep.subr.bf16.mxu0 0
          %4391 = vmatpush1.bf16.msra.mxu0 0
          %4392 = vmatprep.subr.bf16.mxu0 0
          %4393 = vmatpush1.bf16.msra.mxu0 0
          %4394 = vmatprep.subr.bf16.mxu0 0
          %4395 = vmatpush1.bf16.msra.mxu0 0
          %4396 = vmatprep.subr.bf16.mxu0 0
          %4397 = vmatpush1.bf16.msra.mxu0 0
          %4398 = vmatprep.subr.bf16.mxu0 0
          %4399 = vmatpush1.bf16.msra.mxu0 0
          %4400 = vmatprep.subr.bf16.mxu0 0
          %4401 = vmatpush1.bf16.msra.mxu0 0
          %4402 = vmatprep.subr.bf16.mxu0 0
          %4403 = vmatpush1.bf16.msra.mxu0 0
          %4404 = vmatprep.subr.bf16.mxu0 0
          %4405 = vmatpush1.bf16.msra.mxu0 0
          %4406 = vmatprep.subr.bf16.mxu0 0
          %4407 = vmatpush1.bf16.msra.mxu0 0
          %4408 = vmatprep.subr.bf16.mxu0 0
          %4409 = vmatpush1.bf16.msra.mxu0 0
          %4410 = vmatprep.subr.bf16.mxu0 0
          %4411 = vmatpush1.bf16.msra.mxu0 0
          %4412 = vmatprep.subr.bf16.mxu0 0
          %4413 = vmatpush1.bf16.msra.mxu0 0
          %4414 = vmatprep.mubr.bf16.mxu0 0
          %4415 = vmatmul.mubr.bf16.gmra.mrb[0].mxu0 %v4380
          %v4416 = vpop.f32.mrb[0].mxu0
          %v4417 = vadd.f32 %v4353, %v4416
          %v4418 = vpop.f32.mrb[0].mxu0
          %v4419 = vpop.f32.mrb[0].mxu0
          %v4420 = vadd.f32 %v4353, %v4419
          %v4421 = vpop.f32.mrb[0].mxu0
          %4422 = vdwg.mxu0
          %v4423 = vmul.f32 %v4417, 1.702
          %v4424 = vmul.f32 %v4420, 1.702
          %v4425 = vxor.u32 %v4423, 2147483648
          %v4426 = vxor.u32 %v4424, 2147483648
          %v4427 = vmul.f32 %v4425, 1.442695
          %v4428 = vpow.pop %v4427
          %v4429 = vmul.f32 %v4426, 1.442695
          %v4430 = vpow.pop %v4429
          %v4431 = vadd.f32 %v4428, 1.0
          %v4432 = vadd.f32 %v4430, 1.0
          %v4433 = vrcp.pop %v4431
          %v4434 = vmul.f32 1.0, %v4433
          %v4435 = vrcp.pop %v4432
          %v4436 = vmul.f32 1.0, %v4435
          %v4437 = vmul.f32 %v4417, %v4434
          %v4438 = vmul.f32 %v4420, %v4436
          %v4439 = vpack.c.bf16 %v4438, %v4437
          %s4440 = scalar_lea.vmem %s35, 64
          %v4441 = vld [vmem:[%s4440] sm:$0xf]
          %v4442 = vld [vmem:[%s4440 + $0x4] sm:$0xf]
          %v4443 = vld [vmem:[%s4440 + $0x8] sm:$0xf]
          %v4444 = vld [vmem:[%s4440 + $0xc] sm:$0xf]
          %v4445 = vld [vmem:[%s4440 + $0x10] sm:$0xf]
          %v4446 = vld [vmem:[%s4440 + $0x14] sm:$0xf]
          %v4447 = vld [vmem:[%s4440 + $0x18] sm:$0xf]
          %v4448 = vld [vmem:[%s4440 + $0x1c] sm:$0xf]
          %v4449 = vld [vmem:[%s4440 + $0x20] sm:$0xf]
          %v4450 = vld [vmem:[%s4440 + $0x24] sm:$0xf]
          %v4451 = vld [vmem:[%s4440 + $0x28] sm:$0xf]
          %v4452 = vld [vmem:[%s4440 + $0x2c] sm:$0xf]
          %v4453 = vld [vmem:[%s4440 + $0x30] sm:$0xf]
          %v4454 = vld [vmem:[%s4440 + $0x34] sm:$0xf]
          %v4455 = vld [vmem:[%s4440 + $0x38] sm:$0xf]
          %v4456 = vld [vmem:[%s4440 + $0x3c] sm:$0xf]
          %s4457 = scalar_lea.vmem [#allocation20], 1
          %v4458 = vld [vmem:[%s4457] sm:$0x1]
          %v4460 = vlaneseq
          %v4461 = vshrl.u32 %v4460, 7
          %v4462 = vsub.s32 0, %v4461
          %v4463 = vrot.slane %v4458, %v4462
          %v4481 = vunpack.c.l.b16 %v4441
          %v4482 = vunpack.c.l.b16 %v4442
          %v4483 = vunpack.c.l.b16 %v4443
          %v4484 = vunpack.c.l.b16 %v4444
          %v4485 = vunpack.c.l.b16 %v4445
          %v4486 = vunpack.c.l.b16 %v4446
          %v4487 = vunpack.c.l.b16 %v4447
          %v4488 = vunpack.c.l.b16 %v4448
          %v4489 = vunpack.c.l.b16 %v4449
          %v4490 = vunpack.c.l.b16 %v4450
          %v4491 = vunpack.c.l.b16 %v4451
          %v4492 = vunpack.c.l.b16 %v4452
          %v4493 = vunpack.c.l.b16 %v4453
          %v4494 = vunpack.c.l.b16 %v4454
          %v4495 = vunpack.c.l.b16 %v4455
          %v4496 = vunpack.c.l.b16 %v4456
          %v4497 = vpack.c.b16 %v4482, %v4481
          %v4498 = vpack.c.b16 %v4484, %v4483
          %v4499 = vpack.c.b16 %v4486, %v4485
          %v4500 = vpack.c.b16 %v4488, %v4487
          %v4501 = vpack.c.b16 %v4490, %v4489
          %v4502 = vpack.c.b16 %v4492, %v4491
          %v4503 = vpack.c.b16 %v4494, %v4493
          %v4504 = vpack.c.b16 %v4496, %v4495
          %4513 = vmatprep.subr.bf16.mxu0 0
          %4514 = vmatpush1.bf16.msra.mxu0 %v4497
          %4515 = vmatprep.subr.bf16.mxu0 0
          %4516 = vmatpush1.bf16.msra.mxu0 %v4498
          %4517 = vmatprep.subr.bf16.mxu0 0
          %4518 = vmatpush1.bf16.msra.mxu0 %v4499
          %4519 = vmatprep.subr.bf16.mxu0 0
          %4520 = vmatpush1.bf16.msra.mxu0 %v4500
          %4521 = vmatprep.subr.bf16.mxu0 0
          %4522 = vmatpush1.bf16.msra.mxu0 %v4501
          %4523 = vmatprep.subr.bf16.mxu0 0
          %4524 = vmatpush1.bf16.msra.mxu0 %v4502
          %4525 = vmatprep.subr.bf16.mxu0 0
          %4526 = vmatpush1.bf16.msra.mxu0 %v4503
          %4527 = vmatprep.subr.bf16.mxu0 0
          %4528 = vmatpush1.bf16.msra.mxu0 %v4504
          %4529 = vmatprep.subr.bf16.mxu0 0
          %4530 = vmatpush1.bf16.msra.mxu0 0
          %4531 = vmatprep.subr.bf16.mxu0 0
          %4532 = vmatpush1.bf16.msra.mxu0 0
          %4533 = vmatprep.subr.bf16.mxu0 0
          %4534 = vmatpush1.bf16.msra.mxu0 0
          %4535 = vmatprep.subr.bf16.mxu0 0
          %4536 = vmatpush1.bf16.msra.mxu0 0
          %4537 = vmatprep.subr.bf16.mxu0 0
          %4538 = vmatpush1.bf16.msra.mxu0 0
          %4539 = vmatprep.subr.bf16.mxu0 0
          %4540 = vmatpush1.bf16.msra.mxu0 0
          %4541 = vmatprep.subr.bf16.mxu0 0
          %4542 = vmatpush1.bf16.msra.mxu0 0
          %4543 = vmatprep.subr.bf16.mxu0 0
          %4544 = vmatpush1.bf16.msra.mxu0 0
          %4545 = vmatprep.mubr.bf16.mxu0 0
          %4546 = vmatmul.mubr.bf16.gmra.mrb[0].mxu0 %v4439
          %v4547 = vpop.f32.mrb[0].mxu0
          %v4548 = vadd.f32 %v4463, %v4547
          %v4549 = vpop.f32.mrb[0].mxu0
          %v4550 = vpop.f32.mrb[0].mxu0
          %v4551 = vadd.f32 %v4463, %v4550
          %v4552 = vpop.f32.mrb[0].mxu0
          %4553 = vdwg.mxu0
          %v4554 = vadd.f32 %v4289, %v4548
          %v4555 = vadd.f32 %v4290, %v4551
          %v4557 = vrot.slane %v4555, 7
          %v4559 = vsel %vm1638, %v4554, %v4557
          %v4560 = vld [vmem:[#allocation22] sm:$0x1]
          %v4561 = vld [vmem:[#allocation23] sm:$0x1]
          %vm4562 = vcmask 517120
          %v4563 = vsel %vm4562, %v4559, 0.0
          %4564 = vadd.xlane.f32.xlu0 %v4563
          %v4565 = vpop.xlane.xlu0 %4564
          %v4566 = vmul.f32 %v4565, %v1658
          %v4567 = vsub.f32 %v4559, %v4566
          %v4568 = vmul.f32 %v4567, %v4567
          %v4569 = vsel %vm4562, %v4568, 0.0
          %4570 = vadd.xlane.f32.xlu0 %v4569
          %v4571 = vpop.xlane.xlu0 %4570
          %v4572 = vmul.f32 %v4571, %v1658
          %v4573 = vadd.f32 %v4572, 1e-05
          %v4574 = vrsqrt.pop %v4573
          %v4575 = vmul.f32 %v4567, %v4574
          %v4577 = vlaneseq
          %v4578 = vshrl.u32 %v4577, 7
          %v4579 = vsub.s32 0, %v4578
          %v4580 = vrot.slane %v4560, %v4579
          %v4582 = vmul.f32 %v4575, %v4580
          %v4584 = vlaneseq
          %v4585 = vshrl.u32 %v4584, 7
          %v4586 = vsub.s32 0, %v4585
          %v4587 = vrot.slane %v4561, %v4586
          %v4589 = vadd.f32 %v4582, %v4587
          %v4590 = vpack.c.bf16 %v4589, %v4589
          %v4591 = vld [vmem:[#allocation25] sm:$0xf]
          %v4592 = vld [vmem:[#allocation25 + $0x4] sm:$0xf]
          %v4593 = vld [vmem:[#allocation25 + $0x8] sm:$0xf]
          %v4594 = vld [vmem:[#allocation25 + $0xc] sm:$0xf]
          %v4595 = vld [vmem:[#allocation25 + $0x10] sm:$0xf]
          %v4596 = vld [vmem:[#allocation25 + $0x14] sm:$0xf]
          %v4597 = vld [vmem:[#allocation25 + $0x18] sm:$0xf]
          %v4598 = vld [vmem:[#allocation25 + $0x1c] sm:$0xf]
          %v4607 = vunpack.c.l.b16 %v4591
          %v4608 = vunpack.c.l.b16 %v4592
          %v4609 = vunpack.c.l.b16 %v4593
          %v4610 = vunpack.c.l.b16 %v4594
          %v4611 = vunpack.c.l.b16 %v4595
          %v4612 = vunpack.c.l.b16 %v4596
          %v4613 = vunpack.c.l.b16 %v4597
          %v4614 = vunpack.c.l.b16 %v4598
          %v4615 = vpack.c.b16 %v4608, %v4607
          %v4616 = vpack.c.b16 %v4610, %v4609
          %v4617 = vpack.c.b16 %v4612, %v4611
          %v4618 = vpack.c.b16 %v4614, %v4613
          %v4624 = vsel %vm1584, %v4590, 0
          %4626 = vmatprep.subr.bf16.mxu0 0
          %4627 = vmatpush1.bf16.msra.mxu0 %v4615
          %4628 = vmatprep.subr.bf16.mxu0 0
          %4629 = vmatpush1.bf16.msra.mxu0 %v4616
          %4630 = vmatprep.subr.bf16.mxu0 0
          %4631 = vmatpush1.bf16.msra.mxu0 %v4617
          %4632 = vmatprep.subr.bf16.mxu0 0
          %4633 = vmatpush1.bf16.msra.mxu0 %v4618
          %4634 = vmatprep.subr.bf16.mxu0 0
          %4635 = vmatpush1.bf16.msra.mxu0 0
          %4636 = vmatprep.subr.bf16.mxu0 0
          %4637 = vmatpush1.bf16.msra.mxu0 0
          %4638 = vmatprep.subr.bf16.mxu0 0
          %4639 = vmatpush1.bf16.msra.mxu0 0
          %4640 = vmatprep.subr.bf16.mxu0 0
          %4641 = vmatpush1.bf16.msra.mxu0 0
          %4642 = vmatprep.subr.bf16.mxu0 0
          %4643 = vmatpush1.bf16.msra.mxu0 0
          %4644 = vmatprep.subr.bf16.mxu0 0
          %4645 = vmatpush1.bf16.msra.mxu0 0
          %4646 = vmatprep.subr.bf16.mxu0 0
          %4647 = vmatpush1.bf16.msra.mxu0 0
          %4648 = vmatprep.subr.bf16.mxu0 0
          %4649 = vmatpush1.bf16.msra.mxu0 0
          %4650 = vmatprep.subr.bf16.mxu0 0
          %4651 = vmatpush1.bf16.msra.mxu0 0
          %4652 = vmatprep.subr.bf16.mxu0 0
          %4653 = vmatpush1.bf16.msra.mxu0 0
          %4654 = vmatprep.subr.bf16.mxu0 0
          %4655 = vmatpush1.bf16.msra.mxu0 0
          %4656 = vmatprep.subr.bf16.mxu0 0
          %4657 = vmatpush1.bf16.msra.mxu0 0
          %4658 = vmatprep.mubr.bf16.mxu0 0
          %4659 = vmatmul.mubr.bf16.gmra.mrb[0].mxu0 %v4624
          %v4660 = vpop.f32.mrb[0].mxu0
          %v4661 = vadd.f32 0.0, %v4660
          %v4662 = vpop.f32.mrb[0].mxu0
          %v4663 = vpop.f32.mrb[0].mxu0
          %v4664 = vpop.f32.mrb[0].mxu0
          %4665 = vdwg.mxu0
          %v4666 = vmul.f32 %v4661, %v4661
          %vm4667 = vcmask 1041408
          %v4668 = vsel %vm4667, %v4666, 0.0
          %4669 = vadd.xlane.f32.xlu0 %v4668
          %v4670 = vpop.xlane.xlu0 %4669
          %v4671 = vrsqrt.pop %v4670
          %v4672 = vmul.f32 %v4661, %v4671
          %4673 = vst [vmem:[%s1478] sm:$0x3] %v4672
        $region272: #{tpu_custom_call.1} parent=175 // pred_fallthru
          _
        %p4674 = scmp.eq.s32.totalorder %s105, 1
        // Predicated region
        $region273: #{tpu_custom_call.1} parent=175 // pred_check
          %p4675 = pneg %p4674
        $region274: #{tpu_custom_call.1} parent=175 // pred_check_branch
          %4677 = sbr.rel (%p4675) target = $region276
        $region275: #{tpu_custom_call.1} parent=175 // pred_region
          %v4678 = vld [vmem:[%s1] sm:$0xff]
          %v4679 = vld [vmem:[%s1 + $0x8] sm:$0xff]
          %v4680 = vlaneseq
          %v4681 = vand.u32 %v4680, 127
          %4682 = vset.pattern.permute.xlu0 0
          %4683 = vperm.xlu0 %4682, %v4678
          %v4684 = vpop.permute.xlu0 %4683
          %4685 = vset.pattern.permute.xlu0 0
          %4686 = vperm.xlu0 %4685, %v4679
          %v4687 = vpop.permute.xlu0 %4686
          %vm4688 = vcmp.eq.s32.totalorder %v4681, %v4684
          %vm4689 = vcmp.eq.s32.totalorder %v4681, %v4687
          %v4690 = vsel %vm4688, 1, 0
          %v4691 = vsel %vm4689, 1, 0
          %v4692 = vcvt.s32.f32 %v4690
          %v4693 = vcvt.s32.f32 %v4691
          %v4694 = vld [vmem:[%s45] sm:$0xff]
          %v4695 = vld [vmem:[%s45 + $0x8] sm:$0xff]
          %v4696 = vld [vmem:[%s45 + $0x10] sm:$0xff]
          %v4697 = vld [vmem:[%s45 + $0x18] sm:$0xff]
          %v4698 = vld [vmem:[%s45 + $0x20] sm:$0xff]
          %v4699 = vld [vmem:[%s45 + $0x28] sm:$0xff]
          %v4700 = vld [vmem:[%s45 + $0x30] sm:$0xff]
          %v4701 = vld [vmem:[%s45 + $0x38] sm:$0xff]
          %v4702 = vld [vmem:[#allocation26] sm:$0xff]
          %vm4703 = vcmask 523264
          %v4705 = vsel %vm4703, %v4692, 0
          %v4708 = vsel %vm4703, %v4693, 0
          %4710 = vmatprep.subr.mxu0 0.0
          %4711 = vmatpush1.msra.mxu0 %v4694
          %4712 = vmatprep.subr.mxu0 0.0
          %4713 = vmatpush1.msra.mxu0 %v4695
          %4714 = vmatprep.subr.mxu0 0.0
          %4715 = vmatpush1.msra.mxu0 %v4696
          %4716 = vmatprep.subr.mxu0 0.0
          %4717 = vmatpush1.msra.mxu0 %v4697
          %4718 = vmatprep.subr.mxu0 0.0
          %4719 = vmatpush1.msra.mxu0 %v4698
          %4720 = vmatprep.subr.mxu0 0.0
          %4721 = vmatpush1.msra.mxu0 %v4699
          %4722 = vmatprep.subr.mxu0 0.0
          %4723 = vmatpush1.msra.mxu0 %v4700
          %4724 = vmatprep.subr.mxu0 0.0
          %4725 = vmatpush1.msra.mxu0 %v4701
          %4726 = vmatprep.subr.mxu0 0.0
          %4727 = vmatpush1.msra.mxu0 0.0
          %4728 = vmatprep.subr.mxu0 0.0
          %4729 = vmatpush1.msra.mxu0 0.0
          %4730 = vmatprep.subr.mxu0 0.0
          %4731 = vmatpush1.msra.mxu0 0.0
          %4732 = vmatprep.subr.mxu0 0.0
          %4733 = vmatpush1.msra.mxu0 0.0
          %4734 = vmatprep.subr.mxu0 0.0
          %4735 = vmatpush1.msra.mxu0 0.0
          %4736 = vmatprep.subr.mxu0 0.0
          %4737 = vmatpush1.msra.mxu0 0.0
          %4738 = vmatprep.subr.mxu0 0.0
          %4739 = vmatpush1.msra.mxu0 0.0
          %4740 = vmatprep.subr.mxu0 0.0
          %4741 = vmatpush1.msra.mxu0 0.0
          %4742 = vmatprep.subr.mxu0 0.0
          %4743 = vmatpush1.msra.mxu0 0.0
          %4744 = vmatprep.subr.mxu0 0.0
          %4745 = vmatpush1.msra.mxu0 0.0
          %4746 = vmatprep.subr.mxu0 0.0
          %4747 = vmatpush1.msra.mxu0 0.0
          %4748 = vmatprep.subr.mxu0 0.0
          %4749 = vmatpush1.msra.mxu0 0.0
          %4750 = vmatprep.subr.mxu0 0.0
          %4751 = vmatpush1.msra.mxu0 0.0
          %4752 = vmatprep.subr.mxu0 0.0
          %4753 = vmatpush1.msra.mxu0 0.0
          %4754 = vmatprep.subr.mxu0 0.0
          %4755 = vmatpush1.msra.mxu0 0.0
          %4756 = vmatprep.subr.mxu0 0.0
          %4757 = vmatpush1.msra.mxu0 0.0
          %4758 = vmatprep.subr.mxu0 0.0
          %4759 = vmatpush1.msra.mxu0 0.0
          %4760 = vmatprep.subr.mxu0 0.0
          %4761 = vmatpush1.msra.mxu0 0.0
          %4762 = vmatprep.subr.mxu0 0.0
          %4763 = vmatpush1.msra.mxu0 0.0
          %4764 = vmatprep.subr.mxu0 0.0
          %4765 = vmatpush1.msra.mxu0 0.0
          %4766 = vmatprep.subr.mxu0 0.0
          %4767 = vmatpush1.msra.mxu0 0.0
          %4768 = vmatprep.subr.mxu0 0.0
          %4769 = vmatpush1.msra.mxu0 0.0
          %4770 = vmatprep.subr.mxu0 0.0
          %4771 = vmatpush1.msra.mxu0 0.0
          %4772 = vmatprep.subr.mxu0 0.0
          %4773 = vmatpush1.msra.mxu0 0.0
          %4774 = vmatprep.mubr.f32.mxu0 0.0
          %4775 = vmatmul.mubr.f32.gmra.mrb[0].mxu0 %v4705
          %v4776 = vpop.f32.mrb[0].mxu0
          %v4777 = vadd.f32 %v4702, %v4776
          %v4778 = vpop.f32.mrb[0].mxu0
          %4779 = vmatprep.mubr.f32.mxu0 0.0
          %4780 = vmatmul.mubr.f32.gmra.mrb[0].mxu0 %v4708
          %v4781 = vpop.f32.mrb[0].mxu0
          %v4782 = vadd.f32 %v4702, %v4781
          %v4783 = vpop.f32.mrb[0].mxu0
          %4784 = vdwg.mxu0
          %v4785 = vlaneseq
          %v4786 = vshrl.u32 %v4785, 7
          %vm4787 = vcmp.ge.s32.totalorder %v4786, %v4681
          %v4788 = vsel %vm4787, 0.0, -1e+09
          %v4789 = vld [vmem:[#allocation28] sm:$0x1]
          %v4790 = vld [vmem:[#allocation29] sm:$0x1]
          %v4791 = vsel %vm4703, %v4777, 0.0
          %4792 = vadd.xlane.f32.xlu0 %v4791
          %v4793 = vpop.xlane.xlu0 %4792
          %v4794 = vsel %vm4703, %v4782, 0.0
          %4795 = vadd.xlane.f32.xlu0 %v4794
          %v4796 = vpop.xlane.xlu0 %4795
          %v4797 = vrcp.pop 64.0
          %v4798 = vmul.f32 %v4793, %v4797
          %v4799 = vmul.f32 %v4796, %v4797
          %v4800 = vsub.f32 %v4777, %v4798
          %v4801 = vsub.f32 %v4782, %v4799
          %v4802 = vmul.f32 %v4800, %v4800
          %v4803 = vmul.f32 %v4801, %v4801
          %v4804 = vsel %vm4703, %v4802, 0.0
          %4805 = vadd.xlane.f32.xlu0 %v4804
          %v4806 = vpop.xlane.xlu0 %4805
          %v4807 = vsel %vm4703, %v4803, 0.0
          %4808 = vadd.xlane.f32.xlu0 %v4807
          %v4809 = vpop.xlane.xlu0 %4808
          %v4810 = vmul.f32 %v4806, %v4797
          %v4811 = vmul.f32 %v4809, %v4797
          %v4812 = vadd.f32 %v4810, 1e-05
          %v4813 = vadd.f32 %v4811, 1e-05
          %v4814 = vrsqrt.pop %v4812
          %v4815 = vrsqrt.pop %v4813
          %v4816 = vmul.f32 %v4800, %v4814
          %v4817 = vmul.f32 %v4801, %v4815
          %v4819 = vlaneseq
          %v4820 = vshrl.u32 %v4819, 7
          %v4821 = vsub.s32 0, %v4820
          %v4822 = vrot.slane %v4789, %v4821
          %v4824 = vmul.f32 %v4816, %v4822
          %v4825 = vmul.f32 %v4817, %v4822
          %v4827 = vlaneseq
          %v4828 = vshrl.u32 %v4827, 7
          %v4829 = vsub.s32 0, %v4828
          %v4830 = vrot.slane %v4790, %v4829
          %v4832 = vadd.f32 %v4824, %v4830
          %v4833 = vadd.f32 %v4825, %v4830
          %v4834 = vpack.c.bf16 %v4833, %v4832
          %v4835 = vld [vmem:[%s53] sm:$0xff]
          %v4836 = vld [vmem:[%s53 + $0x8] sm:$0xff]
          %v4837 = vld [vmem:[%s53 + $0x10] sm:$0xff]
          %v4838 = vld [vmem:[%s53 + $0x18] sm:$0xff]
          %v4839 = vld [vmem:[%s53 + $0x20] sm:$0xff]
          %v4840 = vld [vmem:[%s53 + $0x28] sm:$0xff]
          %v4841 = vld [vmem:[%s53 + $0x30] sm:$0xff]
          %v4842 = vld [vmem:[%s53 + $0x38] sm:$0xff]
          %v4843 = vld [vmem:[#allocation31] sm:$0x3]
          %v4845 = vlaneseq
          %v4846 = vshrl.u32 %v4845, 7
          %v4847 = vsub.s32 0, %v4846
          %v4848 = vrot.slane %v4843, %v4847
          %v4849 = vlaneseq
          %v4850 = vshrl.u32 %v4849, 7
          %v4851 = vsub.s32 1, %v4850
          %v4852 = vrot.slane %v4843, %v4851
          %v4863 = vunpack.c.l.b16 %v4835
          %v4864 = vunpack.c.h.b16 %v4835
          %v4865 = vunpack.c.l.b16 %v4836
          %v4866 = vunpack.c.h.b16 %v4836
          %v4867 = vunpack.c.l.b16 %v4837
          %v4868 = vunpack.c.h.b16 %v4837
          %v4869 = vunpack.c.l.b16 %v4838
          %v4870 = vunpack.c.h.b16 %v4838
          %v4871 = vunpack.c.l.b16 %v4839
          %v4872 = vunpack.c.h.b16 %v4839
          %v4873 = vunpack.c.l.b16 %v4840
          %v4874 = vunpack.c.h.b16 %v4840
          %v4875 = vunpack.c.l.b16 %v4841
          %v4876 = vunpack.c.h.b16 %v4841
          %v4877 = vunpack.c.l.b16 %v4842
          %v4878 = vunpack.c.h.b16 %v4842
          %v4879 = vpack.c.b16 %v4865, %v4863
          %v4880 = vpack.c.b16 %v4866, %v4864
          %v4881 = vpack.c.b16 %v4869, %v4867
          %v4882 = vpack.c.b16 %v4870, %v4868
          %v4883 = vpack.c.b16 %v4873, %v4871
          %v4884 = vpack.c.b16 %v4874, %v4872
          %v4885 = vpack.c.b16 %v4877, %v4875
          %v4886 = vpack.c.b16 %v4878, %v4876
          %v4896 = vsel %vm4703, %v4834, 0
          %4898 = vmatprep.subr.bf16.mxu0 %v4880
          %4899 = vmatpush1.bf16.msra.mxu0 %v4879
          %4900 = vmatprep.subr.bf16.mxu0 %v4882
          %4901 = vmatpush1.bf16.msra.mxu0 %v4881
          %4902 = vmatprep.subr.bf16.mxu0 %v4884
          %4903 = vmatpush1.bf16.msra.mxu0 %v4883
          %4904 = vmatprep.subr.bf16.mxu0 %v4886
          %4905 = vmatpush1.bf16.msra.mxu0 %v4885
          %4906 = vmatprep.subr.bf16.mxu0 0
          %4907 = vmatpush1.bf16.msra.mxu0 0
          %4908 = vmatprep.subr.bf16.mxu0 0
          %4909 = vmatpush1.bf16.msra.mxu0 0
          %4910 = vmatprep.subr.bf16.mxu0 0
          %4911 = vmatpush1.bf16.msra.mxu0 0
          %4912 = vmatprep.subr.bf16.mxu0 0
          %4913 = vmatpush1.bf16.msra.mxu0 0
          %4914 = vmatprep.subr.bf16.mxu0 0
          %4915 = vmatpush1.bf16.msra.mxu0 0
          %4916 = vmatprep.subr.bf16.mxu0 0
          %4917 = vmatpush1.bf16.msra.mxu0 0
          %4918 = vmatprep.subr.bf16.mxu0 0
          %4919 = vmatpush1.bf16.msra.mxu0 0
          %4920 = vmatprep.subr.bf16.mxu0 0
          %4921 = vmatpush1.bf16.msra.mxu0 0
          %4922 = vmatprep.subr.bf16.mxu0 0
          %4923 = vmatpush1.bf16.msra.mxu0 0
          %4924 = vmatprep.subr.bf16.mxu0 0
          %4925 = vmatpush1.bf16.msra.mxu0 0
          %4926 = vmatprep.subr.bf16.mxu0 0
          %4927 = vmatpush1.bf16.msra.mxu0 0
          %4928 = vmatprep.subr.bf16.mxu0 0
          %4929 = vmatpush1.bf16.msra.mxu0 0
          %4930 = vmatprep.mubr.bf16.mxu0 0
          %4931 = vmatmul.mubr.bf16.gmra.mrb[0].mxu0 %v4896
          %v4932 = vpop.f32.mrb[0].mxu0
          %v4933 = vadd.f32 %v4848, %v4932
          %v4934 = vpop.f32.mrb[0].mxu0
          %v4935 = vadd.f32 %v4852, %v4934
          %v4936 = vpop.f32.mrb[0].mxu0
          %v4937 = vadd.f32 %v4848, %v4936
          %v4938 = vpop.f32.mrb[0].mxu0
          %v4939 = vadd.f32 %v4852, %v4938
          %4940 = vdwg.mxu0
          %v4941 = vmul.f32 %v4933, 0.25
          %v4942 = vmul.f32 %v4937, 0.25
          %v4943 = vpack.c.bf16 %v4941, %v4941
          %v4944 = vpack.c.bf16 %v4933, %v4933
          %4946 = vrot.lane.b32.xlu0 %v4944, 64
          %v4947 = vpop.permute.xlu0 %4946
          %vm4948 = vcmask 130048
          %v4950 = vsel %vm4948, %v4943, 0
          %v4953 = vsel %vm4948, %v4947, 0
          %4955 = vmatprep.subr.bf16.mxu0 0
          %4956 = vmatpush1.bf16.xpose.msra.mxu0 %v4953
          %4957 = vmatprep.subr.bf16.mxu0 0
          %4958 = vmatpush1.bf16.xpose.msra.mxu0 0
          %4959 = vmatprep.subr.bf16.mxu0 0
          %4960 = vmatpush1.bf16.xpose.msra.mxu0 0
          %4961 = vmatprep.subr.bf16.mxu0 0
          %4962 = vmatpush1.bf16.xpose.msra.mxu0 0
          %4963 = vmatprep.subr.bf16.mxu0 0
          %4964 = vmatpush1.bf16.xpose.msra.mxu0 0
          %4965 = vmatprep.subr.bf16.mxu0 0
          %4966 = vmatpush1.bf16.xpose.msra.mxu0 0
          %4967 = vmatprep.subr.bf16.mxu0 0
          %4968 = vmatpush1.bf16.xpose.msra.mxu0 0
          %4969 = vmatprep.subr.bf16.mxu0 0
          %4970 = vmatpush1.bf16.xpose.msra.mxu0 0
          %4971 = vmatprep.subr.bf16.mxu0 0
          %4972 = vmatpush1.bf16.xpose.msra.mxu0 0
          %4973 = vmatprep.subr.bf16.mxu0 0
          %4974 = vmatpush1.bf16.xpose.msra.mxu0 0
          %4975 = vmatprep.subr.bf16.mxu0 0
          %4976 = vmatpush1.bf16.xpose.msra.mxu0 0
          %4977 = vmatprep.subr.bf16.mxu0 0
          %4978 = vmatpush1.bf16.xpose.msra.mxu0 0
          %4979 = vmatprep.subr.bf16.mxu0 0
          %4980 = vmatpush1.bf16.xpose.msra.mxu0 0
          %4981 = vmatprep.subr.bf16.mxu0 0
          %4982 = vmatpush1.bf16.xpose.msra.mxu0 0
          %4983 = vmatprep.subr.bf16.mxu0 0
          %4984 = vmatpush1.bf16.xpose.msra.mxu0 0
          %4985 = vmatprep.subr.bf16.mxu0 0
          %4986 = vmatpush1.bf16.xpose.msra.mxu0 0
          %4987 = vmatprep.mubr.bf16.mxu0 0
          %4988 = vmatmul.mubr.bf16.gmra.mrb[0].mxu0 %v4950
          %v4989 = vpop.f32.mrb[0].mxu0
          %v4990 = vadd.f32 0.0, %v4989
          %v4991 = vpop.f32.mrb[0].mxu0
          %v4992 = vpop.f32.mrb[0].mxu0
          %v4993 = vpop.f32.mrb[0].mxu0
          %4994 = vdwg.mxu0
          %4996 = vrot.lane.b32.xlu0 %v4943, 112
          %v4997 = vpop.permute.xlu0 %4996
          %4998 = vrot.lane.b32.xlu0 %v4944, 48
          %v4999 = vpop.permute.xlu0 %4998
          %v5001 = vsel %vm4948, %v4997, 0
          %v5004 = vsel %vm4948, %v4999, 0
          %5006 = vmatprep.subr.bf16.mxu0 0
          %5007 = vmatpush1.bf16.xpose.msra.mxu0 %v5004
          %5008 = vmatprep.subr.bf16.mxu0 0
          %5009 = vmatpush1.bf16.xpose.msra.mxu0 0
          %5010 = vmatprep.subr.bf16.mxu0 0
          %5011 = vmatpush1.bf16.xpose.msra.mxu0 0
          %5012 = vmatprep.subr.bf16.mxu0 0
          %5013 = vmatpush1.bf16.xpose.msra.mxu0 0
          %5014 = vmatprep.subr.bf16.mxu0 0
          %5015 = vmatpush1.bf16.xpose.msra.mxu0 0
          %5016 = vmatprep.subr.bf16.mxu0 0
          %5017 = vmatpush1.bf16.xpose.msra.mxu0 0
          %5018 = vmatprep.subr.bf16.mxu0 0
          %5019 = vmatpush1.bf16.xpose.msra.mxu0 0
          %5020 = vmatprep.subr.bf16.mxu0 0
          %5021 = vmatpush1.bf16.xpose.msra.mxu0 0
          %5022 = vmatprep.subr.bf16.mxu0 0
          %5023 = vmatpush1.bf16.xpose.msra.mxu0 0
          %5024 = vmatprep.subr.bf16.mxu0 0
          %5025 = vmatpush1.bf16.xpose.msra.mxu0 0
          %5026 = vmatprep.subr.bf16.mxu0 0
          %5027 = vmatpush1.bf16.xpose.msra.mxu0 0
          %5028 = vmatprep.subr.bf16.mxu0 0
          %5029 = vmatpush1.bf16.xpose.msra.mxu0 0
          %5030 = vmatprep.subr.bf16.mxu0 0
          %5031 = vmatpush1.bf16.xpose.msra.mxu0 0
          %5032 = vmatprep.subr.bf16.mxu0 0
          %5033 = vmatpush1.bf16.xpose.msra.mxu0 0
          %5034 = vmatprep.subr.bf16.mxu0 0
          %5035 = vmatpush1.bf16.xpose.msra.mxu0 0
          %5036 = vmatprep.subr.bf16.mxu0 0
          %5037 = vmatpush1.bf16.xpose.msra.mxu0 0
          %5038 = vmatprep.mubr.bf16.mxu0 0
          %5039 = vmatmul.mubr.bf16.gmra.mrb[0].mxu0 %v5001
          %v5040 = vpop.f32.mrb[0].mxu0
          %v5041 = vadd.f32 0.0, %v5040
          %v5042 = vpop.f32.mrb[0].mxu0
          %v5043 = vpop.f32.mrb[0].mxu0
          %v5044 = vpop.f32.mrb[0].mxu0
          %5045 = vdwg.mxu0
          %5046 = vrot.lane.b32.xlu0 %v4943, 96
          %v5047 = vpop.permute.xlu0 %5046
          %5048 = vrot.lane.b32.xlu0 %v4944, 32
          %v5049 = vpop.permute.xlu0 %5048
          %v5051 = vsel %vm4948, %v5047, 0
          %v5054 = vsel %vm4948, %v5049, 0
          %5056 = vmatprep.subr.bf16.mxu0 0
          %5057 = vmatpush1.bf16.xpose.msra.mxu0 %v5054
          %5058 = vmatprep.subr.bf16.mxu0 0
          %5059 = vmatpush1.bf16.xpose.msra.mxu0 0
          %5060 = vmatprep.subr.bf16.mxu0 0
          %5061 = vmatpush1.bf16.xpose.msra.mxu0 0
          %5062 = vmatprep.subr.bf16.mxu0 0
          %5063 = vmatpush1.bf16.xpose.msra.mxu0 0
          %5064 = vmatprep.subr.bf16.mxu0 0
          %5065 = vmatpush1.bf16.xpose.msra.mxu0 0
          %5066 = vmatprep.subr.bf16.mxu0 0
          %5067 = vmatpush1.bf16.xpose.msra.mxu0 0
          %5068 = vmatprep.subr.bf16.mxu0 0
          %5069 = vmatpush1.bf16.xpose.msra.mxu0 0
          %5070 = vmatprep.subr.bf16.mxu0 0
          %5071 = vmatpush1.bf16.xpose.msra.mxu0 0
          %5072 = vmatprep.subr.bf16.mxu0 0
          %5073 = vmatpush1.bf16.xpose.msra.mxu0 0
          %5074 = vmatprep.subr.bf16.mxu0 0
          %5075 = vmatpush1.bf16.xpose.msra.mxu0 0
          %5076 = vmatprep.subr.bf16.mxu0 0
          %5077 = vmatpush1.bf16.xpose.msra.mxu0 0
          %5078 = vmatprep.subr.bf16.mxu0 0
          %5079 = vmatpush1.bf16.xpose.msra.mxu0 0
          %5080 = vmatprep.subr.bf16.mxu0 0
          %5081 = vmatpush1.bf16.xpose.msra.mxu0 0
          %5082 = vmatprep.subr.bf16.mxu0 0
          %5083 = vmatpush1.bf16.xpose.msra.mxu0 0
          %5084 = vmatprep.subr.bf16.mxu0 0
          %5085 = vmatpush1.bf16.xpose.msra.mxu0 0
          %5086 = vmatprep.subr.bf16.mxu0 0
          %5087 = vmatpush1.bf16.xpose.msra.mxu0 0
          %5088 = vmatprep.mubr.bf16.mxu0 0
          %5089 = vmatmul.mubr.bf16.gmra.mrb[0].mxu0 %v5051
          %v5090 = vpop.f32.mrb[0].mxu0
          %v5091 = vadd.f32 0.0, %v5090
          %v5092 = vpop.f32.mrb[0].mxu0
          %v5093 = vpop.f32.mrb[0].mxu0
          %v5094 = vpop.f32.mrb[0].mxu0
          %5095 = vdwg.mxu0
          %5096 = vrot.lane.b32.xlu0 %v4943, 80
          %v5097 = vpop.permute.xlu0 %5096
          %5098 = vrot.lane.b32.xlu0 %v4944, 16
          %v5099 = vpop.permute.xlu0 %5098
          %v5101 = vsel %vm4948, %v5097, 0
          %v5104 = vsel %vm4948, %v5099, 0
          %5106 = vmatprep.subr.bf16.mxu0 0
          %5107 = vmatpush1.bf16.xpose.msra.mxu0 %v5104
          %5108 = vmatprep.subr.bf16.mxu0 0
          %5109 = vmatpush1.bf16.xpose.msra.mxu0 0
          %5110 = vmatprep.subr.bf16.mxu0 0
          %5111 = vmatpush1.bf16.xpose.msra.mxu0 0
          %5112 = vmatprep.subr.bf16.mxu0 0
          %5113 = vmatpush1.bf16.xpose.msra.mxu0 0
          %5114 = vmatprep.subr.bf16.mxu0 0
          %5115 = vmatpush1.bf16.xpose.msra.mxu0 0
          %5116 = vmatprep.subr.bf16.mxu0 0
          %5117 = vmatpush1.bf16.xpose.msra.mxu0 0
          %5118 = vmatprep.subr.bf16.mxu0 0
          %5119 = vmatpush1.bf16.xpose.msra.mxu0 0
          %5120 = vmatprep.subr.bf16.mxu0 0
          %5121 = vmatpush1.bf16.xpose.msra.mxu0 0
          %5122 = vmatprep.subr.bf16.mxu0 0
          %5123 = vmatpush1.bf16.xpose.msra.mxu0 0
          %5124 = vmatprep.subr.bf16.mxu0 0
          %5125 = vmatpush1.bf16.xpose.msra.mxu0 0
          %5126 = vmatprep.subr.bf16.mxu0 0
          %5127 = vmatpush1.bf16.xpose.msra.mxu0 0
          %5128 = vmatprep.subr.bf16.mxu0 0
          %5129 = vmatpush1.bf16.xpose.msra.mxu0 0
          %5130 = vmatprep.subr.bf16.mxu0 0
          %5131 = vmatpush1.bf16.xpose.msra.mxu0 0
          %5132 = vmatprep.subr.bf16.mxu0 0
          %5133 = vmatpush1.bf16.xpose.msra.mxu0 0
          %5134 = vmatprep.subr.bf16.mxu0 0
          %5135 = vmatpush1.bf16.xpose.msra.mxu0 0
          %5136 = vmatprep.subr.bf16.mxu0 0
          %5137 = vmatpush1.bf16.xpose.msra.mxu0 0
          %5138 = vmatprep.mubr.bf16.mxu0 0
          %5139 = vmatmul.mubr.bf16.gmra.mrb[0].mxu0 %v5101
          %v5140 = vpop.f32.mrb[0].mxu0
          %v5141 = vadd.f32 0.0, %v5140
          %v5142 = vpop.f32.mrb[0].mxu0
          %v5143 = vpop.f32.mrb[0].mxu0
          %v5144 = vpop.f32.mrb[0].mxu0
          %5145 = vdwg.mxu0
          %v5146 = vpack.c.bf16 %v4942, %v4942
          %v5147 = vpack.c.bf16 %v4937, %v4937
          %5149 = vrot.lane.b32.xlu0 %v5147, 64
          %v5150 = vpop.permute.xlu0 %5149
          %v5152 = vsel %vm4948, %v5146, 0
          %v5155 = vsel %vm4948, %v5150, 0
          %5157 = vmatprep.subr.bf16.mxu0 0
          %5158 = vmatpush1.bf16.xpose.msra.mxu0 %v5155
          %5159 = vmatprep.subr.bf16.mxu0 0
          %5160 = vmatpush1.bf16.xpose.msra.mxu0 0
          %5161 = vmatprep.subr.bf16.mxu0 0
          %5162 = vmatpush1.bf16.xpose.msra.mxu0 0
          %5163 = vmatprep.subr.bf16.mxu0 0
          %5164 = vmatpush1.bf16.xpose.msra.mxu0 0
          %5165 = vmatprep.subr.bf16.mxu0 0
          %5166 = vmatpush1.bf16.xpose.msra.mxu0 0
          %5167 = vmatprep.subr.bf16.mxu0 0
          %5168 = vmatpush1.bf16.xpose.msra.mxu0 0
          %5169 = vmatprep.subr.bf16.mxu0 0
          %5170 = vmatpush1.bf16.xpose.msra.mxu0 0
          %5171 = vmatprep.subr.bf16.mxu0 0
          %5172 = vmatpush1.bf16.xpose.msra.mxu0 0
          %5173 = vmatprep.subr.bf16.mxu0 0
          %5174 = vmatpush1.bf16.xpose.msra.mxu0 0
          %5175 = vmatprep.subr.bf16.mxu0 0
          %5176 = vmatpush1.bf16.xpose.msra.mxu0 0
          %5177 = vmatprep.subr.bf16.mxu0 0
          %5178 = vmatpush1.bf16.xpose.msra.mxu0 0
          %5179 = vmatprep.subr.bf16.mxu0 0
          %5180 = vmatpush1.bf16.xpose.msra.mxu0 0
          %5181 = vmatprep.subr.bf16.mxu0 0
          %5182 = vmatpush1.bf16.xpose.msra.mxu0 0
          %5183 = vmatprep.subr.bf16.mxu0 0
          %5184 = vmatpush1.bf16.xpose.msra.mxu0 0
          %5185 = vmatprep.subr.bf16.mxu0 0
          %5186 = vmatpush1.bf16.xpose.msra.mxu0 0
          %5187 = vmatprep.subr.bf16.mxu0 0
          %5188 = vmatpush1.bf16.xpose.msra.mxu0 0
          %5189 = vmatprep.mubr.bf16.mxu0 0
          %5190 = vmatmul.mubr.bf16.gmra.mrb[0].mxu0 %v5152
          %v5191 = vpop.f32.mrb[0].mxu0
          %v5192 = vadd.f32 0.0, %v5191
          %v5193 = vpop.f32.mrb[0].mxu0
          %v5194 = vpop.f32.mrb[0].mxu0
          %v5195 = vpop.f32.mrb[0].mxu0
          %5196 = vdwg.mxu0
          %5198 = vrot.lane.b32.xlu0 %v5146, 112
          %v5199 = vpop.permute.xlu0 %5198
          %5200 = vrot.lane.b32.xlu0 %v5147, 48
          %v5201 = vpop.permute.xlu0 %5200
          %v5203 = vsel %vm4948, %v5199, 0
          %v5206 = vsel %vm4948, %v5201, 0
          %5208 = vmatprep.subr.bf16.mxu0 0
          %5209 = vmatpush1.bf16.xpose.msra.mxu0 %v5206
          %5210 = vmatprep.subr.bf16.mxu0 0
          %5211 = vmatpush1.bf16.xpose.msra.mxu0 0
          %5212 = vmatprep.subr.bf16.mxu0 0
          %5213 = vmatpush1.bf16.xpose.msra.mxu0 0
          %5214 = vmatprep.subr.bf16.mxu0 0
          %5215 = vmatpush1.bf16.xpose.msra.mxu0 0
          %5216 = vmatprep.subr.bf16.mxu0 0
          %5217 = vmatpush1.bf16.xpose.msra.mxu0 0
          %5218 = vmatprep.subr.bf16.mxu0 0
          %5219 = vmatpush1.bf16.xpose.msra.mxu0 0
          %5220 = vmatprep.subr.bf16.mxu0 0
          %5221 = vmatpush1.bf16.xpose.msra.mxu0 0
          %5222 = vmatprep.subr.bf16.mxu0 0
          %5223 = vmatpush1.bf16.xpose.msra.mxu0 0
          %5224 = vmatprep.subr.bf16.mxu0 0
          %5225 = vmatpush1.bf16.xpose.msra.mxu0 0
          %5226 = vmatprep.subr.bf16.mxu0 0
          %5227 = vmatpush1.bf16.xpose.msra.mxu0 0
          %5228 = vmatprep.subr.bf16.mxu0 0
          %5229 = vmatpush1.bf16.xpose.msra.mxu0 0
          %5230 = vmatprep.subr.bf16.mxu0 0
          %5231 = vmatpush1.bf16.xpose.msra.mxu0 0
          %5232 = vmatprep.subr.bf16.mxu0 0
          %5233 = vmatpush1.bf16.xpose.msra.mxu0 0
          %5234 = vmatprep.subr.bf16.mxu0 0
          %5235 = vmatpush1.bf16.xpose.msra.mxu0 0
          %5236 = vmatprep.subr.bf16.mxu0 0
          %5237 = vmatpush1.bf16.xpose.msra.mxu0 0
          %5238 = vmatprep.subr.bf16.mxu0 0
          %5239 = vmatpush1.bf16.xpose.msra.mxu0 0
          %5240 = vmatprep.mubr.bf16.mxu0 0
          %5241 = vmatmul.mubr.bf16.gmra.mrb[0].mxu0 %v5203
          %v5242 = vpop.f32.mrb[0].mxu0
          %v5243 = vadd.f32 0.0, %v5242
          %v5244 = vpop.f32.mrb[0].mxu0
          %v5245 = vpop.f32.mrb[0].mxu0
          %v5246 = vpop.f32.mrb[0].mxu0
          %5247 = vdwg.mxu0
          %5248 = vrot.lane.b32.xlu0 %v5146, 96
          %v5249 = vpop.permute.xlu0 %5248
          %5250 = vrot.lane.b32.xlu0 %v5147, 32
          %v5251 = vpop.permute.xlu0 %5250
          %v5253 = vsel %vm4948, %v5249, 0
          %v5256 = vsel %vm4948, %v5251, 0
          %5258 = vmatprep.subr.bf16.mxu0 0
          %5259 = vmatpush1.bf16.xpose.msra.mxu0 %v5256
          %5260 = vmatprep.subr.bf16.mxu0 0
          %5261 = vmatpush1.bf16.xpose.msra.mxu0 0
          %5262 = vmatprep.subr.bf16.mxu0 0
          %5263 = vmatpush1.bf16.xpose.msra.mxu0 0
          %5264 = vmatprep.subr.bf16.mxu0 0
          %5265 = vmatpush1.bf16.xpose.msra.mxu0 0
          %5266 = vmatprep.subr.bf16.mxu0 0
          %5267 = vmatpush1.bf16.xpose.msra.mxu0 0
          %5268 = vmatprep.subr.bf16.mxu0 0
          %5269 = vmatpush1.bf16.xpose.msra.mxu0 0
          %5270 = vmatprep.subr.bf16.mxu0 0
          %5271 = vmatpush1.bf16.xpose.msra.mxu0 0
          %5272 = vmatprep.subr.bf16.mxu0 0
          %5273 = vmatpush1.bf16.xpose.msra.mxu0 0
          %5274 = vmatprep.subr.bf16.mxu0 0
          %5275 = vmatpush1.bf16.xpose.msra.mxu0 0
          %5276 = vmatprep.subr.bf16.mxu0 0
          %5277 = vmatpush1.bf16.xpose.msra.mxu0 0
          %5278 = vmatprep.subr.bf16.mxu0 0
          %5279 = vmatpush1.bf16.xpose.msra.mxu0 0
          %5280 = vmatprep.subr.bf16.mxu0 0
          %5281 = vmatpush1.bf16.xpose.msra.mxu0 0
          %5282 = vmatprep.subr.bf16.mxu0 0
          %5283 = vmatpush1.bf16.xpose.msra.mxu0 0
          %5284 = vmatprep.subr.bf16.mxu0 0
          %5285 = vmatpush1.bf16.xpose.msra.mxu0 0
          %5286 = vmatprep.subr.bf16.mxu0 0
          %5287 = vmatpush1.bf16.xpose.msra.mxu0 0
          %5288 = vmatprep.subr.bf16.mxu0 0
          %5289 = vmatpush1.bf16.xpose.msra.mxu0 0
          %5290 = vmatprep.mubr.bf16.mxu0 0
          %5291 = vmatmul.mubr.bf16.gmra.mrb[0].mxu0 %v5253
          %v5292 = vpop.f32.mrb[0].mxu0
          %v5293 = vadd.f32 0.0, %v5292
          %v5294 = vpop.f32.mrb[0].mxu0
          %v5295 = vpop.f32.mrb[0].mxu0
          %v5296 = vpop.f32.mrb[0].mxu0
          %5297 = vdwg.mxu0
          %5298 = vrot.lane.b32.xlu0 %v5146, 80
          %v5299 = vpop.permute.xlu0 %5298
          %5300 = vrot.lane.b32.xlu0 %v5147, 16
          %v5301 = vpop.permute.xlu0 %5300
          %v5303 = vsel %vm4948, %v5299, 0
          %v5306 = vsel %vm4948, %v5301, 0
          %5308 = vmatprep.subr.bf16.mxu0 0
          %5309 = vmatpush1.bf16.xpose.msra.mxu0 %v5306
          %5310 = vmatprep.subr.bf16.mxu0 0
          %5311 = vmatpush1.bf16.xpose.msra.mxu0 0
          %5312 = vmatprep.subr.bf16.mxu0 0
          %5313 = vmatpush1.bf16.xpose.msra.mxu0 0
          %5314 = vmatprep.subr.bf16.mxu0 0
          %5315 = vmatpush1.bf16.xpose.msra.mxu0 0
          %5316 = vmatprep.subr.bf16.mxu0 0
          %5317 = vmatpush1.bf16.xpose.msra.mxu0 0
          %5318 = vmatprep.subr.bf16.mxu0 0
          %5319 = vmatpush1.bf16.xpose.msra.mxu0 0
          %5320 = vmatprep.subr.bf16.mxu0 0
          %5321 = vmatpush1.bf16.xpose.msra.mxu0 0
          %5322 = vmatprep.subr.bf16.mxu0 0
          %5323 = vmatpush1.bf16.xpose.msra.mxu0 0
          %5324 = vmatprep.subr.bf16.mxu0 0
          %5325 = vmatpush1.bf16.xpose.msra.mxu0 0
          %5326 = vmatprep.subr.bf16.mxu0 0
          %5327 = vmatpush1.bf16.xpose.msra.mxu0 0
          %5328 = vmatprep.subr.bf16.mxu0 0
          %5329 = vmatpush1.bf16.xpose.msra.mxu0 0
          %5330 = vmatprep.subr.bf16.mxu0 0
          %5331 = vmatpush1.bf16.xpose.msra.mxu0 0
          %5332 = vmatprep.subr.bf16.mxu0 0
          %5333 = vmatpush1.bf16.xpose.msra.mxu0 0
          %5334 = vmatprep.subr.bf16.mxu0 0
          %5335 = vmatpush1.bf16.xpose.msra.mxu0 0
          %5336 = vmatprep.subr.bf16.mxu0 0
          %5337 = vmatpush1.bf16.xpose.msra.mxu0 0
          %5338 = vmatprep.subr.bf16.mxu0 0
          %5339 = vmatpush1.bf16.xpose.msra.mxu0 0
          %5340 = vmatprep.mubr.bf16.mxu0 0
          %5341 = vmatmul.mubr.bf16.gmra.mrb[0].mxu0 %v5303
          %v5342 = vpop.f32.mrb[0].mxu0
          %v5343 = vadd.f32 0.0, %v5342
          %v5344 = vpop.f32.mrb[0].mxu0
          %v5345 = vpop.f32.mrb[0].mxu0
          %v5346 = vpop.f32.mrb[0].mxu0
          %5347 = vdwg.mxu0
          %v5348 = vadd.f32 %v4990, %v4788
          %v5349 = vadd.f32 %v5041, %v4788
          %v5350 = vadd.f32 %v5091, %v4788
          %v5351 = vadd.f32 %v5141, %v4788
          %v5352 = vadd.f32 %v5192, %v4788
          %v5353 = vadd.f32 %v5243, %v4788
          %v5354 = vadd.f32 %v5293, %v4788
          %v5355 = vadd.f32 %v5343, %v4788
          %vm5356 = vcmask 64512
          %v5357 = vsel %vm5356, %v5348, -inf
          %5358 = vmax.xlane.f32.xlu0 %v5357
          %v5359 = vpop.xlane.xlu0 %5358
          %v5360 = vsel %vm5356, %v5349, -inf
          %5361 = vmax.xlane.f32.xlu0 %v5360
          %v5362 = vpop.xlane.xlu0 %5361
          %v5363 = vsel %vm5356, %v5350, -inf
          %5364 = vmax.xlane.f32.xlu0 %v5363
          %v5365 = vpop.xlane.xlu0 %5364
          %v5366 = vsel %vm5356, %v5351, -inf
          %5367 = vmax.xlane.f32.xlu0 %v5366
          %v5368 = vpop.xlane.xlu0 %5367
          %v5369 = vsel %vm5356, %v5352, -inf
          %5370 = vmax.xlane.f32.xlu0 %v5369
          %v5371 = vpop.xlane.xlu0 %5370
          %v5372 = vsel %vm5356, %v5353, -inf
          %5373 = vmax.xlane.f32.xlu0 %v5372
          %v5374 = vpop.xlane.xlu0 %5373
          %v5375 = vsel %vm5356, %v5354, -inf
          %5376 = vmax.xlane.f32.xlu0 %v5375
          %v5377 = vpop.xlane.xlu0 %5376
          %v5378 = vsel %vm5356, %v5355, -inf
          %5379 = vmax.xlane.f32.xlu0 %v5378
          %v5380 = vpop.xlane.xlu0 %5379
          %v5381 = vsub.f32 %v5348, %v5359
          %v5382 = vsub.f32 %v5349, %v5362
          %v5383 = vsub.f32 %v5350, %v5365
          %v5384 = vsub.f32 %v5351, %v5368
          %v5385 = vsub.f32 %v5352, %v5371
          %v5386 = vsub.f32 %v5353, %v5374
          %v5387 = vsub.f32 %v5354, %v5377
          %v5388 = vsub.f32 %v5355, %v5380
          %v5389 = vmul.f32 %v5381, 1.442695
          %v5390 = vpow.pop %v5389
          %v5391 = vmul.f32 %v5382, 1.442695
          %v5392 = vpow.pop %v5391
          %v5393 = vmul.f32 %v5383, 1.442695
          %v5394 = vpow.pop %v5393
          %v5395 = vmul.f32 %v5384, 1.442695
          %v5396 = vpow.pop %v5395
          %v5397 = vmul.f32 %v5385, 1.442695
          %v5398 = vpow.pop %v5397
          %v5399 = vmul.f32 %v5386, 1.442695
          %v5400 = vpow.pop %v5399
          %v5401 = vmul.f32 %v5387, 1.442695
          %v5402 = vpow.pop %v5401
          %v5403 = vmul.f32 %v5388, 1.442695
          %v5404 = vpow.pop %v5403
          %v5405 = vsel %vm5356, %v5390, 0.0
          %5406 = vadd.xlane.f32.xlu0 %v5405
          %v5407 = vpop.xlane.xlu0 %5406
          %v5408 = vsel %vm5356, %v5392, 0.0
          %5409 = vadd.xlane.f32.xlu0 %v5408
          %v5410 = vpop.xlane.xlu0 %5409
          %v5411 = vsel %vm5356, %v5394, 0.0
          %5412 = vadd.xlane.f32.xlu0 %v5411
          %v5413 = vpop.xlane.xlu0 %5412
          %v5414 = vsel %vm5356, %v5396, 0.0
          %5415 = vadd.xlane.f32.xlu0 %v5414
          %v5416 = vpop.xlane.xlu0 %5415
          %v5417 = vsel %vm5356, %v5398, 0.0
          %5418 = vadd.xlane.f32.xlu0 %v5417
          %v5419 = vpop.xlane.xlu0 %5418
          %v5420 = vsel %vm5356, %v5400, 0.0
          %5421 = vadd.xlane.f32.xlu0 %v5420
          %v5422 = vpop.xlane.xlu0 %5421
          %v5423 = vsel %vm5356, %v5402, 0.0
          %5424 = vadd.xlane.f32.xlu0 %v5423
          %v5425 = vpop.xlane.xlu0 %5424
          %v5426 = vsel %vm5356, %v5404, 0.0
          %5427 = vadd.xlane.f32.xlu0 %v5426
          %v5428 = vpop.xlane.xlu0 %5427
          %v5429 = vrcp.pop %v5407
          %v5430 = vrcp.pop %v5410
          %v5431 = vrcp.pop %v5413
          %v5432 = vrcp.pop %v5416
          %v5433 = vrcp.pop %v5419
          %v5434 = vrcp.pop %v5422
          %v5435 = vrcp.pop %v5425
          %v5436 = vrcp.pop %v5428
          %v5437 = vmul.f32 %v5390, %v5429
          %v5438 = vmul.f32 %v5392, %v5430
          %v5439 = vmul.f32 %v5394, %v5431
          %v5440 = vmul.f32 %v5396, %v5432
          %v5441 = vmul.f32 %v5398, %v5433
          %v5442 = vmul.f32 %v5400, %v5434
          %v5443 = vmul.f32 %v5402, %v5435
          %v5444 = vmul.f32 %v5404, %v5436
          %v5445 = vpack.c.bf16 %v5437, %v5437
          %v5446 = vpack.c.bf16 %v4935, %v4935
          %v5448 = vsel %vm5356, %v5445, 0
          %vm5450 = vcmask 1043456
          %v5452 = vsel %vm5450, %v5446, 0
          %5454 = vmatprep.subr.bf16.mxu0 0
          %5455 = vmatpush1.bf16.msra.mxu0 %v5452
          %5456 = vmatprep.subr.bf16.mxu0 0
          %5457 = vmatpush1.bf16.msra.mxu0 0
          %5458 = vmatprep.subr.bf16.mxu0 0
          %5459 = vmatpush1.bf16.msra.mxu0 0
          %5460 = vmatprep.subr.bf16.mxu0 0
          %5461 = vmatpush1.bf16.msra.mxu0 0
          %5462 = vmatprep.subr.bf16.mxu0 0
          %5463 = vmatpush1.bf16.msra.mxu0 0
          %5464 = vmatprep.subr.bf16.mxu0 0
          %5465 = vmatpush1.bf16.msra.mxu0 0
          %5466 = vmatprep.subr.bf16.mxu0 0
          %5467 = vmatpush1.bf16.msra.mxu0 0
          %5468 = vmatprep.subr.bf16.mxu0 0
          %5469 = vmatpush1.bf16.msra.mxu0 0
          %5470 = vmatprep.subr.bf16.mxu0 0
          %5471 = vmatpush1.bf16.msra.mxu0 0
          %5472 = vmatprep.subr.bf16.mxu0 0
          %5473 = vmatpush1.bf16.msra.mxu0 0
          %5474 = vmatprep.subr.bf16.mxu0 0
          %5475 = vmatpush1.bf16.msra.mxu0 0
          %5476 = vmatprep.subr.bf16.mxu0 0
          %5477 = vmatpush1.bf16.msra.mxu0 0
          %5478 = vmatprep.subr.bf16.mxu0 0
          %5479 = vmatpush1.bf16.msra.mxu0 0
          %5480 = vmatprep.subr.bf16.mxu0 0
          %5481 = vmatpush1.bf16.msra.mxu0 0
          %5482 = vmatprep.subr.bf16.mxu0 0
          %5483 = vmatpush1.bf16.msra.mxu0 0
          %5484 = vmatprep.subr.bf16.mxu0 0
          %5485 = vmatpush1.bf16.msra.mxu0 0
          %5486 = vmatprep.mubr.bf16.mxu0 0
          %5487 = vmatmul.mubr.bf16.gmra.mrb[0].mxu0 %v5448
          %v5488 = vpop.f32.mrb[0].mxu0
          %v5489 = vadd.f32 0.0, %v5488
          %v5490 = vpop.f32.mrb[0].mxu0
          %v5491 = vpop.f32.mrb[0].mxu0
          %v5492 = vpop.f32.mrb[0].mxu0
          %5493 = vdwg.mxu0
          %v5494 = vpack.c.bf16 %v5438, %v5438
          %5496 = vrot.lane.b32.xlu0 %v5446, 112
          %v5497 = vpop.permute.xlu0 %5496
          %v5499 = vsel %vm5356, %v5494, 0
          %v5502 = vsel %vm5450, %v5497, 0
          %5504 = vmatprep.subr.bf16.mxu0 0
          %5505 = vmatpush1.bf16.msra.mxu0 %v5502
          %5506 = vmatprep.subr.bf16.mxu0 0
          %5507 = vmatpush1.bf16.msra.mxu0 0
          %5508 = vmatprep.subr.bf16.mxu0 0
          %5509 = vmatpush1.bf16.msra.mxu0 0
          %5510 = vmatprep.subr.bf16.mxu0 0
          %5511 = vmatpush1.bf16.msra.mxu0 0
          %5512 = vmatprep.subr.bf16.mxu0 0
          %5513 = vmatpush1.bf16.msra.mxu0 0
          %5514 = vmatprep.subr.bf16.mxu0 0
          %5515 = vmatpush1.bf16.msra.mxu0 0
          %5516 = vmatprep.subr.bf16.mxu0 0
          %5517 = vmatpush1.bf16.msra.mxu0 0
          %5518 = vmatprep.subr.bf16.mxu0 0
          %5519 = vmatpush1.bf16.msra.mxu0 0
          %5520 = vmatprep.subr.bf16.mxu0 0
          %5521 = vmatpush1.bf16.msra.mxu0 0
          %5522 = vmatprep.subr.bf16.mxu0 0
          %5523 = vmatpush1.bf16.msra.mxu0 0
          %5524 = vmatprep.subr.bf16.mxu0 0
          %5525 = vmatpush1.bf16.msra.mxu0 0
          %5526 = vmatprep.subr.bf16.mxu0 0
          %5527 = vmatpush1.bf16.msra.mxu0 0
          %5528 = vmatprep.subr.bf16.mxu0 0
          %5529 = vmatpush1.bf16.msra.mxu0 0
          %5530 = vmatprep.subr.bf16.mxu0 0
          %5531 = vmatpush1.bf16.msra.mxu0 0
          %5532 = vmatprep.subr.bf16.mxu0 0
          %5533 = vmatpush1.bf16.msra.mxu0 0
          %5534 = vmatprep.subr.bf16.mxu0 0
          %5535 = vmatpush1.bf16.msra.mxu0 0
          %5536 = vmatprep.mubr.bf16.mxu0 0
          %5537 = vmatmul.mubr.bf16.gmra.mrb[0].mxu0 %v5499
          %v5538 = vpop.f32.mrb[0].mxu0
          %v5539 = vadd.f32 0.0, %v5538
          %v5540 = vpop.f32.mrb[0].mxu0
          %v5541 = vpop.f32.mrb[0].mxu0
          %v5542 = vpop.f32.mrb[0].mxu0
          %5543 = vdwg.mxu0
          %v5544 = vpack.c.bf16 %v5439, %v5439
          %5545 = vrot.lane.b32.xlu0 %v5446, 96
          %v5546 = vpop.permute.xlu0 %5545
          %v5548 = vsel %vm5356, %v5544, 0
          %v5551 = vsel %vm5450, %v5546, 0
          %5553 = vmatprep.subr.bf16.mxu0 0
          %5554 = vmatpush1.bf16.msra.mxu0 %v5551
          %5555 = vmatprep.subr.bf16.mxu0 0
          %5556 = vmatpush1.bf16.msra.mxu0 0
          %5557 = vmatprep.subr.bf16.mxu0 0
          %5558 = vmatpush1.bf16.msra.mxu0 0
          %5559 = vmatprep.subr.bf16.mxu0 0
          %5560 = vmatpush1.bf16.msra.mxu0 0
          %5561 = vmatprep.subr.bf16.mxu0 0
          %5562 = vmatpush1.bf16.msra.mxu0 0
          %5563 = vmatprep.subr.bf16.mxu0 0
          %5564 = vmatpush1.bf16.msra.mxu0 0
          %5565 = vmatprep.subr.bf16.mxu0 0
          %5566 = vmatpush1.bf16.msra.mxu0 0
          %5567 = vmatprep.subr.bf16.mxu0 0
          %5568 = vmatpush1.bf16.msra.mxu0 0
          %5569 = vmatprep.subr.bf16.mxu0 0
          %5570 = vmatpush1.bf16.msra.mxu0 0
          %5571 = vmatprep.subr.bf16.mxu0 0
          %5572 = vmatpush1.bf16.msra.mxu0 0
          %5573 = vmatprep.subr.bf16.mxu0 0
          %5574 = vmatpush1.bf16.msra.mxu0 0
          %5575 = vmatprep.subr.bf16.mxu0 0
          %5576 = vmatpush1.bf16.msra.mxu0 0
          %5577 = vmatprep.subr.bf16.mxu0 0
          %5578 = vmatpush1.bf16.msra.mxu0 0
          %5579 = vmatprep.subr.bf16.mxu0 0
          %5580 = vmatpush1.bf16.msra.mxu0 0
          %5581 = vmatprep.subr.bf16.mxu0 0
          %5582 = vmatpush1.bf16.msra.mxu0 0
          %5583 = vmatprep.subr.bf16.mxu0 0
          %5584 = vmatpush1.bf16.msra.mxu0 0
          %5585 = vmatprep.mubr.bf16.mxu0 0
          %5586 = vmatmul.mubr.bf16.gmra.mrb[0].mxu0 %v5548
          %v5587 = vpop.f32.mrb[0].mxu0
          %v5588 = vadd.f32 0.0, %v5587
          %v5589 = vpop.f32.mrb[0].mxu0
          %v5590 = vpop.f32.mrb[0].mxu0
          %v5591 = vpop.f32.mrb[0].mxu0
          %5592 = vdwg.mxu0
          %v5593 = vpack.c.bf16 %v5440, %v5440
          %5594 = vrot.lane.b32.xlu0 %v5446, 80
          %v5595 = vpop.permute.xlu0 %5594
          %v5597 = vsel %vm5356, %v5593, 0
          %v5600 = vsel %vm5450, %v5595, 0
          %5602 = vmatprep.subr.bf16.mxu0 0
          %5603 = vmatpush1.bf16.msra.mxu0 %v5600
          %5604 = vmatprep.subr.bf16.mxu0 0
          %5605 = vmatpush1.bf16.msra.mxu0 0
          %5606 = vmatprep.subr.bf16.mxu0 0
          %5607 = vmatpush1.bf16.msra.mxu0 0
          %5608 = vmatprep.subr.bf16.mxu0 0
          %5609 = vmatpush1.bf16.msra.mxu0 0
          %5610 = vmatprep.subr.bf16.mxu0 0
          %5611 = vmatpush1.bf16.msra.mxu0 0
          %5612 = vmatprep.subr.bf16.mxu0 0
          %5613 = vmatpush1.bf16.msra.mxu0 0
          %5614 = vmatprep.subr.bf16.mxu0 0
          %5615 = vmatpush1.bf16.msra.mxu0 0
          %5616 = vmatprep.subr.bf16.mxu0 0
          %5617 = vmatpush1.bf16.msra.mxu0 0
          %5618 = vmatprep.subr.bf16.mxu0 0
          %5619 = vmatpush1.bf16.msra.mxu0 0
          %5620 = vmatprep.subr.bf16.mxu0 0
          %5621 = vmatpush1.bf16.msra.mxu0 0
          %5622 = vmatprep.subr.bf16.mxu0 0
          %5623 = vmatpush1.bf16.msra.mxu0 0
          %5624 = vmatprep.subr.bf16.mxu0 0
          %5625 = vmatpush1.bf16.msra.mxu0 0
          %5626 = vmatprep.subr.bf16.mxu0 0
          %5627 = vmatpush1.bf16.msra.mxu0 0
          %5628 = vmatprep.subr.bf16.mxu0 0
          %5629 = vmatpush1.bf16.msra.mxu0 0
          %5630 = vmatprep.subr.bf16.mxu0 0
          %5631 = vmatpush1.bf16.msra.mxu0 0
          %5632 = vmatprep.subr.bf16.mxu0 0
          %5633 = vmatpush1.bf16.msra.mxu0 0
          %5634 = vmatprep.mubr.bf16.mxu0 0
          %5635 = vmatmul.mubr.bf16.gmra.mrb[0].mxu0 %v5597
          %v5636 = vpop.f32.mrb[0].mxu0
          %v5637 = vadd.f32 0.0, %v5636
          %v5638 = vpop.f32.mrb[0].mxu0
          %v5639 = vpop.f32.mrb[0].mxu0
          %v5640 = vpop.f32.mrb[0].mxu0
          %5641 = vdwg.mxu0
          %5643 = vrot.lane.b32.xlu0 %v5539, 16
          %v5644 = vpop.permute.xlu0 %5643
          %5647 = vrot.lane.b32.xlu0 %v5588, 32
          %v5648 = vpop.permute.xlu0 %5647
          %5651 = vrot.lane.b32.xlu0 %v5637, 48
          %v5652 = vpop.permute.xlu0 %5651
          %v5654 = vsel %vm4948, %v5489, %v5644
          %vm5655 = vcmask 261120
          %v5656 = vsel %vm5655, %v5654, %v5648
          %vm5657 = vcmask 392192
          %v5658 = vsel %vm5657, %v5656, %v5652
          %v5659 = vpack.c.bf16 %v5441, %v5441
          %v5660 = vpack.c.bf16 %v4939, %v4939
          %v5662 = vsel %vm5356, %v5659, 0
          %v5665 = vsel %vm5450, %v5660, 0
          %5667 = vmatprep.subr.bf16.mxu0 0
          %5668 = vmatpush1.bf16.msra.mxu0 %v5665
          %5669 = vmatprep.subr.bf16.mxu0 0
          %5670 = vmatpush1.bf16.msra.mxu0 0
          %5671 = vmatprep.subr.bf16.mxu0 0
          %5672 = vmatpush1.bf16.msra.mxu0 0
          %5673 = vmatprep.subr.bf16.mxu0 0
          %5674 = vmatpush1.bf16.msra.mxu0 0
          %5675 = vmatprep.subr.bf16.mxu0 0
          %5676 = vmatpush1.bf16.msra.mxu0 0
          %5677 = vmatprep.subr.bf16.mxu0 0
          %5678 = vmatpush1.bf16.msra.mxu0 0
          %5679 = vmatprep.subr.bf16.mxu0 0
          %5680 = vmatpush1.bf16.msra.mxu0 0
          %5681 = vmatprep.subr.bf16.mxu0 0
          %5682 = vmatpush1.bf16.msra.mxu0 0
          %5683 = vmatprep.subr.bf16.mxu0 0
          %5684 = vmatpush1.bf16.msra.mxu0 0
          %5685 = vmatprep.subr.bf16.mxu0 0
          %5686 = vmatpush1.bf16.msra.mxu0 0
          %5687 = vmatprep.subr.bf16.mxu0 0
          %5688 = vmatpush1.bf16.msra.mxu0 0
          %5689 = vmatprep.subr.bf16.mxu0 0
          %5690 = vmatpush1.bf16.msra.mxu0 0
          %5691 = vmatprep.subr.bf16.mxu0 0
          %5692 = vmatpush1.bf16.msra.mxu0 0
          %5693 = vmatprep.subr.bf16.mxu0 0
          %5694 = vmatpush1.bf16.msra.mxu0 0
          %5695 = vmatprep.subr.bf16.mxu0 0
          %5696 = vmatpush1.bf16.msra.mxu0 0
          %5697 = vmatprep.subr.bf16.mxu0 0
          %5698 = vmatpush1.bf16.msra.mxu0 0
          %5699 = vmatprep.mubr.bf16.mxu0 0
          %5700 = vmatmul.mubr.bf16.gmra.mrb[0].mxu0 %v5662
          %v5701 = vpop.f32.mrb[0].mxu0
          %v5702 = vadd.f32 0.0, %v5701
          %v5703 = vpop.f32.mrb[0].mxu0
          %v5704 = vpop.f32.mrb[0].mxu0
          %v5705 = vpop.f32.mrb[0].mxu0
          %5706 = vdwg.mxu0
          %v5707 = vpack.c.bf16 %v5442, %v5442
          %5709 = vrot.lane.b32.xlu0 %v5660, 112
          %v5710 = vpop.permute.xlu0 %5709
          %v5712 = vsel %vm5356, %v5707, 0
          %v5715 = vsel %vm5450, %v5710, 0
          %5717 = vmatprep.subr.bf16.mxu0 0
          %5718 = vmatpush1.bf16.msra.mxu0 %v5715
          %5719 = vmatprep.subr.bf16.mxu0 0
          %5720 = vmatpush1.bf16.msra.mxu0 0
          %5721 = vmatprep.subr.bf16.mxu0 0
          %5722 = vmatpush1.bf16.msra.mxu0 0
          %5723 = vmatprep.subr.bf16.mxu0 0
          %5724 = vmatpush1.bf16.msra.mxu0 0
          %5725 = vmatprep.subr.bf16.mxu0 0
          %5726 = vmatpush1.bf16.msra.mxu0 0
          %5727 = vmatprep.subr.bf16.mxu0 0
          %5728 = vmatpush1.bf16.msra.mxu0 0
          %5729 = vmatprep.subr.bf16.mxu0 0
          %5730 = vmatpush1.bf16.msra.mxu0 0
          %5731 = vmatprep.subr.bf16.mxu0 0
          %5732 = vmatpush1.bf16.msra.mxu0 0
          %5733 = vmatprep.subr.bf16.mxu0 0
          %5734 = vmatpush1.bf16.msra.mxu0 0
          %5735 = vmatprep.subr.bf16.mxu0 0
          %5736 = vmatpush1.bf16.msra.mxu0 0
          %5737 = vmatprep.subr.bf16.mxu0 0
          %5738 = vmatpush1.bf16.msra.mxu0 0
          %5739 = vmatprep.subr.bf16.mxu0 0
          %5740 = vmatpush1.bf16.msra.mxu0 0
          %5741 = vmatprep.subr.bf16.mxu0 0
          %5742 = vmatpush1.bf16.msra.mxu0 0
          %5743 = vmatprep.subr.bf16.mxu0 0
          %5744 = vmatpush1.bf16.msra.mxu0 0
          %5745 = vmatprep.subr.bf16.mxu0 0
          %5746 = vmatpush1.bf16.msra.mxu0 0
          %5747 = vmatprep.subr.bf16.mxu0 0
          %5748 = vmatpush1.bf16.msra.mxu0 0
          %5749 = vmatprep.mubr.bf16.mxu0 0
          %5750 = vmatmul.mubr.bf16.gmra.mrb[0].mxu0 %v5712
          %v5751 = vpop.f32.mrb[0].mxu0
          %v5752 = vadd.f32 0.0, %v5751
          %v5753 = vpop.f32.mrb[0].mxu0
          %v5754 = vpop.f32.mrb[0].mxu0
          %v5755 = vpop.f32.mrb[0].mxu0
          %5756 = vdwg.mxu0
          %v5757 = vpack.c.bf16 %v5443, %v5443
          %5758 = vrot.lane.b32.xlu0 %v5660, 96
          %v5759 = vpop.permute.xlu0 %5758
          %v5761 = vsel %vm5356, %v5757, 0
          %v5764 = vsel %vm5450, %v5759, 0
          %5766 = vmatprep.subr.bf16.mxu0 0
          %5767 = vmatpush1.bf16.msra.mxu0 %v5764
          %5768 = vmatprep.subr.bf16.mxu0 0
          %5769 = vmatpush1.bf16.msra.mxu0 0
          %5770 = vmatprep.subr.bf16.mxu0 0
          %5771 = vmatpush1.bf16.msra.mxu0 0
          %5772 = vmatprep.subr.bf16.mxu0 0
          %5773 = vmatpush1.bf16.msra.mxu0 0
          %5774 = vmatprep.subr.bf16.mxu0 0
          %5775 = vmatpush1.bf16.msra.mxu0 0
          %5776 = vmatprep.subr.bf16.mxu0 0
          %5777 = vmatpush1.bf16.msra.mxu0 0
          %5778 = vmatprep.subr.bf16.mxu0 0
          %5779 = vmatpush1.bf16.msra.mxu0 0
          %5780 = vmatprep.subr.bf16.mxu0 0
          %5781 = vmatpush1.bf16.msra.mxu0 0
          %5782 = vmatprep.subr.bf16.mxu0 0
          %5783 = vmatpush1.bf16.msra.mxu0 0
          %5784 = vmatprep.subr.bf16.mxu0 0
          %5785 = vmatpush1.bf16.msra.mxu0 0
          %5786 = vmatprep.subr.bf16.mxu0 0
          %5787 = vmatpush1.bf16.msra.mxu0 0
          %5788 = vmatprep.subr.bf16.mxu0 0
          %5789 = vmatpush1.bf16.msra.mxu0 0
          %5790 = vmatprep.subr.bf16.mxu0 0
          %5791 = vmatpush1.bf16.msra.mxu0 0
          %5792 = vmatprep.subr.bf16.mxu0 0
          %5793 = vmatpush1.bf16.msra.mxu0 0
          %5794 = vmatprep.subr.bf16.mxu0 0
          %5795 = vmatpush1.bf16.msra.mxu0 0
          %5796 = vmatprep.subr.bf16.mxu0 0
          %5797 = vmatpush1.bf16.msra.mxu0 0
          %5798 = vmatprep.mubr.bf16.mxu0 0
          %5799 = vmatmul.mubr.bf16.gmra.mrb[0].mxu0 %v5761
          %v5800 = vpop.f32.mrb[0].mxu0
          %v5801 = vadd.f32 0.0, %v5800
          %v5802 = vpop.f32.mrb[0].mxu0
          %v5803 = vpop.f32.mrb[0].mxu0
          %v5804 = vpop.f32.mrb[0].mxu0
          %5805 = vdwg.mxu0
          %v5806 = vpack.c.bf16 %v5444, %v5444
          %5807 = vrot.lane.b32.xlu0 %v5660, 80
          %v5808 = vpop.permute.xlu0 %5807
          %v5810 = vsel %vm5356, %v5806, 0
          %v5813 = vsel %vm5450, %v5808, 0
          %5815 = vmatprep.subr.bf16.mxu0 0
          %5816 = vmatpush1.bf16.msra.mxu0 %v5813
          %5817 = vmatprep.subr.bf16.mxu0 0
          %5818 = vmatpush1.bf16.msra.mxu0 0
          %5819 = vmatprep.subr.bf16.mxu0 0
          %5820 = vmatpush1.bf16.msra.mxu0 0
          %5821 = vmatprep.subr.bf16.mxu0 0
          %5822 = vmatpush1.bf16.msra.mxu0 0
          %5823 = vmatprep.subr.bf16.mxu0 0
          %5824 = vmatpush1.bf16.msra.mxu0 0
          %5825 = vmatprep.subr.bf16.mxu0 0
          %5826 = vmatpush1.bf16.msra.mxu0 0
          %5827 = vmatprep.subr.bf16.mxu0 0
          %5828 = vmatpush1.bf16.msra.mxu0 0
          %5829 = vmatprep.subr.bf16.mxu0 0
          %5830 = vmatpush1.bf16.msra.mxu0 0
          %5831 = vmatprep.subr.bf16.mxu0 0
          %5832 = vmatpush1.bf16.msra.mxu0 0
          %5833 = vmatprep.subr.bf16.mxu0 0
          %5834 = vmatpush1.bf16.msra.mxu0 0
          %5835 = vmatprep.subr.bf16.mxu0 0
          %5836 = vmatpush1.bf16.msra.mxu0 0
          %5837 = vmatprep.subr.bf16.mxu0 0
          %5838 = vmatpush1.bf16.msra.mxu0 0
          %5839 = vmatprep.subr.bf16.mxu0 0
          %5840 = vmatpush1.bf16.msra.mxu0 0
          %5841 = vmatprep.subr.bf16.mxu0 0
          %5842 = vmatpush1.bf16.msra.mxu0 0
          %5843 = vmatprep.subr.bf16.mxu0 0
          %5844 = vmatpush1.bf16.msra.mxu0 0
          %5845 = vmatprep.subr.bf16.mxu0 0
          %5846 = vmatpush1.bf16.msra.mxu0 0
          %5847 = vmatprep.mubr.bf16.mxu0 0
          %5848 = vmatmul.mubr.bf16.gmra.mrb[0].mxu0 %v5810
          %v5849 = vpop.f32.mrb[0].mxu0
          %v5850 = vadd.f32 0.0, %v5849
          %v5851 = vpop.f32.mrb[0].mxu0
          %v5852 = vpop.f32.mrb[0].mxu0
          %v5853 = vpop.f32.mrb[0].mxu0
          %5854 = vdwg.mxu0
          %5856 = vrot.lane.b32.xlu0 %v5752, 16
          %v5857 = vpop.permute.xlu0 %5856
          %5860 = vrot.lane.b32.xlu0 %v5801, 32
          %v5861 = vpop.permute.xlu0 %5860
          %5864 = vrot.lane.b32.xlu0 %v5850, 48
          %v5865 = vpop.permute.xlu0 %5864
          %v5867 = vsel %vm4948, %v5702, %v5857
          %v5868 = vsel %vm5655, %v5867, %v5861
          %v5869 = vsel %vm5657, %v5868, %v5865
          %v5870 = vpack.c.bf16 %v5869, %v5658
          %v5871 = vld [vmem:[%s57] sm:$0xf]
          %v5872 = vld [vmem:[%s57 + $0x4] sm:$0xf]
          %v5873 = vld [vmem:[%s57 + $0x8] sm:$0xf]
          %v5874 = vld [vmem:[%s57 + $0xc] sm:$0xf]
          %v5875 = vld [vmem:[%s57 + $0x10] sm:$0xf]
          %v5876 = vld [vmem:[%s57 + $0x14] sm:$0xf]
          %v5877 = vld [vmem:[%s57 + $0x18] sm:$0xf]
          %v5878 = vld [vmem:[%s57 + $0x1c] sm:$0xf]
          %v5879 = vld [vmem:[#allocation32] sm:$0x1]
          %v5881 = vlaneseq
          %v5882 = vshrl.u32 %v5881, 7
          %v5883 = vsub.s32 0, %v5882
          %v5884 = vrot.slane %v5879, %v5883
          %v5894 = vunpack.c.l.b16 %v5871
          %v5895 = vunpack.c.l.b16 %v5872
          %v5896 = vunpack.c.l.b16 %v5873
          %v5897 = vunpack.c.l.b16 %v5874
          %v5898 = vunpack.c.l.b16 %v5875
          %v5899 = vunpack.c.l.b16 %v5876
          %v5900 = vunpack.c.l.b16 %v5877
          %v5901 = vunpack.c.l.b16 %v5878
          %v5902 = vpack.c.b16 %v5895, %v5894
          %v5903 = vpack.c.b16 %v5897, %v5896
          %v5904 = vpack.c.b16 %v5899, %v5898
          %v5905 = vpack.c.b16 %v5901, %v5900
          %v5911 = vsel %vm4703, %v5870, 0
          %5913 = vmatprep.subr.bf16.mxu0 0
          %5914 = vmatpush1.bf16.msra.mxu0 %v5902
          %5915 = vmatprep.subr.bf16.mxu0 0
          %5916 = vmatpush1.bf16.msra.mxu0 %v5903
          %5917 = vmatprep.subr.bf16.mxu0 0
          %5918 = vmatpush1.bf16.msra.mxu0 %v5904
          %5919 = vmatprep.subr.bf16.mxu0 0
          %5920 = vmatpush1.bf16.msra.mxu0 %v5905
          %5921 = vmatprep.subr.bf16.mxu0 0
          %5922 = vmatpush1.bf16.msra.mxu0 0
          %5923 = vmatprep.subr.bf16.mxu0 0
          %5924 = vmatpush1.bf16.msra.mxu0 0
          %5925 = vmatprep.subr.bf16.mxu0 0
          %5926 = vmatpush1.bf16.msra.mxu0 0
          %5927 = vmatprep.subr.bf16.mxu0 0
          %5928 = vmatpush1.bf16.msra.mxu0 0
          %5929 = vmatprep.subr.bf16.mxu0 0
          %5930 = vmatpush1.bf16.msra.mxu0 0
          %5931 = vmatprep.subr.bf16.mxu0 0
          %5932 = vmatpush1.bf16.msra.mxu0 0
          %5933 = vmatprep.subr.bf16.mxu0 0
          %5934 = vmatpush1.bf16.msra.mxu0 0
          %5935 = vmatprep.subr.bf16.mxu0 0
          %5936 = vmatpush1.bf16.msra.mxu0 0
          %5937 = vmatprep.subr.bf16.mxu0 0
          %5938 = vmatpush1.bf16.msra.mxu0 0
          %5939 = vmatprep.subr.bf16.mxu0 0
          %5940 = vmatpush1.bf16.msra.mxu0 0
          %5941 = vmatprep.subr.bf16.mxu0 0
          %5942 = vmatpush1.bf16.msra.mxu0 0
          %5943 = vmatprep.subr.bf16.mxu0 0
          %5944 = vmatpush1.bf16.msra.mxu0 0
          %5945 = vmatprep.mubr.bf16.mxu0 0
          %5946 = vmatmul.mubr.bf16.gmra.mrb[0].mxu0 %v5911
          %v5947 = vpop.f32.mrb[0].mxu0
          %v5948 = vadd.f32 %v5884, %v5947
          %v5949 = vpop.f32.mrb[0].mxu0
          %v5950 = vpop.f32.mrb[0].mxu0
          %v5951 = vadd.f32 %v5884, %v5950
          %v5952 = vpop.f32.mrb[0].mxu0
          %5953 = vdwg.mxu0
          %v5954 = vadd.f32 %v4777, %v5948
          %v5955 = vadd.f32 %v4782, %v5951
          %v5956 = vld [vmem:[#allocation34] sm:$0x1]
          %v5957 = vld [vmem:[#allocation35] sm:$0x1]
          %v5958 = vsel %vm4703, %v5954, 0.0
          %5959 = vadd.xlane.f32.xlu0 %v5958
          %v5960 = vpop.xlane.xlu0 %5959
          %v5961 = vsel %vm4703, %v5955, 0.0
          %5962 = vadd.xlane.f32.xlu0 %v5961
          %v5963 = vpop.xlane.xlu0 %5962
          %v5964 = vmul.f32 %v5960, %v4797
          %v5965 = vmul.f32 %v5963, %v4797
          %v5966 = vsub.f32 %v5954, %v5964
          %v5967 = vsub.f32 %v5955, %v5965
          %v5968 = vmul.f32 %v5966, %v5966
          %v5969 = vmul.f32 %v5967, %v5967
          %v5970 = vsel %vm4703, %v5968, 0.0
          %5971 = vadd.xlane.f32.xlu0 %v5970
          %v5972 = vpop.xlane.xlu0 %5971
          %v5973 = vsel %vm4703, %v5969, 0.0
          %5974 = vadd.xlane.f32.xlu0 %v5973
          %v5975 = vpop.xlane.xlu0 %5974
          %v5976 = vmul.f32 %v5972, %v4797
          %v5977 = vmul.f32 %v5975, %v4797
          %v5978 = vadd.f32 %v5976, 1e-05
          %v5979 = vadd.f32 %v5977, 1e-05
          %v5980 = vrsqrt.pop %v5978
          %v5981 = vrsqrt.pop %v5979
          %v5982 = vmul.f32 %v5966, %v5980
          %v5983 = vmul.f32 %v5967, %v5981
          %v5985 = vlaneseq
          %v5986 = vshrl.u32 %v5985, 7
          %v5987 = vsub.s32 0, %v5986
          %v5988 = vrot.slane %v5956, %v5987
          %v5990 = vmul.f32 %v5982, %v5988
          %v5991 = vmul.f32 %v5983, %v5988
          %v5993 = vlaneseq
          %v5994 = vshrl.u32 %v5993, 7
          %v5995 = vsub.s32 0, %v5994
          %v5996 = vrot.slane %v5957, %v5995
          %v5998 = vadd.f32 %v5990, %v5996
          %v5999 = vadd.f32 %v5991, %v5996
          %v6000 = vpack.c.bf16 %v5999, %v5998
          %v6001 = vld [vmem:[#allocation37] sm:$0xf]
          %v6002 = vld [vmem:[#allocation37 + $0x4] sm:$0xf]
          %v6003 = vld [vmem:[#allocation37 + $0x8] sm:$0xf]
          %v6004 = vld [vmem:[#allocation37 + $0xc] sm:$0xf]
          %v6005 = vld [vmem:[#allocation37 + $0x10] sm:$0xf]
          %v6006 = vld [vmem:[#allocation37 + $0x14] sm:$0xf]
          %v6007 = vld [vmem:[#allocation37 + $0x18] sm:$0xf]
          %v6008 = vld [vmem:[#allocation37 + $0x1c] sm:$0xf]
          %v6009 = vld [vmem:[%s67] sm:$0x1]
          %v6011 = vlaneseq
          %v6012 = vshrl.u32 %v6011, 7
          %v6013 = vsub.s32 0, %v6012
          %v6014 = vrot.slane %v6009, %v6013
          %v6024 = vunpack.c.l.b16 %v6001
          %v6025 = vunpack.c.l.b16 %v6002
          %v6026 = vunpack.c.l.b16 %v6003
          %v6027 = vunpack.c.l.b16 %v6004
          %v6028 = vunpack.c.l.b16 %v6005
          %v6029 = vunpack.c.l.b16 %v6006
          %v6030 = vunpack.c.l.b16 %v6007
          %v6031 = vunpack.c.l.b16 %v6008
          %v6032 = vpack.c.b16 %v6025, %v6024
          %v6033 = vpack.c.b16 %v6027, %v6026
          %v6034 = vpack.c.b16 %v6029, %v6028
          %v6035 = vpack.c.b16 %v6031, %v6030
          %v6041 = vsel %vm4703, %v6000, 0
          %6043 = vmatprep.subr.bf16.mxu0 0
          %6044 = vmatpush1.bf16.msra.mxu0 %v6032
          %6045 = vmatprep.subr.bf16.mxu0 0
          %6046 = vmatpush1.bf16.msra.mxu0 %v6033
          %6047 = vmatprep.subr.bf16.mxu0 0
          %6048 = vmatpush1.bf16.msra.mxu0 %v6034
          %6049 = vmatprep.subr.bf16.mxu0 0
          %6050 = vmatpush1.bf16.msra.mxu0 %v6035
          %6051 = vmatprep.subr.bf16.mxu0 0
          %6052 = vmatpush1.bf16.msra.mxu0 0
          %6053 = vmatprep.subr.bf16.mxu0 0
          %6054 = vmatpush1.bf16.msra.mxu0 0
          %6055 = vmatprep.subr.bf16.mxu0 0
          %6056 = vmatpush1.bf16.msra.mxu0 0
          %6057 = vmatprep.subr.bf16.mxu0 0
          %6058 = vmatpush1.bf16.msra.mxu0 0
          %6059 = vmatprep.subr.bf16.mxu0 0
          %6060 = vmatpush1.bf16.msra.mxu0 0
          %6061 = vmatprep.subr.bf16.mxu0 0
          %6062 = vmatpush1.bf16.msra.mxu0 0
          %6063 = vmatprep.subr.bf16.mxu0 0
          %6064 = vmatpush1.bf16.msra.mxu0 0
          %6065 = vmatprep.subr.bf16.mxu0 0
          %6066 = vmatpush1.bf16.msra.mxu0 0
          %6067 = vmatprep.subr.bf16.mxu0 0
          %6068 = vmatpush1.bf16.msra.mxu0 0
          %6069 = vmatprep.subr.bf16.mxu0 0
          %6070 = vmatpush1.bf16.msra.mxu0 0
          %6071 = vmatprep.subr.bf16.mxu0 0
          %6072 = vmatpush1.bf16.msra.mxu0 0
          %6073 = vmatprep.subr.bf16.mxu0 0
          %6074 = vmatpush1.bf16.msra.mxu0 0
          %6075 = vmatprep.mubr.bf16.mxu0 0
          %6076 = vmatmul.mubr.bf16.gmra.mrb[0].mxu0 %v6041
          %v6077 = vpop.f32.mrb[0].mxu0
          %v6078 = vadd.f32 %v6014, %v6077
          %v6079 = vpop.f32.mrb[0].mxu0
          %v6080 = vpop.f32.mrb[0].mxu0
          %v6081 = vadd.f32 %v6014, %v6080
          %v6082 = vpop.f32.mrb[0].mxu0
          %6083 = vdwg.mxu0
          %v6084 = vmul.f32 %v6078, 1.702
          %v6085 = vmul.f32 %v6081, 1.702
          %v6086 = vxor.u32 %v6084, 2147483648
          %v6087 = vxor.u32 %v6085, 2147483648
          %v6088 = vmul.f32 %v6086, 1.442695
          %v6089 = vpow.pop %v6088
          %v6090 = vmul.f32 %v6087, 1.442695
          %v6091 = vpow.pop %v6090
          %v6092 = vadd.f32 %v6089, 1.0
          %v6093 = vadd.f32 %v6091, 1.0
          %v6094 = vrcp.pop %v6092
          %v6095 = vmul.f32 1.0, %v6094
          %v6096 = vrcp.pop %v6093
          %v6097 = vmul.f32 1.0, %v6096
          %v6098 = vmul.f32 %v6078, %v6095
          %v6099 = vmul.f32 %v6081, %v6097
          %v6100 = vpack.c.bf16 %v6099, %v6098
          %v6101 = vld [vmem:[%s69] sm:$0xf]
          %v6102 = vld [vmem:[%s69 + $0x4] sm:$0xf]
          %v6103 = vld [vmem:[%s69 + $0x8] sm:$0xf]
          %v6104 = vld [vmem:[%s69 + $0xc] sm:$0xf]
          %v6105 = vld [vmem:[%s69 + $0x10] sm:$0xf]
          %v6106 = vld [vmem:[%s69 + $0x14] sm:$0xf]
          %v6107 = vld [vmem:[%s69 + $0x18] sm:$0xf]
          %v6108 = vld [vmem:[%s69 + $0x1c] sm:$0xf]
          %v6109 = vld [vmem:[%s69 + $0x20] sm:$0xf]
          %v6110 = vld [vmem:[%s69 + $0x24] sm:$0xf]
          %v6111 = vld [vmem:[%s69 + $0x28] sm:$0xf]
          %v6112 = vld [vmem:[%s69 + $0x2c] sm:$0xf]
          %v6113 = vld [vmem:[%s69 + $0x30] sm:$0xf]
          %v6114 = vld [vmem:[%s69 + $0x34] sm:$0xf]
          %v6115 = vld [vmem:[%s69 + $0x38] sm:$0xf]
          %v6116 = vld [vmem:[%s69 + $0x3c] sm:$0xf]
          %v6117 = vld [vmem:[%s71] sm:$0x1]
          %v6119 = vlaneseq
          %v6120 = vshrl.u32 %v6119, 7
          %v6121 = vsub.s32 0, %v6120
          %v6122 = vrot.slane %v6117, %v6121
          %v6140 = vunpack.c.l.b16 %v6101
          %v6141 = vunpack.c.l.b16 %v6102
          %v6142 = vunpack.c.l.b16 %v6103
          %v6143 = vunpack.c.l.b16 %v6104
          %v6144 = vunpack.c.l.b16 %v6105
          %v6145 = vunpack.c.l.b16 %v6106
          %v6146 = vunpack.c.l.b16 %v6107
          %v6147 = vunpack.c.l.b16 %v6108
          %v6148 = vunpack.c.l.b16 %v6109
          %v6149 = vunpack.c.l.b16 %v6110
          %v6150 = vunpack.c.l.b16 %v6111
          %v6151 = vunpack.c.l.b16 %v6112
          %v6152 = vunpack.c.l.b16 %v6113
          %v6153 = vunpack.c.l.b16 %v6114
          %v6154 = vunpack.c.l.b16 %v6115
          %v6155 = vunpack.c.l.b16 %v6116
          %v6156 = vpack.c.b16 %v6141, %v6140
          %v6157 = vpack.c.b16 %v6143, %v6142
          %v6158 = vpack.c.b16 %v6145, %v6144
          %v6159 = vpack.c.b16 %v6147, %v6146
          %v6160 = vpack.c.b16 %v6149, %v6148
          %v6161 = vpack.c.b16 %v6151, %v6150
          %v6162 = vpack.c.b16 %v6153, %v6152
          %v6163 = vpack.c.b16 %v6155, %v6154
          %6172 = vmatprep.subr.bf16.mxu0 0
          %6173 = vmatpush1.bf16.msra.mxu0 %v6156
          %6174 = vmatprep.subr.bf16.mxu0 0
          %6175 = vmatpush1.bf16.msra.mxu0 %v6157
          %6176 = vmatprep.subr.bf16.mxu0 0
          %6177 = vmatpush1.bf16.msra.mxu0 %v6158
          %6178 = vmatprep.subr.bf16.mxu0 0
          %6179 = vmatpush1.bf16.msra.mxu0 %v6159
          %6180 = vmatprep.subr.bf16.mxu0 0
          %6181 = vmatpush1.bf16.msra.mxu0 %v6160
          %6182 = vmatprep.subr.bf16.mxu0 0
          %6183 = vmatpush1.bf16.msra.mxu0 %v6161
          %6184 = vmatprep.subr.bf16.mxu0 0
          %6185 = vmatpush1.bf16.msra.mxu0 %v6162
          %6186 = vmatprep.subr.bf16.mxu0 0
          %6187 = vmatpush1.bf16.msra.mxu0 %v6163
          %6188 = vmatprep.subr.bf16.mxu0 0
          %6189 = vmatpush1.bf16.msra.mxu0 0
          %6190 = vmatprep.subr.bf16.mxu0 0
          %6191 = vmatpush1.bf16.msra.mxu0 0
          %6192 = vmatprep.subr.bf16.mxu0 0
          %6193 = vmatpush1.bf16.msra.mxu0 0
          %6194 = vmatprep.subr.bf16.mxu0 0
          %6195 = vmatpush1.bf16.msra.mxu0 0
          %6196 = vmatprep.subr.bf16.mxu0 0
          %6197 = vmatpush1.bf16.msra.mxu0 0
          %6198 = vmatprep.subr.bf16.mxu0 0
          %6199 = vmatpush1.bf16.msra.mxu0 0
          %6200 = vmatprep.subr.bf16.mxu0 0
          %6201 = vmatpush1.bf16.msra.mxu0 0
          %6202 = vmatprep.subr.bf16.mxu0 0
          %6203 = vmatpush1.bf16.msra.mxu0 0
          %6204 = vmatprep.mubr.bf16.mxu0 0
          %6205 = vmatmul.mubr.bf16.gmra.mrb[0].mxu0 %v6100
          %v6206 = vpop.f32.mrb[0].mxu0
          %v6207 = vadd.f32 %v6122, %v6206
          %v6208 = vpop.f32.mrb[0].mxu0
          %v6209 = vpop.f32.mrb[0].mxu0
          %v6210 = vadd.f32 %v6122, %v6209
          %v6211 = vpop.f32.mrb[0].mxu0
          %6212 = vdwg.mxu0
          %v6213 = vadd.f32 %v5954, %v6207
          %v6214 = vadd.f32 %v5955, %v6210
          %s6215 = scalar_lea.vmem [#allocation28], 1
          %v6216 = vld [vmem:[%s6215] sm:$0x1]
          %s6217 = scalar_lea.vmem [#allocation29], 1
          %v6218 = vld [vmem:[%s6217] sm:$0x1]
          %v6219 = vsel %vm4703, %v6213, 0.0
          %6220 = vadd.xlane.f32.xlu0 %v6219
          %v6221 = vpop.xlane.xlu0 %6220
          %v6222 = vsel %vm4703, %v6214, 0.0
          %6223 = vadd.xlane.f32.xlu0 %v6222
          %v6224 = vpop.xlane.xlu0 %6223
          %v6225 = vmul.f32 %v6221, %v4797
          %v6226 = vmul.f32 %v6224, %v4797
          %v6227 = vsub.f32 %v6213, %v6225
          %v6228 = vsub.f32 %v6214, %v6226
          %v6229 = vmul.f32 %v6227, %v6227
          %v6230 = vmul.f32 %v6228, %v6228
          %v6231 = vsel %vm4703, %v6229, 0.0
          %6232 = vadd.xlane.f32.xlu0 %v6231
          %v6233 = vpop.xlane.xlu0 %6232
          %v6234 = vsel %vm4703, %v6230, 0.0
          %6235 = vadd.xlane.f32.xlu0 %v6234
          %v6236 = vpop.xlane.xlu0 %6235
          %v6237 = vmul.f32 %v6233, %v4797
          %v6238 = vmul.f32 %v6236, %v4797
          %v6239 = vadd.f32 %v6237, 1e-05
          %v6240 = vadd.f32 %v6238, 1e-05
          %v6241 = vrsqrt.pop %v6239
          %v6242 = vrsqrt.pop %v6240
          %v6243 = vmul.f32 %v6227, %v6241
          %v6244 = vmul.f32 %v6228, %v6242
          %v6246 = vlaneseq
          %v6247 = vshrl.u32 %v6246, 7
          %v6248 = vsub.s32 0, %v6247
          %v6249 = vrot.slane %v6216, %v6248
          %v6251 = vmul.f32 %v6243, %v6249
          %v6252 = vmul.f32 %v6244, %v6249
          %v6254 = vlaneseq
          %v6255 = vshrl.u32 %v6254, 7
          %v6256 = vsub.s32 0, %v6255
          %v6257 = vrot.slane %v6218, %v6256
          %v6259 = vadd.f32 %v6251, %v6257
          %v6260 = vadd.f32 %v6252, %v6257
          %v6261 = vpack.c.bf16 %v6260, %v6259
          %s6262 = scalar_lea.vmem %s53, 64
          %v6263 = vld [vmem:[%s6262] sm:$0xff]
          %v6264 = vld [vmem:[%s6262 + $0x8] sm:$0xff]
          %v6265 = vld [vmem:[%s6262 + $0x10] sm:$0xff]
          %v6266 = vld [vmem:[%s6262 + $0x18] sm:$0xff]
          %v6267 = vld [vmem:[%s6262 + $0x20] sm:$0xff]
          %v6268 = vld [vmem:[%s6262 + $0x28] sm:$0xff]
          %v6269 = vld [vmem:[%s6262 + $0x30] sm:$0xff]
          %v6270 = vld [vmem:[%s6262 + $0x38] sm:$0xff]
          %s6271 = scalar_lea.vmem [#allocation31], 2
          %v6272 = vld [vmem:[%s6271] sm:$0x3]
          %v6274 = vlaneseq
          %v6275 = vshrl.u32 %v6274, 7
          %v6276 = vsub.s32 0, %v6275
          %v6277 = vrot.slane %v6272, %v6276
          %v6278 = vlaneseq
          %v6279 = vshrl.u32 %v6278, 7
          %v6280 = vsub.s32 1, %v6279
          %v6281 = vrot.slane %v6272, %v6280
          %v6292 = vunpack.c.l.b16 %v6263
          %v6293 = vunpack.c.h.b16 %v6263
          %v6294 = vunpack.c.l.b16 %v6264
          %v6295 = vunpack.c.h.b16 %v6264
          %v6296 = vunpack.c.l.b16 %v6265
          %v6297 = vunpack.c.h.b16 %v6265
          %v6298 = vunpack.c.l.b16 %v6266
          %v6299 = vunpack.c.h.b16 %v6266
          %v6300 = vunpack.c.l.b16 %v6267
          %v6301 = vunpack.c.h.b16 %v6267
          %v6302 = vunpack.c.l.b16 %v6268
          %v6303 = vunpack.c.h.b16 %v6268
          %v6304 = vunpack.c.l.b16 %v6269
          %v6305 = vunpack.c.h.b16 %v6269
          %v6306 = vunpack.c.l.b16 %v6270
          %v6307 = vunpack.c.h.b16 %v6270
          %v6308 = vpack.c.b16 %v6294, %v6292
          %v6309 = vpack.c.b16 %v6295, %v6293
          %v6310 = vpack.c.b16 %v6298, %v6296
          %v6311 = vpack.c.b16 %v6299, %v6297
          %v6312 = vpack.c.b16 %v6302, %v6300
          %v6313 = vpack.c.b16 %v6303, %v6301
          %v6314 = vpack.c.b16 %v6306, %v6304
          %v6315 = vpack.c.b16 %v6307, %v6305
          %v6325 = vsel %vm4703, %v6261, 0
          %6327 = vmatprep.subr.bf16.mxu0 %v6309
          %6328 = vmatpush1.bf16.msra.mxu0 %v6308
          %6329 = vmatprep.subr.bf16.mxu0 %v6311
          %6330 = vmatpush1.bf16.msra.mxu0 %v6310
          %6331 = vmatprep.subr.bf16.mxu0 %v6313
          %6332 = vmatpush1.bf16.msra.mxu0 %v6312
          %6333 = vmatprep.subr.bf16.mxu0 %v6315
          %6334 = vmatpush1.bf16.msra.mxu0 %v6314
          %6335 = vmatprep.subr.bf16.mxu0 0
          %6336 = vmatpush1.bf16.msra.mxu0 0
          %6337 = vmatprep.subr.bf16.mxu0 0
          %6338 = vmatpush1.bf16.msra.mxu0 0
          %6339 = vmatprep.subr.bf16.mxu0 0
          %6340 = vmatpush1.bf16.msra.mxu0 0
          %6341 = vmatprep.subr.bf16.mxu0 0
          %6342 = vmatpush1.bf16.msra.mxu0 0
          %6343 = vmatprep.subr.bf16.mxu0 0
          %6344 = vmatpush1.bf16.msra.mxu0 0
          %6345 = vmatprep.subr.bf16.mxu0 0
          %6346 = vmatpush1.bf16.msra.mxu0 0
          %6347 = vmatprep.subr.bf16.mxu0 0
          %6348 = vmatpush1.bf16.msra.mxu0 0
          %6349 = vmatprep.subr.bf16.mxu0 0
          %6350 = vmatpush1.bf16.msra.mxu0 0
          %6351 = vmatprep.subr.bf16.mxu0 0
          %6352 = vmatpush1.bf16.msra.mxu0 0
          %6353 = vmatprep.subr.bf16.mxu0 0
          %6354 = vmatpush1.bf16.msra.mxu0 0
          %6355 = vmatprep.subr.bf16.mxu0 0
          %6356 = vmatpush1.bf16.msra.mxu0 0
          %6357 = vmatprep.subr.bf16.mxu0 0
          %6358 = vmatpush1.bf16.msra.mxu0 0
          %6359 = vmatprep.mubr.bf16.mxu0 0
          %6360 = vmatmul.mubr.bf16.gmra.mrb[0].mxu0 %v6325
          %v6361 = vpop.f32.mrb[0].mxu0
          %v6362 = vadd.f32 %v6277, %v6361
          %v6363 = vpop.f32.mrb[0].mxu0
          %v6364 = vadd.f32 %v6281, %v6363
          %v6365 = vpop.f32.mrb[0].mxu0
          %v6366 = vadd.f32 %v6277, %v6365
          %v6367 = vpop.f32.mrb[0].mxu0
          %v6368 = vadd.f32 %v6281, %v6367
          %6369 = vdwg.mxu0
          %v6370 = vmul.f32 %v6362, 0.25
          %v6371 = vmul.f32 %v6366, 0.25
          %v6372 = vpack.c.bf16 %v6370, %v6370
          %v6373 = vpack.c.bf16 %v6362, %v6362
          %6375 = vrot.lane.b32.xlu0 %v6373, 64
          %v6376 = vpop.permute.xlu0 %6375
          %v6378 = vsel %vm4948, %v6372, 0
          %v6381 = vsel %vm4948, %v6376, 0
          %6383 = vmatprep.subr.bf16.mxu0 0
          %6384 = vmatpush1.bf16.xpose.msra.mxu0 %v6381
          %6385 = vmatprep.subr.bf16.mxu0 0
          %6386 = vmatpush1.bf16.xpose.msra.mxu0 0
          %6387 = vmatprep.subr.bf16.mxu0 0
          %6388 = vmatpush1.bf16.xpose.msra.mxu0 0
          %6389 = vmatprep.subr.bf16.mxu0 0
          %6390 = vmatpush1.bf16.xpose.msra.mxu0 0
          %6391 = vmatprep.subr.bf16.mxu0 0
          %6392 = vmatpush1.bf16.xpose.msra.mxu0 0
          %6393 = vmatprep.subr.bf16.mxu0 0
          %6394 = vmatpush1.bf16.xpose.msra.mxu0 0
          %6395 = vmatprep.subr.bf16.mxu0 0
          %6396 = vmatpush1.bf16.xpose.msra.mxu0 0
          %6397 = vmatprep.subr.bf16.mxu0 0
          %6398 = vmatpush1.bf16.xpose.msra.mxu0 0
          %6399 = vmatprep.subr.bf16.mxu0 0
          %6400 = vmatpush1.bf16.xpose.msra.mxu0 0
          %6401 = vmatprep.subr.bf16.mxu0 0
          %6402 = vmatpush1.bf16.xpose.msra.mxu0 0
          %6403 = vmatprep.subr.bf16.mxu0 0
          %6404 = vmatpush1.bf16.xpose.msra.mxu0 0
          %6405 = vmatprep.subr.bf16.mxu0 0
          %6406 = vmatpush1.bf16.xpose.msra.mxu0 0
          %6407 = vmatprep.subr.bf16.mxu0 0
          %6408 = vmatpush1.bf16.xpose.msra.mxu0 0
          %6409 = vmatprep.subr.bf16.mxu0 0
          %6410 = vmatpush1.bf16.xpose.msra.mxu0 0
          %6411 = vmatprep.subr.bf16.mxu0 0
          %6412 = vmatpush1.bf16.xpose.msra.mxu0 0
          %6413 = vmatprep.subr.bf16.mxu0 0
          %6414 = vmatpush1.bf16.xpose.msra.mxu0 0
          %6415 = vmatprep.mubr.bf16.mxu0 0
          %6416 = vmatmul.mubr.bf16.gmra.mrb[0].mxu0 %v6378
          %v6417 = vpop.f32.mrb[0].mxu0
          %v6418 = vadd.f32 0.0, %v6417
          %v6419 = vpop.f32.mrb[0].mxu0
          %v6420 = vpop.f32.mrb[0].mxu0
          %v6421 = vpop.f32.mrb[0].mxu0
          %6422 = vdwg.mxu0
          %6424 = vrot.lane.b32.xlu0 %v6372, 112
          %v6425 = vpop.permute.xlu0 %6424
          %6426 = vrot.lane.b32.xlu0 %v6373, 48
          %v6427 = vpop.permute.xlu0 %6426
          %v6429 = vsel %vm4948, %v6425, 0
          %v6432 = vsel %vm4948, %v6427, 0
          %6434 = vmatprep.subr.bf16.mxu0 0
          %6435 = vmatpush1.bf16.xpose.msra.mxu0 %v6432
          %6436 = vmatprep.subr.bf16.mxu0 0
          %6437 = vmatpush1.bf16.xpose.msra.mxu0 0
          %6438 = vmatprep.subr.bf16.mxu0 0
          %6439 = vmatpush1.bf16.xpose.msra.mxu0 0
          %6440 = vmatprep.subr.bf16.mxu0 0
          %6441 = vmatpush1.bf16.xpose.msra.mxu0 0
          %6442 = vmatprep.subr.bf16.mxu0 0
          %6443 = vmatpush1.bf16.xpose.msra.mxu0 0
          %6444 = vmatprep.subr.bf16.mxu0 0
          %6445 = vmatpush1.bf16.xpose.msra.mxu0 0
          %6446 = vmatprep.subr.bf16.mxu0 0
          %6447 = vmatpush1.bf16.xpose.msra.mxu0 0
          %6448 = vmatprep.subr.bf16.mxu0 0
          %6449 = vmatpush1.bf16.xpose.msra.mxu0 0
          %6450 = vmatprep.subr.bf16.mxu0 0
          %6451 = vmatpush1.bf16.xpose.msra.mxu0 0
          %6452 = vmatprep.subr.bf16.mxu0 0
          %6453 = vmatpush1.bf16.xpose.msra.mxu0 0
          %6454 = vmatprep.subr.bf16.mxu0 0
          %6455 = vmatpush1.bf16.xpose.msra.mxu0 0
          %6456 = vmatprep.subr.bf16.mxu0 0
          %6457 = vmatpush1.bf16.xpose.msra.mxu0 0
          %6458 = vmatprep.subr.bf16.mxu0 0
          %6459 = vmatpush1.bf16.xpose.msra.mxu0 0
          %6460 = vmatprep.subr.bf16.mxu0 0
          %6461 = vmatpush1.bf16.xpose.msra.mxu0 0
          %6462 = vmatprep.subr.bf16.mxu0 0
          %6463 = vmatpush1.bf16.xpose.msra.mxu0 0
          %6464 = vmatprep.subr.bf16.mxu0 0
          %6465 = vmatpush1.bf16.xpose.msra.mxu0 0
          %6466 = vmatprep.mubr.bf16.mxu0 0
          %6467 = vmatmul.mubr.bf16.gmra.mrb[0].mxu0 %v6429
          %v6468 = vpop.f32.mrb[0].mxu0
          %v6469 = vadd.f32 0.0, %v6468
          %v6470 = vpop.f32.mrb[0].mxu0
          %v6471 = vpop.f32.mrb[0].mxu0
          %v6472 = vpop.f32.mrb[0].mxu0
          %6473 = vdwg.mxu0
          %6474 = vrot.lane.b32.xlu0 %v6372, 96
          %v6475 = vpop.permute.xlu0 %6474
          %6476 = vrot.lane.b32.xlu0 %v6373, 32
          %v6477 = vpop.permute.xlu0 %6476
          %v6479 = vsel %vm4948, %v6475, 0
          %v6482 = vsel %vm4948, %v6477, 0
          %6484 = vmatprep.subr.bf16.mxu0 0
          %6485 = vmatpush1.bf16.xpose.msra.mxu0 %v6482
          %6486 = vmatprep.subr.bf16.mxu0 0
          %6487 = vmatpush1.bf16.xpose.msra.mxu0 0
          %6488 = vmatprep.subr.bf16.mxu0 0
          %6489 = vmatpush1.bf16.xpose.msra.mxu0 0
          %6490 = vmatprep.subr.bf16.mxu0 0
          %6491 = vmatpush1.bf16.xpose.msra.mxu0 0
          %6492 = vmatprep.subr.bf16.mxu0 0
          %6493 = vmatpush1.bf16.xpose.msra.mxu0 0
          %6494 = vmatprep.subr.bf16.mxu0 0
          %6495 = vmatpush1.bf16.xpose.msra.mxu0 0
          %6496 = vmatprep.subr.bf16.mxu0 0
          %6497 = vmatpush1.bf16.xpose.msra.mxu0 0
          %6498 = vmatprep.subr.bf16.mxu0 0
          %6499 = vmatpush1.bf16.xpose.msra.mxu0 0
          %6500 = vmatprep.subr.bf16.mxu0 0
          %6501 = vmatpush1.bf16.xpose.msra.mxu0 0
          %6502 = vmatprep.subr.bf16.mxu0 0
          %6503 = vmatpush1.bf16.xpose.msra.mxu0 0
          %6504 = vmatprep.subr.bf16.mxu0 0
          %6505 = vmatpush1.bf16.xpose.msra.mxu0 0
          %6506 = vmatprep.subr.bf16.mxu0 0
          %6507 = vmatpush1.bf16.xpose.msra.mxu0 0
          %6508 = vmatprep.subr.bf16.mxu0 0
          %6509 = vmatpush1.bf16.xpose.msra.mxu0 0
          %6510 = vmatprep.subr.bf16.mxu0 0
          %6511 = vmatpush1.bf16.xpose.msra.mxu0 0
          %6512 = vmatprep.subr.bf16.mxu0 0
          %6513 = vmatpush1.bf16.xpose.msra.mxu0 0
          %6514 = vmatprep.subr.bf16.mxu0 0
          %6515 = vmatpush1.bf16.xpose.msra.mxu0 0
          %6516 = vmatprep.mubr.bf16.mxu0 0
          %6517 = vmatmul.mubr.bf16.gmra.mrb[0].mxu0 %v6479
          %v6518 = vpop.f32.mrb[0].mxu0
          %v6519 = vadd.f32 0.0, %v6518
          %v6520 = vpop.f32.mrb[0].mxu0
          %v6521 = vpop.f32.mrb[0].mxu0
          %v6522 = vpop.f32.mrb[0].mxu0
          %6523 = vdwg.mxu0
          %6524 = vrot.lane.b32.xlu0 %v6372, 80
          %v6525 = vpop.permute.xlu0 %6524
          %6526 = vrot.lane.b32.xlu0 %v6373, 16
          %v6527 = vpop.permute.xlu0 %6526
          %v6529 = vsel %vm4948, %v6525, 0
          %v6532 = vsel %vm4948, %v6527, 0
          %6534 = vmatprep.subr.bf16.mxu0 0
          %6535 = vmatpush1.bf16.xpose.msra.mxu0 %v6532
          %6536 = vmatprep.subr.bf16.mxu0 0
          %6537 = vmatpush1.bf16.xpose.msra.mxu0 0
          %6538 = vmatprep.subr.bf16.mxu0 0
          %6539 = vmatpush1.bf16.xpose.msra.mxu0 0
          %6540 = vmatprep.subr.bf16.mxu0 0
          %6541 = vmatpush1.bf16.xpose.msra.mxu0 0
          %6542 = vmatprep.subr.bf16.mxu0 0
          %6543 = vmatpush1.bf16.xpose.msra.mxu0 0
          %6544 = vmatprep.subr.bf16.mxu0 0
          %6545 = vmatpush1.bf16.xpose.msra.mxu0 0
          %6546 = vmatprep.subr.bf16.mxu0 0
          %6547 = vmatpush1.bf16.xpose.msra.mxu0 0
          %6548 = vmatprep.subr.bf16.mxu0 0
          %6549 = vmatpush1.bf16.xpose.msra.mxu0 0
          %6550 = vmatprep.subr.bf16.mxu0 0
          %6551 = vmatpush1.bf16.xpose.msra.mxu0 0
          %6552 = vmatprep.subr.bf16.mxu0 0
          %6553 = vmatpush1.bf16.xpose.msra.mxu0 0
          %6554 = vmatprep.subr.bf16.mxu0 0
          %6555 = vmatpush1.bf16.xpose.msra.mxu0 0
          %6556 = vmatprep.subr.bf16.mxu0 0
          %6557 = vmatpush1.bf16.xpose.msra.mxu0 0
          %6558 = vmatprep.subr.bf16.mxu0 0
          %6559 = vmatpush1.bf16.xpose.msra.mxu0 0
          %6560 = vmatprep.subr.bf16.mxu0 0
          %6561 = vmatpush1.bf16.xpose.msra.mxu0 0
          %6562 = vmatprep.subr.bf16.mxu0 0
          %6563 = vmatpush1.bf16.xpose.msra.mxu0 0
          %6564 = vmatprep.subr.bf16.mxu0 0
          %6565 = vmatpush1.bf16.xpose.msra.mxu0 0
          %6566 = vmatprep.mubr.bf16.mxu0 0
          %6567 = vmatmul.mubr.bf16.gmra.mrb[0].mxu0 %v6529
          %v6568 = vpop.f32.mrb[0].mxu0
          %v6569 = vadd.f32 0.0, %v6568
          %v6570 = vpop.f32.mrb[0].mxu0
          %v6571 = vpop.f32.mrb[0].mxu0
          %v6572 = vpop.f32.mrb[0].mxu0
          %6573 = vdwg.mxu0
          %v6574 = vpack.c.bf16 %v6371, %v6371
          %v6575 = vpack.c.bf16 %v6366, %v6366
          %6577 = vrot.lane.b32.xlu0 %v6575, 64
          %v6578 = vpop.permute.xlu0 %6577
          %v6580 = vsel %vm4948, %v6574, 0
          %v6583 = vsel %vm4948, %v6578, 0
          %6585 = vmatprep.subr.bf16.mxu0 0
          %6586 = vmatpush1.bf16.xpose.msra.mxu0 %v6583
          %6587 = vmatprep.subr.bf16.mxu0 0
          %6588 = vmatpush1.bf16.xpose.msra.mxu0 0
          %6589 = vmatprep.subr.bf16.mxu0 0
          %6590 = vmatpush1.bf16.xpose.msra.mxu0 0
          %6591 = vmatprep.subr.bf16.mxu0 0
          %6592 = vmatpush1.bf16.xpose.msra.mxu0 0
          %6593 = vmatprep.subr.bf16.mxu0 0
          %6594 = vmatpush1.bf16.xpose.msra.mxu0 0
          %6595 = vmatprep.subr.bf16.mxu0 0
          %6596 = vmatpush1.bf16.xpose.msra.mxu0 0
          %6597 = vmatprep.subr.bf16.mxu0 0
          %6598 = vmatpush1.bf16.xpose.msra.mxu0 0
          %6599 = vmatprep.subr.bf16.mxu0 0
          %6600 = vmatpush1.bf16.xpose.msra.mxu0 0
          %6601 = vmatprep.subr.bf16.mxu0 0
          %6602 = vmatpush1.bf16.xpose.msra.mxu0 0
          %6603 = vmatprep.subr.bf16.mxu0 0
          %6604 = vmatpush1.bf16.xpose.msra.mxu0 0
          %6605 = vmatprep.subr.bf16.mxu0 0
          %6606 = vmatpush1.bf16.xpose.msra.mxu0 0
          %6607 = vmatprep.subr.bf16.mxu0 0
          %6608 = vmatpush1.bf16.xpose.msra.mxu0 0
          %6609 = vmatprep.subr.bf16.mxu0 0
          %6610 = vmatpush1.bf16.xpose.msra.mxu0 0
          %6611 = vmatprep.subr.bf16.mxu0 0
          %6612 = vmatpush1.bf16.xpose.msra.mxu0 0
          %6613 = vmatprep.subr.bf16.mxu0 0
          %6614 = vmatpush1.bf16.xpose.msra.mxu0 0
          %6615 = vmatprep.subr.bf16.mxu0 0
          %6616 = vmatpush1.bf16.xpose.msra.mxu0 0
          %6617 = vmatprep.mubr.bf16.mxu0 0
          %6618 = vmatmul.mubr.bf16.gmra.mrb[0].mxu0 %v6580
          %v6619 = vpop.f32.mrb[0].mxu0
          %v6620 = vadd.f32 0.0, %v6619
          %v6621 = vpop.f32.mrb[0].mxu0
          %v6622 = vpop.f32.mrb[0].mxu0
          %v6623 = vpop.f32.mrb[0].mxu0
          %6624 = vdwg.mxu0
          %6626 = vrot.lane.b32.xlu0 %v6574, 112
          %v6627 = vpop.permute.xlu0 %6626
          %6628 = vrot.lane.b32.xlu0 %v6575, 48
          %v6629 = vpop.permute.xlu0 %6628
          %v6631 = vsel %vm4948, %v6627, 0
          %v6634 = vsel %vm4948, %v6629, 0
          %6636 = vmatprep.subr.bf16.mxu0 0
          %6637 = vmatpush1.bf16.xpose.msra.mxu0 %v6634
          %6638 = vmatprep.subr.bf16.mxu0 0
          %6639 = vmatpush1.bf16.xpose.msra.mxu0 0
          %6640 = vmatprep.subr.bf16.mxu0 0
          %6641 = vmatpush1.bf16.xpose.msra.mxu0 0
          %6642 = vmatprep.subr.bf16.mxu0 0
          %6643 = vmatpush1.bf16.xpose.msra.mxu0 0
          %6644 = vmatprep.subr.bf16.mxu0 0
          %6645 = vmatpush1.bf16.xpose.msra.mxu0 0
          %6646 = vmatprep.subr.bf16.mxu0 0
          %6647 = vmatpush1.bf16.xpose.msra.mxu0 0
          %6648 = vmatprep.subr.bf16.mxu0 0
          %6649 = vmatpush1.bf16.xpose.msra.mxu0 0
          %6650 = vmatprep.subr.bf16.mxu0 0
          %6651 = vmatpush1.bf16.xpose.msra.mxu0 0
          %6652 = vmatprep.subr.bf16.mxu0 0
          %6653 = vmatpush1.bf16.xpose.msra.mxu0 0
          %6654 = vmatprep.subr.bf16.mxu0 0
          %6655 = vmatpush1.bf16.xpose.msra.mxu0 0
          %6656 = vmatprep.subr.bf16.mxu0 0
          %6657 = vmatpush1.bf16.xpose.msra.mxu0 0
          %6658 = vmatprep.subr.bf16.mxu0 0
          %6659 = vmatpush1.bf16.xpose.msra.mxu0 0
          %6660 = vmatprep.subr.bf16.mxu0 0
          %6661 = vmatpush1.bf16.xpose.msra.mxu0 0
          %6662 = vmatprep.subr.bf16.mxu0 0
          %6663 = vmatpush1.bf16.xpose.msra.mxu0 0
          %6664 = vmatprep.subr.bf16.mxu0 0
          %6665 = vmatpush1.bf16.xpose.msra.mxu0 0
          %6666 = vmatprep.subr.bf16.mxu0 0
          %6667 = vmatpush1.bf16.xpose.msra.mxu0 0
          %6668 = vmatprep.mubr.bf16.mxu0 0
          %6669 = vmatmul.mubr.bf16.gmra.mrb[0].mxu0 %v6631
          %v6670 = vpop.f32.mrb[0].mxu0
          %v6671 = vadd.f32 0.0, %v6670
          %v6672 = vpop.f32.mrb[0].mxu0
          %v6673 = vpop.f32.mrb[0].mxu0
          %v6674 = vpop.f32.mrb[0].mxu0
          %6675 = vdwg.mxu0
          %6676 = vrot.lane.b32.xlu0 %v6574, 96
          %v6677 = vpop.permute.xlu0 %6676
          %6678 = vrot.lane.b32.xlu0 %v6575, 32
          %v6679 = vpop.permute.xlu0 %6678
          %v6681 = vsel %vm4948, %v6677, 0
          %v6684 = vsel %vm4948, %v6679, 0
          %6686 = vmatprep.subr.bf16.mxu0 0
          %6687 = vmatpush1.bf16.xpose.msra.mxu0 %v6684
          %6688 = vmatprep.subr.bf16.mxu0 0
          %6689 = vmatpush1.bf16.xpose.msra.mxu0 0
          %6690 = vmatprep.subr.bf16.mxu0 0
          %6691 = vmatpush1.bf16.xpose.msra.mxu0 0
          %6692 = vmatprep.subr.bf16.mxu0 0
          %6693 = vmatpush1.bf16.xpose.msra.mxu0 0
          %6694 = vmatprep.subr.bf16.mxu0 0
          %6695 = vmatpush1.bf16.xpose.msra.mxu0 0
          %6696 = vmatprep.subr.bf16.mxu0 0
          %6697 = vmatpush1.bf16.xpose.msra.mxu0 0
          %6698 = vmatprep.subr.bf16.mxu0 0
          %6699 = vmatpush1.bf16.xpose.msra.mxu0 0
          %6700 = vmatprep.subr.bf16.mxu0 0
          %6701 = vmatpush1.bf16.xpose.msra.mxu0 0
          %6702 = vmatprep.subr.bf16.mxu0 0
          %6703 = vmatpush1.bf16.xpose.msra.mxu0 0
          %6704 = vmatprep.subr.bf16.mxu0 0
          %6705 = vmatpush1.bf16.xpose.msra.mxu0 0
          %6706 = vmatprep.subr.bf16.mxu0 0
          %6707 = vmatpush1.bf16.xpose.msra.mxu0 0
          %6708 = vmatprep.subr.bf16.mxu0 0
          %6709 = vmatpush1.bf16.xpose.msra.mxu0 0
          %6710 = vmatprep.subr.bf16.mxu0 0
          %6711 = vmatpush1.bf16.xpose.msra.mxu0 0
          %6712 = vmatprep.subr.bf16.mxu0 0
          %6713 = vmatpush1.bf16.xpose.msra.mxu0 0
          %6714 = vmatprep.subr.bf16.mxu0 0
          %6715 = vmatpush1.bf16.xpose.msra.mxu0 0
          %6716 = vmatprep.subr.bf16.mxu0 0
          %6717 = vmatpush1.bf16.xpose.msra.mxu0 0
          %6718 = vmatprep.mubr.bf16.mxu0 0
          %6719 = vmatmul.mubr.bf16.gmra.mrb[0].mxu0 %v6681
          %v6720 = vpop.f32.mrb[0].mxu0
          %v6721 = vadd.f32 0.0, %v6720
          %v6722 = vpop.f32.mrb[0].mxu0
          %v6723 = vpop.f32.mrb[0].mxu0
          %v6724 = vpop.f32.mrb[0].mxu0
          %6725 = vdwg.mxu0
          %6726 = vrot.lane.b32.xlu0 %v6574, 80
          %v6727 = vpop.permute.xlu0 %6726
          %6728 = vrot.lane.b32.xlu0 %v6575, 16
          %v6729 = vpop.permute.xlu0 %6728
          %v6731 = vsel %vm4948, %v6727, 0
          %v6734 = vsel %vm4948, %v6729, 0
          %6736 = vmatprep.subr.bf16.mxu0 0
          %6737 = vmatpush1.bf16.xpose.msra.mxu0 %v6734
          %6738 = vmatprep.subr.bf16.mxu0 0
          %6739 = vmatpush1.bf16.xpose.msra.mxu0 0
          %6740 = vmatprep.subr.bf16.mxu0 0
          %6741 = vmatpush1.bf16.xpose.msra.mxu0 0
          %6742 = vmatprep.subr.bf16.mxu0 0
          %6743 = vmatpush1.bf16.xpose.msra.mxu0 0
          %6744 = vmatprep.subr.bf16.mxu0 0
          %6745 = vmatpush1.bf16.xpose.msra.mxu0 0
          %6746 = vmatprep.subr.bf16.mxu0 0
          %6747 = vmatpush1.bf16.xpose.msra.mxu0 0
          %6748 = vmatprep.subr.bf16.mxu0 0
          %6749 = vmatpush1.bf16.xpose.msra.mxu0 0
          %6750 = vmatprep.subr.bf16.mxu0 0
          %6751 = vmatpush1.bf16.xpose.msra.mxu0 0
          %6752 = vmatprep.subr.bf16.mxu0 0
          %6753 = vmatpush1.bf16.xpose.msra.mxu0 0
          %6754 = vmatprep.subr.bf16.mxu0 0
          %6755 = vmatpush1.bf16.xpose.msra.mxu0 0
          %6756 = vmatprep.subr.bf16.mxu0 0
          %6757 = vmatpush1.bf16.xpose.msra.mxu0 0
          %6758 = vmatprep.subr.bf16.mxu0 0
          %6759 = vmatpush1.bf16.xpose.msra.mxu0 0
          %6760 = vmatprep.subr.bf16.mxu0 0
          %6761 = vmatpush1.bf16.xpose.msra.mxu0 0
          %6762 = vmatprep.subr.bf16.mxu0 0
          %6763 = vmatpush1.bf16.xpose.msra.mxu0 0
          %6764 = vmatprep.subr.bf16.mxu0 0
          %6765 = vmatpush1.bf16.xpose.msra.mxu0 0
          %6766 = vmatprep.subr.bf16.mxu0 0
          %6767 = vmatpush1.bf16.xpose.msra.mxu0 0
          %6768 = vmatprep.mubr.bf16.mxu0 0
          %6769 = vmatmul.mubr.bf16.gmra.mrb[0].mxu0 %v6731
          %v6770 = vpop.f32.mrb[0].mxu0
          %v6771 = vadd.f32 0.0, %v6770
          %v6772 = vpop.f32.mrb[0].mxu0
          %v6773 = vpop.f32.mrb[0].mxu0
          %v6774 = vpop.f32.mrb[0].mxu0
          %6775 = vdwg.mxu0
          %v6776 = vadd.f32 %v6418, %v4788
          %v6777 = vadd.f32 %v6469, %v4788
          %v6778 = vadd.f32 %v6519, %v4788
          %v6779 = vadd.f32 %v6569, %v4788
          %v6780 = vadd.f32 %v6620, %v4788
          %v6781 = vadd.f32 %v6671, %v4788
          %v6782 = vadd.f32 %v6721, %v4788
          %v6783 = vadd.f32 %v6771, %v4788
          %v6784 = vsel %vm5356, %v6776, -inf
          %6785 = vmax.xlane.f32.xlu0 %v6784
          %v6786 = vpop.xlane.xlu0 %6785
          %v6787 = vsel %vm5356, %v6777, -inf
          %6788 = vmax.xlane.f32.xlu0 %v6787
          %v6789 = vpop.xlane.xlu0 %6788
          %v6790 = vsel %vm5356, %v6778, -inf
          %6791 = vmax.xlane.f32.xlu0 %v6790
          %v6792 = vpop.xlane.xlu0 %6791
          %v6793 = vsel %vm5356, %v6779, -inf
          %6794 = vmax.xlane.f32.xlu0 %v6793
          %v6795 = vpop.xlane.xlu0 %6794
          %v6796 = vsel %vm5356, %v6780, -inf
          %6797 = vmax.xlane.f32.xlu0 %v6796
          %v6798 = vpop.xlane.xlu0 %6797
          %v6799 = vsel %vm5356, %v6781, -inf
          %6800 = vmax.xlane.f32.xlu0 %v6799
          %v6801 = vpop.xlane.xlu0 %6800
          %v6802 = vsel %vm5356, %v6782, -inf
          %6803 = vmax.xlane.f32.xlu0 %v6802
          %v6804 = vpop.xlane.xlu0 %6803
          %v6805 = vsel %vm5356, %v6783, -inf
          %6806 = vmax.xlane.f32.xlu0 %v6805
          %v6807 = vpop.xlane.xlu0 %6806
          %v6808 = vsub.f32 %v6776, %v6786
          %v6809 = vsub.f32 %v6777, %v6789
          %v6810 = vsub.f32 %v6778, %v6792
          %v6811 = vsub.f32 %v6779, %v6795
          %v6812 = vsub.f32 %v6780, %v6798
          %v6813 = vsub.f32 %v6781, %v6801
          %v6814 = vsub.f32 %v6782, %v6804
          %v6815 = vsub.f32 %v6783, %v6807
          %v6816 = vmul.f32 %v6808, 1.442695
          %v6817 = vpow.pop %v6816
          %v6818 = vmul.f32 %v6809, 1.442695
          %v6819 = vpow.pop %v6818
          %v6820 = vmul.f32 %v6810, 1.442695
          %v6821 = vpow.pop %v6820
          %v6822 = vmul.f32 %v6811, 1.442695
          %v6823 = vpow.pop %v6822
          %v6824 = vmul.f32 %v6812, 1.442695
          %v6825 = vpow.pop %v6824
          %v6826 = vmul.f32 %v6813, 1.442695
          %v6827 = vpow.pop %v6826
          %v6828 = vmul.f32 %v6814, 1.442695
          %v6829 = vpow.pop %v6828
          %v6830 = vmul.f32 %v6815, 1.442695
          %v6831 = vpow.pop %v6830
          %v6832 = vsel %vm5356, %v6817, 0.0
          %6833 = vadd.xlane.f32.xlu0 %v6832
          %v6834 = vpop.xlane.xlu0 %6833
          %v6835 = vsel %vm5356, %v6819, 0.0
          %6836 = vadd.xlane.f32.xlu0 %v6835
          %v6837 = vpop.xlane.xlu0 %6836
          %v6838 = vsel %vm5356, %v6821, 0.0
          %6839 = vadd.xlane.f32.xlu0 %v6838
          %v6840 = vpop.xlane.xlu0 %6839
          %v6841 = vsel %vm5356, %v6823, 0.0
          %6842 = vadd.xlane.f32.xlu0 %v6841
          %v6843 = vpop.xlane.xlu0 %6842
          %v6844 = vsel %vm5356, %v6825, 0.0
          %6845 = vadd.xlane.f32.xlu0 %v6844
          %v6846 = vpop.xlane.xlu0 %6845
          %v6847 = vsel %vm5356, %v6827, 0.0
          %6848 = vadd.xlane.f32.xlu0 %v6847
          %v6849 = vpop.xlane.xlu0 %6848
          %v6850 = vsel %vm5356, %v6829, 0.0
          %6851 = vadd.xlane.f32.xlu0 %v6850
          %v6852 = vpop.xlane.xlu0 %6851
          %v6853 = vsel %vm5356, %v6831, 0.0
          %6854 = vadd.xlane.f32.xlu0 %v6853
          %v6855 = vpop.xlane.xlu0 %6854
          %v6856 = vrcp.pop %v6834
          %v6857 = vrcp.pop %v6837
          %v6858 = vrcp.pop %v6840
          %v6859 = vrcp.pop %v6843
          %v6860 = vrcp.pop %v6846
          %v6861 = vrcp.pop %v6849
          %v6862 = vrcp.pop %v6852
          %v6863 = vrcp.pop %v6855
          %v6864 = vmul.f32 %v6817, %v6856
          %v6865 = vmul.f32 %v6819, %v6857
          %v6866 = vmul.f32 %v6821, %v6858
          %v6867 = vmul.f32 %v6823, %v6859
          %v6868 = vmul.f32 %v6825, %v6860
          %v6869 = vmul.f32 %v6827, %v6861
          %v6870 = vmul.f32 %v6829, %v6862
          %v6871 = vmul.f32 %v6831, %v6863
          %v6872 = vpack.c.bf16 %v6864, %v6864
          %v6873 = vpack.c.bf16 %v6364, %v6364
          %v6875 = vsel %vm5356, %v6872, 0
          %v6878 = vsel %vm5450, %v6873, 0
          %6880 = vmatprep.subr.bf16.mxu0 0
          %6881 = vmatpush1.bf16.msra.mxu0 %v6878
          %6882 = vmatprep.subr.bf16.mxu0 0
          %6883 = vmatpush1.bf16.msra.mxu0 0
          %6884 = vmatprep.subr.bf16.mxu0 0
          %6885 = vmatpush1.bf16.msra.mxu0 0
          %6886 = vmatprep.subr.bf16.mxu0 0
          %6887 = vmatpush1.bf16.msra.mxu0 0
          %6888 = vmatprep.subr.bf16.mxu0 0
          %6889 = vmatpush1.bf16.msra.mxu0 0
          %6890 = vmatprep.subr.bf16.mxu0 0
          %6891 = vmatpush1.bf16.msra.mxu0 0
          %6892 = vmatprep.subr.bf16.mxu0 0
          %6893 = vmatpush1.bf16.msra.mxu0 0
          %6894 = vmatprep.subr.bf16.mxu0 0
          %6895 = vmatpush1.bf16.msra.mxu0 0
          %6896 = vmatprep.subr.bf16.mxu0 0
          %6897 = vmatpush1.bf16.msra.mxu0 0
          %6898 = vmatprep.subr.bf16.mxu0 0
          %6899 = vmatpush1.bf16.msra.mxu0 0
          %6900 = vmatprep.subr.bf16.mxu0 0
          %6901 = vmatpush1.bf16.msra.mxu0 0
          %6902 = vmatprep.subr.bf16.mxu0 0
          %6903 = vmatpush1.bf16.msra.mxu0 0
          %6904 = vmatprep.subr.bf16.mxu0 0
          %6905 = vmatpush1.bf16.msra.mxu0 0
          %6906 = vmatprep.subr.bf16.mxu0 0
          %6907 = vmatpush1.bf16.msra.mxu0 0
          %6908 = vmatprep.subr.bf16.mxu0 0
          %6909 = vmatpush1.bf16.msra.mxu0 0
          %6910 = vmatprep.subr.bf16.mxu0 0
          %6911 = vmatpush1.bf16.msra.mxu0 0
          %6912 = vmatprep.mubr.bf16.mxu0 0
          %6913 = vmatmul.mubr.bf16.gmra.mrb[0].mxu0 %v6875
          %v6914 = vpop.f32.mrb[0].mxu0
          %v6915 = vadd.f32 0.0, %v6914
          %v6916 = vpop.f32.mrb[0].mxu0
          %v6917 = vpop.f32.mrb[0].mxu0
          %v6918 = vpop.f32.mrb[0].mxu0
          %6919 = vdwg.mxu0
          %v6920 = vpack.c.bf16 %v6865, %v6865
          %6922 = vrot.lane.b32.xlu0 %v6873, 112
          %v6923 = vpop.permute.xlu0 %6922
          %v6925 = vsel %vm5356, %v6920, 0
          %v6928 = vsel %vm5450, %v6923, 0
          %6930 = vmatprep.subr.bf16.mxu0 0
          %6931 = vmatpush1.bf16.msra.mxu0 %v6928
          %6932 = vmatprep.subr.bf16.mxu0 0
          %6933 = vmatpush1.bf16.msra.mxu0 0
          %6934 = vmatprep.subr.bf16.mxu0 0
          %6935 = vmatpush1.bf16.msra.mxu0 0
          %6936 = vmatprep.subr.bf16.mxu0 0
          %6937 = vmatpush1.bf16.msra.mxu0 0
          %6938 = vmatprep.subr.bf16.mxu0 0
          %6939 = vmatpush1.bf16.msra.mxu0 0
          %6940 = vmatprep.subr.bf16.mxu0 0
          %6941 = vmatpush1.bf16.msra.mxu0 0
          %6942 = vmatprep.subr.bf16.mxu0 0
          %6943 = vmatpush1.bf16.msra.mxu0 0
          %6944 = vmatprep.subr.bf16.mxu0 0
          %6945 = vmatpush1.bf16.msra.mxu0 0
          %6946 = vmatprep.subr.bf16.mxu0 0
          %6947 = vmatpush1.bf16.msra.mxu0 0
          %6948 = vmatprep.subr.bf16.mxu0 0
          %6949 = vmatpush1.bf16.msra.mxu0 0
          %6950 = vmatprep.subr.bf16.mxu0 0
          %6951 = vmatpush1.bf16.msra.mxu0 0
          %6952 = vmatprep.subr.bf16.mxu0 0
          %6953 = vmatpush1.bf16.msra.mxu0 0
          %6954 = vmatprep.subr.bf16.mxu0 0
          %6955 = vmatpush1.bf16.msra.mxu0 0
          %6956 = vmatprep.subr.bf16.mxu0 0
          %6957 = vmatpush1.bf16.msra.mxu0 0
          %6958 = vmatprep.subr.bf16.mxu0 0
          %6959 = vmatpush1.bf16.msra.mxu0 0
          %6960 = vmatprep.subr.bf16.mxu0 0
          %6961 = vmatpush1.bf16.msra.mxu0 0
          %6962 = vmatprep.mubr.bf16.mxu0 0
          %6963 = vmatmul.mubr.bf16.gmra.mrb[0].mxu0 %v6925
          %v6964 = vpop.f32.mrb[0].mxu0
          %v6965 = vadd.f32 0.0, %v6964
          %v6966 = vpop.f32.mrb[0].mxu0
          %v6967 = vpop.f32.mrb[0].mxu0
          %v6968 = vpop.f32.mrb[0].mxu0
          %6969 = vdwg.mxu0
          %v6970 = vpack.c.bf16 %v6866, %v6866
          %6971 = vrot.lane.b32.xlu0 %v6873, 96
          %v6972 = vpop.permute.xlu0 %6971
          %v6974 = vsel %vm5356, %v6970, 0
          %v6977 = vsel %vm5450, %v6972, 0
          %6979 = vmatprep.subr.bf16.mxu0 0
          %6980 = vmatpush1.bf16.msra.mxu0 %v6977
          %6981 = vmatprep.subr.bf16.mxu0 0
          %6982 = vmatpush1.bf16.msra.mxu0 0
          %6983 = vmatprep.subr.bf16.mxu0 0
          %6984 = vmatpush1.bf16.msra.mxu0 0
          %6985 = vmatprep.subr.bf16.mxu0 0
          %6986 = vmatpush1.bf16.msra.mxu0 0
          %6987 = vmatprep.subr.bf16.mxu0 0
          %6988 = vmatpush1.bf16.msra.mxu0 0
          %6989 = vmatprep.subr.bf16.mxu0 0
          %6990 = vmatpush1.bf16.msra.mxu0 0
          %6991 = vmatprep.subr.bf16.mxu0 0
          %6992 = vmatpush1.bf16.msra.mxu0 0
          %6993 = vmatprep.subr.bf16.mxu0 0
          %6994 = vmatpush1.bf16.msra.mxu0 0
          %6995 = vmatprep.subr.bf16.mxu0 0
          %6996 = vmatpush1.bf16.msra.mxu0 0
          %6997 = vmatprep.subr.bf16.mxu0 0
          %6998 = vmatpush1.bf16.msra.mxu0 0
          %6999 = vmatprep.subr.bf16.mxu0 0
          %7000 = vmatpush1.bf16.msra.mxu0 0
          %7001 = vmatprep.subr.bf16.mxu0 0
          %7002 = vmatpush1.bf16.msra.mxu0 0
          %7003 = vmatprep.subr.bf16.mxu0 0
          %7004 = vmatpush1.bf16.msra.mxu0 0
          %7005 = vmatprep.subr.bf16.mxu0 0
          %7006 = vmatpush1.bf16.msra.mxu0 0
          %7007 = vmatprep.subr.bf16.mxu0 0
          %7008 = vmatpush1.bf16.msra.mxu0 0
          %7009 = vmatprep.subr.bf16.mxu0 0
          %7010 = vmatpush1.bf16.msra.mxu0 0
          %7011 = vmatprep.mubr.bf16.mxu0 0
          %7012 = vmatmul.mubr.bf16.gmra.mrb[0].mxu0 %v6974
          %v7013 = vpop.f32.mrb[0].mxu0
          %v7014 = vadd.f32 0.0, %v7013
          %v7015 = vpop.f32.mrb[0].mxu0
          %v7016 = vpop.f32.mrb[0].mxu0
          %v7017 = vpop.f32.mrb[0].mxu0
          %7018 = vdwg.mxu0
          %v7019 = vpack.c.bf16 %v6867, %v6867
          %7020 = vrot.lane.b32.xlu0 %v6873, 80
          %v7021 = vpop.permute.xlu0 %7020
          %v7023 = vsel %vm5356, %v7019, 0
          %v7026 = vsel %vm5450, %v7021, 0
          %7028 = vmatprep.subr.bf16.mxu0 0
          %7029 = vmatpush1.bf16.msra.mxu0 %v7026
          %7030 = vmatprep.subr.bf16.mxu0 0
          %7031 = vmatpush1.bf16.msra.mxu0 0
          %7032 = vmatprep.subr.bf16.mxu0 0
          %7033 = vmatpush1.bf16.msra.mxu0 0
          %7034 = vmatprep.subr.bf16.mxu0 0
          %7035 = vmatpush1.bf16.msra.mxu0 0
          %7036 = vmatprep.subr.bf16.mxu0 0
          %7037 = vmatpush1.bf16.msra.mxu0 0
          %7038 = vmatprep.subr.bf16.mxu0 0
          %7039 = vmatpush1.bf16.msra.mxu0 0
          %7040 = vmatprep.subr.bf16.mxu0 0
          %7041 = vmatpush1.bf16.msra.mxu0 0
          %7042 = vmatprep.subr.bf16.mxu0 0
          %7043 = vmatpush1.bf16.msra.mxu0 0
          %7044 = vmatprep.subr.bf16.mxu0 0
          %7045 = vmatpush1.bf16.msra.mxu0 0
          %7046 = vmatprep.subr.bf16.mxu0 0
          %7047 = vmatpush1.bf16.msra.mxu0 0
          %7048 = vmatprep.subr.bf16.mxu0 0
          %7049 = vmatpush1.bf16.msra.mxu0 0
          %7050 = vmatprep.subr.bf16.mxu0 0
          %7051 = vmatpush1.bf16.msra.mxu0 0
          %7052 = vmatprep.subr.bf16.mxu0 0
          %7053 = vmatpush1.bf16.msra.mxu0 0
          %7054 = vmatprep.subr.bf16.mxu0 0
          %7055 = vmatpush1.bf16.msra.mxu0 0
          %7056 = vmatprep.subr.bf16.mxu0 0
          %7057 = vmatpush1.bf16.msra.mxu0 0
          %7058 = vmatprep.subr.bf16.mxu0 0
          %7059 = vmatpush1.bf16.msra.mxu0 0
          %7060 = vmatprep.mubr.bf16.mxu0 0
          %7061 = vmatmul.mubr.bf16.gmra.mrb[0].mxu0 %v7023
          %v7062 = vpop.f32.mrb[0].mxu0
          %v7063 = vadd.f32 0.0, %v7062
          %v7064 = vpop.f32.mrb[0].mxu0
          %v7065 = vpop.f32.mrb[0].mxu0
          %v7066 = vpop.f32.mrb[0].mxu0
          %7067 = vdwg.mxu0
          %7069 = vrot.lane.b32.xlu0 %v6965, 16
          %v7070 = vpop.permute.xlu0 %7069
          %7073 = vrot.lane.b32.xlu0 %v7014, 32
          %v7074 = vpop.permute.xlu0 %7073
          %7077 = vrot.lane.b32.xlu0 %v7063, 48
          %v7078 = vpop.permute.xlu0 %7077
          %v7080 = vsel %vm4948, %v6915, %v7070
          %v7081 = vsel %vm5655, %v7080, %v7074
          %v7082 = vsel %vm5657, %v7081, %v7078
          %v7083 = vpack.c.bf16 %v6868, %v6868
          %v7084 = vpack.c.bf16 %v6368, %v6368
          %v7086 = vsel %vm5356, %v7083, 0
          %v7089 = vsel %vm5450, %v7084, 0
          %7091 = vmatprep.subr.bf16.mxu0 0
          %7092 = vmatpush1.bf16.msra.mxu0 %v7089
          %7093 = vmatprep.subr.bf16.mxu0 0
          %7094 = vmatpush1.bf16.msra.mxu0 0
          %7095 = vmatprep.subr.bf16.mxu0 0
          %7096 = vmatpush1.bf16.msra.mxu0 0
          %7097 = vmatprep.subr.bf16.mxu0 0
          %7098 = vmatpush1.bf16.msra.mxu0 0
          %7099 = vmatprep.subr.bf16.mxu0 0
          %7100 = vmatpush1.bf16.msra.mxu0 0
          %7101 = vmatprep.subr.bf16.mxu0 0
          %7102 = vmatpush1.bf16.msra.mxu0 0
          %7103 = vmatprep.subr.bf16.mxu0 0
          %7104 = vmatpush1.bf16.msra.mxu0 0
          %7105 = vmatprep.subr.bf16.mxu0 0
          %7106 = vmatpush1.bf16.msra.mxu0 0
          %7107 = vmatprep.subr.bf16.mxu0 0
          %7108 = vmatpush1.bf16.msra.mxu0 0
          %7109 = vmatprep.subr.bf16.mxu0 0
          %7110 = vmatpush1.bf16.msra.mxu0 0
          %7111 = vmatprep.subr.bf16.mxu0 0
          %7112 = vmatpush1.bf16.msra.mxu0 0
          %7113 = vmatprep.subr.bf16.mxu0 0
          %7114 = vmatpush1.bf16.msra.mxu0 0
          %7115 = vmatprep.subr.bf16.mxu0 0
          %7116 = vmatpush1.bf16.msra.mxu0 0
          %7117 = vmatprep.subr.bf16.mxu0 0
          %7118 = vmatpush1.bf16.msra.mxu0 0
          %7119 = vmatprep.subr.bf16.mxu0 0
          %7120 = vmatpush1.bf16.msra.mxu0 0
          %7121 = vmatprep.subr.bf16.mxu0 0
          %7122 = vmatpush1.bf16.msra.mxu0 0
          %7123 = vmatprep.mubr.bf16.mxu0 0
          %7124 = vmatmul.mubr.bf16.gmra.mrb[0].mxu0 %v7086
          %v7125 = vpop.f32.mrb[0].mxu0
          %v7126 = vadd.f32 0.0, %v7125
          %v7127 = vpop.f32.mrb[0].mxu0
          %v7128 = vpop.f32.mrb[0].mxu0
          %v7129 = vpop.f32.mrb[0].mxu0
          %7130 = vdwg.mxu0
          %v7131 = vpack.c.bf16 %v6869, %v6869
          %7133 = vrot.lane.b32.xlu0 %v7084, 112
          %v7134 = vpop.permute.xlu0 %7133
          %v7136 = vsel %vm5356, %v7131, 0
          %v7139 = vsel %vm5450, %v7134, 0
          %7141 = vmatprep.subr.bf16.mxu0 0
          %7142 = vmatpush1.bf16.msra.mxu0 %v7139
          %7143 = vmatprep.subr.bf16.mxu0 0
          %7144 = vmatpush1.bf16.msra.mxu0 0
          %7145 = vmatprep.subr.bf16.mxu0 0
          %7146 = vmatpush1.bf16.msra.mxu0 0
          %7147 = vmatprep.subr.bf16.mxu0 0
          %7148 = vmatpush1.bf16.msra.mxu0 0
          %7149 = vmatprep.subr.bf16.mxu0 0
          %7150 = vmatpush1.bf16.msra.mxu0 0
          %7151 = vmatprep.subr.bf16.mxu0 0
          %7152 = vmatpush1.bf16.msra.mxu0 0
          %7153 = vmatprep.subr.bf16.mxu0 0
          %7154 = vmatpush1.bf16.msra.mxu0 0
          %7155 = vmatprep.subr.bf16.mxu0 0
          %7156 = vmatpush1.bf16.msra.mxu0 0
          %7157 = vmatprep.subr.bf16.mxu0 0
          %7158 = vmatpush1.bf16.msra.mxu0 0
          %7159 = vmatprep.subr.bf16.mxu0 0
          %7160 = vmatpush1.bf16.msra.mxu0 0
          %7161 = vmatprep.subr.bf16.mxu0 0
          %7162 = vmatpush1.bf16.msra.mxu0 0
          %7163 = vmatprep.subr.bf16.mxu0 0
          %7164 = vmatpush1.bf16.msra.mxu0 0
          %7165 = vmatprep.subr.bf16.mxu0 0
          %7166 = vmatpush1.bf16.msra.mxu0 0
          %7167 = vmatprep.subr.bf16.mxu0 0
          %7168 = vmatpush1.bf16.msra.mxu0 0
          %7169 = vmatprep.subr.bf16.mxu0 0
          %7170 = vmatpush1.bf16.msra.mxu0 0
          %7171 = vmatprep.subr.bf16.mxu0 0
          %7172 = vmatpush1.bf16.msra.mxu0 0
          %7173 = vmatprep.mubr.bf16.mxu0 0
          %7174 = vmatmul.mubr.bf16.gmra.mrb[0].mxu0 %v7136
          %v7175 = vpop.f32.mrb[0].mxu0
          %v7176 = vadd.f32 0.0, %v7175
          %v7177 = vpop.f32.mrb[0].mxu0
          %v7178 = vpop.f32.mrb[0].mxu0
          %v7179 = vpop.f32.mrb[0].mxu0
          %7180 = vdwg.mxu0
          %v7181 = vpack.c.bf16 %v6870, %v6870
          %7182 = vrot.lane.b32.xlu0 %v7084, 96
          %v7183 = vpop.permute.xlu0 %7182
          %v7185 = vsel %vm5356, %v7181, 0
          %v7188 = vsel %vm5450, %v7183, 0
          %7190 = vmatprep.subr.bf16.mxu0 0
          %7191 = vmatpush1.bf16.msra.mxu0 %v7188
          %7192 = vmatprep.subr.bf16.mxu0 0
          %7193 = vmatpush1.bf16.msra.mxu0 0
          %7194 = vmatprep.subr.bf16.mxu0 0
          %7195 = vmatpush1.bf16.msra.mxu0 0
          %7196 = vmatprep.subr.bf16.mxu0 0
          %7197 = vmatpush1.bf16.msra.mxu0 0
          %7198 = vmatprep.subr.bf16.mxu0 0
          %7199 = vmatpush1.bf16.msra.mxu0 0
          %7200 = vmatprep.subr.bf16.mxu0 0
          %7201 = vmatpush1.bf16.msra.mxu0 0
          %7202 = vmatprep.subr.bf16.mxu0 0
          %7203 = vmatpush1.bf16.msra.mxu0 0
          %7204 = vmatprep.subr.bf16.mxu0 0
          %7205 = vmatpush1.bf16.msra.mxu0 0
          %7206 = vmatprep.subr.bf16.mxu0 0
          %7207 = vmatpush1.bf16.msra.mxu0 0
          %7208 = vmatprep.subr.bf16.mxu0 0
          %7209 = vmatpush1.bf16.msra.mxu0 0
          %7210 = vmatprep.subr.bf16.mxu0 0
          %7211 = vmatpush1.bf16.msra.mxu0 0
          %7212 = vmatprep.subr.bf16.mxu0 0
          %7213 = vmatpush1.bf16.msra.mxu0 0
          %7214 = vmatprep.subr.bf16.mxu0 0
          %7215 = vmatpush1.bf16.msra.mxu0 0
          %7216 = vmatprep.subr.bf16.mxu0 0
          %7217 = vmatpush1.bf16.msra.mxu0 0
          %7218 = vmatprep.subr.bf16.mxu0 0
          %7219 = vmatpush1.bf16.msra.mxu0 0
          %7220 = vmatprep.subr.bf16.mxu0 0
          %7221 = vmatpush1.bf16.msra.mxu0 0
          %7222 = vmatprep.mubr.bf16.mxu0 0
          %7223 = vmatmul.mubr.bf16.gmra.mrb[0].mxu0 %v7185
          %v7224 = vpop.f32.mrb[0].mxu0
          %v7225 = vadd.f32 0.0, %v7224
          %v7226 = vpop.f32.mrb[0].mxu0
          %v7227 = vpop.f32.mrb[0].mxu0
          %v7228 = vpop.f32.mrb[0].mxu0
          %7229 = vdwg.mxu0
          %v7230 = vpack.c.bf16 %v6871, %v6871
          %7231 = vrot.lane.b32.xlu0 %v7084, 80
          %v7232 = vpop.permute.xlu0 %7231
          %v7234 = vsel %vm5356, %v7230, 0
          %v7237 = vsel %vm5450, %v7232, 0
          %7239 = vmatprep.subr.bf16.mxu0 0
          %7240 = vmatpush1.bf16.msra.mxu0 %v7237
          %7241 = vmatprep.subr.bf16.mxu0 0
          %7242 = vmatpush1.bf16.msra.mxu0 0
          %7243 = vmatprep.subr.bf16.mxu0 0
          %7244 = vmatpush1.bf16.msra.mxu0 0
          %7245 = vmatprep.subr.bf16.mxu0 0
          %7246 = vmatpush1.bf16.msra.mxu0 0
          %7247 = vmatprep.subr.bf16.mxu0 0
          %7248 = vmatpush1.bf16.msra.mxu0 0
          %7249 = vmatprep.subr.bf16.mxu0 0
          %7250 = vmatpush1.bf16.msra.mxu0 0
          %7251 = vmatprep.subr.bf16.mxu0 0
          %7252 = vmatpush1.bf16.msra.mxu0 0
          %7253 = vmatprep.subr.bf16.mxu0 0
          %7254 = vmatpush1.bf16.msra.mxu0 0
          %7255 = vmatprep.subr.bf16.mxu0 0
          %7256 = vmatpush1.bf16.msra.mxu0 0
          %7257 = vmatprep.subr.bf16.mxu0 0
          %7258 = vmatpush1.bf16.msra.mxu0 0
          %7259 = vmatprep.subr.bf16.mxu0 0
          %7260 = vmatpush1.bf16.msra.mxu0 0
          %7261 = vmatprep.subr.bf16.mxu0 0
          %7262 = vmatpush1.bf16.msra.mxu0 0
          %7263 = vmatprep.subr.bf16.mxu0 0
          %7264 = vmatpush1.bf16.msra.mxu0 0
          %7265 = vmatprep.subr.bf16.mxu0 0
          %7266 = vmatpush1.bf16.msra.mxu0 0
          %7267 = vmatprep.subr.bf16.mxu0 0
          %7268 = vmatpush1.bf16.msra.mxu0 0
          %7269 = vmatprep.subr.bf16.mxu0 0
          %7270 = vmatpush1.bf16.msra.mxu0 0
          %7271 = vmatprep.mubr.bf16.mxu0 0
          %7272 = vmatmul.mubr.bf16.gmra.mrb[0].mxu0 %v7234
          %v7273 = vpop.f32.mrb[0].mxu0
          %v7274 = vadd.f32 0.0, %v7273
          %v7275 = vpop.f32.mrb[0].mxu0
          %v7276 = vpop.f32.mrb[0].mxu0
          %v7277 = vpop.f32.mrb[0].mxu0
          %7278 = vdwg.mxu0
          %7280 = vrot.lane.b32.xlu0 %v7176, 16
          %v7281 = vpop.permute.xlu0 %7280
          %7284 = vrot.lane.b32.xlu0 %v7225, 32
          %v7285 = vpop.permute.xlu0 %7284
          %7288 = vrot.lane.b32.xlu0 %v7274, 48
          %v7289 = vpop.permute.xlu0 %7288
          %v7291 = vsel %vm4948, %v7126, %v7281
          %v7292 = vsel %vm5655, %v7291, %v7285
          %v7293 = vsel %vm5657, %v7292, %v7289
          %v7294 = vpack.c.bf16 %v7293, %v7082
          %s7295 = scalar_lea.vmem %s57, 32
          %v7296 = vld [vmem:[%s7295] sm:$0xf]
          %v7297 = vld [vmem:[%s7295 + $0x4] sm:$0xf]
          %v7298 = vld [vmem:[%s7295 + $0x8] sm:$0xf]
          %v7299 = vld [vmem:[%s7295 + $0xc] sm:$0xf]
          %v7300 = vld [vmem:[%s7295 + $0x10] sm:$0xf]
          %v7301 = vld [vmem:[%s7295 + $0x14] sm:$0xf]
          %v7302 = vld [vmem:[%s7295 + $0x18] sm:$0xf]
          %v7303 = vld [vmem:[%s7295 + $0x1c] sm:$0xf]
          %s7304 = scalar_lea.vmem [#allocation32], 1
          %v7305 = vld [vmem:[%s7304] sm:$0x1]
          %v7307 = vlaneseq
          %v7308 = vshrl.u32 %v7307, 7
          %v7309 = vsub.s32 0, %v7308
          %v7310 = vrot.slane %v7305, %v7309
          %v7320 = vunpack.c.l.b16 %v7296
          %v7321 = vunpack.c.l.b16 %v7297
          %v7322 = vunpack.c.l.b16 %v7298
          %v7323 = vunpack.c.l.b16 %v7299
          %v7324 = vunpack.c.l.b16 %v7300
          %v7325 = vunpack.c.l.b16 %v7301
          %v7326 = vunpack.c.l.b16 %v7302
          %v7327 = vunpack.c.l.b16 %v7303
          %v7328 = vpack.c.b16 %v7321, %v7320
          %v7329 = vpack.c.b16 %v7323, %v7322
          %v7330 = vpack.c.b16 %v7325, %v7324
          %v7331 = vpack.c.b16 %v7327, %v7326
          %v7337 = vsel %vm4703, %v7294, 0
          %7339 = vmatprep.subr.bf16.mxu0 0
          %7340 = vmatpush1.bf16.msra.mxu0 %v7328
          %7341 = vmatprep.subr.bf16.mxu0 0
          %7342 = vmatpush1.bf16.msra.mxu0 %v7329
          %7343 = vmatprep.subr.bf16.mxu0 0
          %7344 = vmatpush1.bf16.msra.mxu0 %v7330
          %7345 = vmatprep.subr.bf16.mxu0 0
          %7346 = vmatpush1.bf16.msra.mxu0 %v7331
          %7347 = vmatprep.subr.bf16.mxu0 0
          %7348 = vmatpush1.bf16.msra.mxu0 0
          %7349 = vmatprep.subr.bf16.mxu0 0
          %7350 = vmatpush1.bf16.msra.mxu0 0
          %7351 = vmatprep.subr.bf16.mxu0 0
          %7352 = vmatpush1.bf16.msra.mxu0 0
          %7353 = vmatprep.subr.bf16.mxu0 0
          %7354 = vmatpush1.bf16.msra.mxu0 0
          %7355 = vmatprep.subr.bf16.mxu0 0
          %7356 = vmatpush1.bf16.msra.mxu0 0
          %7357 = vmatprep.subr.bf16.mxu0 0
          %7358 = vmatpush1.bf16.msra.mxu0 0
          %7359 = vmatprep.subr.bf16.mxu0 0
          %7360 = vmatpush1.bf16.msra.mxu0 0
          %7361 = vmatprep.subr.bf16.mxu0 0
          %7362 = vmatpush1.bf16.msra.mxu0 0
          %7363 = vmatprep.subr.bf16.mxu0 0
          %7364 = vmatpush1.bf16.msra.mxu0 0
          %7365 = vmatprep.subr.bf16.mxu0 0
          %7366 = vmatpush1.bf16.msra.mxu0 0
          %7367 = vmatprep.subr.bf16.mxu0 0
          %7368 = vmatpush1.bf16.msra.mxu0 0
          %7369 = vmatprep.subr.bf16.mxu0 0
          %7370 = vmatpush1.bf16.msra.mxu0 0
          %7371 = vmatprep.mubr.bf16.mxu0 0
          %7372 = vmatmul.mubr.bf16.gmra.mrb[0].mxu0 %v7337
          %v7373 = vpop.f32.mrb[0].mxu0
          %v7374 = vadd.f32 %v7310, %v7373
          %v7375 = vpop.f32.mrb[0].mxu0
          %v7376 = vpop.f32.mrb[0].mxu0
          %v7377 = vadd.f32 %v7310, %v7376
          %v7378 = vpop.f32.mrb[0].mxu0
          %7379 = vdwg.mxu0
          %v7380 = vadd.f32 %v6213, %v7374
          %v7381 = vadd.f32 %v6214, %v7377
          %s7382 = scalar_lea.vmem [#allocation34], 1
          %v7383 = vld [vmem:[%s7382] sm:$0x1]
          %s7384 = scalar_lea.vmem [#allocation35], 1
          %v7385 = vld [vmem:[%s7384] sm:$0x1]
          %v7386 = vsel %vm4703, %v7380, 0.0
          %7387 = vadd.xlane.f32.xlu0 %v7386
          %v7388 = vpop.xlane.xlu0 %7387
          %v7389 = vsel %vm4703, %v7381, 0.0
          %7390 = vadd.xlane.f32.xlu0 %v7389
          %v7391 = vpop.xlane.xlu0 %7390
          %v7392 = vmul.f32 %v7388, %v4797
          %v7393 = vmul.f32 %v7391, %v4797
          %v7394 = vsub.f32 %v7380, %v7392
          %v7395 = vsub.f32 %v7381, %v7393
          %v7396 = vmul.f32 %v7394, %v7394
          %v7397 = vmul.f32 %v7395, %v7395
          %v7398 = vsel %vm4703, %v7396, 0.0
          %7399 = vadd.xlane.f32.xlu0 %v7398
          %v7400 = vpop.xlane.xlu0 %7399
          %v7401 = vsel %vm4703, %v7397, 0.0
          %7402 = vadd.xlane.f32.xlu0 %v7401
          %v7403 = vpop.xlane.xlu0 %7402
          %v7404 = vmul.f32 %v7400, %v4797
          %v7405 = vmul.f32 %v7403, %v4797
          %v7406 = vadd.f32 %v7404, 1e-05
          %v7407 = vadd.f32 %v7405, 1e-05
          %v7408 = vrsqrt.pop %v7406
          %v7409 = vrsqrt.pop %v7407
          %v7410 = vmul.f32 %v7394, %v7408
          %v7411 = vmul.f32 %v7395, %v7409
          %v7413 = vlaneseq
          %v7414 = vshrl.u32 %v7413, 7
          %v7415 = vsub.s32 0, %v7414
          %v7416 = vrot.slane %v7383, %v7415
          %v7418 = vmul.f32 %v7410, %v7416
          %v7419 = vmul.f32 %v7411, %v7416
          %v7421 = vlaneseq
          %v7422 = vshrl.u32 %v7421, 7
          %v7423 = vsub.s32 0, %v7422
          %v7424 = vrot.slane %v7385, %v7423
          %v7426 = vadd.f32 %v7418, %v7424
          %v7427 = vadd.f32 %v7419, %v7424
          %v7428 = vpack.c.bf16 %v7427, %v7426
          %s7429 = scalar_lea.vmem [#allocation37], 32
          %v7430 = vld [vmem:[%s7429] sm:$0xf]
          %v7431 = vld [vmem:[%s7429 + $0x4] sm:$0xf]
          %v7432 = vld [vmem:[%s7429 + $0x8] sm:$0xf]
          %v7433 = vld [vmem:[%s7429 + $0xc] sm:$0xf]
          %v7434 = vld [vmem:[%s7429 + $0x10] sm:$0xf]
          %v7435 = vld [vmem:[%s7429 + $0x14] sm:$0xf]
          %v7436 = vld [vmem:[%s7429 + $0x18] sm:$0xf]
          %v7437 = vld [vmem:[%s7429 + $0x1c] sm:$0xf]
          %s7438 = scalar_lea.vmem %s67, 1
          %v7439 = vld [vmem:[%s7438] sm:$0x1]
          %v7441 = vlaneseq
          %v7442 = vshrl.u32 %v7441, 7
          %v7443 = vsub.s32 0, %v7442
          %v7444 = vrot.slane %v7439, %v7443
          %v7454 = vunpack.c.l.b16 %v7430
          %v7455 = vunpack.c.l.b16 %v7431
          %v7456 = vunpack.c.l.b16 %v7432
          %v7457 = vunpack.c.l.b16 %v7433
          %v7458 = vunpack.c.l.b16 %v7434
          %v7459 = vunpack.c.l.b16 %v7435
          %v7460 = vunpack.c.l.b16 %v7436
          %v7461 = vunpack.c.l.b16 %v7437
          %v7462 = vpack.c.b16 %v7455, %v7454
          %v7463 = vpack.c.b16 %v7457, %v7456
          %v7464 = vpack.c.b16 %v7459, %v7458
          %v7465 = vpack.c.b16 %v7461, %v7460
          %v7471 = vsel %vm4703, %v7428, 0
          %7473 = vmatprep.subr.bf16.mxu0 0
          %7474 = vmatpush1.bf16.msra.mxu0 %v7462
          %7475 = vmatprep.subr.bf16.mxu0 0
          %7476 = vmatpush1.bf16.msra.mxu0 %v7463
          %7477 = vmatprep.subr.bf16.mxu0 0
          %7478 = vmatpush1.bf16.msra.mxu0 %v7464
          %7479 = vmatprep.subr.bf16.mxu0 0
          %7480 = vmatpush1.bf16.msra.mxu0 %v7465
          %7481 = vmatprep.subr.bf16.mxu0 0
          %7482 = vmatpush1.bf16.msra.mxu0 0
          %7483 = vmatprep.subr.bf16.mxu0 0
          %7484 = vmatpush1.bf16.msra.mxu0 0
          %7485 = vmatprep.subr.bf16.mxu0 0
          %7486 = vmatpush1.bf16.msra.mxu0 0
          %7487 = vmatprep.subr.bf16.mxu0 0
          %7488 = vmatpush1.bf16.msra.mxu0 0
          %7489 = vmatprep.subr.bf16.mxu0 0
          %7490 = vmatpush1.bf16.msra.mxu0 0
          %7491 = vmatprep.subr.bf16.mxu0 0
          %7492 = vmatpush1.bf16.msra.mxu0 0
          %7493 = vmatprep.subr.bf16.mxu0 0
          %7494 = vmatpush1.bf16.msra.mxu0 0
          %7495 = vmatprep.subr.bf16.mxu0 0
          %7496 = vmatpush1.bf16.msra.mxu0 0
          %7497 = vmatprep.subr.bf16.mxu0 0
          %7498 = vmatpush1.bf16.msra.mxu0 0
          %7499 = vmatprep.subr.bf16.mxu0 0
          %7500 = vmatpush1.bf16.msra.mxu0 0
          %7501 = vmatprep.subr.bf16.mxu0 0
          %7502 = vmatpush1.bf16.msra.mxu0 0
          %7503 = vmatprep.subr.bf16.mxu0 0
          %7504 = vmatpush1.bf16.msra.mxu0 0
          %7505 = vmatprep.mubr.bf16.mxu0 0
          %7506 = vmatmul.mubr.bf16.gmra.mrb[0].mxu0 %v7471
          %v7507 = vpop.f32.mrb[0].mxu0
          %v7508 = vadd.f32 %v7444, %v7507
          %v7509 = vpop.f32.mrb[0].mxu0
          %v7510 = vpop.f32.mrb[0].mxu0
          %v7511 = vadd.f32 %v7444, %v7510
          %v7512 = vpop.f32.mrb[0].mxu0
          %7513 = vdwg.mxu0
          %v7514 = vmul.f32 %v7508, 1.702
          %v7515 = vmul.f32 %v7511, 1.702
          %v7516 = vxor.u32 %v7514, 2147483648
          %v7517 = vxor.u32 %v7515, 2147483648
          %v7518 = vmul.f32 %v7516, 1.442695
          %v7519 = vpow.pop %v7518
          %v7520 = vmul.f32 %v7517, 1.442695
          %v7521 = vpow.pop %v7520
          %v7522 = vadd.f32 %v7519, 1.0
          %v7523 = vadd.f32 %v7521, 1.0
          %v7524 = vrcp.pop %v7522
          %v7525 = vmul.f32 1.0, %v7524
          %v7526 = vrcp.pop %v7523
          %v7527 = vmul.f32 1.0, %v7526
          %v7528 = vmul.f32 %v7508, %v7525
          %v7529 = vmul.f32 %v7511, %v7527
          %v7530 = vpack.c.bf16 %v7529, %v7528
          %s7531 = scalar_lea.vmem %s69, 64
          %v7532 = vld [vmem:[%s7531] sm:$0xf]
          %v7533 = vld [vmem:[%s7531 + $0x4] sm:$0xf]
          %v7534 = vld [vmem:[%s7531 + $0x8] sm:$0xf]
          %v7535 = vld [vmem:[%s7531 + $0xc] sm:$0xf]
          %v7536 = vld [vmem:[%s7531 + $0x10] sm:$0xf]
          %v7537 = vld [vmem:[%s7531 + $0x14] sm:$0xf]
          %v7538 = vld [vmem:[%s7531 + $0x18] sm:$0xf]
          %v7539 = vld [vmem:[%s7531 + $0x1c] sm:$0xf]
          %v7540 = vld [vmem:[%s7531 + $0x20] sm:$0xf]
          %v7541 = vld [vmem:[%s7531 + $0x24] sm:$0xf]
          %v7542 = vld [vmem:[%s7531 + $0x28] sm:$0xf]
          %v7543 = vld [vmem:[%s7531 + $0x2c] sm:$0xf]
          %v7544 = vld [vmem:[%s7531 + $0x30] sm:$0xf]
          %v7545 = vld [vmem:[%s7531 + $0x34] sm:$0xf]
          %v7546 = vld [vmem:[%s7531 + $0x38] sm:$0xf]
          %v7547 = vld [vmem:[%s7531 + $0x3c] sm:$0xf]
          %s7548 = scalar_lea.vmem %s71, 1
          %v7549 = vld [vmem:[%s7548] sm:$0x1]
          %v7551 = vlaneseq
          %v7552 = vshrl.u32 %v7551, 7
          %v7553 = vsub.s32 0, %v7552
          %v7554 = vrot.slane %v7549, %v7553
          %v7572 = vunpack.c.l.b16 %v7532
          %v7573 = vunpack.c.l.b16 %v7533
          %v7574 = vunpack.c.l.b16 %v7534
          %v7575 = vunpack.c.l.b16 %v7535
          %v7576 = vunpack.c.l.b16 %v7536
          %v7577 = vunpack.c.l.b16 %v7537
          %v7578 = vunpack.c.l.b16 %v7538
          %v7579 = vunpack.c.l.b16 %v7539
          %v7580 = vunpack.c.l.b16 %v7540
          %v7581 = vunpack.c.l.b16 %v7541
          %v7582 = vunpack.c.l.b16 %v7542
          %v7583 = vunpack.c.l.b16 %v7543
          %v7584 = vunpack.c.l.b16 %v7544
          %v7585 = vunpack.c.l.b16 %v7545
          %v7586 = vunpack.c.l.b16 %v7546
          %v7587 = vunpack.c.l.b16 %v7547
          %v7588 = vpack.c.b16 %v7573, %v7572
          %v7589 = vpack.c.b16 %v7575, %v7574
          %v7590 = vpack.c.b16 %v7577, %v7576
          %v7591 = vpack.c.b16 %v7579, %v7578
          %v7592 = vpack.c.b16 %v7581, %v7580
          %v7593 = vpack.c.b16 %v7583, %v7582
          %v7594 = vpack.c.b16 %v7585, %v7584
          %v7595 = vpack.c.b16 %v7587, %v7586
          %7604 = vmatprep.subr.bf16.mxu0 0
          %7605 = vmatpush1.bf16.msra.mxu0 %v7588
          %7606 = vmatprep.subr.bf16.mxu0 0
          %7607 = vmatpush1.bf16.msra.mxu0 %v7589
          %7608 = vmatprep.subr.bf16.mxu0 0
          %7609 = vmatpush1.bf16.msra.mxu0 %v7590
          %7610 = vmatprep.subr.bf16.mxu0 0
          %7611 = vmatpush1.bf16.msra.mxu0 %v7591
          %7612 = vmatprep.subr.bf16.mxu0 0
          %7613 = vmatpush1.bf16.msra.mxu0 %v7592
          %7614 = vmatprep.subr.bf16.mxu0 0
          %7615 = vmatpush1.bf16.msra.mxu0 %v7593
          %7616 = vmatprep.subr.bf16.mxu0 0
          %7617 = vmatpush1.bf16.msra.mxu0 %v7594
          %7618 = vmatprep.subr.bf16.mxu0 0
          %7619 = vmatpush1.bf16.msra.mxu0 %v7595
          %7620 = vmatprep.subr.bf16.mxu0 0
          %7621 = vmatpush1.bf16.msra.mxu0 0
          %7622 = vmatprep.subr.bf16.mxu0 0
          %7623 = vmatpush1.bf16.msra.mxu0 0
          %7624 = vmatprep.subr.bf16.mxu0 0
          %7625 = vmatpush1.bf16.msra.mxu0 0
          %7626 = vmatprep.subr.bf16.mxu0 0
          %7627 = vmatpush1.bf16.msra.mxu0 0
          %7628 = vmatprep.subr.bf16.mxu0 0
          %7629 = vmatpush1.bf16.msra.mxu0 0
          %7630 = vmatprep.subr.bf16.mxu0 0
          %7631 = vmatpush1.bf16.msra.mxu0 0
          %7632 = vmatprep.subr.bf16.mxu0 0
          %7633 = vmatpush1.bf16.msra.mxu0 0
          %7634 = vmatprep.subr.bf16.mxu0 0
          %7635 = vmatpush1.bf16.msra.mxu0 0
          %7636 = vmatprep.mubr.bf16.mxu0 0
          %7637 = vmatmul.mubr.bf16.gmra.mrb[0].mxu0 %v7530
          %v7638 = vpop.f32.mrb[0].mxu0
          %v7639 = vadd.f32 %v7554, %v7638
          %v7640 = vpop.f32.mrb[0].mxu0
          %v7641 = vpop.f32.mrb[0].mxu0
          %v7642 = vadd.f32 %v7554, %v7641
          %v7643 = vpop.f32.mrb[0].mxu0
          %7644 = vdwg.mxu0
          %v7645 = vadd.f32 %v7380, %v7639
          %v7646 = vadd.f32 %v7381, %v7642
          %v7647 = vld [vmem:[%s73] sm:$0x1]
          %v7648 = vld [vmem:[%s75] sm:$0x1]
          %v7649 = vsel %vm4703, %v7645, 0.0
          %7650 = vadd.xlane.f32.xlu0 %v7649
          %v7651 = vpop.xlane.xlu0 %7650
          %v7652 = vsel %vm4703, %v7646, 0.0
          %7653 = vadd.xlane.f32.xlu0 %v7652
          %v7654 = vpop.xlane.xlu0 %7653
          %v7655 = vmul.f32 %v7651, %v4797
          %v7656 = vmul.f32 %v7654, %v4797
          %v7657 = vsub.f32 %v7645, %v7655
          %v7658 = vsub.f32 %v7646, %v7656
          %v7659 = vmul.f32 %v7657, %v7657
          %v7660 = vmul.f32 %v7658, %v7658
          %v7661 = vsel %vm4703, %v7659, 0.0
          %7662 = vadd.xlane.f32.xlu0 %v7661
          %v7663 = vpop.xlane.xlu0 %7662
          %v7664 = vsel %vm4703, %v7660, 0.0
          %7665 = vadd.xlane.f32.xlu0 %v7664
          %v7666 = vpop.xlane.xlu0 %7665
          %v7667 = vmul.f32 %v7663, %v4797
          %v7668 = vmul.f32 %v7666, %v4797
          %v7669 = vadd.f32 %v7667, 1e-05
          %v7670 = vadd.f32 %v7668, 1e-05
          %v7671 = vrsqrt.pop %v7669
          %v7672 = vrsqrt.pop %v7670
          %v7673 = vmul.f32 %v7657, %v7671
          %v7674 = vmul.f32 %v7658, %v7672
          %v7676 = vlaneseq
          %v7677 = vshrl.u32 %v7676, 7
          %v7678 = vsub.s32 0, %v7677
          %v7679 = vrot.slane %v7647, %v7678
          %v7681 = vmul.f32 %v7673, %v7679
          %v7682 = vmul.f32 %v7674, %v7679
          %v7684 = vlaneseq
          %v7685 = vshrl.u32 %v7684, 7
          %v7686 = vsub.s32 0, %v7685
          %v7687 = vrot.slane %v7648, %v7686
          %v7689 = vadd.f32 %v7681, %v7687
          %v7690 = vadd.f32 %v7682, %v7687
          %v7692 = vrot.slane %v7689, 7
          %v7695 = vrot.slane %v7690, 6
          %vm7697 = vcmask 1040384
          %v7698 = vsel %vm7697, %v7692, %v7695
          %v7699 = vpack.c.bf16 %v7698, %v7698
          %v7700 = vld [vmem:[%s77] sm:$0xf]
          %v7701 = vld [vmem:[%s77 + $0x4] sm:$0xf]
          %v7702 = vld [vmem:[%s77 + $0x8] sm:$0xf]
          %v7703 = vld [vmem:[%s77 + $0xc] sm:$0xf]
          %v7704 = vld [vmem:[%s77 + $0x10] sm:$0xf]
          %v7705 = vld [vmem:[%s77 + $0x14] sm:$0xf]
          %v7706 = vld [vmem:[%s77 + $0x18] sm:$0xf]
          %v7707 = vld [vmem:[%s77 + $0x1c] sm:$0xf]
          %v7716 = vunpack.c.l.b16 %v7700
          %v7717 = vunpack.c.l.b16 %v7701
          %v7718 = vunpack.c.l.b16 %v7702
          %v7719 = vunpack.c.l.b16 %v7703
          %v7720 = vunpack.c.l.b16 %v7704
          %v7721 = vunpack.c.l.b16 %v7705
          %v7722 = vunpack.c.l.b16 %v7706
          %v7723 = vunpack.c.l.b16 %v7707
          %v7724 = vpack.c.b16 %v7717, %v7716
          %v7725 = vpack.c.b16 %v7719, %v7718
          %v7726 = vpack.c.b16 %v7721, %v7720
          %v7727 = vpack.c.b16 %v7723, %v7722
          %v7733 = vsel %vm4703, %v7699, 0
          %7735 = vmatprep.subr.bf16.mxu0 0
          %7736 = vmatpush1.bf16.msra.mxu0 %v7724
          %7737 = vmatprep.subr.bf16.mxu0 0
          %7738 = vmatpush1.bf16.msra.mxu0 %v7725
          %7739 = vmatprep.subr.bf16.mxu0 0
          %7740 = vmatpush1.bf16.msra.mxu0 %v7726
          %7741 = vmatprep.subr.bf16.mxu0 0
          %7742 = vmatpush1.bf16.msra.mxu0 %v7727
          %7743 = vmatprep.subr.bf16.mxu0 0
          %7744 = vmatpush1.bf16.msra.mxu0 0
          %7745 = vmatprep.subr.bf16.mxu0 0
          %7746 = vmatpush1.bf16.msra.mxu0 0
          %7747 = vmatprep.subr.bf16.mxu0 0
          %7748 = vmatpush1.bf16.msra.mxu0 0
          %7749 = vmatprep.subr.bf16.mxu0 0
          %7750 = vmatpush1.bf16.msra.mxu0 0
          %7751 = vmatprep.subr.bf16.mxu0 0
          %7752 = vmatpush1.bf16.msra.mxu0 0
          %7753 = vmatprep.subr.bf16.mxu0 0
          %7754 = vmatpush1.bf16.msra.mxu0 0
          %7755 = vmatprep.subr.bf16.mxu0 0
          %7756 = vmatpush1.bf16.msra.mxu0 0
          %7757 = vmatprep.subr.bf16.mxu0 0
          %7758 = vmatpush1.bf16.msra.mxu0 0
          %7759 = vmatprep.subr.bf16.mxu0 0
          %7760 = vmatpush1.bf16.msra.mxu0 0
          %7761 = vmatprep.subr.bf16.mxu0 0
          %7762 = vmatpush1.bf16.msra.mxu0 0
          %7763 = vmatprep.subr.bf16.mxu0 0
          %7764 = vmatpush1.bf16.msra.mxu0 0
          %7765 = vmatprep.subr.bf16.mxu0 0
          %7766 = vmatpush1.bf16.msra.mxu0 0
          %7767 = vmatprep.mubr.bf16.mxu0 0
          %7768 = vmatmul.mubr.bf16.gmra.mrb[0].mxu0 %v7733
          %v7769 = vpop.f32.mrb[0].mxu0
          %v7770 = vadd.f32 0.0, %v7769
          %v7771 = vpop.f32.mrb[0].mxu0
          %v7772 = vpop.f32.mrb[0].mxu0
          %v7773 = vpop.f32.mrb[0].mxu0
          %7774 = vdwg.mxu0
          %v7775 = vmul.f32 %v7770, %v7770
          %vm7776 = vcmask 1041408
          %v7777 = vsel %vm7776, %v7775, 0.0
          %7778 = vadd.xlane.f32.xlu0 %v7777
          %v7779 = vpop.xlane.xlu0 %7778
          %v7780 = vrsqrt.pop %v7779
          %v7781 = vmul.f32 %v7770, %v7780
          %7782 = vst [vmem:[%s1478] sm:$0x3] %v7781
        $region276: #{tpu_custom_call.1} parent=175 // pred_fallthru
          _
        %s7783 = sand.u32 %s932, 1
        %s7784 = scalar_lea.sflag [#allocation4], %s7783
        %s7785 = sand.u32 %s932, 1
        %s7786 = smul.addr %s7785, 2
        %s7787 = scalar_lea.vmem [#allocation38], %s7786
        // Predicated region
        $region277: #{tpu_custom_call.1} parent=175 // pred_check
          %p7788 = pneg %p942
        $region278: #{tpu_custom_call.1} parent=175 // pred_check_branch
          %7790 = sbr.rel (%p7788) target = $region280
        $region279: #{tpu_custom_call.1} parent=175 // pred_region
          %s7792 = ssub.s32 32, 32
          %7793 = vsyncadd %s7784, %s7792
          %s7794 = smul.addr %s105, 32
          %s7795 = scalar_lea.hbm %s79, %s7794
          %s7797 = sshll.u32 %s7787, 4
          %s7798 = int_to_ptr.vmem [resolvable:$true] %s7797
          %7800 = dma.vmem_to_hbm [thread:$0]  %s7798, 32, %s7795, %s7784
        $region280: #{tpu_custom_call.1} parent=175 // pred_fallthru
          _
      $region176: #{tpu_custom_call.1} parent=5 // pred_fallthru
        _
      %p7801 = scmp.le.s32.totalorder 2, %s100
      // Predicated region
      $region281: #{tpu_custom_call.1} parent=5 // pred_check
        %p7802 = pneg %p7801
      $region282: #{tpu_custom_call.1} parent=5 // pred_check_branch
        %7804 = sbr.rel (%p7802) target = $region284
      $region283: #{tpu_custom_call.1} parent=5 // pred_region
        %s7805 = ssub.s32 %s100, 2
        // Predicated region
        $region285: #{tpu_custom_call.1} parent=283 // pred_check
          %p7806 = pneg %p948
        $region286: #{tpu_custom_call.1} parent=283 // pred_check_branch
          %7808 = sbr.rel (%p7806) target = $region288
        $region287: #{tpu_custom_call.1} parent=283 // pred_region
          %s7809 = sand.u32 %s933, 1
          %s7810 = scalar_lea.sflag [#allocation4], %s7809
          %s7811 = sand.u32 %s933, 1
          %s7812 = smul.addr %s7811, 2
          %s7813 = scalar_lea.vmem [#allocation38], %s7812
          %7814 = dma.done %s7810, 32
        $region288: #{tpu_custom_call.1} parent=283 // pred_fallthru
          _
      $region284: #{tpu_custom_call.1} parent=5 // pred_fallthru
        _
    $region6: #{tpu_custom_call.1} parent=1 // loop_footer
      %s104 = sadd.s32 1, %s100
    $region7: #{tpu_custom_call.1} parent=1 // loop_footer_branch
      %99 = sbr.rel target = $region3
    $region8: #{tpu_custom_call.1} parent=1 // loop_exit
      _
    %7815 = vsyncpa [#allocation3], 1
    %s7816 = scalar_lea.sflag [#allocation3], 1
    %7817 = vsyncpa %s7816, 1
    %7818 = vsyncpa [#allocation6], 1
    %7819 = vsyncpa [#allocation9], 1
    %7820 = vsyncpa [#allocation12], 1
    %7821 = vsyncpa [#allocation15], 1
    %7822 = vsyncpa [#allocation18], 1
    %7823 = vsyncpa [#allocation21], 1
    %7824 = vsyncpa [#allocation24], 1
    %7825 = vsyncpa [#allocation27], 1
    %7826 = vsyncpa [#allocation30], 1
    %7827 = vsyncpa [#allocation33], 1
    %7828 = vsyncpa [#allocation36], 1
    %7829 = vsyncpa [#allocation4], 1
    %s7830 = scalar_lea.sflag [#allocation4], 1
    %7831 = vsyncpa %s7830, 1

</llo_original>
